<compile_context>
chip_gen: v5e
topology: v5e:2x2
jax: 0.10.0
libtpu: 0.0.40
codegen_flags: <defaults>
</compile_context>

<pallas_src>
import jax
import jax.numpy as jnp
from jax.experimental import pallas as pl
from jax.experimental.pallas import tpu as pltpu

HIDDEN = 512
GATES = 4 * HIDDEN            # 2048
LSTM_IN = 64 * 7 * 7          # 3136
K_PAD = 3200                  # 3136 padded to a multiple of K_BLK
K_BLK = 640                   # 5 * 128 lanes, 40 * 16 sublanes (bf16-friendly)
N_KBLK = K_PAD // K_BLK       # 5 grid steps


# ----------------------------- Pallas kernels ------------------------------

def _whole_vmem():
    return pl.BlockSpec(memory_space=pltpu.MemorySpace.VMEM)


def _const_spec(shape):
    """Whole-array VMEM block whose index never changes across the grid."""
    return pl.BlockSpec(shape, lambda k: (0,) * len(shape))


def _conv_kernel(p_ref, w_ref, b_ref, o_ref):
    """Fused im2col-matmul + bias + ReLU (bf16 weights, f32 accumulate)."""
    y = jnp.dot(p_ref[...].astype(jnp.bfloat16), w_ref[...],
                preferred_element_type=jnp.float32)
    o_ref[...] = jnp.maximum(y + b_ref[...], 0.0).astype(o_ref.dtype)


def conv_mm(patches, w_bf16, b_f32):
    m, n = patches.shape[0], w_bf16.shape[1]
    return pl.pallas_call(
        _conv_kernel,
        out_shape=jax.ShapeDtypeStruct((m, n), jnp.float32),
        in_specs=[_whole_vmem(), _whole_vmem(), _whole_vmem()],
        out_specs=_whole_vmem(),
    )(patches, w_bf16, b_f32)


def _lstm_heads_kernel(x_ref, wih0_ref, b0_ref, wih1_ref, b1_ref,
                       a1w_ref, a1b_ref, a2w_ref, a2b_ref, ahw_ref, ahb_ref,
                       v1w_ref, v1b_ref, v2w_ref, v2b_ref, vhw_ref, vhb_ref,
                       probs_ref, value_ref, acc_ref):
    """K-tiled layer-0 gate matmul + (reset-path) 2-layer LSTM + both heads."""
    k = pl.program_id(0)

    @pl.when(k == 0)
    def _():
        acc_ref[...] = jnp.zeros_like(acc_ref)

    # Stream one (K_BLK, 2048) slice of W_ih0 and accumulate the gate pre-acts.
    acc_ref[...] += jnp.dot(x_ref[...], wih0_ref[...],
                            preferred_element_type=jnp.float32)

    @pl.when(k == pl.num_programs(0) - 1)
    def _():
        def lstm_reset_cell(gates):
            # PyTorch gate order (i, f, g, o).  Reset path: c_prev = 0, so the
            # forget gate is dead and c_new = i * g; h_new = o * tanh(c_new).
            i = jax.nn.sigmoid(gates[:, 0:HIDDEN])
            g = jnp.tanh(gates[:, 2 * HIDDEN:3 * HIDDEN])
            o = jax.nn.sigmoid(gates[:, 3 * HIDDEN:4 * HIDDEN])
            return o * jnp.tanh(i * g)

        # LSTM layer 0 (the big W_ih0 contribution is in acc_ref).
        h1 = lstm_reset_cell(acc_ref[...] + b0_ref[...])            # (1, 512)

        # LSTM layer 1 (also zero initial state on the reset path).
        gates1 = jnp.dot(h1.astype(jnp.bfloat16), wih1_ref[...],
                         preferred_element_type=jnp.float32) + b1_ref[...]
        feat = lstm_reset_cell(gates1).astype(jnp.bfloat16)         # (1, 512)

        def dense_relu(xv, w_ref, b_ref):
            y = jnp.dot(xv, w_ref[...], preferred_element_type=jnp.float32)
            return jnp.maximum(y + b_ref[...], 0.0).astype(jnp.bfloat16)

        # Action head -> stabilized softmax probs (1, 3).
        a = dense_relu(feat, a1w_ref, a1b_ref)
        a = dense_relu(a, a2w_ref, a2b_ref)
        logits = jnp.dot(a, ahw_ref[...],
                         preferred_element_type=jnp.float32) + ahb_ref[...]
        logits = logits - jnp.max(logits, axis=-1, keepdims=True)
        e = jnp.exp(logits)
        probs_ref[...] = (e / jnp.sum(e, axis=-1, keepdims=True)
                          ).astype(probs_ref.dtype)

        # Value head -> (1, 1).
        v = dense_relu(feat, v1w_ref, v1b_ref)
        v = dense_relu(v, v2w_ref, v2b_ref)
        value_ref[...] = (jnp.dot(v, vhw_ref[...],
                                  preferred_element_type=jnp.float32)
                          + vhb_ref[...]).astype(value_ref.dtype)


def lstm_and_heads(flat_bf16_padded, p):
    in_specs = [
        pl.BlockSpec((1, K_BLK), lambda k: (0, k)),            # x (streamed K)
        pl.BlockSpec((K_BLK, GATES), lambda k: (k, 0)),        # W_ih0 (streamed)
        _const_spec((1, GATES)),                               # b0
        _const_spec((HIDDEN, GATES)),                          # W_ih1
        _const_spec((1, GATES)),                               # b1
        _const_spec((HIDDEN, 128)), _const_spec((1, 128)),     # action1
        _const_spec((128, 64)), _const_spec((1, 64)),          # action2
        _const_spec((64, 3)), _const_spec((1, 3)),             # action_head
        _const_spec((HIDDEN, 128)), _const_spec((1, 128)),     # value1
        _const_spec((128, 64)), _const_spec((1, 64)),          # value2
        _const_spec((64, 1)), _const_spec((1, 1)),             # value_head
    ]
    out_specs = (_const_spec((1, 3)), _const_spec((1, 1)))
    return pl.pallas_call(
        _lstm_heads_kernel,
        out_shape=(jax.ShapeDtypeStruct((1, 3), jnp.float32),
                   jax.ShapeDtypeStruct((1, 1), jnp.float32)),
        grid_spec=pltpu.PrefetchScalarGridSpec(
            num_scalar_prefetch=0,
            grid=(N_KBLK,),
            in_specs=in_specs,
            out_specs=out_specs,
            scratch_shapes=[pltpu.VMEM((1, GATES), jnp.float32)],
        ),
        compiler_params=pltpu.CompilerParams(
            dimension_semantics=("arbitrary",)),
    )(flat_bf16_padded, p["lstm_wih0"], p["lstm_b0"],
      p["lstm_wih1"], p["lstm_b1"],
      p["a1_w"], p["a1_b"], p["a2_w"], p["a2_b"], p["ah_w"], p["ah_b"],
      p["v1_w"], p["v1_b"], p["v2_w"], p["v2_b"], p["vh_w"], p["vh_b"])


# ------------------------------- JAX glue ----------------------------------

def im2col(x_chw, kh, kw, sh, sw):
    """x_chw: (C, H, W) -> patches (oh*ow, C*kh*kw), K ordered (C, kh, kw)."""
    C, H, W = x_chw.shape
    oh = (H - kh) // sh + 1
    ow = (W - kw) // sw + 1
    pieces = []
    for i in range(kh):
        for j in range(kw):
            pieces.append(x_chw[:, i:i + sh * oh:sh, j:j + sw * ow:sw])
    p = jnp.stack(pieces, axis=0).reshape(kh, kw, C, oh, ow)
    p = p.transpose(3, 4, 2, 0, 1).reshape(oh * ow, C * kh * kw)
    return p, oh, ow


def init_params(key):
    """PyTorch-style uniform(+-1/sqrt(fan_in)) init.

    Weight matrices are pre-transposed (in_features, out_features) and stored
    in bfloat16; biases stay float32.  W_ih0 is zero-padded K: 3136 -> 3200."""
    keys = iter(jax.random.split(key, 32))
    bf = jnp.bfloat16

    def u(shape, fan_in, dtype=jnp.float32):
        bound = 1.0 / (fan_in ** 0.5)
        return jax.random.uniform(next(keys), shape, jnp.float32,
                                  -bound, bound).astype(dtype)

    p = {}
    # conv1: Conv2d(2, 32, 8x8, s4) -> K = 2*8*8 = 128
    p["conv1_w"], p["conv1_b"] = u((128, 32), 128, bf), u((1, 32), 128)
    # conv2: Conv2d(32, 64, 4x4, s2) -> K = 32*4*4 = 512
    p["conv2_w"], p["conv2_b"] = u((512, 64), 512, bf), u((1, 64), 512)
    # conv3: Conv2d(64, 64, 3x3, s1) -> K = 64*3*3 = 576
    p["conv3_w"], p["conv3_b"] = u((576, 64), 576, bf), u((1, 64), 576)
    # LSTM(input=3136, hidden=512, layers=2); b = b_ih + b_hh folded.
    wih0 = u((LSTM_IN, GATES), HIDDEN)
    p["lstm_wih0"] = jnp.pad(wih0, ((0, K_PAD - LSTM_IN), (0, 0))).astype(bf)
    p["lstm_b0"] = u((1, GATES), HIDDEN) + u((1, GATES), HIDDEN)
    p["lstm_wih1"] = u((HIDDEN, GATES), HIDDEN, bf)
    p["lstm_b1"] = u((1, GATES), HIDDEN) + u((1, GATES), HIDDEN)
    # W_hh matrices exist in the module but are provably unused on the reset
    # path (h0 = c0 = 0); kept for parameter parity, never loaded by a kernel.
    p["lstm_whh0"] = u((HIDDEN, GATES), HIDDEN, bf)
    p["lstm_whh1"] = u((HIDDEN, GATES), HIDDEN, bf)
    # action head
    p["a1_w"], p["a1_b"] = u((HIDDEN, 128), HIDDEN, bf), u((1, 128), HIDDEN)
    p["a2_w"], p["a2_b"] = u((128, 64), 128, bf), u((1, 64), 128)
    p["ah_w"], p["ah_b"] = u((64, 3), 64, bf), u((1, 3), 64)
    # value head
    p["v1_w"], p["v1_b"] = u((HIDDEN, 128), HIDDEN, bf), u((1, 128), HIDDEN)
    p["v2_w"], p["v2_b"] = u((128, 64), 128, bf), u((1, 64), 128)
    p["vh_w"], p["vh_b"] = u((64, 1), 64, bf), u((1, 1), 64)
    return p


@jax.jit
def policy_forward(params, x):
    """x: (1, 2, 84, 84) NCHW f32 (84x84 is forced by LSTM input_size 3136)."""
    img = x[0]                                                     # (2, 84, 84)

    # conv1 + relu -> (32, 20, 20)
    p1, oh1, ow1 = im2col(img, 8, 8, 4, 4)                         # (400, 128)
    y1 = conv_mm(p1, params["conv1_w"], params["conv1_b"])         # (400, 32)
    f1 = y1.reshape(oh1, ow1, 32).transpose(2, 0, 1)

    # conv2 + relu -> (64, 9, 9)
    p2, oh2, ow2 = im2col(f1, 4, 4, 2, 2)                          # (81, 512)
    y2 = conv_mm(p2, params["conv2_w"], params["conv2_b"])         # (81, 64)
    f2 = y2.reshape(oh2, ow2, 64).transpose(2, 0, 1)

    # conv3 + relu -> (64, 7, 7)
    p3, oh3, ow3 = im2col(f2, 3, 3, 1, 1)                          # (49, 576)
    y3 = conv_mm(p3, params["conv3_w"], params["conv3_b"])         # (49, 64)
    f3 = y3.reshape(oh3, ow3, 64).transpose(2, 0, 1)

    # NCHW flatten exactly like conv3.view(time_steps=1, 1, -1), then pad the
    # K axis to 3200 (zero rows in W_ih0 make this a no-op numerically).
    flat = f3.reshape(1, LSTM_IN)
    flat = jnp.pad(flat, ((0, 0), (0, K_PAD - LSTM_IN))).astype(jnp.bfloat16)

    # Fused: 2-layer LSTM (reset path, zero initial state) + both heads.
    probs, value = lstm_and_heads(flat, params)

    # TODO(synk): per-agent cached (h_n, c_n) state, the reset flag, and
    # Categorical action sampling are host-side bookkeeping in the original
    # module; the non-reset path would additionally need the W_hh matmuls.
    # TODO(synk): if several agents are evaluated per step, batch them (M>1)
    # to amortize the weight stream instead of calling this per agent.
    return probs, value


if __name__ == "__main__":
    key = jax.random.PRNGKey(0)
    pkey, xkey = jax.random.split(key)
    params = init_params(pkey)
    # Input shape implied by the module: batch 1, 2 channels, 84x84 spatial
    # (conv stack -> 64x7x7 = 3136 = LSTM input_size).
    x = jax.random.normal(xkey, (1, 2, 84, 84), jnp.float32)

    probs, value = policy_forward(params, x)
    jax.block_until_ready((probs, value))

    assert probs.shape == (1, 3) and value.shape == (1, 1)
    assert abs(float(jnp.sum(probs)) - 1.0) < 1e-3
    print("KERNEL_OK")
</pallas_src>

<mosaic_0001>
module attributes {stable_mosaic.version = 11 : i64} {
  func.func @_conv_kernel(%arg0: memref<400x128xf32, #tpu.memory_space<vmem>>, %arg1: memref<128x32xbf16, #tpu.memory_space<vmem>>, %arg2: memref<1x32xf32, #tpu.memory_space<vmem>>, %arg3: memref<400x32xf32, #tpu.memory_space<vmem>>) attributes {dimension_semantics = [], scalar_prefetch = 0 : i64, scratch_operands = 0 : i64, tpu.core_type = #tpu.core_type<tc>} {
    %c0 = arith.constant 0 : index
    %c0_0 = arith.constant 0 : index
    %0 = vector.load %arg0[%c0, %c0_0] : memref<400x128xf32, #tpu.memory_space<vmem>>, vector<400x128xf32>
    %1 = arith.truncf %0 : vector<400x128xf32> to vector<400x128xbf16>
    %c0_1 = arith.constant 0 : index
    %c0_2 = arith.constant 0 : index
    %2 = vector.load %arg1[%c0_1, %c0_2] : memref<128x32xbf16, #tpu.memory_space<vmem>>, vector<128x32xbf16>
    %cst = arith.constant dense<0.000000e+00> : vector<400x32xf32>
    %3 = tpu.matmul %1, %2, %cst {dimension_numbers = #tpu.dot_dimension_numbers<[1], [0], [0], [1], [0, 0, 1, 1], [], []>} : vector<400x128xbf16>, vector<128x32xbf16>, vector<400x32xf32> -> vector<400x32xf32>
    %c0_3 = arith.constant 0 : index
    %c0_4 = arith.constant 0 : index
    %4 = vector.load %arg2[%c0_3, %c0_4] : memref<1x32xf32, #tpu.memory_space<vmem>>, vector<1x32xf32>
    %5 = vector.broadcast %4 : vector<1x32xf32> to vector<400x32xf32>
    %6 = arith.addf %3, %5 : vector<400x32xf32>
    %cst_5 = arith.constant 0.000000e+00 : f32
    %7 = vector.broadcast %cst_5 : f32 to vector<400x32xf32>
    %8 = arith.maximumf %6, %7 : vector<400x32xf32>
    %c0_6 = arith.constant 0 : index
    %c0_7 = arith.constant 0 : index
    %9 = vector.load %arg3[%c0_6, %c0_7] : memref<400x32xf32, #tpu.memory_space<vmem>>, vector<400x32xf32>
    tpu.vector_store %arg3[%c0_6, %c0_7], %8 {strides = array<i32>} : memref<400x32xf32, #tpu.memory_space<vmem>>, vector<400x32xf32>,
    return
  }
}

module attributes {stable_mosaic.version = 11 : i64} {
  func.func @_conv_kernel(%arg0: memref<81x512xf32, #tpu.memory_space<vmem>>, %arg1: memref<512x64xbf16, #tpu.memory_space<vmem>>, %arg2: memref<1x64xf32, #tpu.memory_space<vmem>>, %arg3: memref<81x64xf32, #tpu.memory_space<vmem>>) attributes {dimension_semantics = [], scalar_prefetch = 0 : i64, scratch_operands = 0 : i64, tpu.core_type = #tpu.core_type<tc>} {
    %c0 = arith.constant 0 : index
    %c0_0 = arith.constant 0 : index
    %0 = vector.load %arg0[%c0, %c0_0] : memref<81x512xf32, #tpu.memory_space<vmem>>, vector<81x512xf32>
    %1 = arith.truncf %0 : vector<81x512xf32> to vector<81x512xbf16>
    %c0_1 = arith.constant 0 : index
    %c0_2 = arith.constant 0 : index
    %2 = vector.load %arg1[%c0_1, %c0_2] : memref<512x64xbf16, #tpu.memory_space<vmem>>, vector<512x64xbf16>
    %cst = arith.constant dense<0.000000e+00> : vector<81x64xf32>
    %3 = tpu.matmul %1, %2, %cst {dimension_numbers = #tpu.dot_dimension_numbers<[1], [0], [0], [1], [0, 0, 1, 1], [], []>} : vector<81x512xbf16>, vector<512x64xbf16>, vector<81x64xf32> -> vector<81x64xf32>
    %c0_3 = arith.constant 0 : index
    %c0_4 = arith.constant 0 : index
    %4 = vector.load %arg2[%c0_3, %c0_4] : memref<1x64xf32, #tpu.memory_space<vmem>>, vector<1x64xf32>
    %5 = vector.broadcast %4 : vector<1x64xf32> to vector<81x64xf32>
    %6 = arith.addf %3, %5 : vector<81x64xf32>
    %cst_5 = arith.constant 0.000000e+00 : f32
    %7 = vector.broadcast %cst_5 : f32 to vector<81x64xf32>
    %8 = arith.maximumf %6, %7 : vector<81x64xf32>
    %c0_6 = arith.constant 0 : index
    %c0_7 = arith.constant 0 : index
    %9 = vector.load %arg3[%c0_6, %c0_7] : memref<81x64xf32, #tpu.memory_space<vmem>>, vector<81x64xf32>
    tpu.vector_store %arg3[%c0_6, %c0_7], %8 {strides = array<i32>} : memref<81x64xf32, #tpu.memory_space<vmem>>, vector<81x64xf32>,
    return
  }
}

module attributes {stable_mosaic.version = 11 : i64} {
  func.func @_conv_kernel(%arg0: memref<49x576xf32, #tpu.memory_space<vmem>>, %arg1: memref<576x64xbf16, #tpu.memory_space<vmem>>, %arg2: memref<1x64xf32, #tpu.memory_space<vmem>>, %arg3: memref<49x64xf32, #tpu.memory_space<vmem>>) attributes {dimension_semantics = [], scalar_prefetch = 0 : i64, scratch_operands = 0 : i64, tpu.core_type = #tpu.core_type<tc>} {
    %c0 = arith.constant 0 : index
    %c0_0 = arith.constant 0 : index
    %0 = vector.load %arg0[%c0, %c0_0] : memref<49x576xf32, #tpu.memory_space<vmem>>, vector<49x576xf32>
    %1 = arith.truncf %0 : vector<49x576xf32> to vector<49x576xbf16>
    %c0_1 = arith.constant 0 : index
    %c0_2 = arith.constant 0 : index
    %2 = vector.load %arg1[%c0_1, %c0_2] : memref<576x64xbf16, #tpu.memory_space<vmem>>, vector<576x64xbf16>
    %cst = arith.constant dense<0.000000e+00> : vector<49x64xf32>
    %3 = tpu.matmul %1, %2, %cst {dimension_numbers = #tpu.dot_dimension_numbers<[1], [0], [0], [1], [0, 0, 1, 1], [], []>} : vector<49x576xbf16>, vector<576x64xbf16>, vector<49x64xf32> -> vector<49x64xf32>
    %c0_3 = arith.constant 0 : index
    %c0_4 = arith.constant 0 : index
    %4 = vector.load %arg2[%c0_3, %c0_4] : memref<1x64xf32, #tpu.memory_space<vmem>>, vector<1x64xf32>
    %5 = vector.broadcast %4 : vector<1x64xf32> to vector<49x64xf32>
    %6 = arith.addf %3, %5 : vector<49x64xf32>
    %cst_5 = arith.constant 0.000000e+00 : f32
    %7 = vector.broadcast %cst_5 : f32 to vector<49x64xf32>
    %8 = arith.maximumf %6, %7 : vector<49x64xf32>
    %c0_6 = arith.constant 0 : index
    %c0_7 = arith.constant 0 : index
    %9 = vector.load %arg3[%c0_6, %c0_7] : memref<49x64xf32, #tpu.memory_space<vmem>>, vector<49x64xf32>
    tpu.vector_store %arg3[%c0_6, %c0_7], %8 {strides = array<i32>} : memref<49x64xf32, #tpu.memory_space<vmem>>, vector<49x64xf32>,
    return
  }
}

module attributes {stable_mosaic.version = 11 : i64} {
  func.func @_lstm_heads_kernel(%arg0: i32, %arg1: memref<1x640xbf16, #tpu.memory_space<vmem>>, %arg2: memref<640x2048xbf16, #tpu.memory_space<vmem>>, %arg3: memref<1x2048xf32, #tpu.memory_space<vmem>>, %arg4: memref<512x2048xbf16, #tpu.memory_space<vmem>>, %arg5: memref<1x2048xf32, #tpu.memory_space<vmem>>, %arg6: memref<512x128xbf16, #tpu.memory_space<vmem>>, %arg7: memref<1x128xf32, #tpu.memory_space<vmem>>, %arg8: memref<128x64xbf16, #tpu.memory_space<vmem>>, %arg9: memref<1x64xf32, #tpu.memory_space<vmem>>, %arg10: memref<64x3xbf16, #tpu.memory_space<vmem>>, %arg11: memref<1x3xf32, #tpu.memory_space<vmem>>, %arg12: memref<512x128xbf16, #tpu.memory_space<vmem>>, %arg13: memref<1x128xf32, #tpu.memory_space<vmem>>, %arg14: memref<128x64xbf16, #tpu.memory_space<vmem>>, %arg15: memref<1x64xf32, #tpu.memory_space<vmem>>, %arg16: memref<64x1xbf16, #tpu.memory_space<vmem>>, %arg17: memref<1x1xf32, #tpu.memory_space<vmem>>, %arg18: memref<1x3xf32, #tpu.memory_space<vmem>>, %arg19: memref<1x1xf32, #tpu.memory_space<vmem>>, %arg20: memref<1x2048xf32, #tpu.memory_space<vmem>>) attributes {dimension_semantics = [#tpu.dimension_semantics<arbitrary>], iteration_bounds = array<i64: 5>, scalar_prefetch = 0 : i64, scratch_operands = 1 : i64, tpu.core_type = #tpu.core_type<tc>, window_params = [{transform_indices = @transform_0, window_bounds = array<i64: 1, 640>}, {transform_indices = @transform_1, window_bounds = array<i64: 640, 2048>}, {pipeline_mode = #tpu.pipeline_mode<synchronous>, transform_indices = @transform_2, window_bounds = array<i64: 1, 2048>}, {pipeline_mode = #tpu.pipeline_mode<synchronous>, transform_indices = @transform_3, window_bounds = array<i64: 512, 2048>}, {pipeline_mode = #tpu.pipeline_mode<synchronous>, transform_indices = @transform_4, window_bounds = array<i64: 1, 2048>}, {pipeline_mode = #tpu.pipeline_mode<synchronous>, transform_indices = @transform_5, window_bounds = array<i64: 512, 128>}, {pipeline_mode = #tpu.pipeline_mode<synchronous>, transform_indices = @transform_6, window_bounds = array<i64: 1, 128>}, {pipeline_mode = #tpu.pipeline_mode<synchronous>, transform_indices = @transform_7, window_bounds = array<i64: 128, 64>}, {pipeline_mode = #tpu.pipeline_mode<synchronous>, transform_indices = @transform_8, window_bounds = array<i64: 1, 64>}, {pipeline_mode = #tpu.pipeline_mode<synchronous>, transform_indices = @transform_9, window_bounds = array<i64: 64, 3>}, {pipeline_mode = #tpu.pipeline_mode<synchronous>, transform_indices = @transform_10, window_bounds = array<i64: 1, 3>}, {pipeline_mode = #tpu.pipeline_mode<synchronous>, transform_indices = @transform_11, window_bounds = array<i64: 512, 128>}, {pipeline_mode = #tpu.pipeline_mode<synchronous>, transform_indices = @transform_12, window_bounds = array<i64: 1, 128>}, {pipeline_mode = #tpu.pipeline_mode<synchronous>, transform_indices = @transform_13, window_bounds = array<i64: 128, 64>}, {pipeline_mode = #tpu.pipeline_mode<synchronous>, transform_indices = @transform_14, window_bounds = array<i64: 1, 64>}, {pipeline_mode = #tpu.pipeline_mode<synchronous>, transform_indices = @transform_15, window_bounds = array<i64: 64, 1>}, {pipeline_mode = #tpu.pipeline_mode<synchronous>, transform_indices = @transform_16, window_bounds = array<i64: 1, 1>}, {pipeline_mode = #tpu.pipeline_mode<synchronous>, transform_indices = @transform_17, window_bounds = array<i64: 1, 3>}, {pipeline_mode = #tpu.pipeline_mode<synchronous>, transform_indices = @transform_18, window_bounds = array<i64: 1, 1>}]} {
    %c0_i32 = arith.constant 0 : i32
    %0 = arith.cmpi eq, %arg0, %c0_i32 : i32
    %1 = arith.extui %0 : i1 to i32
    %c0_i32_0 = arith.constant 0 : i32
    %2 = arith.cmpi ne, %1, %c0_i32_0 : i32
    scf.if %2 {
      %cst_9 = arith.constant 0.000000e+00 : f32
      %12 = vector.broadcast %cst_9 : f32 to vector<1x2048xf32>
      %c0_10 = arith.constant 0 : index
      %c0_11 = arith.constant 0 : index
      %13 = vector.load %arg20[%c0_10, %c0_11] : memref<1x2048xf32, #tpu.memory_space<vmem>>, vector<1x2048xf32>
      tpu.vector_store %arg20[%c0_10, %c0_11], %12 {strides = array<i32>} : memref<1x2048xf32, #tpu.memory_space<vmem>>, vector<1x2048xf32>,
    } else {
    }
    %c0 = arith.constant 0 : index
    %c0_1 = arith.constant 0 : index
    %3 = vector.load %arg20[%c0, %c0_1] : memref<1x2048xf32, #tpu.memory_space<vmem>>, vector<1x2048xf32>
    %c0_2 = arith.constant 0 : index
    %c0_3 = arith.constant 0 : index
    %4 = vector.load %arg1[%c0_2, %c0_3] : memref<1x640xbf16, #tpu.memory_space<vmem>>, vector<1x640xbf16>
    %c0_4 = arith.constant 0 : index
    %c0_5 = arith.constant 0 : index
    %5 = vector.load %arg2[%c0_4, %c0_5] : memref<640x2048xbf16, #tpu.memory_space<vmem>>, vector<640x2048xbf16>
    %cst = arith.constant dense<0.000000e+00> : vector<1x2048xf32>
    %6 = tpu.matmul %4, %5, %cst {dimension_numbers = #tpu.dot_dimension_numbers<[1], [0], [0], [1], [0, 0, 1, 1], [], []>} : vector<1x640xbf16>, vector<640x2048xbf16>, vector<1x2048xf32> -> vector<1x2048xf32>
    %7 = arith.addf %3, %6 : vector<1x2048xf32>
    %c0_6 = arith.constant 0 : index
    %c0_7 = arith.constant 0 : index
    %8 = vector.load %arg20[%c0_6, %c0_7] : memref<1x2048xf32, #tpu.memory_space<vmem>>, vector<1x2048xf32>
    tpu.vector_store %arg20[%c0_6, %c0_7], %7 {strides = array<i32>} : memref<1x2048xf32, #tpu.memory_space<vmem>>, vector<1x2048xf32>,
    %c4_i32 = arith.constant 4 : i32
    %9 = arith.cmpi eq, %arg0, %c4_i32 : i32
    %10 = arith.extui %9 : i1 to i32
    %c0_i32_8 = arith.constant 0 : i32
    %11 = arith.cmpi ne, %10, %c0_i32_8 : i32
    scf.if %11 {
      %c0_9 = arith.constant 0 : index
      %c0_10 = arith.constant 0 : index
      %12 = vector.load %arg20[%c0_9, %c0_10] : memref<1x2048xf32, #tpu.memory_space<vmem>>, vector<1x2048xf32>
      %c0_11 = arith.constant 0 : index
      %c0_12 = arith.constant 0 : index
      %13 = vector.load %arg3[%c0_11, %c0_12] : memref<1x2048xf32, #tpu.memory_space<vmem>>, vector<1x2048xf32>
      %14 = arith.addf %12, %13 : vector<1x2048xf32>
      %15 = vector.extract_strided_slice %14 {offsets = [0, 0], sizes = [1, 512], strides = [1, 1]} : vector<1x2048xf32> to vector<1x512xf32>
      %16 = arith.negf %15 : vector<1x512xf32>
      %17 = math.exp %16 : vector<1x512xf32>
      %cst_13 = arith.constant 1.000000e+00 : f32
      %18 = vector.broadcast %cst_13 : f32 to vector<1x512xf32>
      %19 = arith.addf %18, %17 : vector<1x512xf32>
      %20 = arith.divf %18, %19 : vector<1x512xf32>
      %21 = vector.extract_strided_slice %14 {offsets = [0, 1024], sizes = [1, 512], strides = [1, 1]} : vector<1x2048xf32> to vector<1x512xf32>
      %22 = math.tanh %21 : vector<1x512xf32>
      %23 = vector.extract_strided_slice %14 {offsets = [0, 1536], sizes = [1, 512], strides = [1, 1]} : vector<1x2048xf32> to vector<1x512xf32>
      %24 = arith.negf %23 : vector<1x512xf32>
      %25 = math.exp %24 : vector<1x512xf32>
      %cst_14 = arith.constant 1.000000e+00 : f32
      %26 = vector.broadcast %cst_14 : f32 to vector<1x512xf32>
      %27 = arith.addf %26, %25 : vector<1x512xf32>
      %28 = arith.divf %26, %27 : vector<1x512xf32>
      %29 = arith.mulf %20, %22 : vector<1x512xf32>
      %30 = math.tanh %29 : vector<1x512xf32>
      %31 = arith.mulf %28, %30 : vector<1x512xf32>
      %32 = arith.truncf %31 : vector<1x512xf32> to vector<1x512xbf16>
      %c0_15 = arith.constant 0 : index
      %c0_16 = arith.constant 0 : index
      %33 = vector.load %arg4[%c0_15, %c0_16] : memref<512x2048xbf16, #tpu.memory_space<vmem>>, vector<512x2048xbf16>
      %cst_17 = arith.constant dense<0.000000e+00> : vector<1x2048xf32>
      %34 = tpu.matmul %32, %33, %cst_17 {dimension_numbers = #tpu.dot_dimension_numbers<[1], [0], [0], [1], [0, 0, 1, 1], [], []>} : vector<1x512xbf16>, vector<512x2048xbf16>, vector<1x2048xf32> -> vector<1x2048xf32>
      %c0_18 = arith.constant 0 : index
      %c0_19 = arith.constant 0 : index
      %35 = vector.load %arg5[%c0_18, %c0_19] : memref<1x2048xf32, #tpu.memory_space<vmem>>, vector<1x2048xf32>
      %36 = arith.addf %34, %35 : vector<1x2048xf32>
      %37 = vector.extract_strided_slice %36 {offsets = [0, 0], sizes = [1, 512], strides = [1, 1]} : vector<1x2048xf32> to vector<1x512xf32>
      %38 = arith.negf %37 : vector<1x512xf32>
      %39 = math.exp %38 : vector<1x512xf32>
      %cst_20 = arith.constant 1.000000e+00 : f32
      %40 = vector.broadcast %cst_20 : f32 to vector<1x512xf32>
      %41 = arith.addf %40, %39 : vector<1x512xf32>
      %42 = arith.divf %40, %41 : vector<1x512xf32>
      %43 = vector.extract_strided_slice %36 {offsets = [0, 1024], sizes = [1, 512], strides = [1, 1]} : vector<1x2048xf32> to vector<1x512xf32>
      %44 = math.tanh %43 : vector<1x512xf32>
      %45 = vector.extract_strided_slice %36 {offsets = [0, 1536], sizes = [1, 512], strides = [1, 1]} : vector<1x2048xf32> to vector<1x512xf32>
      %46 = arith.negf %45 : vector<1x512xf32>
      %47 = math.exp %46 : vector<1x512xf32>
      %cst_21 = arith.constant 1.000000e+00 : f32
      %48 = vector.broadcast %cst_21 : f32 to vector<1x512xf32>
      %49 = arith.addf %48, %47 : vector<1x512xf32>
      %50 = arith.divf %48, %49 : vector<1x512xf32>
      %51 = arith.mulf %42, %44 : vector<1x512xf32>
      %52 = math.tanh %51 : vector<1x512xf32>
      %53 = arith.mulf %50, %52 : vector<1x512xf32>
      %54 = arith.truncf %53 : vector<1x512xf32> to vector<1x512xbf16>
      %c0_22 = arith.constant 0 : index
      %c0_23 = arith.constant 0 : index
      %55 = vector.load %arg6[%c0_22, %c0_23] : memref<512x128xbf16, #tpu.memory_space<vmem>>, vector<512x128xbf16>
      %cst_24 = arith.constant dense<0.000000e+00> : vector<1x128xf32>
      %56 = tpu.matmul %54, %55, %cst_24 {dimension_numbers = #tpu.dot_dimension_numbers<[1], [0], [0], [1], [0, 0, 1, 1], [], []>} : vector<1x512xbf16>, vector<512x128xbf16>, vector<1x128xf32> -> vector<1x128xf32>
      %c0_25 = arith.constant 0 : index
      %c0_26 = arith.constant 0 : index
      %57 = vector.load %arg7[%c0_25, %c0_26] : memref<1x128xf32, #tpu.memory_space<vmem>>, vector<1x128xf32>
      %58 = arith.addf %56, %57 : vector<1x128xf32>
      %cst_27 = arith.constant 0.000000e+00 : f32
      %59 = vector.broadcast %cst_27 : f32 to vector<1x128xf32>
      %60 = arith.maximumf %58, %59 : vector<1x128xf32>
      %61 = arith.truncf %60 : vector<1x128xf32> to vector<1x128xbf16>
      %c0_28 = arith.constant 0 : index
      %c0_29 = arith.constant 0 : index
      %62 = vector.load %arg8[%c0_28, %c0_29] : memref<128x64xbf16, #tpu.memory_space<vmem>>, vector<128x64xbf16>
      %cst_30 = arith.constant dense<0.000000e+00> : vector<1x64xf32>
      %63 = tpu.matmul %61, %62, %cst_30 {dimension_numbers = #tpu.dot_dimension_numbers<[1], [0], [0], [1], [0, 0, 1, 1], [], []>} : vector<1x128xbf16>, vector<128x64xbf16>, vector<1x64xf32> -> vector<1x64xf32>
      %c0_31 = arith.constant 0 : index
      %c0_32 = arith.constant 0 : index
      %64 = vector.load %arg9[%c0_31, %c0_32] : memref<1x64xf32, #tpu.memory_space<vmem>>, vector<1x64xf32>
      %65 = arith.addf %63, %64 : vector<1x64xf32>
      %cst_33 = arith.constant 0.000000e+00 : f32
      %66 = vector.broadcast %cst_33 : f32 to vector<1x64xf32>
      %67 = arith.maximumf %65, %66 : vector<1x64xf32>
      %68 = arith.truncf %67 : vector<1x64xf32> to vector<1x64xbf16>
      %c0_34 = arith.constant 0 : index
      %c0_35 = arith.constant 0 : index
      %69 = vector.load %arg10[%c0_34, %c0_35] : memref<64x3xbf16, #tpu.memory_space<vmem>>, vector<64x3xbf16>
      %cst_36 = arith.constant dense<0.000000e+00> : vector<1x3xf32>
      %70 = tpu.matmul %68, %69, %cst_36 {dimension_numbers = #tpu.dot_dimension_numbers<[1], [0], [0], [1], [0, 0, 1, 1], [], []>} : vector<1x64xbf16>, vector<64x3xbf16>, vector<1x3xf32> -> vector<1x3xf32>
      %c0_37 = arith.constant 0 : index
      %c0_38 = arith.constant 0 : index
      %71 = vector.load %arg11[%c0_37, %c0_38] : memref<1x3xf32, #tpu.memory_space<vmem>>, vector<1x3xf32>
      %72 = arith.addf %70, %71 : vector<1x3xf32>
      %cst_39 = arith.constant dense<0xFF800000> : vector<1xf32>
      %73 = vector.multi_reduction <maximumf>, %72, %cst_39 [1] : vector<1x3xf32> to vector<1xf32>
      %74 = vector.shape_cast %73 : vector<1xf32> to vector<1x1xf32>
      %75 = vector.broadcast %74 : vector<1x1xf32> to vector<1x3xf32>
      %76 = arith.subf %72, %75 : vector<1x3xf32>
      %77 = math.exp %76 : vector<1x3xf32>
      %cst_40 = arith.constant dense<0.000000e+00> : vector<1xf32>
      %78 = vector.multi_reduction <add>, %77, %cst_40 [1] : vector<1x3xf32> to vector<1xf32>
      %79 = vector.shape_cast %78 : vector<1xf32> to vector<1x1xf32>
      %80 = vector.broadcast %79 : vector<1x1xf32> to vector<1x3xf32>
      %81 = arith.divf %77, %80 : vector<1x3xf32>
      %c0_41 = arith.constant 0 : index
      %c0_42 = arith.constant 0 : index
      %82 = vector.load %arg18[%c0_41, %c0_42] : memref<1x3xf32, #tpu.memory_space<vmem>>, vector<1x3xf32>
      tpu.vector_store %arg18[%c0_41, %c0_42], %81 {strides = array<i32>} : memref<1x3xf32, #tpu.memory_space<vmem>>, vector<1x3xf32>,
      %c0_43 = arith.constant 0 : index
      %c0_44 = arith.constant 0 : index
      %83 = vector.load %arg12[%c0_43, %c0_44] : memref<512x128xbf16, #tpu.memory_space<vmem>>, vector<512x128xbf16>
      %cst_45 = arith.constant dense<0.000000e+00> : vector<1x128xf32>
      %84 = tpu.matmul %54, %83, %cst_45 {dimension_numbers = #tpu.dot_dimension_numbers<[1], [0], [0], [1], [0, 0, 1, 1], [], []>} : vector<1x512xbf16>, vector<512x128xbf16>, vector<1x128xf32> -> vector<1x128xf32>
      %c0_46 = arith.constant 0 : index
      %c0_47 = arith.constant 0 : index
      %85 = vector.load %arg13[%c0_46, %c0_47] : memref<1x128xf32, #tpu.memory_space<vmem>>, vector<1x128xf32>
      %86 = arith.addf %84, %85 : vector<1x128xf32>
      %cst_48 = arith.constant 0.000000e+00 : f32
      %87 = vector.broadcast %cst_48 : f32 to vector<1x128xf32>
      %88 = arith.maximumf %86, %87 : vector<1x128xf32>
      %89 = arith.truncf %88 : vector<1x128xf32> to vector<1x128xbf16>
      %c0_49 = arith.constant 0 : index
      %c0_50 = arith.constant 0 : index
      %90 = vector.load %arg14[%c0_49, %c0_50] : memref<128x64xbf16, #tpu.memory_space<vmem>>, vector<128x64xbf16>
      %cst_51 = arith.constant dense<0.000000e+00> : vector<1x64xf32>
      %91 = tpu.matmul %89, %90, %cst_51 {dimension_numbers = #tpu.dot_dimension_numbers<[1], [0], [0], [1], [0, 0, 1, 1], [], []>} : vector<1x128xbf16>, vector<128x64xbf16>, vector<1x64xf32> -> vector<1x64xf32>
      %c0_52 = arith.constant 0 : index
      %c0_53 = arith.constant 0 : index
      %92 = vector.load %arg15[%c0_52, %c0_53] : memref<1x64xf32, #tpu.memory_space<vmem>>, vector<1x64xf32>
      %93 = arith.addf %91, %92 : vector<1x64xf32>
      %cst_54 = arith.constant 0.000000e+00 : f32
      %94 = vector.broadcast %cst_54 : f32 to vector<1x64xf32>
      %95 = arith.maximumf %93, %94 : vector<1x64xf32>
      %96 = arith.truncf %95 : vector<1x64xf32> to vector<1x64xbf16>
      %c0_55 = arith.constant 0 : index
      %c0_56 = arith.constant 0 : index
      %97 = vector.load %arg16[%c0_55, %c0_56] : memref<64x1xbf16, #tpu.memory_space<vmem>>, vector<64x1xbf16>
      %cst_57 = arith.constant dense<0.000000e+00> : vector<1x1xf32>
      %98 = tpu.matmul %96, %97, %cst_57 {dimension_numbers = #tpu.dot_dimension_numbers<[1], [0], [0], [1], [0, 0, 1, 1], [], []>} : vector<1x64xbf16>, vector<64x1xbf16>, vector<1x1xf32> -> vector<1x1xf32>
      %c0_58 = arith.constant 0 : index
      %c0_59 = arith.constant 0 : index
      %99 = vector.load %arg17[%c0_58, %c0_59] : memref<1x1xf32, #tpu.memory_space<vmem>>, vector<1x1xf32>
      %100 = arith.addf %98, %99 : vector<1x1xf32>
      %c0_60 = arith.constant 0 : index
      %c0_61 = arith.constant 0 : index
      %101 = vector.load %arg19[%c0_60, %c0_61] : memref<1x1xf32, #tpu.memory_space<vmem>>, vector<1x1xf32>
      tpu.vector_store %arg19[%c0_60, %c0_61], %100 {strides = array<i32>} : memref<1x1xf32, #tpu.memory_space<vmem>>, vector<1x1xf32>,
    } else {
    }
    return
  }
  func.func @transform_0(%arg0: i32) -> (i32, i32) {
    %c0_i32 = arith.constant 0 : i32
    %c0_i32_0 = arith.constant 0 : i32
    return %c0_i32, %arg0 : i32, i32
  }
  func.func @transform_1(%arg0: i32) -> (i32, i32) {
    %c0_i32 = arith.constant 0 : i32
    %c0_i32_0 = arith.constant 0 : i32
    return %arg0, %c0_i32 : i32, i32
  }
  func.func @transform_2(%arg0: i32) -> (i32, i32) {
    %c0_i32 = arith.constant 0 : i32
    %c0_i32_0 = arith.constant 0 : i32
    %c0_i32_1 = arith.constant 0 : i32
    return %c0_i32, %c0_i32_0 : i32, i32
  }
  func.func @transform_3(%arg0: i32) -> (i32, i32) {
    %c0_i32 = arith.constant 0 : i32
    %c0_i32_0 = arith.constant 0 : i32
    %c0_i32_1 = arith.constant 0 : i32
    return %c0_i32, %c0_i32_0 : i32, i32
  }
  func.func @transform_4(%arg0: i32) -> (i32, i32) {
    %c0_i32 = arith.constant 0 : i32
    %c0_i32_0 = arith.constant 0 : i32
    %c0_i32_1 = arith.constant 0 : i32
    return %c0_i32, %c0_i32_0 : i32, i32
  }
  func.func @transform_5(%arg0: i32) -> (i32, i32) {
    %c0_i32 = arith.constant 0 : i32
    %c0_i32_0 = arith.constant 0 : i32
    %c0_i32_1 = arith.constant 0 : i32
    return %c0_i32, %c0_i32_0 : i32, i32
  }
  func.func @transform_6(%arg0: i32) -> (i32, i32) {
    %c0_i32 = arith.constant 0 : i32
    %c0_i32_0 = arith.constant 0 : i32
    %c0_i32_1 = arith.constant 0 : i32
    return %c0_i32, %c0_i32_0 : i32, i32
  }
  func.func @transform_7(%arg0: i32) -> (i32, i32) {
    %c0_i32 = arith.constant 0 : i32
    %c0_i32_0 = arith.constant 0 : i32
    %c0_i32_1 = arith.constant 0 : i32
    return %c0_i32, %c0_i32_0 : i32, i32
  }
  func.func @transform_8(%arg0: i32) -> (i32, i32) {
    %c0_i32 = arith.constant 0 : i32
    %c0_i32_0 = arith.constant 0 : i32
    %c0_i32_1 = arith.constant 0 : i32
    return %c0_i32, %c0_i32_0 : i32, i32
  }
  func.func @transform_9(%arg0: i32) -> (i32, i32) {
    %c0_i32 = arith.constant 0 : i32
    %c0_i32_0 = arith.constant 0 : i32
    %c0_i32_1 = arith.constant 0 : i32
    return %c0_i32, %c0_i32_0 : i32, i32
  }
  func.func @transform_10(%arg0: i32) -> (i32, i32) {
    %c0_i32 = arith.constant 0 : i32
    %c0_i32_0 = arith.constant 0 : i32
    %c0_i32_1 = arith.constant 0 : i32
    return %c0_i32, %c0_i32_0 : i32, i32
  }
  func.func @transform_11(%arg0: i32) -> (i32, i32) {
    %c0_i32 = arith.constant 0 : i32
    %c0_i32_0 = arith.constant 0 : i32
    %c0_i32_1 = arith.constant 0 : i32
    return %c0_i32, %c0_i32_0 : i32, i32
  }
  func.func @transform_12(%arg0: i32) -> (i32, i32) {
    %c0_i32 = arith.constant 0 : i32
    %c0_i32_0 = arith.constant 0 : i32
    %c0_i32_1 = arith.constant 0 : i32
    return %c0_i32, %c0_i32_0 : i32, i32
  }
  func.func @transform_13(%arg0: i32) -> (i32, i32) {
    %c0_i32 = arith.constant 0 : i32
    %c0_i32_0 = arith.constant 0 : i32
    %c0_i32_1 = arith.constant 0 : i32
    return %c0_i32, %c0_i32_0 : i32, i32
  }
  func.func @transform_14(%arg0: i32) -> (i32, i32) {
    %c0_i32 = arith.constant 0 : i32
    %c0_i32_0 = arith.constant 0 : i32
    %c0_i32_1 = arith.constant 0 : i32
    return %c0_i32, %c0_i32_0 : i32, i32
  }
  func.func @transform_15(%arg0: i32) -> (i32, i32) {
    %c0_i32 = arith.constant 0 : i32
    %c0_i32_0 = arith.constant 0 : i32
    %c0_i32_1 = arith.constant 0 : i32
    return %c0_i32, %c0_i32_0 : i32, i32
  }
  func.func @transform_16(%arg0: i32) -> (i32, i32) {
    %c0_i32 = arith.constant 0 : i32
    %c0_i32_0 = arith.constant 0 : i32
    %c0_i32_1 = arith.constant 0 : i32
    return %c0_i32, %c0_i32_0 : i32, i32
  }
  func.func @transform_17(%arg0: i32) -> (i32, i32) {
    %c0_i32 = arith.constant 0 : i32
    %c0_i32_0 = arith.constant 0 : i32
    %c0_i32_1 = arith.constant 0 : i32
    return %c0_i32, %c0_i32_0 : i32, i32
  }
  func.func @transform_18(%arg0: i32) -> (i32, i32) {
    %c0_i32 = arith.constant 0 : i32
    %c0_i32_0 = arith.constant 0 : i32
    %c0_i32_1 = arith.constant 0 : i32
    return %c0_i32, %c0_i32_0 : i32, i32
  }
}

</mosaic_0001>

<llo_original>
// kernel: policy_forward.4
$region0: #{policy_forward.4}
  #allocation0 [shape = 'u32[]', space=smem, size = 0x4, offset = 0x4, fixed_abs, tag = 'smem constant byte address 0x4 - core index']
  #allocation1 [shape = 'u32[72,128]{1,0:T(1,128)}', space=vmem, size = 0x9000, scoped, tag = 'internal scratch']
  %s0 = inlined_call_operand.vmem [shape: f32[400,128], index: 0, kind: input, shape index: {}]
  %s1 = inlined_call_operand.vmem [shape: bf16[128,32], index: 1, kind: input, shape index: {}]
  %s2 = inlined_call_operand.vmem [shape: f32[1,32], index: 2, kind: input, shape index: {}]
  %s3 = inlined_call_operand.vmem [shape: f32[400,32], index: 3, kind: output, shape index: {}]
  %s4 = sld [smem:[#allocation0]]
  $region22: #{policy_forward.4} parent=0
    _
  %s6 = ssub.s32 1, %s4
  %s7 = scalar_select 0, %s6, %s4
  // Predicated region
  $region2: #{policy_forward.4} parent=0 // pred_check
    _
  $region3: #{policy_forward.4} parent=0 // pred_check_branch
    %9 = sbr.rel (0) target = $region5
  $region4: #{policy_forward.4} parent=0 // pred_region
    _
  $region5: #{policy_forward.4} parent=0 // pred_fallthru
    _
  // Predicated region
  $region6: #{policy_forward.4} parent=0 // pred_check
    _
  $region7: #{policy_forward.4} parent=0 // pred_check_branch
    %11 = sbr.rel (0) target = $region9
  $region8: #{policy_forward.4} parent=0 // pred_region
    _
  $region9: #{policy_forward.4} parent=0 // pred_fallthru
    _
  // Predicated region
  $region10: #{policy_forward.4} parent=0 // pred_check
    _
  $region11: #{policy_forward.4} parent=0 // pred_check_branch
    %13 = sbr.rel (0) target = $region13
  $region12: #{policy_forward.4} parent=0 // pred_region
    _
  $region13: #{policy_forward.4} parent=0 // pred_fallthru
    _
  %v14 = vld [vmem:[%s0] sm:$0xff]
  %v15 = vld [vmem:[%s0 + $0x8] sm:$0xff]
  %v16 = vld [vmem:[%s0 + $0x10] sm:$0xff]
  %v17 = vld [vmem:[%s0 + $0x18] sm:$0xff]
  %v18 = vld [vmem:[%s0 + $0x20] sm:$0xff]
  %v19 = vld [vmem:[%s0 + $0x28] sm:$0xff]
  %v20 = vld [vmem:[%s0 + $0x30] sm:$0xff]
  %v21 = vld [vmem:[%s0 + $0x38] sm:$0xff]
  %v22 = vld [vmem:[%s0 + $0x40] sm:$0xff]
  %v23 = vld [vmem:[%s0 + $0x48] sm:$0xff]
  %v24 = vld [vmem:[%s0 + $0x50] sm:$0xff]
  %v25 = vld [vmem:[%s0 + $0x58] sm:$0xff]
  %v26 = vld [vmem:[%s0 + $0x60] sm:$0xff]
  %v27 = vld [vmem:[%s0 + $0x68] sm:$0xff]
  %v28 = vld [vmem:[%s0 + $0x70] sm:$0xff]
  %v29 = vld [vmem:[%s0 + $0x78] sm:$0xff]
  %v30 = vld [vmem:[%s0 + $0x80] sm:$0xff]
  %v31 = vld [vmem:[%s0 + $0x88] sm:$0xff]
  %v32 = vld [vmem:[%s0 + $0x90] sm:$0xff]
  %v33 = vld [vmem:[%s0 + $0x98] sm:$0xff]
  %v34 = vld [vmem:[%s0 + $0xa0] sm:$0xff]
  %v35 = vld [vmem:[%s0 + $0xa8] sm:$0xff]
  %v36 = vld [vmem:[%s0 + $0xb0] sm:$0xff]
  %v37 = vld [vmem:[%s0 + $0xb8] sm:$0xff]
  %v38 = vld [vmem:[%s0 + $0xc0] sm:$0xff]
  %v39 = vld [vmem:[%s0 + $0xc8] sm:$0xff]
  %v40 = vld [vmem:[%s0 + $0xd0] sm:$0xff]
  %v41 = vld [vmem:[%s0 + $0xd8] sm:$0xff]
  %v42 = vld [vmem:[%s0 + $0xe0] sm:$0xff]
  %v43 = vld [vmem:[%s0 + $0xe8] sm:$0xff]
  %v44 = vld [vmem:[%s0 + $0xf0] sm:$0xff]
  %v45 = vld [vmem:[%s0 + $0xf8] sm:$0xff]
  %v46 = vld [vmem:[%s0 + $0x100] sm:$0xff]
  %v47 = vld [vmem:[%s0 + $0x108] sm:$0xff]
  %v48 = vld [vmem:[%s0 + $0x110] sm:$0xff]
  %v49 = vld [vmem:[%s0 + $0x118] sm:$0xff]
  %v50 = vld [vmem:[%s0 + $0x120] sm:$0xff]
  %v51 = vld [vmem:[%s0 + $0x128] sm:$0xff]
  %v52 = vld [vmem:[%s0 + $0x130] sm:$0xff]
  %v53 = vld [vmem:[%s0 + $0x138] sm:$0xff]
  %v54 = vld [vmem:[%s0 + $0x140] sm:$0xff]
  %v55 = vld [vmem:[%s0 + $0x148] sm:$0xff]
  %v56 = vld [vmem:[%s0 + $0x150] sm:$0xff]
  %v57 = vld [vmem:[%s0 + $0x158] sm:$0xff]
  %v58 = vld [vmem:[%s0 + $0x160] sm:$0xff]
  %v59 = vld [vmem:[%s0 + $0x168] sm:$0xff]
  %v60 = vld [vmem:[%s0 + $0x170] sm:$0xff]
  %v61 = vld [vmem:[%s0 + $0x178] sm:$0xff]
  %v62 = vld [vmem:[%s0 + $0x180] sm:$0xff]
  %v63 = vld [vmem:[%s0 + $0x188] sm:$0xff]
  %v64 = vpack.c.bf16 %v15, %v14
  %v65 = vpack.c.bf16 %v17, %v16
  %v66 = vpack.c.bf16 %v19, %v18
  %v67 = vpack.c.bf16 %v21, %v20
  %v68 = vpack.c.bf16 %v23, %v22
  %v69 = vpack.c.bf16 %v25, %v24
  %v70 = vpack.c.bf16 %v27, %v26
  %v71 = vpack.c.bf16 %v29, %v28
  %v72 = vpack.c.bf16 %v31, %v30
  %v73 = vpack.c.bf16 %v33, %v32
  %v74 = vpack.c.bf16 %v35, %v34
  %v75 = vpack.c.bf16 %v37, %v36
  %v76 = vpack.c.bf16 %v39, %v38
  %v77 = vpack.c.bf16 %v41, %v40
  %v78 = vpack.c.bf16 %v43, %v42
  %v79 = vpack.c.bf16 %v45, %v44
  %v80 = vpack.c.bf16 %v47, %v46
  %v81 = vpack.c.bf16 %v49, %v48
  %v82 = vpack.c.bf16 %v51, %v50
  %v83 = vpack.c.bf16 %v53, %v52
  %v84 = vpack.c.bf16 %v55, %v54
  %v85 = vpack.c.bf16 %v57, %v56
  %v86 = vpack.c.bf16 %v59, %v58
  %v87 = vpack.c.bf16 %v61, %v60
  %v88 = vpack.c.bf16 %v63, %v62
  %v89 = vld [vmem:[%s1] sm:$0xf]
  %v90 = vld [vmem:[%s1 + $0x4] sm:$0xf]
  %v91 = vld [vmem:[%s1 + $0x8] sm:$0xf]
  %v92 = vld [vmem:[%s1 + $0xc] sm:$0xf]
  %v93 = vld [vmem:[%s1 + $0x10] sm:$0xf]
  %v94 = vld [vmem:[%s1 + $0x14] sm:$0xf]
  %v95 = vld [vmem:[%s1 + $0x18] sm:$0xf]
  %v96 = vld [vmem:[%s1 + $0x1c] sm:$0xf]
  %v97 = vld [vmem:[%s1 + $0x20] sm:$0xf]
  %v98 = vld [vmem:[%s1 + $0x24] sm:$0xf]
  %v99 = vld [vmem:[%s1 + $0x28] sm:$0xf]
  %v100 = vld [vmem:[%s1 + $0x2c] sm:$0xf]
  %v101 = vld [vmem:[%s1 + $0x30] sm:$0xf]
  %v102 = vld [vmem:[%s1 + $0x34] sm:$0xf]
  %v103 = vld [vmem:[%s1 + $0x38] sm:$0xf]
  %v104 = vld [vmem:[%s1 + $0x3c] sm:$0xf]
  %v105 = vld [vmem:[%s2] sm:$0x1]
  %v107 = vperm.slane %v105, 0
  %v125 = vunpack.c.l.b16 %v89
  %v126 = vunpack.c.l.b16 %v90
  %v127 = vunpack.c.l.b16 %v91
  %v128 = vunpack.c.l.b16 %v92
  %v129 = vunpack.c.l.b16 %v93
  %v130 = vunpack.c.l.b16 %v94
  %v131 = vunpack.c.l.b16 %v95
  %v132 = vunpack.c.l.b16 %v96
  %v133 = vunpack.c.l.b16 %v97
  %v134 = vunpack.c.l.b16 %v98
  %v135 = vunpack.c.l.b16 %v99
  %v136 = vunpack.c.l.b16 %v100
  %v137 = vunpack.c.l.b16 %v101
  %v138 = vunpack.c.l.b16 %v102
  %v139 = vunpack.c.l.b16 %v103
  %v140 = vunpack.c.l.b16 %v104
  %v141 = vpack.c.b16 %v126, %v125
  %v142 = vpack.c.b16 %v128, %v127
  %v143 = vpack.c.b16 %v130, %v129
  %v144 = vpack.c.b16 %v132, %v131
  %v145 = vpack.c.b16 %v134, %v133
  %v146 = vpack.c.b16 %v136, %v135
  %v147 = vpack.c.b16 %v138, %v137
  %v148 = vpack.c.b16 %v140, %v139
  %157 = vmatpush.bf16.msra.mxu0 %v148
  %158 = vmatpush.bf16.msra.mxu0 %v147
  %159 = vmatpush.bf16.msra.mxu0 %v146
  %160 = vmatpush.bf16.msra.mxu0 %v145
  %161 = vmatpush.bf16.msra.mxu0 %v144
  %162 = vmatpush.bf16.msra.mxu0 %v143
  %163 = vmatpush.bf16.msra.mxu0 %v142
  %164 = vmatpush.bf16.msra.mxu0 %v141
  %165 = vmatmul.bf16.gmra.mxu0 %v64
  %v166 = vpop.f32.mrf.mxu0
  %v167 = vadd.f32 %v107, %v166
  %v168 = vpop.f32.mrf.mxu0
  %v169 = vadd.f32 %v107, %v168
  %170 = vmatmul.bf16.gmra.mxu0 %v65
  %v171 = vpop.f32.mrf.mxu0
  %v172 = vadd.f32 %v107, %v171
  %v173 = vpop.f32.mrf.mxu0
  %v174 = vadd.f32 %v107, %v173
  %175 = vmatmul.bf16.gmra.mxu0 %v66
  %v176 = vpop.f32.mrf.mxu0
  %v177 = vadd.f32 %v107, %v176
  %v178 = vpop.f32.mrf.mxu0
  %v179 = vadd.f32 %v107, %v178
  %180 = vmatmul.bf16.gmra.mxu0 %v67
  %v181 = vpop.f32.mrf.mxu0
  %v182 = vadd.f32 %v107, %v181
  %v183 = vpop.f32.mrf.mxu0
  %v184 = vadd.f32 %v107, %v183
  %185 = vmatmul.bf16.gmra.mxu0 %v68
  %v186 = vpop.f32.mrf.mxu0
  %v187 = vadd.f32 %v107, %v186
  %v188 = vpop.f32.mrf.mxu0
  %v189 = vadd.f32 %v107, %v188
  %190 = vmatmul.bf16.gmra.mxu0 %v69
  %v191 = vpop.f32.mrf.mxu0
  %v192 = vadd.f32 %v107, %v191
  %v193 = vpop.f32.mrf.mxu0
  %v194 = vadd.f32 %v107, %v193
  %195 = vmatmul.bf16.gmra.mxu0 %v70
  %v196 = vpop.f32.mrf.mxu0
  %v197 = vadd.f32 %v107, %v196
  %v198 = vpop.f32.mrf.mxu0
  %v199 = vadd.f32 %v107, %v198
  %200 = vmatmul.bf16.gmra.mxu0 %v71
  %v201 = vpop.f32.mrf.mxu0
  %v202 = vadd.f32 %v107, %v201
  %v203 = vpop.f32.mrf.mxu0
  %v204 = vadd.f32 %v107, %v203
  %205 = vmatmul.bf16.gmra.mxu0 %v72
  %v206 = vpop.f32.mrf.mxu0
  %v207 = vadd.f32 %v107, %v206
  %v208 = vpop.f32.mrf.mxu0
  %v209 = vadd.f32 %v107, %v208
  %210 = vmatmul.bf16.gmra.mxu0 %v73
  %v211 = vpop.f32.mrf.mxu0
  %v212 = vadd.f32 %v107, %v211
  %v213 = vpop.f32.mrf.mxu0
  %v214 = vadd.f32 %v107, %v213
  %215 = vmatmul.bf16.gmra.mxu0 %v74
  %v216 = vpop.f32.mrf.mxu0
  %v217 = vadd.f32 %v107, %v216
  %v218 = vpop.f32.mrf.mxu0
  %v219 = vadd.f32 %v107, %v218
  %220 = vmatmul.bf16.gmra.mxu0 %v75
  %v221 = vpop.f32.mrf.mxu0
  %v222 = vadd.f32 %v107, %v221
  %v223 = vpop.f32.mrf.mxu0
  %v224 = vadd.f32 %v107, %v223
  %225 = vmatmul.bf16.gmra.mxu0 %v76
  %v226 = vpop.f32.mrf.mxu0
  %v227 = vadd.f32 %v107, %v226
  %v228 = vpop.f32.mrf.mxu0
  %v229 = vadd.f32 %v107, %v228
  %230 = vmatmul.bf16.gmra.mxu0 %v77
  %v231 = vpop.f32.mrf.mxu0
  %v232 = vadd.f32 %v107, %v231
  %v233 = vpop.f32.mrf.mxu0
  %v234 = vadd.f32 %v107, %v233
  %235 = vmatmul.bf16.gmra.mxu0 %v78
  %v236 = vpop.f32.mrf.mxu0
  %v237 = vadd.f32 %v107, %v236
  %v238 = vpop.f32.mrf.mxu0
  %v239 = vadd.f32 %v107, %v238
  %240 = vmatmul.bf16.gmra.mxu0 %v79
  %v241 = vpop.f32.mrf.mxu0
  %v242 = vadd.f32 %v107, %v241
  %v243 = vpop.f32.mrf.mxu0
  %v244 = vadd.f32 %v107, %v243
  %245 = vmatmul.bf16.gmra.mxu0 %v80
  %v246 = vpop.f32.mrf.mxu0
  %v247 = vadd.f32 %v107, %v246
  %v248 = vpop.f32.mrf.mxu0
  %v249 = vadd.f32 %v107, %v248
  %250 = vmatmul.bf16.gmra.mxu0 %v81
  %v251 = vpop.f32.mrf.mxu0
  %v252 = vadd.f32 %v107, %v251
  %v253 = vpop.f32.mrf.mxu0
  %v254 = vadd.f32 %v107, %v253
  %255 = vmatmul.bf16.gmra.mxu0 %v82
  %v256 = vpop.f32.mrf.mxu0
  %v257 = vadd.f32 %v107, %v256
  %v258 = vpop.f32.mrf.mxu0
  %v259 = vadd.f32 %v107, %v258
  %260 = vmatmul.bf16.gmra.mxu0 %v83
  %v261 = vpop.f32.mrf.mxu0
  %v262 = vadd.f32 %v107, %v261
  %v263 = vpop.f32.mrf.mxu0
  %v264 = vadd.f32 %v107, %v263
  %265 = vmatmul.bf16.gmra.mxu0 %v84
  %v266 = vpop.f32.mrf.mxu0
  %v267 = vadd.f32 %v107, %v266
  %v268 = vpop.f32.mrf.mxu0
  %v269 = vadd.f32 %v107, %v268
  %270 = vmatmul.bf16.gmra.mxu0 %v85
  %v271 = vpop.f32.mrf.mxu0
  %v272 = vadd.f32 %v107, %v271
  %v273 = vpop.f32.mrf.mxu0
  %v274 = vadd.f32 %v107, %v273
  %275 = vmatmul.bf16.gmra.mxu0 %v86
  %v276 = vpop.f32.mrf.mxu0
  %v277 = vadd.f32 %v107, %v276
  %v278 = vpop.f32.mrf.mxu0
  %v279 = vadd.f32 %v107, %v278
  %280 = vmatmul.bf16.gmra.mxu0 %v87
  %v281 = vpop.f32.mrf.mxu0
  %v282 = vadd.f32 %v107, %v281
  %v283 = vpop.f32.mrf.mxu0
  %v284 = vadd.f32 %v107, %v283
  %285 = vmatmul.bf16.gmra.mxu0 %v88
  %v286 = vpop.f32.mrf.mxu0
  %v287 = vadd.f32 %v107, %v286
  %v288 = vpop.f32.mrf.mxu0
  %v289 = vadd.f32 %v107, %v288
  %290 = vdwg.mxu0
  %v291 = vmax.f32 %v167, 0.0
  %v292 = vmax.f32 %v169, 0.0
  %v293 = vmax.f32 %v172, 0.0
  %v294 = vmax.f32 %v174, 0.0
  %v295 = vmax.f32 %v177, 0.0
  %v296 = vmax.f32 %v179, 0.0
  %v297 = vmax.f32 %v182, 0.0
  %v298 = vmax.f32 %v184, 0.0
  %v299 = vmax.f32 %v187, 0.0
  %v300 = vmax.f32 %v189, 0.0
  %v301 = vmax.f32 %v192, 0.0
  %v302 = vmax.f32 %v194, 0.0
  %v303 = vmax.f32 %v197, 0.0
  %v304 = vmax.f32 %v199, 0.0
  %v305 = vmax.f32 %v202, 0.0
  %v306 = vmax.f32 %v204, 0.0
  %v307 = vmax.f32 %v207, 0.0
  %v308 = vmax.f32 %v209, 0.0
  %v309 = vmax.f32 %v212, 0.0
  %v310 = vmax.f32 %v214, 0.0
  %v311 = vmax.f32 %v217, 0.0
  %v312 = vmax.f32 %v219, 0.0
  %v313 = vmax.f32 %v222, 0.0
  %v314 = vmax.f32 %v224, 0.0
  %v315 = vmax.f32 %v227, 0.0
  %v316 = vmax.f32 %v229, 0.0
  %v317 = vmax.f32 %v232, 0.0
  %v318 = vmax.f32 %v234, 0.0
  %v319 = vmax.f32 %v237, 0.0
  %v320 = vmax.f32 %v239, 0.0
  %v321 = vmax.f32 %v242, 0.0
  %v322 = vmax.f32 %v244, 0.0
  %v323 = vmax.f32 %v247, 0.0
  %v324 = vmax.f32 %v249, 0.0
  %v325 = vmax.f32 %v252, 0.0
  %v326 = vmax.f32 %v254, 0.0
  %v327 = vmax.f32 %v257, 0.0
  %v328 = vmax.f32 %v259, 0.0
  %v329 = vmax.f32 %v262, 0.0
  %v330 = vmax.f32 %v264, 0.0
  %v331 = vmax.f32 %v267, 0.0
  %v332 = vmax.f32 %v269, 0.0
  %v333 = vmax.f32 %v272, 0.0
  %v334 = vmax.f32 %v274, 0.0
  %v335 = vmax.f32 %v277, 0.0
  %v336 = vmax.f32 %v279, 0.0
  %v337 = vmax.f32 %v282, 0.0
  %v338 = vmax.f32 %v284, 0.0
  %v339 = vmax.f32 %v287, 0.0
  %v340 = vmax.f32 %v289, 0.0
  %vm341 = vcmask 261120
  %342 = vst.msk [vmem:[%s3] sm:$0xff] %vm341, %v291
  %343 = vst.msk [vmem:[%s3 + $0x8] sm:$0xff] %vm341, %v292
  %344 = vst.msk [vmem:[%s3 + $0x10] sm:$0xff] %vm341, %v293
  %345 = vst.msk [vmem:[%s3 + $0x18] sm:$0xff] %vm341, %v294
  %346 = vst.msk [vmem:[%s3 + $0x20] sm:$0xff] %vm341, %v295
  %347 = vst.msk [vmem:[%s3 + $0x28] sm:$0xff] %vm341, %v296
  %348 = vst.msk [vmem:[%s3 + $0x30] sm:$0xff] %vm341, %v297
  %349 = vst.msk [vmem:[%s3 + $0x38] sm:$0xff] %vm341, %v298
  %350 = vst.msk [vmem:[%s3 + $0x40] sm:$0xff] %vm341, %v299
  %351 = vst.msk [vmem:[%s3 + $0x48] sm:$0xff] %vm341, %v300
  %352 = vst.msk [vmem:[%s3 + $0x50] sm:$0xff] %vm341, %v301
  %353 = vst.msk [vmem:[%s3 + $0x58] sm:$0xff] %vm341, %v302
  %354 = vst.msk [vmem:[%s3 + $0x60] sm:$0xff] %vm341, %v303
  %355 = vst.msk [vmem:[%s3 + $0x68] sm:$0xff] %vm341, %v304
  %356 = vst.msk [vmem:[%s3 + $0x70] sm:$0xff] %vm341, %v305
  %357 = vst.msk [vmem:[%s3 + $0x78] sm:$0xff] %vm341, %v306
  %358 = vst.msk [vmem:[%s3 + $0x80] sm:$0xff] %vm341, %v307
  %359 = vst.msk [vmem:[%s3 + $0x88] sm:$0xff] %vm341, %v308
  %360 = vst.msk [vmem:[%s3 + $0x90] sm:$0xff] %vm341, %v309
  %361 = vst.msk [vmem:[%s3 + $0x98] sm:$0xff] %vm341, %v310
  %362 = vst.msk [vmem:[%s3 + $0xa0] sm:$0xff] %vm341, %v311
  %363 = vst.msk [vmem:[%s3 + $0xa8] sm:$0xff] %vm341, %v312
  %364 = vst.msk [vmem:[%s3 + $0xb0] sm:$0xff] %vm341, %v313
  %365 = vst.msk [vmem:[%s3 + $0xb8] sm:$0xff] %vm341, %v314
  %366 = vst.msk [vmem:[%s3 + $0xc0] sm:$0xff] %vm341, %v315
  %367 = vst.msk [vmem:[%s3 + $0xc8] sm:$0xff] %vm341, %v316
  %368 = vst.msk [vmem:[%s3 + $0xd0] sm:$0xff] %vm341, %v317
  %369 = vst.msk [vmem:[%s3 + $0xd8] sm:$0xff] %vm341, %v318
  %370 = vst.msk [vmem:[%s3 + $0xe0] sm:$0xff] %vm341, %v319
  %371 = vst.msk [vmem:[%s3 + $0xe8] sm:$0xff] %vm341, %v320
  %372 = vst.msk [vmem:[%s3 + $0xf0] sm:$0xff] %vm341, %v321
  %373 = vst.msk [vmem:[%s3 + $0xf8] sm:$0xff] %vm341, %v322
  %374 = vst.msk [vmem:[%s3 + $0x100] sm:$0xff] %vm341, %v323
  %375 = vst.msk [vmem:[%s3 + $0x108] sm:$0xff] %vm341, %v324
  %376 = vst.msk [vmem:[%s3 + $0x110] sm:$0xff] %vm341, %v325
  %377 = vst.msk [vmem:[%s3 + $0x118] sm:$0xff] %vm341, %v326
  %378 = vst.msk [vmem:[%s3 + $0x120] sm:$0xff] %vm341, %v327
  %379 = vst.msk [vmem:[%s3 + $0x128] sm:$0xff] %vm341, %v328
  %380 = vst.msk [vmem:[%s3 + $0x130] sm:$0xff] %vm341, %v329
  %381 = vst.msk [vmem:[%s3 + $0x138] sm:$0xff] %vm341, %v330
  %382 = vst.msk [vmem:[%s3 + $0x140] sm:$0xff] %vm341, %v331
  %383 = vst.msk [vmem:[%s3 + $0x148] sm:$0xff] %vm341, %v332
  %384 = vst.msk [vmem:[%s3 + $0x150] sm:$0xff] %vm341, %v333
  %385 = vst.msk [vmem:[%s3 + $0x158] sm:$0xff] %vm341, %v334
  %386 = vst.msk [vmem:[%s3 + $0x160] sm:$0xff] %vm341, %v335
  %387 = vst.msk [vmem:[%s3 + $0x168] sm:$0xff] %vm341, %v336
  %388 = vst.msk [vmem:[%s3 + $0x170] sm:$0xff] %vm341, %v337
  %389 = vst.msk [vmem:[%s3 + $0x178] sm:$0xff] %vm341, %v338
  %390 = vst.msk [vmem:[%s3 + $0x180] sm:$0xff] %vm341, %v339
  %391 = vst.msk [vmem:[%s3 + $0x188] sm:$0xff] %vm341, %v340
  // Predicated region
  $region14: #{policy_forward.4} parent=0 // pred_check
    _
  $region15: #{policy_forward.4} parent=0 // pred_check_branch
    %393 = sbr.rel (0) target = $region17
  $region16: #{policy_forward.4} parent=0 // pred_region
    _
  $region17: #{policy_forward.4} parent=0 // pred_fallthru
    _
  // Predicated region
  $region18: #{policy_forward.4} parent=0 // pred_check
    _
  $region19: #{policy_forward.4} parent=0 // pred_check_branch
    %395 = sbr.rel (0) target = $region21
  $region20: #{policy_forward.4} parent=0 // pred_region
    _
  $region21: #{policy_forward.4} parent=0 // pred_fallthru
    _

// kernel: policy_forward.5
$region0: #{policy_forward.5}
  #allocation0 [shape = 'u32[]', space=smem, size = 0x4, offset = 0x4, fixed_abs, tag = 'smem constant byte address 0x4 - core index']
  #allocation1 [shape = 'u32[72,128]{1,0:T(1,128)}', space=vmem, size = 0x9000, scoped, tag = 'internal scratch']
  %s0 = inlined_call_operand.vmem [shape: f32[81,512], index: 0, kind: input, shape index: {}]
  %s1 = inlined_call_operand.vmem [shape: bf16[512,64], index: 1, kind: input, shape index: {}]
  %s2 = inlined_call_operand.vmem [shape: f32[1,64], index: 2, kind: input, shape index: {}]
  %s3 = inlined_call_operand.vmem [shape: f32[81,64], index: 3, kind: output, shape index: {}]
  %s4 = sld [smem:[#allocation0]]
  $region22: #{policy_forward.5} parent=0
    _
  %s6 = ssub.s32 1, %s4
  %s7 = scalar_select 0, %s6, %s4
  // Predicated region
  $region2: #{policy_forward.5} parent=0 // pred_check
    _
  $region3: #{policy_forward.5} parent=0 // pred_check_branch
    %9 = sbr.rel (0) target = $region5
  $region4: #{policy_forward.5} parent=0 // pred_region
    _
  $region5: #{policy_forward.5} parent=0 // pred_fallthru
    _
  // Predicated region
  $region6: #{policy_forward.5} parent=0 // pred_check
    _
  $region7: #{policy_forward.5} parent=0 // pred_check_branch
    %11 = sbr.rel (0) target = $region9
  $region8: #{policy_forward.5} parent=0 // pred_region
    _
  $region9: #{policy_forward.5} parent=0 // pred_fallthru
    _
  // Predicated region
  $region10: #{policy_forward.5} parent=0 // pred_check
    _
  $region11: #{policy_forward.5} parent=0 // pred_check_branch
    %13 = sbr.rel (0) target = $region13
  $region12: #{policy_forward.5} parent=0 // pred_region
    _
  $region13: #{policy_forward.5} parent=0 // pred_fallthru
    _
  %v14 = vld [vmem:[%s0] sm:$0xff]
  %v15 = vld [vmem:[%s0 + $0x8] sm:$0xff]
  %v16 = vld [vmem:[%s0 + $0x10] sm:$0xff]
  %v17 = vld [vmem:[%s0 + $0x18] sm:$0xff]
  %v18 = vld [vmem:[%s0 + $0x20] sm:$0xff]
  %v19 = vld [vmem:[%s0 + $0x28] sm:$0xff]
  %v20 = vld [vmem:[%s0 + $0x30] sm:$0xff]
  %v21 = vld [vmem:[%s0 + $0x38] sm:$0xff]
  %v22 = vld [vmem:[%s0 + $0x40] sm:$0xff]
  %v23 = vld [vmem:[%s0 + $0x48] sm:$0xff]
  %v24 = vld [vmem:[%s0 + $0x50] sm:$0xff]
  %v25 = vld [vmem:[%s0 + $0x58] sm:$0xff]
  %v26 = vld [vmem:[%s0 + $0x60] sm:$0xff]
  %v27 = vld [vmem:[%s0 + $0x68] sm:$0xff]
  %v28 = vld [vmem:[%s0 + $0x70] sm:$0xff]
  %v29 = vld [vmem:[%s0 + $0x78] sm:$0xff]
  %v30 = vld [vmem:[%s0 + $0x80] sm:$0xff]
  %v31 = vld [vmem:[%s0 + $0x88] sm:$0xff]
  %v32 = vld [vmem:[%s0 + $0x90] sm:$0xff]
  %v33 = vld [vmem:[%s0 + $0x98] sm:$0xff]
  %v34 = vld [vmem:[%s0 + $0xa0] sm:$0xff]
  %v35 = vld [vmem:[%s0 + $0xa8] sm:$0xff]
  %v36 = vld [vmem:[%s0 + $0xb0] sm:$0xff]
  %v37 = vld [vmem:[%s0 + $0xb8] sm:$0xff]
  %v38 = vld [vmem:[%s0 + $0xc0] sm:$0xff]
  %v39 = vld [vmem:[%s0 + $0xc8] sm:$0xff]
  %v40 = vld [vmem:[%s0 + $0xd0] sm:$0xff]
  %v41 = vld [vmem:[%s0 + $0xd8] sm:$0xff]
  %v42 = vld [vmem:[%s0 + $0xe0] sm:$0xff]
  %v43 = vld [vmem:[%s0 + $0xe8] sm:$0xff]
  %v44 = vld [vmem:[%s0 + $0xf0] sm:$0xff]
  %v45 = vld [vmem:[%s0 + $0xf8] sm:$0xff]
  %v46 = vld [vmem:[%s0 + $0x100] sm:$0xff]
  %v47 = vld [vmem:[%s0 + $0x108] sm:$0xff]
  %v48 = vld [vmem:[%s0 + $0x110] sm:$0xff]
  %v49 = vld [vmem:[%s0 + $0x118] sm:$0xff]
  %v50 = vld [vmem:[%s0 + $0x120] sm:$0xff]
  %v51 = vld [vmem:[%s0 + $0x128] sm:$0xff]
  %v52 = vld [vmem:[%s0 + $0x130] sm:$0xff]
  %v53 = vld [vmem:[%s0 + $0x138] sm:$0xff]
  %v54 = vld [vmem:[%s0 + $0x140] sm:$0x1]
  %v55 = vld [vmem:[%s0 + $0x148] sm:$0x1]
  %v56 = vld [vmem:[%s0 + $0x150] sm:$0x1]
  %v57 = vld [vmem:[%s0 + $0x158] sm:$0x1]
  %v58 = vpack.c.bf16 %v18, %v14
  %v59 = vpack.c.bf16 %v19, %v15
  %v60 = vpack.c.bf16 %v20, %v16
  %v61 = vpack.c.bf16 %v21, %v17
  %v62 = vpack.c.bf16 %v26, %v22
  %v63 = vpack.c.bf16 %v27, %v23
  %v64 = vpack.c.bf16 %v28, %v24
  %v65 = vpack.c.bf16 %v29, %v25
  %v66 = vpack.c.bf16 %v34, %v30
  %v67 = vpack.c.bf16 %v35, %v31
  %v68 = vpack.c.bf16 %v36, %v32
  %v69 = vpack.c.bf16 %v37, %v33
  %v70 = vpack.c.bf16 %v42, %v38
  %v71 = vpack.c.bf16 %v43, %v39
  %v72 = vpack.c.bf16 %v44, %v40
  %v73 = vpack.c.bf16 %v45, %v41
  %v74 = vpack.c.bf16 %v50, %v46
  %v75 = vpack.c.bf16 %v51, %v47
  %v76 = vpack.c.bf16 %v52, %v48
  %v77 = vpack.c.bf16 %v53, %v49
  %v78 = vpack.c.bf16 %v54, %v54
  %v79 = vpack.c.bf16 %v55, %v55
  %v80 = vpack.c.bf16 %v56, %v56
  %v81 = vpack.c.bf16 %v57, %v57
  %v82 = vld [vmem:[%s1] sm:$0xf]
  %v83 = vld [vmem:[%s1 + $0x4] sm:$0xf]
  %v84 = vld [vmem:[%s1 + $0x8] sm:$0xf]
  %v85 = vld [vmem:[%s1 + $0xc] sm:$0xf]
  %v86 = vld [vmem:[%s1 + $0x10] sm:$0xf]
  %v87 = vld [vmem:[%s1 + $0x14] sm:$0xf]
  %v88 = vld [vmem:[%s1 + $0x18] sm:$0xf]
  %v89 = vld [vmem:[%s1 + $0x1c] sm:$0xf]
  %v90 = vld [vmem:[%s1 + $0x20] sm:$0xf]
  %v91 = vld [vmem:[%s1 + $0x24] sm:$0xf]
  %v92 = vld [vmem:[%s1 + $0x28] sm:$0xf]
  %v93 = vld [vmem:[%s1 + $0x2c] sm:$0xf]
  %v94 = vld [vmem:[%s1 + $0x30] sm:$0xf]
  %v95 = vld [vmem:[%s1 + $0x34] sm:$0xf]
  %v96 = vld [vmem:[%s1 + $0x38] sm:$0xf]
  %v97 = vld [vmem:[%s1 + $0x3c] sm:$0xf]
  %v98 = vld [vmem:[%s1 + $0x40] sm:$0xf]
  %v99 = vld [vmem:[%s1 + $0x44] sm:$0xf]
  %v100 = vld [vmem:[%s1 + $0x48] sm:$0xf]
  %v101 = vld [vmem:[%s1 + $0x4c] sm:$0xf]
  %v102 = vld [vmem:[%s1 + $0x50] sm:$0xf]
  %v103 = vld [vmem:[%s1 + $0x54] sm:$0xf]
  %v104 = vld [vmem:[%s1 + $0x58] sm:$0xf]
  %v105 = vld [vmem:[%s1 + $0x5c] sm:$0xf]
  %v106 = vld [vmem:[%s1 + $0x60] sm:$0xf]
  %v107 = vld [vmem:[%s1 + $0x64] sm:$0xf]
  %v108 = vld [vmem:[%s1 + $0x68] sm:$0xf]
  %v109 = vld [vmem:[%s1 + $0x6c] sm:$0xf]
  %v110 = vld [vmem:[%s1 + $0x70] sm:$0xf]
  %v111 = vld [vmem:[%s1 + $0x74] sm:$0xf]
  %v112 = vld [vmem:[%s1 + $0x78] sm:$0xf]
  %v113 = vld [vmem:[%s1 + $0x7c] sm:$0xf]
  %v114 = vld [vmem:[%s1 + $0x80] sm:$0xf]
  %v115 = vld [vmem:[%s1 + $0x84] sm:$0xf]
  %v116 = vld [vmem:[%s1 + $0x88] sm:$0xf]
  %v117 = vld [vmem:[%s1 + $0x8c] sm:$0xf]
  %v118 = vld [vmem:[%s1 + $0x90] sm:$0xf]
  %v119 = vld [vmem:[%s1 + $0x94] sm:$0xf]
  %v120 = vld [vmem:[%s1 + $0x98] sm:$0xf]
  %v121 = vld [vmem:[%s1 + $0x9c] sm:$0xf]
  %v122 = vld [vmem:[%s1 + $0xa0] sm:$0xf]
  %v123 = vld [vmem:[%s1 + $0xa4] sm:$0xf]
  %v124 = vld [vmem:[%s1 + $0xa8] sm:$0xf]
  %v125 = vld [vmem:[%s1 + $0xac] sm:$0xf]
  %v126 = vld [vmem:[%s1 + $0xb0] sm:$0xf]
  %v127 = vld [vmem:[%s1 + $0xb4] sm:$0xf]
  %v128 = vld [vmem:[%s1 + $0xb8] sm:$0xf]
  %v129 = vld [vmem:[%s1 + $0xbc] sm:$0xf]
  %v130 = vld [vmem:[%s1 + $0xc0] sm:$0xf]
  %v131 = vld [vmem:[%s1 + $0xc4] sm:$0xf]
  %v132 = vld [vmem:[%s1 + $0xc8] sm:$0xf]
  %v133 = vld [vmem:[%s1 + $0xcc] sm:$0xf]
  %v134 = vld [vmem:[%s1 + $0xd0] sm:$0xf]
  %v135 = vld [vmem:[%s1 + $0xd4] sm:$0xf]
  %v136 = vld [vmem:[%s1 + $0xd8] sm:$0xf]
  %v137 = vld [vmem:[%s1 + $0xdc] sm:$0xf]
  %v138 = vld [vmem:[%s1 + $0xe0] sm:$0xf]
  %v139 = vld [vmem:[%s1 + $0xe4] sm:$0xf]
  %v140 = vld [vmem:[%s1 + $0xe8] sm:$0xf]
  %v141 = vld [vmem:[%s1 + $0xec] sm:$0xf]
  %v142 = vld [vmem:[%s1 + $0xf0] sm:$0xf]
  %v143 = vld [vmem:[%s1 + $0xf4] sm:$0xf]
  %v144 = vld [vmem:[%s1 + $0xf8] sm:$0xf]
  %v145 = vld [vmem:[%s1 + $0xfc] sm:$0xf]
  %v146 = vld [vmem:[%s2] sm:$0x1]
  %v148 = vperm.slane %v146, 0
  %v214 = vunpack.c.l.b16 %v82
  %v215 = vunpack.c.l.b16 %v83
  %v216 = vunpack.c.l.b16 %v84
  %v217 = vunpack.c.l.b16 %v85
  %v218 = vunpack.c.l.b16 %v86
  %v219 = vunpack.c.l.b16 %v87
  %v220 = vunpack.c.l.b16 %v88
  %v221 = vunpack.c.l.b16 %v89
  %v222 = vunpack.c.l.b16 %v90
  %v223 = vunpack.c.l.b16 %v91
  %v224 = vunpack.c.l.b16 %v92
  %v225 = vunpack.c.l.b16 %v93
  %v226 = vunpack.c.l.b16 %v94
  %v227 = vunpack.c.l.b16 %v95
  %v228 = vunpack.c.l.b16 %v96
  %v229 = vunpack.c.l.b16 %v97
  %v230 = vunpack.c.l.b16 %v98
  %v231 = vunpack.c.l.b16 %v99
  %v232 = vunpack.c.l.b16 %v100
  %v233 = vunpack.c.l.b16 %v101
  %v234 = vunpack.c.l.b16 %v102
  %v235 = vunpack.c.l.b16 %v103
  %v236 = vunpack.c.l.b16 %v104
  %v237 = vunpack.c.l.b16 %v105
  %v238 = vunpack.c.l.b16 %v106
  %v239 = vunpack.c.l.b16 %v107
  %v240 = vunpack.c.l.b16 %v108
  %v241 = vunpack.c.l.b16 %v109
  %v242 = vunpack.c.l.b16 %v110
  %v243 = vunpack.c.l.b16 %v111
  %v244 = vunpack.c.l.b16 %v112
  %v245 = vunpack.c.l.b16 %v113
  %v246 = vunpack.c.l.b16 %v114
  %v247 = vunpack.c.l.b16 %v115
  %v248 = vunpack.c.l.b16 %v116
  %v249 = vunpack.c.l.b16 %v117
  %v250 = vunpack.c.l.b16 %v118
  %v251 = vunpack.c.l.b16 %v119
  %v252 = vunpack.c.l.b16 %v120
  %v253 = vunpack.c.l.b16 %v121
  %v254 = vunpack.c.l.b16 %v122
  %v255 = vunpack.c.l.b16 %v123
  %v256 = vunpack.c.l.b16 %v124
  %v257 = vunpack.c.l.b16 %v125
  %v258 = vunpack.c.l.b16 %v126
  %v259 = vunpack.c.l.b16 %v127
  %v260 = vunpack.c.l.b16 %v128
  %v261 = vunpack.c.l.b16 %v129
  %v262 = vunpack.c.l.b16 %v130
  %v263 = vunpack.c.l.b16 %v131
  %v264 = vunpack.c.l.b16 %v132
  %v265 = vunpack.c.l.b16 %v133
  %v266 = vunpack.c.l.b16 %v134
  %v267 = vunpack.c.l.b16 %v135
  %v268 = vunpack.c.l.b16 %v136
  %v269 = vunpack.c.l.b16 %v137
  %v270 = vunpack.c.l.b16 %v138
  %v271 = vunpack.c.l.b16 %v139
  %v272 = vunpack.c.l.b16 %v140
  %v273 = vunpack.c.l.b16 %v141
  %v274 = vunpack.c.l.b16 %v142
  %v275 = vunpack.c.l.b16 %v143
  %v276 = vunpack.c.l.b16 %v144
  %v277 = vunpack.c.l.b16 %v145
  %v278 = vpack.c.b16 %v215, %v214
  %v279 = vpack.c.b16 %v217, %v216
  %v280 = vpack.c.b16 %v219, %v218
  %v281 = vpack.c.b16 %v221, %v220
  %v282 = vpack.c.b16 %v223, %v222
  %v283 = vpack.c.b16 %v225, %v224
  %v284 = vpack.c.b16 %v227, %v226
  %v285 = vpack.c.b16 %v229, %v228
  %v286 = vpack.c.b16 %v231, %v230
  %v287 = vpack.c.b16 %v233, %v232
  %v288 = vpack.c.b16 %v235, %v234
  %v289 = vpack.c.b16 %v237, %v236
  %v290 = vpack.c.b16 %v239, %v238
  %v291 = vpack.c.b16 %v241, %v240
  %v292 = vpack.c.b16 %v243, %v242
  %v293 = vpack.c.b16 %v245, %v244
  %v294 = vpack.c.b16 %v247, %v246
  %v295 = vpack.c.b16 %v249, %v248
  %v296 = vpack.c.b16 %v251, %v250
  %v297 = vpack.c.b16 %v253, %v252
  %v298 = vpack.c.b16 %v255, %v254
  %v299 = vpack.c.b16 %v257, %v256
  %v300 = vpack.c.b16 %v259, %v258
  %v301 = vpack.c.b16 %v261, %v260
  %v302 = vpack.c.b16 %v263, %v262
  %v303 = vpack.c.b16 %v265, %v264
  %v304 = vpack.c.b16 %v267, %v266
  %v305 = vpack.c.b16 %v269, %v268
  %v306 = vpack.c.b16 %v271, %v270
  %v307 = vpack.c.b16 %v273, %v272
  %v308 = vpack.c.b16 %v275, %v274
  %v309 = vpack.c.b16 %v277, %v276
  %342 = vmatpush.bf16.msra.mxu0 %v285
  %343 = vmatpush.bf16.msra.mxu0 %v284
  %344 = vmatpush.bf16.msra.mxu0 %v283
  %345 = vmatpush.bf16.msra.mxu0 %v282
  %346 = vmatpush.bf16.msra.mxu0 %v281
  %347 = vmatpush.bf16.msra.mxu0 %v280
  %348 = vmatpush.bf16.msra.mxu0 %v279
  %349 = vmatpush.bf16.msra.mxu0 %v278
  %350 = vmatmul.bf16.gmra.mxu0 %v58
  %v351 = vpop.f32.mrf.mxu0
  %v352 = vadd.f32 %v148, %v351
  %v353 = vpop.f32.mrf.mxu0
  %v354 = vadd.f32 %v148, %v353
  %355 = vmatmul.bf16.gmra.mxu0 %v62
  %v356 = vpop.f32.mrf.mxu0
  %v357 = vadd.f32 %v148, %v356
  %v358 = vpop.f32.mrf.mxu0
  %v359 = vadd.f32 %v148, %v358
  %360 = vmatmul.bf16.gmra.mxu0 %v66
  %v361 = vpop.f32.mrf.mxu0
  %v362 = vadd.f32 %v148, %v361
  %v363 = vpop.f32.mrf.mxu0
  %v364 = vadd.f32 %v148, %v363
  %365 = vmatmul.bf16.gmra.mxu0 %v70
  %v366 = vpop.f32.mrf.mxu0
  %v367 = vadd.f32 %v148, %v366
  %v368 = vpop.f32.mrf.mxu0
  %v369 = vadd.f32 %v148, %v368
  %370 = vmatmul.bf16.gmra.mxu0 %v74
  %v371 = vpop.f32.mrf.mxu0
  %v372 = vadd.f32 %v148, %v371
  %v373 = vpop.f32.mrf.mxu0
  %v374 = vadd.f32 %v148, %v373
  %375 = vmatmul.bf16.gmra.mxu0 %v78
  %v376 = vpop.f32.mrf.mxu0
  %v377 = vadd.f32 %v148, %v376
  %v378 = vpop.f32.mrf.mxu0
  %379 = vdwg.mxu0
  %380 = vmatpush.bf16.msra.mxu0 %v293
  %381 = vmatpush.bf16.msra.mxu0 %v292
  %382 = vmatpush.bf16.msra.mxu0 %v291
  %383 = vmatpush.bf16.msra.mxu0 %v290
  %384 = vmatpush.bf16.msra.mxu0 %v289
  %385 = vmatpush.bf16.msra.mxu0 %v288
  %386 = vmatpush.bf16.msra.mxu0 %v287
  %387 = vmatpush.bf16.msra.mxu0 %v286
  %388 = vmatmul.bf16.gmra.mxu0 %v59
  %v389 = vpop.f32.mrf.mxu0
  %v390 = vadd.f32 %v352, %v389
  %v391 = vpop.f32.mrf.mxu0
  %v392 = vadd.f32 %v354, %v391
  %393 = vmatmul.bf16.gmra.mxu0 %v63
  %v394 = vpop.f32.mrf.mxu0
  %v395 = vadd.f32 %v357, %v394
  %v396 = vpop.f32.mrf.mxu0
  %v397 = vadd.f32 %v359, %v396
  %398 = vmatmul.bf16.gmra.mxu0 %v67
  %v399 = vpop.f32.mrf.mxu0
  %v400 = vadd.f32 %v362, %v399
  %v401 = vpop.f32.mrf.mxu0
  %v402 = vadd.f32 %v364, %v401
  %403 = vmatmul.bf16.gmra.mxu0 %v71
  %v404 = vpop.f32.mrf.mxu0
  %v405 = vadd.f32 %v367, %v404
  %v406 = vpop.f32.mrf.mxu0
  %v407 = vadd.f32 %v369, %v406
  %408 = vmatmul.bf16.gmra.mxu0 %v75
  %v409 = vpop.f32.mrf.mxu0
  %v410 = vadd.f32 %v372, %v409
  %v411 = vpop.f32.mrf.mxu0
  %v412 = vadd.f32 %v374, %v411
  %413 = vmatmul.bf16.gmra.mxu0 %v79
  %v414 = vpop.f32.mrf.mxu0
  %v415 = vadd.f32 %v377, %v414
  %v416 = vpop.f32.mrf.mxu0
  %417 = vdwg.mxu0
  %418 = vmatpush.bf16.msra.mxu0 %v301
  %419 = vmatpush.bf16.msra.mxu0 %v300
  %420 = vmatpush.bf16.msra.mxu0 %v299
  %421 = vmatpush.bf16.msra.mxu0 %v298
  %422 = vmatpush.bf16.msra.mxu0 %v297
  %423 = vmatpush.bf16.msra.mxu0 %v296
  %424 = vmatpush.bf16.msra.mxu0 %v295
  %425 = vmatpush.bf16.msra.mxu0 %v294
  %426 = vmatmul.bf16.gmra.mxu0 %v60
  %v427 = vpop.f32.mrf.mxu0
  %v428 = vadd.f32 %v390, %v427
  %v429 = vpop.f32.mrf.mxu0
  %v430 = vadd.f32 %v392, %v429
  %431 = vmatmul.bf16.gmra.mxu0 %v64
  %v432 = vpop.f32.mrf.mxu0
  %v433 = vadd.f32 %v395, %v432
  %v434 = vpop.f32.mrf.mxu0
  %v435 = vadd.f32 %v397, %v434
  %436 = vmatmul.bf16.gmra.mxu0 %v68
  %v437 = vpop.f32.mrf.mxu0
  %v438 = vadd.f32 %v400, %v437
  %v439 = vpop.f32.mrf.mxu0
  %v440 = vadd.f32 %v402, %v439
  %441 = vmatmul.bf16.gmra.mxu0 %v72
  %v442 = vpop.f32.mrf.mxu0
  %v443 = vadd.f32 %v405, %v442
  %v444 = vpop.f32.mrf.mxu0
  %v445 = vadd.f32 %v407, %v444
  %446 = vmatmul.bf16.gmra.mxu0 %v76
  %v447 = vpop.f32.mrf.mxu0
  %v448 = vadd.f32 %v410, %v447
  %v449 = vpop.f32.mrf.mxu0
  %v450 = vadd.f32 %v412, %v449
  %451 = vmatmul.bf16.gmra.mxu0 %v80
  %v452 = vpop.f32.mrf.mxu0
  %v453 = vadd.f32 %v415, %v452
  %v454 = vpop.f32.mrf.mxu0
  %455 = vdwg.mxu0
  %456 = vmatpush.bf16.msra.mxu0 %v309
  %457 = vmatpush.bf16.msra.mxu0 %v308
  %458 = vmatpush.bf16.msra.mxu0 %v307
  %459 = vmatpush.bf16.msra.mxu0 %v306
  %460 = vmatpush.bf16.msra.mxu0 %v305
  %461 = vmatpush.bf16.msra.mxu0 %v304
  %462 = vmatpush.bf16.msra.mxu0 %v303
  %463 = vmatpush.bf16.msra.mxu0 %v302
  %464 = vmatmul.bf16.gmra.mxu0 %v61
  %v465 = vpop.f32.mrf.mxu0
  %v466 = vadd.f32 %v428, %v465
  %v467 = vpop.f32.mrf.mxu0
  %v468 = vadd.f32 %v430, %v467
  %469 = vmatmul.bf16.gmra.mxu0 %v65
  %v470 = vpop.f32.mrf.mxu0
  %v471 = vadd.f32 %v433, %v470
  %v472 = vpop.f32.mrf.mxu0
  %v473 = vadd.f32 %v435, %v472
  %474 = vmatmul.bf16.gmra.mxu0 %v69
  %v475 = vpop.f32.mrf.mxu0
  %v476 = vadd.f32 %v438, %v475
  %v477 = vpop.f32.mrf.mxu0
  %v478 = vadd.f32 %v440, %v477
  %479 = vmatmul.bf16.gmra.mxu0 %v73
  %v480 = vpop.f32.mrf.mxu0
  %v481 = vadd.f32 %v443, %v480
  %v482 = vpop.f32.mrf.mxu0
  %v483 = vadd.f32 %v445, %v482
  %484 = vmatmul.bf16.gmra.mxu0 %v77
  %v485 = vpop.f32.mrf.mxu0
  %v486 = vadd.f32 %v448, %v485
  %v487 = vpop.f32.mrf.mxu0
  %v488 = vadd.f32 %v450, %v487
  %489 = vmatmul.bf16.gmra.mxu0 %v81
  %v490 = vpop.f32.mrf.mxu0
  %v491 = vadd.f32 %v453, %v490
  %v492 = vpop.f32.mrf.mxu0
  %493 = vdwg.mxu0
  %v494 = vmax.f32 %v466, 0.0
  %v495 = vmax.f32 %v468, 0.0
  %v496 = vmax.f32 %v471, 0.0
  %v497 = vmax.f32 %v473, 0.0
  %v498 = vmax.f32 %v476, 0.0
  %v499 = vmax.f32 %v478, 0.0
  %v500 = vmax.f32 %v481, 0.0
  %v501 = vmax.f32 %v483, 0.0
  %v502 = vmax.f32 %v486, 0.0
  %v503 = vmax.f32 %v488, 0.0
  %v504 = vmax.f32 %v491, 0.0
  %vm505 = vcmask 523264
  %506 = vst.msk [vmem:[%s3] sm:$0xff] %vm505, %v494
  %507 = vst.msk [vmem:[%s3 + $0x8] sm:$0xff] %vm505, %v495
  %508 = vst.msk [vmem:[%s3 + $0x10] sm:$0xff] %vm505, %v496
  %509 = vst.msk [vmem:[%s3 + $0x18] sm:$0xff] %vm505, %v497
  %510 = vst.msk [vmem:[%s3 + $0x20] sm:$0xff] %vm505, %v498
  %511 = vst.msk [vmem:[%s3 + $0x28] sm:$0xff] %vm505, %v499
  %512 = vst.msk [vmem:[%s3 + $0x30] sm:$0xff] %vm505, %v500
  %513 = vst.msk [vmem:[%s3 + $0x38] sm:$0xff] %vm505, %v501
  %514 = vst.msk [vmem:[%s3 + $0x40] sm:$0xff] %vm505, %v502
  %515 = vst.msk [vmem:[%s3 + $0x48] sm:$0xff] %vm505, %v503
  %vm516 = vcmask 516096
  %517 = vst.msk [vmem:[%s3 + $0x50] sm:$0x1] %vm516, %v504
  // Predicated region
  $region14: #{policy_forward.5} parent=0 // pred_check
    _
  $region15: #{policy_forward.5} parent=0 // pred_check_branch
    %519 = sbr.rel (0) target = $region17
  $region16: #{policy_forward.5} parent=0 // pred_region
    _
  $region17: #{policy_forward.5} parent=0 // pred_fallthru
    _
  // Predicated region
  $region18: #{policy_forward.5} parent=0 // pred_check
    _
  $region19: #{policy_forward.5} parent=0 // pred_check_branch
    %521 = sbr.rel (0) target = $region21
  $region20: #{policy_forward.5} parent=0 // pred_region
    _
  $region21: #{policy_forward.5} parent=0 // pred_fallthru
    _

// kernel: policy_forward.6
$region0: #{policy_forward.6}
  #allocation0 [shape = 'u32[]', space=smem, size = 0x4, offset = 0x4, fixed_abs, tag = 'smem constant byte address 0x4 - core index']
  #allocation1 [shape = 'u32[72,128]{1,0:T(1,128)}', space=vmem, size = 0x9000, scoped, tag = 'internal scratch']
  %s0 = inlined_call_operand.vmem [shape: f32[49,576], index: 0, kind: input, shape index: {}]
  %s1 = inlined_call_operand.vmem [shape: bf16[576,64], index: 1, kind: input, shape index: {}]
  %s2 = inlined_call_operand.vmem [shape: f32[1,64], index: 2, kind: input, shape index: {}]
  %s3 = inlined_call_operand.vmem [shape: f32[49,64], index: 3, kind: output, shape index: {}]
  %s4 = sld [smem:[#allocation0]]
  $region22: #{policy_forward.6} parent=0
    _
  %s6 = ssub.s32 1, %s4
  %s7 = scalar_select 0, %s6, %s4
  // Predicated region
  $region2: #{policy_forward.6} parent=0 // pred_check
    _
  $region3: #{policy_forward.6} parent=0 // pred_check_branch
    %9 = sbr.rel (0) target = $region5
  $region4: #{policy_forward.6} parent=0 // pred_region
    _
  $region5: #{policy_forward.6} parent=0 // pred_fallthru
    _
  // Predicated region
  $region6: #{policy_forward.6} parent=0 // pred_check
    _
  $region7: #{policy_forward.6} parent=0 // pred_check_branch
    %11 = sbr.rel (0) target = $region9
  $region8: #{policy_forward.6} parent=0 // pred_region
    _
  $region9: #{policy_forward.6} parent=0 // pred_fallthru
    _
  // Predicated region
  $region10: #{policy_forward.6} parent=0 // pred_check
    _
  $region11: #{policy_forward.6} parent=0 // pred_check_branch
    %13 = sbr.rel (0) target = $region13
  $region12: #{policy_forward.6} parent=0 // pred_region
    _
  $region13: #{policy_forward.6} parent=0 // pred_fallthru
    _
  %v15 = vld [vmem:[%s0] sm:$0xff]
  %v16 = vld [vmem:[%s0 + $0x8] sm:$0xff]
  %v17 = vld [vmem:[%s0 + $0x10] sm:$0xff]
  %v18 = vld [vmem:[%s0 + $0x18] sm:$0xff]
  %v19 = vld [vmem:[%s0 + $0x20] sm:$0xff]
  %v20 = vld [vmem:[%s0 + $0x28] sm:$0xff]
  %v21 = vld [vmem:[%s0 + $0x30] sm:$0xff]
  %v22 = vld [vmem:[%s0 + $0x38] sm:$0xff]
  %v23 = vld [vmem:[%s0 + $0x40] sm:$0xff]
  %v24 = vld [vmem:[%s0 + $0x48] sm:$0xff]
  %v25 = vld [vmem:[%s0 + $0x50] sm:$0xff]
  %v26 = vld [vmem:[%s0 + $0x58] sm:$0xff]
  %v27 = vld [vmem:[%s0 + $0x60] sm:$0xff]
  %v28 = vld [vmem:[%s0 + $0x68] sm:$0xff]
  %v29 = vld [vmem:[%s0 + $0x70] sm:$0xff]
  %v30 = vld [vmem:[%s0 + $0x78] sm:$0xff]
  %v31 = vld [vmem:[%s0 + $0x80] sm:$0xff]
  %v32 = vld [vmem:[%s0 + $0x88] sm:$0xff]
  %v33 = vld [vmem:[%s0 + $0x90] sm:$0xff]
  %v34 = vld [vmem:[%s0 + $0x98] sm:$0xff]
  %v35 = vld [vmem:[%s0 + $0xa0] sm:$0xff]
  %v36 = vld [vmem:[%s0 + $0xa8] sm:$0xff]
  %v37 = vld [vmem:[%s0 + $0xb0] sm:$0xff]
  %v38 = vld [vmem:[%s0 + $0xb8] sm:$0xff]
  %v39 = vld [vmem:[%s0 + $0xc0] sm:$0xff]
  %v40 = vld [vmem:[%s0 + $0xc8] sm:$0xff]
  %v41 = vld [vmem:[%s0 + $0xd0] sm:$0xff]
  %v42 = vld [vmem:[%s0 + $0xd8] sm:$0xff]
  %v43 = vld [vmem:[%s0 + $0xe0] sm:$0xff]
  %v44 = vld [vmem:[%s0 + $0xe8] sm:$0xff]
  %v45 = vld [vmem:[%s0 + $0xf0] sm:$0x1]
  %v46 = vld [vmem:[%s0 + $0xf8] sm:$0x1]
  %v47 = vld [vmem:[%s0 + $0x100] sm:$0x1]
  %v48 = vld [vmem:[%s0 + $0x108] sm:$0x1]
  %v49 = vld [vmem:[%s0 + $0x110] sm:$0x1]
  %v50 = vpack.c.bf16 %v20, %v15
  %v51 = vpack.c.bf16 %v21, %v16
  %v52 = vpack.c.bf16 %v22, %v17
  %v53 = vpack.c.bf16 %v23, %v18
  %v54 = vpack.c.bf16 %v24, %v19
  %v55 = vpack.c.bf16 %v30, %v25
  %v56 = vpack.c.bf16 %v31, %v26
  %v57 = vpack.c.bf16 %v32, %v27
  %v58 = vpack.c.bf16 %v33, %v28
  %v59 = vpack.c.bf16 %v34, %v29
  %v60 = vpack.c.bf16 %v40, %v35
  %v61 = vpack.c.bf16 %v41, %v36
  %v62 = vpack.c.bf16 %v42, %v37
  %v63 = vpack.c.bf16 %v43, %v38
  %v64 = vpack.c.bf16 %v44, %v39
  %v65 = vpack.c.bf16 %v45, %v45
  %v66 = vpack.c.bf16 %v46, %v46
  %v67 = vpack.c.bf16 %v47, %v47
  %v68 = vpack.c.bf16 %v48, %v48
  %v69 = vpack.c.bf16 %v49, %v49
  %v70 = vld [vmem:[%s1] sm:$0xf]
  %v71 = vld [vmem:[%s1 + $0x4] sm:$0xf]
  %v72 = vld [vmem:[%s1 + $0x8] sm:$0xf]
  %v73 = vld [vmem:[%s1 + $0xc] sm:$0xf]
  %v74 = vld [vmem:[%s1 + $0x10] sm:$0xf]
  %v75 = vld [vmem:[%s1 + $0x14] sm:$0xf]
  %v76 = vld [vmem:[%s1 + $0x18] sm:$0xf]
  %v77 = vld [vmem:[%s1 + $0x1c] sm:$0xf]
  %v78 = vld [vmem:[%s1 + $0x20] sm:$0xf]
  %v79 = vld [vmem:[%s1 + $0x24] sm:$0xf]
  %v80 = vld [vmem:[%s1 + $0x28] sm:$0xf]
  %v81 = vld [vmem:[%s1 + $0x2c] sm:$0xf]
  %v82 = vld [vmem:[%s1 + $0x30] sm:$0xf]
  %v83 = vld [vmem:[%s1 + $0x34] sm:$0xf]
  %v84 = vld [vmem:[%s1 + $0x38] sm:$0xf]
  %v85 = vld [vmem:[%s1 + $0x3c] sm:$0xf]
  %v86 = vld [vmem:[%s1 + $0x40] sm:$0xf]
  %v87 = vld [vmem:[%s1 + $0x44] sm:$0xf]
  %v88 = vld [vmem:[%s1 + $0x48] sm:$0xf]
  %v89 = vld [vmem:[%s1 + $0x4c] sm:$0xf]
  %v90 = vld [vmem:[%s1 + $0x50] sm:$0xf]
  %v91 = vld [vmem:[%s1 + $0x54] sm:$0xf]
  %v92 = vld [vmem:[%s1 + $0x58] sm:$0xf]
  %v93 = vld [vmem:[%s1 + $0x5c] sm:$0xf]
  %v94 = vld [vmem:[%s1 + $0x60] sm:$0xf]
  %v95 = vld [vmem:[%s1 + $0x64] sm:$0xf]
  %v96 = vld [vmem:[%s1 + $0x68] sm:$0xf]
  %v97 = vld [vmem:[%s1 + $0x6c] sm:$0xf]
  %v98 = vld [vmem:[%s1 + $0x70] sm:$0xf]
  %v99 = vld [vmem:[%s1 + $0x74] sm:$0xf]
  %v100 = vld [vmem:[%s1 + $0x78] sm:$0xf]
  %v101 = vld [vmem:[%s1 + $0x7c] sm:$0xf]
  %v102 = vld [vmem:[%s1 + $0x80] sm:$0xf]
  %v103 = vld [vmem:[%s1 + $0x84] sm:$0xf]
  %v104 = vld [vmem:[%s1 + $0x88] sm:$0xf]
  %v105 = vld [vmem:[%s1 + $0x8c] sm:$0xf]
  %v106 = vld [vmem:[%s1 + $0x90] sm:$0xf]
  %v107 = vld [vmem:[%s1 + $0x94] sm:$0xf]
  %v108 = vld [vmem:[%s1 + $0x98] sm:$0xf]
  %v109 = vld [vmem:[%s1 + $0x9c] sm:$0xf]
  %v110 = vld [vmem:[%s1 + $0xa0] sm:$0xf]
  %v111 = vld [vmem:[%s1 + $0xa4] sm:$0xf]
  %v112 = vld [vmem:[%s1 + $0xa8] sm:$0xf]
  %v113 = vld [vmem:[%s1 + $0xac] sm:$0xf]
  %v114 = vld [vmem:[%s1 + $0xb0] sm:$0xf]
  %v115 = vld [vmem:[%s1 + $0xb4] sm:$0xf]
  %v116 = vld [vmem:[%s1 + $0xb8] sm:$0xf]
  %v117 = vld [vmem:[%s1 + $0xbc] sm:$0xf]
  %v118 = vld [vmem:[%s1 + $0xc0] sm:$0xf]
  %v119 = vld [vmem:[%s1 + $0xc4] sm:$0xf]
  %v120 = vld [vmem:[%s1 + $0xc8] sm:$0xf]
  %v121 = vld [vmem:[%s1 + $0xcc] sm:$0xf]
  %v122 = vld [vmem:[%s1 + $0xd0] sm:$0xf]
  %v123 = vld [vmem:[%s1 + $0xd4] sm:$0xf]
  %v124 = vld [vmem:[%s1 + $0xd8] sm:$0xf]
  %v125 = vld [vmem:[%s1 + $0xdc] sm:$0xf]
  %v126 = vld [vmem:[%s1 + $0xe0] sm:$0xf]
  %v127 = vld [vmem:[%s1 + $0xe4] sm:$0xf]
  %v128 = vld [vmem:[%s1 + $0xe8] sm:$0xf]
  %v129 = vld [vmem:[%s1 + $0xec] sm:$0xf]
  %v130 = vld [vmem:[%s1 + $0xf0] sm:$0xf]
  %v131 = vld [vmem:[%s1 + $0xf4] sm:$0xf]
  %v132 = vld [vmem:[%s1 + $0xf8] sm:$0xf]
  %v133 = vld [vmem:[%s1 + $0xfc] sm:$0xf]
  %v134 = vld [vmem:[%s1 + $0x100] sm:$0xf]
  %v135 = vld [vmem:[%s1 + $0x104] sm:$0xf]
  %v136 = vld [vmem:[%s1 + $0x108] sm:$0xf]
  %v137 = vld [vmem:[%s1 + $0x10c] sm:$0xf]
  %v138 = vld [vmem:[%s1 + $0x110] sm:$0xf]
  %v139 = vld [vmem:[%s1 + $0x114] sm:$0xf]
  %v140 = vld [vmem:[%s1 + $0x118] sm:$0xf]
  %v141 = vld [vmem:[%s1 + $0x11c] sm:$0xf]
  %v142 = vld [vmem:[%s2] sm:$0x1]
  %v144 = vperm.slane %v142, 0
  %v218 = vunpack.c.l.b16 %v70
  %v219 = vunpack.c.l.b16 %v71
  %v220 = vunpack.c.l.b16 %v72
  %v221 = vunpack.c.l.b16 %v73
  %v222 = vunpack.c.l.b16 %v74
  %v223 = vunpack.c.l.b16 %v75
  %v224 = vunpack.c.l.b16 %v76
  %v225 = vunpack.c.l.b16 %v77
  %v226 = vunpack.c.l.b16 %v78
  %v227 = vunpack.c.l.b16 %v79
  %v228 = vunpack.c.l.b16 %v80
  %v229 = vunpack.c.l.b16 %v81
  %v230 = vunpack.c.l.b16 %v82
  %v231 = vunpack.c.l.b16 %v83
  %v232 = vunpack.c.l.b16 %v84
  %v233 = vunpack.c.l.b16 %v85
  %v234 = vunpack.c.l.b16 %v86
  %v235 = vunpack.c.l.b16 %v87
  %v236 = vunpack.c.l.b16 %v88
  %v237 = vunpack.c.l.b16 %v89
  %v238 = vunpack.c.l.b16 %v90
  %v239 = vunpack.c.l.b16 %v91
  %v240 = vunpack.c.l.b16 %v92
  %v241 = vunpack.c.l.b16 %v93
  %v242 = vunpack.c.l.b16 %v94
  %v243 = vunpack.c.l.b16 %v95
  %v244 = vunpack.c.l.b16 %v96
  %v245 = vunpack.c.l.b16 %v97
  %v246 = vunpack.c.l.b16 %v98
  %v247 = vunpack.c.l.b16 %v99
  %v248 = vunpack.c.l.b16 %v100
  %v249 = vunpack.c.l.b16 %v101
  %v250 = vunpack.c.l.b16 %v102
  %v251 = vunpack.c.l.b16 %v103
  %v252 = vunpack.c.l.b16 %v104
  %v253 = vunpack.c.l.b16 %v105
  %v254 = vunpack.c.l.b16 %v106
  %v255 = vunpack.c.l.b16 %v107
  %v256 = vunpack.c.l.b16 %v108
  %v257 = vunpack.c.l.b16 %v109
  %v258 = vunpack.c.l.b16 %v110
  %v259 = vunpack.c.l.b16 %v111
  %v260 = vunpack.c.l.b16 %v112
  %v261 = vunpack.c.l.b16 %v113
  %v262 = vunpack.c.l.b16 %v114
  %v263 = vunpack.c.l.b16 %v115
  %v264 = vunpack.c.l.b16 %v116
  %v265 = vunpack.c.l.b16 %v117
  %v266 = vunpack.c.l.b16 %v118
  %v267 = vunpack.c.l.b16 %v119
  %v268 = vunpack.c.l.b16 %v120
  %v269 = vunpack.c.l.b16 %v121
  %v270 = vunpack.c.l.b16 %v122
  %v271 = vunpack.c.l.b16 %v123
  %v272 = vunpack.c.l.b16 %v124
  %v273 = vunpack.c.l.b16 %v125
  %v274 = vunpack.c.l.b16 %v126
  %v275 = vunpack.c.l.b16 %v127
  %v276 = vunpack.c.l.b16 %v128
  %v277 = vunpack.c.l.b16 %v129
  %v278 = vunpack.c.l.b16 %v130
  %v279 = vunpack.c.l.b16 %v131
  %v280 = vunpack.c.l.b16 %v132
  %v281 = vunpack.c.l.b16 %v133
  %v282 = vunpack.c.l.b16 %v134
  %v283 = vunpack.c.l.b16 %v135
  %v284 = vunpack.c.l.b16 %v136
  %v285 = vunpack.c.l.b16 %v137
  %v286 = vunpack.c.l.b16 %v138
  %v287 = vunpack.c.l.b16 %v139
  %v288 = vunpack.c.l.b16 %v140
  %v289 = vunpack.c.l.b16 %v141
  %v290 = vpack.c.b16 %v219, %v218
  %v291 = vpack.c.b16 %v221, %v220
  %v292 = vpack.c.b16 %v223, %v222
  %v293 = vpack.c.b16 %v225, %v224
  %v294 = vpack.c.b16 %v227, %v226
  %v295 = vpack.c.b16 %v229, %v228
  %v296 = vpack.c.b16 %v231, %v230
  %v297 = vpack.c.b16 %v233, %v232
  %v298 = vpack.c.b16 %v235, %v234
  %v299 = vpack.c.b16 %v237, %v236
  %v300 = vpack.c.b16 %v239, %v238
  %v301 = vpack.c.b16 %v241, %v240
  %v302 = vpack.c.b16 %v243, %v242
  %v303 = vpack.c.b16 %v245, %v244
  %v304 = vpack.c.b16 %v247, %v246
  %v305 = vpack.c.b16 %v249, %v248
  %v306 = vpack.c.b16 %v251, %v250
  %v307 = vpack.c.b16 %v253, %v252
  %v308 = vpack.c.b16 %v255, %v254
  %v309 = vpack.c.b16 %v257, %v256
  %v310 = vpack.c.b16 %v259, %v258
  %v311 = vpack.c.b16 %v261, %v260
  %v312 = vpack.c.b16 %v263, %v262
  %v313 = vpack.c.b16 %v265, %v264
  %v314 = vpack.c.b16 %v267, %v266
  %v315 = vpack.c.b16 %v269, %v268
  %v316 = vpack.c.b16 %v271, %v270
  %v317 = vpack.c.b16 %v273, %v272
  %v318 = vpack.c.b16 %v275, %v274
  %v319 = vpack.c.b16 %v277, %v276
  %v320 = vpack.c.b16 %v279, %v278
  %v321 = vpack.c.b16 %v281, %v280
  %v322 = vpack.c.b16 %v283, %v282
  %v323 = vpack.c.b16 %v285, %v284
  %v324 = vpack.c.b16 %v287, %v286
  %v325 = vpack.c.b16 %v289, %v288
  %vm362 = vcmask 523264
  %v364 = vsel %vm362, %v54, 0
  %v367 = vsel %vm362, %v59, 0
  %v370 = vsel %vm362, %v64, 0
  %v373 = vsel %vm362, %v69, 0
  %375 = vmatpush.bf16.msra.mxu0 %v297
  %376 = vmatpush.bf16.msra.mxu0 %v296
  %377 = vmatpush.bf16.msra.mxu0 %v295
  %378 = vmatpush.bf16.msra.mxu0 %v294
  %379 = vmatpush.bf16.msra.mxu0 %v293
  %380 = vmatpush.bf16.msra.mxu0 %v292
  %381 = vmatpush.bf16.msra.mxu0 %v291
  %382 = vmatpush.bf16.msra.mxu0 %v290
  %383 = vmatmul.bf16.gmra.mxu0 %v50
  %v384 = vpop.f32.mrf.mxu0
  %v385 = vadd.f32 %v144, %v384
  %v386 = vpop.f32.mrf.mxu0
  %v387 = vadd.f32 %v144, %v386
  %388 = vmatmul.bf16.gmra.mxu0 %v55
  %v389 = vpop.f32.mrf.mxu0
  %v390 = vadd.f32 %v144, %v389
  %v391 = vpop.f32.mrf.mxu0
  %v392 = vadd.f32 %v144, %v391
  %393 = vmatmul.bf16.gmra.mxu0 %v60
  %v394 = vpop.f32.mrf.mxu0
  %v395 = vadd.f32 %v144, %v394
  %v396 = vpop.f32.mrf.mxu0
  %v397 = vadd.f32 %v144, %v396
  %398 = vmatmul.bf16.gmra.mxu0 %v65
  %v399 = vpop.f32.mrf.mxu0
  %v400 = vadd.f32 %v144, %v399
  %v401 = vpop.f32.mrf.mxu0
  %402 = vdwg.mxu0
  %403 = vmatpush.bf16.msra.mxu0 %v305
  %404 = vmatpush.bf16.msra.mxu0 %v304
  %405 = vmatpush.bf16.msra.mxu0 %v303
  %406 = vmatpush.bf16.msra.mxu0 %v302
  %407 = vmatpush.bf16.msra.mxu0 %v301
  %408 = vmatpush.bf16.msra.mxu0 %v300
  %409 = vmatpush.bf16.msra.mxu0 %v299
  %410 = vmatpush.bf16.msra.mxu0 %v298
  %411 = vmatmul.bf16.gmra.mxu0 %v51
  %v412 = vpop.f32.mrf.mxu0
  %v413 = vadd.f32 %v385, %v412
  %v414 = vpop.f32.mrf.mxu0
  %v415 = vadd.f32 %v387, %v414
  %416 = vmatmul.bf16.gmra.mxu0 %v56
  %v417 = vpop.f32.mrf.mxu0
  %v418 = vadd.f32 %v390, %v417
  %v419 = vpop.f32.mrf.mxu0
  %v420 = vadd.f32 %v392, %v419
  %421 = vmatmul.bf16.gmra.mxu0 %v61
  %v422 = vpop.f32.mrf.mxu0
  %v423 = vadd.f32 %v395, %v422
  %v424 = vpop.f32.mrf.mxu0
  %v425 = vadd.f32 %v397, %v424
  %426 = vmatmul.bf16.gmra.mxu0 %v66
  %v427 = vpop.f32.mrf.mxu0
  %v428 = vadd.f32 %v400, %v427
  %v429 = vpop.f32.mrf.mxu0
  %430 = vdwg.mxu0
  %431 = vmatpush.bf16.msra.mxu0 %v313
  %432 = vmatpush.bf16.msra.mxu0 %v312
  %433 = vmatpush.bf16.msra.mxu0 %v311
  %434 = vmatpush.bf16.msra.mxu0 %v310
  %435 = vmatpush.bf16.msra.mxu0 %v309
  %436 = vmatpush.bf16.msra.mxu0 %v308
  %437 = vmatpush.bf16.msra.mxu0 %v307
  %438 = vmatpush.bf16.msra.mxu0 %v306
  %439 = vmatmul.bf16.gmra.mxu0 %v52
  %v440 = vpop.f32.mrf.mxu0
  %v441 = vadd.f32 %v413, %v440
  %v442 = vpop.f32.mrf.mxu0
  %v443 = vadd.f32 %v415, %v442
  %444 = vmatmul.bf16.gmra.mxu0 %v57
  %v445 = vpop.f32.mrf.mxu0
  %v446 = vadd.f32 %v418, %v445
  %v447 = vpop.f32.mrf.mxu0
  %v448 = vadd.f32 %v420, %v447
  %449 = vmatmul.bf16.gmra.mxu0 %v62
  %v450 = vpop.f32.mrf.mxu0
  %v451 = vadd.f32 %v423, %v450
  %v452 = vpop.f32.mrf.mxu0
  %v453 = vadd.f32 %v425, %v452
  %454 = vmatmul.bf16.gmra.mxu0 %v67
  %v455 = vpop.f32.mrf.mxu0
  %v456 = vadd.f32 %v428, %v455
  %v457 = vpop.f32.mrf.mxu0
  %458 = vdwg.mxu0
  %459 = vmatpush.bf16.msra.mxu0 %v321
  %460 = vmatpush.bf16.msra.mxu0 %v320
  %461 = vmatpush.bf16.msra.mxu0 %v319
  %462 = vmatpush.bf16.msra.mxu0 %v318
  %463 = vmatpush.bf16.msra.mxu0 %v317
  %464 = vmatpush.bf16.msra.mxu0 %v316
  %465 = vmatpush.bf16.msra.mxu0 %v315
  %466 = vmatpush.bf16.msra.mxu0 %v314
  %467 = vmatmul.bf16.gmra.mxu0 %v53
  %v468 = vpop.f32.mrf.mxu0
  %v469 = vadd.f32 %v441, %v468
  %v470 = vpop.f32.mrf.mxu0
  %v471 = vadd.f32 %v443, %v470
  %472 = vmatmul.bf16.gmra.mxu0 %v58
  %v473 = vpop.f32.mrf.mxu0
  %v474 = vadd.f32 %v446, %v473
  %v475 = vpop.f32.mrf.mxu0
  %v476 = vadd.f32 %v448, %v475
  %477 = vmatmul.bf16.gmra.mxu0 %v63
  %v478 = vpop.f32.mrf.mxu0
  %v479 = vadd.f32 %v451, %v478
  %v480 = vpop.f32.mrf.mxu0
  %v481 = vadd.f32 %v453, %v480
  %482 = vmatmul.bf16.gmra.mxu0 %v68
  %v483 = vpop.f32.mrf.mxu0
  %v484 = vadd.f32 %v456, %v483
  %v485 = vpop.f32.mrf.mxu0
  %486 = vdwg.mxu0
  %487 = vmatpush.bf16.msra.mxu0 0
  %488 = vmatpush.bf16.msra.mxu0 0
  %489 = vmatpush.bf16.msra.mxu0 0
  %490 = vmatpush.bf16.msra.mxu0 0
  %491 = vmatpush.bf16.msra.mxu0 %v325
  %492 = vmatpush.bf16.msra.mxu0 %v324
  %493 = vmatpush.bf16.msra.mxu0 %v323
  %494 = vmatpush.bf16.msra.mxu0 %v322
  %495 = vmatmul.bf16.gmra.mxu0 %v364
  %v496 = vpop.f32.mrf.mxu0
  %v497 = vadd.f32 %v469, %v496
  %v498 = vpop.f32.mrf.mxu0
  %v499 = vadd.f32 %v471, %v498
  %500 = vmatmul.bf16.gmra.mxu0 %v367
  %v501 = vpop.f32.mrf.mxu0
  %v502 = vadd.f32 %v474, %v501
  %v503 = vpop.f32.mrf.mxu0
  %v504 = vadd.f32 %v476, %v503
  %505 = vmatmul.bf16.gmra.mxu0 %v370
  %v506 = vpop.f32.mrf.mxu0
  %v507 = vadd.f32 %v479, %v506
  %v508 = vpop.f32.mrf.mxu0
  %v509 = vadd.f32 %v481, %v508
  %510 = vmatmul.bf16.gmra.mxu0 %v373
  %v511 = vpop.f32.mrf.mxu0
  %v512 = vadd.f32 %v484, %v511
  %v513 = vpop.f32.mrf.mxu0
  %514 = vdwg.mxu0
  %v515 = vmax.f32 %v497, 0.0
  %v516 = vmax.f32 %v499, 0.0
  %v517 = vmax.f32 %v502, 0.0
  %v518 = vmax.f32 %v504, 0.0
  %v519 = vmax.f32 %v507, 0.0
  %v520 = vmax.f32 %v509, 0.0
  %v521 = vmax.f32 %v512, 0.0
  %522 = vst.msk [vmem:[%s3] sm:$0xff] %vm362, %v515
  %523 = vst.msk [vmem:[%s3 + $0x8] sm:$0xff] %vm362, %v516
  %524 = vst.msk [vmem:[%s3 + $0x10] sm:$0xff] %vm362, %v517
  %525 = vst.msk [vmem:[%s3 + $0x18] sm:$0xff] %vm362, %v518
  %526 = vst.msk [vmem:[%s3 + $0x20] sm:$0xff] %vm362, %v519
  %527 = vst.msk [vmem:[%s3 + $0x28] sm:$0xff] %vm362, %v520
  %vm528 = vcmask 516096
  %529 = vst.msk [vmem:[%s3 + $0x30] sm:$0x1] %vm528, %v521
  // Predicated region
  $region14: #{policy_forward.6} parent=0 // pred_check
    _
  $region15: #{policy_forward.6} parent=0 // pred_check_branch
    %531 = sbr.rel (0) target = $region17
  $region16: #{policy_forward.6} parent=0 // pred_region
    _
  $region17: #{policy_forward.6} parent=0 // pred_fallthru
    _
  // Predicated region
  $region18: #{policy_forward.6} parent=0 // pred_check
    _
  $region19: #{policy_forward.6} parent=0 // pred_check_branch
    %533 = sbr.rel (0) target = $region21
  $region20: #{policy_forward.6} parent=0 // pred_region
    _
  $region21: #{policy_forward.6} parent=0 // pred_fallthru
    _

// kernel: policy_forward.7
$region0: #{policy_forward.7}
  #allocation0 [shape = 'u32[]', space=smem, size = 0x4, offset = 0x4, fixed_abs, tag = 'smem constant byte address 0x4 - core index']
  #allocation1 [shape = 'u32[72,128]{1,0:T(1,128)}', space=vmem, size = 0x9000, scoped, tag = 'internal scratch']
  #allocation2 [shape = 'f32[1,2048]{1,0:T(1,128)}', space=vmem, size = 0x2000, scoped, tag = 'scratch operand']
  #allocation3 [shape = 'f32[1,1]{1,0:T(1,128)S(1)}', space=vmem, size = 0x200, scoped, tag = 'scoped memory for policy_forward.7']
  %s0 = inlined_call_operand.vmem [shape: bf16[1,3200], index: 0, kind: input, shape index: {}]
  %s1 = inlined_call_operand.vmem [shape: bf16[3200,2048], index: 1, kind: input, shape index: {}]
  %s2 = inlined_call_operand.vmem [shape: f32[1,2048], index: 2, kind: input, shape index: {}]
  %s3 = inlined_call_operand.vmem [shape: bf16[512,2048], index: 3, kind: input, shape index: {}]
  %s4 = inlined_call_operand.vmem [shape: f32[1,2048], index: 4, kind: input, shape index: {}]
  %s5 = inlined_call_operand.vmem [shape: bf16[512,128], index: 5, kind: input, shape index: {}]
  %s6 = inlined_call_operand.vmem [shape: f32[1,128], index: 6, kind: input, shape index: {}]
  %s7 = inlined_call_operand.vmem [shape: bf16[128,64], index: 7, kind: input, shape index: {}]
  %s8 = inlined_call_operand.vmem [shape: f32[1,64], index: 8, kind: input, shape index: {}]
  %s9 = inlined_call_operand.vmem [shape: bf16[64,3], index: 9, kind: input, shape index: {}]
  %s10 = inlined_call_operand.vmem [shape: f32[1,3], index: 10, kind: input, shape index: {}]
  %s11 = inlined_call_operand.vmem [shape: bf16[512,128], index: 11, kind: input, shape index: {}]
  %s12 = inlined_call_operand.vmem [shape: f32[1,128], index: 12, kind: input, shape index: {}]
  %s13 = inlined_call_operand.vmem [shape: bf16[128,64], index: 13, kind: input, shape index: {}]
  %s14 = inlined_call_operand.vmem [shape: f32[1,64], index: 14, kind: input, shape index: {}]
  %s15 = inlined_call_operand.vmem [shape: bf16[64,1], index: 15, kind: input, shape index: {}]
  %s16 = inlined_call_operand.<no memory space> [shape: f32[1,1], index: 16, kind: input, shape index: {}]
  %s17 = inlined_call_operand.hbm [shape: f32[1,3], index: 17, kind: output, shape index: {0}]
  %s18 = inlined_call_operand.hbm [shape: f32[1,1], index: 18, kind: output, shape index: {1}]
  %19 = xla_tuple %s17, %s18
  %s20 = sld [smem:[#allocation0]]
  $region117: #{policy_forward.7} parent=0
    _
  %s22 = ssub.s32 1, %s20
  %s23 = scalar_select 0, %s22, %s20
  %v24 = vstv %s16
  %25 = vst [vmem:[#allocation3] sm:$0x1] %v24
  $region1: #{policy_forward.7} parent=0
    #allocation4 [shape = 'u8[512]{0}', space=vmem, size = 0x400, scoped, tag = 'output window, operand 0, single buffered']
    #allocation5 [shape = 's32[2]{0}', space=sflag, size = 0x8, scoped, tag = 'scoped memory for policy_forward.7']
    #allocation6 [shape = 'u8[512]{0}', space=vmem, size = 0x400, scoped, tag = 'output window, operand 1, single buffered']
    #allocation7 [shape = 's32[1]{0}', space=sflag, size = 0x4, scoped, tag = 'scoped memory for policy_forward.7']
    %26 = vsyncpa [#allocation5], 0
    %27 = vsyncpa [#allocation7], 0
    loop: start=0, step=1, limit=7
    $region2: #{policy_forward.7} parent=1 // loop_pre_header
      _
    $region3: #{policy_forward.7} parent=1 // loop_header
      %s29 = sphi 0, %s33
      %p30 = scmp.ge.s32.totalorder %s29, 7
      %s39 = sphi 0, %s41
      %s42 = sphi 0, %s39
      %s43 = sphi 0, %s42
      %s59 = sphi 0, %s43
      %s65 = sphi 0, %s67
      %s68 = sphi 0, %s65
      %s69 = sphi 0, %s68
      %s85 = sphi 0, %s69
      %s89 = sphi 0, %s89
      %s91 = sphi 0, %s89
      %s92 = sphi 0, %s91
      %s106 = sphi 0, %s92
      %s110 = sphi 0, %s110
      %s112 = sphi 0, %s110
      %s113 = sphi 0, %s112
      %s127 = sphi 0, %s113
      %s131 = sphi 0, %s131
      %s133 = sphi 0, %s131
      %s134 = sphi 0, %s133
      %s148 = sphi 0, %s134
      %s152 = sphi 0, %s152
      %s154 = sphi 0, %s152
      %s155 = sphi 0, %s154
      %s169 = sphi 0, %s155
      %s173 = sphi 0, %s173
      %s175 = sphi 0, %s173
      %s176 = sphi 0, %s175
      %s190 = sphi 0, %s176
      %s194 = sphi 0, %s194
      %s196 = sphi 0, %s194
      %s197 = sphi 0, %s196
      %s211 = sphi 0, %s197
      %s215 = sphi 0, %s215
      %s217 = sphi 0, %s215
      %s218 = sphi 0, %s217
      %s232 = sphi 0, %s218
      %s236 = sphi 0, %s236
      %s238 = sphi 0, %s236
      %s239 = sphi 0, %s238
      %s253 = sphi 0, %s239
      %s257 = sphi 0, %s257
      %s259 = sphi 0, %s257
      %s260 = sphi 0, %s259
      %s274 = sphi 0, %s260
      %s278 = sphi 0, %s278
      %s280 = sphi 0, %s278
      %s281 = sphi 0, %s280
      %s295 = sphi 0, %s281
      %s299 = sphi 0, %s299
      %s301 = sphi 0, %s299
      %s302 = sphi 0, %s301
      %s316 = sphi 0, %s302
      %s320 = sphi 0, %s320
      %s322 = sphi 0, %s320
      %s323 = sphi 0, %s322
      %s337 = sphi 0, %s323
      %s341 = sphi 0, %s341
      %s343 = sphi 0, %s341
      %s344 = sphi 0, %s343
      %s358 = sphi 0, %s344
      %s362 = sphi 0, %s362
      %s364 = sphi 0, %s362
      %s365 = sphi 0, %s364
      %s379 = sphi 0, %s365
      %s383 = sphi 0, %s383
      %s385 = sphi 0, %s383
      %s386 = sphi 0, %s385
      %s400 = sphi 0, %s386
      %s404 = sphi 0, %s404
      %s406 = sphi 0, %s404
      %s407 = sphi 0, %s406
      %s421 = sphi 0, %s407
      %s425 = sphi 0, %s425
      %s427 = sphi 0, %s425
      %s428 = sphi 0, %s427
      %s442 = sphi 0, %s428
    $region4: #{policy_forward.7} parent=1 // loop_header_branch
      %32 = sbr.rel (%p30) target = $region8
    $region5: #{policy_forward.7} parent=1 // loop_body
      %s34 = ssub.s32 %s29, 1
      %s35 = ssub.s32 %s29, 2
      %s36 = sadd.s32 %s29, 1
      %s37 = ssub.s32 %s29, %s36
      %p38 = scmp.eq.s32.totalorder %s37, 0
      %s40 = sadd.s32 %s39, 1
      %s41 = scalar_select %p38, %s39, %s40
      %p44 = pneg %p38
      %p45 = scmp.eq.s32.totalorder %s29, 4
      %p46 = por %p44, %p45
      %p47 = scmp.ne.s32.totalorder %s39, %s42
      %p48 = scmp.eq.s32.totalorder %s29, 0
      %p49 = por %p47, %p48
      %p50 = scmp.ne.s32.totalorder %s39, %s42
      %p51 = scmp.eq.s32.totalorder %s34, 4
      %p52 = por %p50, %p51
      %p53 = scmp.ne.s32.totalorder %s42, %s43
      %p54 = scmp.eq.s32.totalorder %s34, 0
      %p55 = por %p53, %p54
      %p56 = scmp.ne.s32.totalorder %s42, %s43
      %p57 = scmp.eq.s32.totalorder %s35, 4
      %p58 = por %p56, %p57
      %p60 = scmp.ne.s32.totalorder %s43, %s59
      %p61 = scmp.eq.s32.totalorder %s35, 0
      %p62 = por %p60, %p61
      %s63 = ssub.s32 %s29, %s36
      %p64 = scmp.eq.s32.totalorder %s63, 0
      %s66 = sadd.s32 %s65, 1
      %s67 = scalar_select %p64, %s65, %s66
      %p70 = pneg %p64
      %p71 = scmp.eq.s32.totalorder %s29, 4
      %p72 = por %p70, %p71
      %p73 = scmp.ne.s32.totalorder %s65, %s68
      %p74 = scmp.eq.s32.totalorder %s29, 0
      %p75 = por %p73, %p74
      %p76 = scmp.ne.s32.totalorder %s65, %s68
      %p77 = scmp.eq.s32.totalorder %s34, 4
      %p78 = por %p76, %p77
      %p79 = scmp.ne.s32.totalorder %s68, %s69
      %p80 = scmp.eq.s32.totalorder %s34, 0
      %p81 = por %p79, %p80
      %p82 = scmp.ne.s32.totalorder %s68, %s69
      %p83 = scmp.eq.s32.totalorder %s35, 4
      %p84 = por %p82, %p83
      %p86 = scmp.ne.s32.totalorder %s69, %s85
      %p87 = scmp.eq.s32.totalorder %s35, 0
      %p88 = por %p86, %p87
      %s90 = sadd.s32 %s89, 1
      %p93 = scmp.eq.s32.totalorder %s29, 4
      %p94 = scmp.ne.s32.totalorder %s89, %s91
      %p95 = scmp.eq.s32.totalorder %s29, 0
      %p96 = por %p94, %p95
      %p97 = scmp.ne.s32.totalorder %s89, %s91
      %p98 = scmp.eq.s32.totalorder %s34, 4
      %p99 = por %p97, %p98
      %p100 = scmp.ne.s32.totalorder %s91, %s92
      %p101 = scmp.eq.s32.totalorder %s34, 0
      %p102 = por %p100, %p101
      %p103 = scmp.ne.s32.totalorder %s91, %s92
      %p104 = scmp.eq.s32.totalorder %s35, 4
      %p105 = por %p103, %p104
      %p107 = scmp.ne.s32.totalorder %s92, %s106
      %p108 = scmp.eq.s32.totalorder %s35, 0
      %p109 = por %p107, %p108
      %s111 = sadd.s32 %s110, 1
      %p114 = scmp.eq.s32.totalorder %s29, 4
      %p115 = scmp.ne.s32.totalorder %s110, %s112
      %p116 = scmp.eq.s32.totalorder %s29, 0
      %p117 = por %p115, %p116
      %p118 = scmp.ne.s32.totalorder %s110, %s112
      %p119 = scmp.eq.s32.totalorder %s34, 4
      %p120 = por %p118, %p119
      %p121 = scmp.ne.s32.totalorder %s112, %s113
      %p122 = scmp.eq.s32.totalorder %s34, 0
      %p123 = por %p121, %p122
      %p124 = scmp.ne.s32.totalorder %s112, %s113
      %p125 = scmp.eq.s32.totalorder %s35, 4
      %p126 = por %p124, %p125
      %p128 = scmp.ne.s32.totalorder %s113, %s127
      %p129 = scmp.eq.s32.totalorder %s35, 0
      %p130 = por %p128, %p129
      %s132 = sadd.s32 %s131, 1
      %p135 = scmp.eq.s32.totalorder %s29, 4
      %p136 = scmp.ne.s32.totalorder %s131, %s133
      %p137 = scmp.eq.s32.totalorder %s29, 0
      %p138 = por %p136, %p137
      %p139 = scmp.ne.s32.totalorder %s131, %s133
      %p140 = scmp.eq.s32.totalorder %s34, 4
      %p141 = por %p139, %p140
      %p142 = scmp.ne.s32.totalorder %s133, %s134
      %p143 = scmp.eq.s32.totalorder %s34, 0
      %p144 = por %p142, %p143
      %p145 = scmp.ne.s32.totalorder %s133, %s134
      %p146 = scmp.eq.s32.totalorder %s35, 4
      %p147 = por %p145, %p146
      %p149 = scmp.ne.s32.totalorder %s134, %s148
      %p150 = scmp.eq.s32.totalorder %s35, 0
      %p151 = por %p149, %p150
      %s153 = sadd.s32 %s152, 1
      %p156 = scmp.eq.s32.totalorder %s29, 4
      %p157 = scmp.ne.s32.totalorder %s152, %s154
      %p158 = scmp.eq.s32.totalorder %s29, 0
      %p159 = por %p157, %p158
      %p160 = scmp.ne.s32.totalorder %s152, %s154
      %p161 = scmp.eq.s32.totalorder %s34, 4
      %p162 = por %p160, %p161
      %p163 = scmp.ne.s32.totalorder %s154, %s155
      %p164 = scmp.eq.s32.totalorder %s34, 0
      %p165 = por %p163, %p164
      %p166 = scmp.ne.s32.totalorder %s154, %s155
      %p167 = scmp.eq.s32.totalorder %s35, 4
      %p168 = por %p166, %p167
      %p170 = scmp.ne.s32.totalorder %s155, %s169
      %p171 = scmp.eq.s32.totalorder %s35, 0
      %p172 = por %p170, %p171
      %s174 = sadd.s32 %s173, 1
      %p177 = scmp.eq.s32.totalorder %s29, 4
      %p178 = scmp.ne.s32.totalorder %s173, %s175
      %p179 = scmp.eq.s32.totalorder %s29, 0
      %p180 = por %p178, %p179
      %p181 = scmp.ne.s32.totalorder %s173, %s175
      %p182 = scmp.eq.s32.totalorder %s34, 4
      %p183 = por %p181, %p182
      %p184 = scmp.ne.s32.totalorder %s175, %s176
      %p185 = scmp.eq.s32.totalorder %s34, 0
      %p186 = por %p184, %p185
      %p187 = scmp.ne.s32.totalorder %s175, %s176
      %p188 = scmp.eq.s32.totalorder %s35, 4
      %p189 = por %p187, %p188
      %p191 = scmp.ne.s32.totalorder %s176, %s190
      %p192 = scmp.eq.s32.totalorder %s35, 0
      %p193 = por %p191, %p192
      %s195 = sadd.s32 %s194, 1
      %p198 = scmp.eq.s32.totalorder %s29, 4
      %p199 = scmp.ne.s32.totalorder %s194, %s196
      %p200 = scmp.eq.s32.totalorder %s29, 0
      %p201 = por %p199, %p200
      %p202 = scmp.ne.s32.totalorder %s194, %s196
      %p203 = scmp.eq.s32.totalorder %s34, 4
      %p204 = por %p202, %p203
      %p205 = scmp.ne.s32.totalorder %s196, %s197
      %p206 = scmp.eq.s32.totalorder %s34, 0
      %p207 = por %p205, %p206
      %p208 = scmp.ne.s32.totalorder %s196, %s197
      %p209 = scmp.eq.s32.totalorder %s35, 4
      %p210 = por %p208, %p209
      %p212 = scmp.ne.s32.totalorder %s197, %s211
      %p213 = scmp.eq.s32.totalorder %s35, 0
      %p214 = por %p212, %p213
      %s216 = sadd.s32 %s215, 1
      %p219 = scmp.eq.s32.totalorder %s29, 4
      %p220 = scmp.ne.s32.totalorder %s215, %s217
      %p221 = scmp.eq.s32.totalorder %s29, 0
      %p222 = por %p220, %p221
      %p223 = scmp.ne.s32.totalorder %s215, %s217
      %p224 = scmp.eq.s32.totalorder %s34, 4
      %p225 = por %p223, %p224
      %p226 = scmp.ne.s32.totalorder %s217, %s218
      %p227 = scmp.eq.s32.totalorder %s34, 0
      %p228 = por %p226, %p227
      %p229 = scmp.ne.s32.totalorder %s217, %s218
      %p230 = scmp.eq.s32.totalorder %s35, 4
      %p231 = por %p229, %p230
      %p233 = scmp.ne.s32.totalorder %s218, %s232
      %p234 = scmp.eq.s32.totalorder %s35, 0
      %p235 = por %p233, %p234
      %s237 = sadd.s32 %s236, 1
      %p240 = scmp.eq.s32.totalorder %s29, 4
      %p241 = scmp.ne.s32.totalorder %s236, %s238
      %p242 = scmp.eq.s32.totalorder %s29, 0
      %p243 = por %p241, %p242
      %p244 = scmp.ne.s32.totalorder %s236, %s238
      %p245 = scmp.eq.s32.totalorder %s34, 4
      %p246 = por %p244, %p245
      %p247 = scmp.ne.s32.totalorder %s238, %s239
      %p248 = scmp.eq.s32.totalorder %s34, 0
      %p249 = por %p247, %p248
      %p250 = scmp.ne.s32.totalorder %s238, %s239
      %p251 = scmp.eq.s32.totalorder %s35, 4
      %p252 = por %p250, %p251
      %p254 = scmp.ne.s32.totalorder %s239, %s253
      %p255 = scmp.eq.s32.totalorder %s35, 0
      %p256 = por %p254, %p255
      %s258 = sadd.s32 %s257, 1
      %p261 = scmp.eq.s32.totalorder %s29, 4
      %p262 = scmp.ne.s32.totalorder %s257, %s259
      %p263 = scmp.eq.s32.totalorder %s29, 0
      %p264 = por %p262, %p263
      %p265 = scmp.ne.s32.totalorder %s257, %s259
      %p266 = scmp.eq.s32.totalorder %s34, 4
      %p267 = por %p265, %p266
      %p268 = scmp.ne.s32.totalorder %s259, %s260
      %p269 = scmp.eq.s32.totalorder %s34, 0
      %p270 = por %p268, %p269
      %p271 = scmp.ne.s32.totalorder %s259, %s260
      %p272 = scmp.eq.s32.totalorder %s35, 4
      %p273 = por %p271, %p272
      %p275 = scmp.ne.s32.totalorder %s260, %s274
      %p276 = scmp.eq.s32.totalorder %s35, 0
      %p277 = por %p275, %p276
      %s279 = sadd.s32 %s278, 1
      %p282 = scmp.eq.s32.totalorder %s29, 4
      %p283 = scmp.ne.s32.totalorder %s278, %s280
      %p284 = scmp.eq.s32.totalorder %s29, 0
      %p285 = por %p283, %p284
      %p286 = scmp.ne.s32.totalorder %s278, %s280
      %p287 = scmp.eq.s32.totalorder %s34, 4
      %p288 = por %p286, %p287
      %p289 = scmp.ne.s32.totalorder %s280, %s281
      %p290 = scmp.eq.s32.totalorder %s34, 0
      %p291 = por %p289, %p290
      %p292 = scmp.ne.s32.totalorder %s280, %s281
      %p293 = scmp.eq.s32.totalorder %s35, 4
      %p294 = por %p292, %p293
      %p296 = scmp.ne.s32.totalorder %s281, %s295
      %p297 = scmp.eq.s32.totalorder %s35, 0
      %p298 = por %p296, %p297
      %s300 = sadd.s32 %s299, 1
      %p303 = scmp.eq.s32.totalorder %s29, 4
      %p304 = scmp.ne.s32.totalorder %s299, %s301
      %p305 = scmp.eq.s32.totalorder %s29, 0
      %p306 = por %p304, %p305
      %p307 = scmp.ne.s32.totalorder %s299, %s301
      %p308 = scmp.eq.s32.totalorder %s34, 4
      %p309 = por %p307, %p308
      %p310 = scmp.ne.s32.totalorder %s301, %s302
      %p311 = scmp.eq.s32.totalorder %s34, 0
      %p312 = por %p310, %p311
      %p313 = scmp.ne.s32.totalorder %s301, %s302
      %p314 = scmp.eq.s32.totalorder %s35, 4
      %p315 = por %p313, %p314
      %p317 = scmp.ne.s32.totalorder %s302, %s316
      %p318 = scmp.eq.s32.totalorder %s35, 0
      %p319 = por %p317, %p318
      %s321 = sadd.s32 %s320, 1
      %p324 = scmp.eq.s32.totalorder %s29, 4
      %p325 = scmp.ne.s32.totalorder %s320, %s322
      %p326 = scmp.eq.s32.totalorder %s29, 0
      %p327 = por %p325, %p326
      %p328 = scmp.ne.s32.totalorder %s320, %s322
      %p329 = scmp.eq.s32.totalorder %s34, 4
      %p330 = por %p328, %p329
      %p331 = scmp.ne.s32.totalorder %s322, %s323
      %p332 = scmp.eq.s32.totalorder %s34, 0
      %p333 = por %p331, %p332
      %p334 = scmp.ne.s32.totalorder %s322, %s323
      %p335 = scmp.eq.s32.totalorder %s35, 4
      %p336 = por %p334, %p335
      %p338 = scmp.ne.s32.totalorder %s323, %s337
      %p339 = scmp.eq.s32.totalorder %s35, 0
      %p340 = por %p338, %p339
      %s342 = sadd.s32 %s341, 1
      %p345 = scmp.eq.s32.totalorder %s29, 4
      %p346 = scmp.ne.s32.totalorder %s341, %s343
      %p347 = scmp.eq.s32.totalorder %s29, 0
      %p348 = por %p346, %p347
      %p349 = scmp.ne.s32.totalorder %s341, %s343
      %p350 = scmp.eq.s32.totalorder %s34, 4
      %p351 = por %p349, %p350
      %p352 = scmp.ne.s32.totalorder %s343, %s344
      %p353 = scmp.eq.s32.totalorder %s34, 0
      %p354 = por %p352, %p353
      %p355 = scmp.ne.s32.totalorder %s343, %s344
      %p356 = scmp.eq.s32.totalorder %s35, 4
      %p357 = por %p355, %p356
      %p359 = scmp.ne.s32.totalorder %s344, %s358
      %p360 = scmp.eq.s32.totalorder %s35, 0
      %p361 = por %p359, %p360
      %s363 = sadd.s32 %s362, 1
      %p366 = scmp.eq.s32.totalorder %s29, 4
      %p367 = scmp.ne.s32.totalorder %s362, %s364
      %p368 = scmp.eq.s32.totalorder %s29, 0
      %p369 = por %p367, %p368
      %p370 = scmp.ne.s32.totalorder %s362, %s364
      %p371 = scmp.eq.s32.totalorder %s34, 4
      %p372 = por %p370, %p371
      %p373 = scmp.ne.s32.totalorder %s364, %s365
      %p374 = scmp.eq.s32.totalorder %s34, 0
      %p375 = por %p373, %p374
      %p376 = scmp.ne.s32.totalorder %s364, %s365
      %p377 = scmp.eq.s32.totalorder %s35, 4
      %p378 = por %p376, %p377
      %p380 = scmp.ne.s32.totalorder %s365, %s379
      %p381 = scmp.eq.s32.totalorder %s35, 0
      %p382 = por %p380, %p381
      %s384 = sadd.s32 %s383, 1
      %p387 = scmp.eq.s32.totalorder %s29, 4
      %p388 = scmp.ne.s32.totalorder %s383, %s385
      %p389 = scmp.eq.s32.totalorder %s29, 0
      %p390 = por %p388, %p389
      %p391 = scmp.ne.s32.totalorder %s383, %s385
      %p392 = scmp.eq.s32.totalorder %s34, 4
      %p393 = por %p391, %p392
      %p394 = scmp.ne.s32.totalorder %s385, %s386
      %p395 = scmp.eq.s32.totalorder %s34, 0
      %p396 = por %p394, %p395
      %p397 = scmp.ne.s32.totalorder %s385, %s386
      %p398 = scmp.eq.s32.totalorder %s35, 4
      %p399 = por %p397, %p398
      %p401 = scmp.ne.s32.totalorder %s386, %s400
      %p402 = scmp.eq.s32.totalorder %s35, 0
      %p403 = por %p401, %p402
      %s405 = sadd.s32 %s404, 1
      %p408 = scmp.eq.s32.totalorder %s29, 4
      %p409 = scmp.ne.s32.totalorder %s404, %s406
      %p410 = scmp.eq.s32.totalorder %s29, 0
      %p411 = por %p409, %p410
      %p412 = scmp.ne.s32.totalorder %s404, %s406
      %p413 = scmp.eq.s32.totalorder %s34, 4
      %p414 = por %p412, %p413
      %p415 = scmp.ne.s32.totalorder %s406, %s407
      %p416 = scmp.eq.s32.totalorder %s34, 0
      %p417 = por %p415, %p416
      %p418 = scmp.ne.s32.totalorder %s406, %s407
      %p419 = scmp.eq.s32.totalorder %s35, 4
      %p420 = por %p418, %p419
      %p422 = scmp.ne.s32.totalorder %s407, %s421
      %p423 = scmp.eq.s32.totalorder %s35, 0
      %p424 = por %p422, %p423
      %s426 = sadd.s32 %s425, 1
      %p429 = scmp.eq.s32.totalorder %s29, 4
      %p430 = scmp.ne.s32.totalorder %s425, %s427
      %p431 = scmp.eq.s32.totalorder %s29, 0
      %p432 = por %p430, %p431
      %p433 = scmp.ne.s32.totalorder %s425, %s427
      %p434 = scmp.eq.s32.totalorder %s34, 4
      %p435 = por %p433, %p434
      %p436 = scmp.ne.s32.totalorder %s427, %s428
      %p437 = scmp.eq.s32.totalorder %s34, 0
      %p438 = por %p436, %p437
      %p439 = scmp.ne.s32.totalorder %s427, %s428
      %p440 = scmp.eq.s32.totalorder %s35, 4
      %p441 = por %p439, %p440
      %p443 = scmp.ne.s32.totalorder %s428, %s442
      %p444 = scmp.eq.s32.totalorder %s35, 0
      %p445 = por %p443, %p444
      %p446 = scmp.le.s32.totalorder 1, %s29
      %p447 = scmp.lt.s32.totalorder %s29, 6
      %p448 = pnand %p446, %p447
      %p449 = pneg %p448
      // Predicated region
      $region9: #{policy_forward.7} parent=5 // pred_check
        _
      $region10: #{policy_forward.7} parent=5 // pred_check_branch
        %451 = sbr.rel (%p448) target = $region12
      $region11: #{policy_forward.7} parent=5 // pred_region
        %s452 = ssub.s32 %s29, 1
        // Predicated region
        $region13: #{policy_forward.7} parent=11 // pred_check
          %p453 = pneg %p102
        $region14: #{policy_forward.7} parent=11 // pred_check_branch
          %455 = sbr.rel (%p453) target = $region16
        $region15: #{policy_forward.7} parent=11 // pred_region
          _
        $region16: #{policy_forward.7} parent=11 // pred_fallthru
          _
        // Predicated region
        $region17: #{policy_forward.7} parent=11 // pred_check
          %p456 = pneg %p123
        $region18: #{policy_forward.7} parent=11 // pred_check_branch
          %458 = sbr.rel (%p456) target = $region20
        $region19: #{policy_forward.7} parent=11 // pred_region
          _
        $region20: #{policy_forward.7} parent=11 // pred_fallthru
          _
        // Predicated region
        $region21: #{policy_forward.7} parent=11 // pred_check
          %p459 = pneg %p144
        $region22: #{policy_forward.7} parent=11 // pred_check_branch
          %461 = sbr.rel (%p459) target = $region24
        $region23: #{policy_forward.7} parent=11 // pred_region
          _
        $region24: #{policy_forward.7} parent=11 // pred_fallthru
          _
        // Predicated region
        $region25: #{policy_forward.7} parent=11 // pred_check
          %p462 = pneg %p165
        $region26: #{policy_forward.7} parent=11 // pred_check_branch
          %464 = sbr.rel (%p462) target = $region28
        $region27: #{policy_forward.7} parent=11 // pred_region
          _
        $region28: #{policy_forward.7} parent=11 // pred_fallthru
          _
        // Predicated region
        $region29: #{policy_forward.7} parent=11 // pred_check
          %p465 = pneg %p186
        $region30: #{policy_forward.7} parent=11 // pred_check_branch
          %467 = sbr.rel (%p465) target = $region32
        $region31: #{policy_forward.7} parent=11 // pred_region
          _
        $region32: #{policy_forward.7} parent=11 // pred_fallthru
          _
        // Predicated region
        $region33: #{policy_forward.7} parent=11 // pred_check
          %p468 = pneg %p207
        $region34: #{policy_forward.7} parent=11 // pred_check_branch
          %470 = sbr.rel (%p468) target = $region36
        $region35: #{policy_forward.7} parent=11 // pred_region
          _
        $region36: #{policy_forward.7} parent=11 // pred_fallthru
          _
        // Predicated region
        $region37: #{policy_forward.7} parent=11 // pred_check
          %p471 = pneg %p228
        $region38: #{policy_forward.7} parent=11 // pred_check_branch
          %473 = sbr.rel (%p471) target = $region40
        $region39: #{policy_forward.7} parent=11 // pred_region
          _
        $region40: #{policy_forward.7} parent=11 // pred_fallthru
          _
        // Predicated region
        $region41: #{policy_forward.7} parent=11 // pred_check
          %p474 = pneg %p249
        $region42: #{policy_forward.7} parent=11 // pred_check_branch
          %476 = sbr.rel (%p474) target = $region44
        $region43: #{policy_forward.7} parent=11 // pred_region
          _
        $region44: #{policy_forward.7} parent=11 // pred_fallthru
          _
        // Predicated region
        $region45: #{policy_forward.7} parent=11 // pred_check
          %p477 = pneg %p270
        $region46: #{policy_forward.7} parent=11 // pred_check_branch
          %479 = sbr.rel (%p477) target = $region48
        $region47: #{policy_forward.7} parent=11 // pred_region
          _
        $region48: #{policy_forward.7} parent=11 // pred_fallthru
          _
        // Predicated region
        $region49: #{policy_forward.7} parent=11 // pred_check
          %p480 = pneg %p291
        $region50: #{policy_forward.7} parent=11 // pred_check_branch
          %482 = sbr.rel (%p480) target = $region52
        $region51: #{policy_forward.7} parent=11 // pred_region
          _
        $region52: #{policy_forward.7} parent=11 // pred_fallthru
          _
        // Predicated region
        $region53: #{policy_forward.7} parent=11 // pred_check
          %p483 = pneg %p312
        $region54: #{policy_forward.7} parent=11 // pred_check_branch
          %485 = sbr.rel (%p483) target = $region56
        $region55: #{policy_forward.7} parent=11 // pred_region
          _
        $region56: #{policy_forward.7} parent=11 // pred_fallthru
          _
        // Predicated region
        $region57: #{policy_forward.7} parent=11 // pred_check
          %p486 = pneg %p333
        $region58: #{policy_forward.7} parent=11 // pred_check_branch
          %488 = sbr.rel (%p486) target = $region60
        $region59: #{policy_forward.7} parent=11 // pred_region
          _
        $region60: #{policy_forward.7} parent=11 // pred_fallthru
          _
        // Predicated region
        $region61: #{policy_forward.7} parent=11 // pred_check
          %p489 = pneg %p354
        $region62: #{policy_forward.7} parent=11 // pred_check_branch
          %491 = sbr.rel (%p489) target = $region64
        $region63: #{policy_forward.7} parent=11 // pred_region
          _
        $region64: #{policy_forward.7} parent=11 // pred_fallthru
          _
        // Predicated region
        $region65: #{policy_forward.7} parent=11 // pred_check
          %p492 = pneg %p375
        $region66: #{policy_forward.7} parent=11 // pred_check_branch
          %494 = sbr.rel (%p492) target = $region68
        $region67: #{policy_forward.7} parent=11 // pred_region
          _
        $region68: #{policy_forward.7} parent=11 // pred_fallthru
          _
        // Predicated region
        $region69: #{policy_forward.7} parent=11 // pred_check
          %p495 = pneg %p396
        $region70: #{policy_forward.7} parent=11 // pred_check_branch
          %497 = sbr.rel (%p495) target = $region72
        $region71: #{policy_forward.7} parent=11 // pred_region
          _
        $region72: #{policy_forward.7} parent=11 // pred_fallthru
          _
      $region12: #{policy_forward.7} parent=5 // pred_fallthru
        _
      %p498 = scmp.lt.s32.totalorder %s29, 5
      // Predicated region
      $region73: #{policy_forward.7} parent=5 // pred_check
        %p499 = pneg %p498
      $region74: #{policy_forward.7} parent=5 // pred_check_branch
        %501 = sbr.rel (%p499) target = $region76
      $region75: #{policy_forward.7} parent=5 // pred_region
        // Predicated region
        $region77: #{policy_forward.7} parent=75 // pred_check
          %p502 = pneg %p49
        $region78: #{policy_forward.7} parent=75 // pred_check_branch
          %504 = sbr.rel (%p502) target = $region80
        $region79: #{policy_forward.7} parent=75 // pred_region
          %s505 = smul.u32 5, %s29
          %p506 = scmp.lt.s32.totalorder %s505, 24
          %s507 = scalar_select %p506, %s505, 24
          %s508 = scalar_lea.vmem %s0, %s507
          %s509 = smul.u32 5, %s29
        $region80: #{policy_forward.7} parent=75 // pred_fallthru
          _
        // Predicated region
        $region81: #{policy_forward.7} parent=75 // pred_check
          %p510 = pneg %p75
        $region82: #{policy_forward.7} parent=75 // pred_check_branch
          %512 = sbr.rel (%p510) target = $region84
        $region83: #{policy_forward.7} parent=75 // pred_region
          %s513 = smul.u32 80, %s29
          %p514 = scmp.lt.s32.totalorder %s513, 399
          %s515 = scalar_select %p514, %s513, 399
          %s516 = smul.addr %s515, 16
          %s517 = smul.addr %s516, 4
          %s518 = scalar_lea.vmem %s1, %s517
          %s519 = smul.u32 80, %s29
        $region84: #{policy_forward.7} parent=75 // pred_fallthru
          _
      $region76: #{policy_forward.7} parent=5 // pred_fallthru
        _
      %p520 = scmp.le.s32.totalorder 1, %s29
      %p521 = scmp.lt.s32.totalorder %s29, 6
      %p522 = pnand %p520, %p521
      %p523 = pneg %p522
      // Predicated region
      $region85: #{policy_forward.7} parent=5 // pred_check
        _
      $region86: #{policy_forward.7} parent=5 // pred_check_branch
        %525 = sbr.rel (%p522) target = $region88
      $region87: #{policy_forward.7} parent=5 // pred_region
        %s526 = ssub.s32 %s29, 1
        %s527 = smul.u32 5, %s34
        %p528 = scmp.lt.s32.totalorder %s527, 24
        %s529 = scalar_select %p528, %s527, 24
        %s530 = scalar_lea.vmem %s0, %s529
        %p531 = pneg %p55
        %p532 = pneg %p52
        %s533 = smul.u32 80, %s34
        %p534 = scmp.lt.s32.totalorder %s533, 399
        %s535 = scalar_select %p534, %s533, 399
        %s536 = smul.addr %s535, 16
        %s537 = smul.addr %s536, 4
        %s538 = scalar_lea.vmem %s1, %s537
        %p539 = pneg %p81
        %p540 = pneg %p78
        %p541 = pneg %p102
        %p542 = pneg %p99
        %p543 = pneg %p123
        %p544 = pneg %p120
        %p545 = pneg %p144
        %p546 = pneg %p141
        %p547 = pneg %p165
        %p548 = pneg %p162
        %p549 = pneg %p186
        %p550 = pneg %p183
        %p551 = pneg %p207
        %p552 = pneg %p204
        %p553 = pneg %p228
        %p554 = pneg %p225
        %p555 = pneg %p249
        %p556 = pneg %p246
        %p557 = pneg %p270
        %p558 = pneg %p267
        %p559 = pneg %p291
        %p560 = pneg %p288
        %p561 = pneg %p312
        %p562 = pneg %p309
        %p563 = pneg %p333
        %p564 = pneg %p330
        %p565 = pneg %p354
        %p566 = pneg %p351
        %p567 = pneg %p375
        %p568 = pneg %p372
        %p569 = pneg %p396
        %p570 = pneg %p393
        %p571 = pneg %p417
        %p572 = pneg %p414
        %p573 = pneg %p438
        %p574 = pneg %p435
        %s575 = smul.u32 5, %s34
        %p576 = scmp.lt.s32.totalorder %s575, 24
        %s577 = scalar_select %p576, %s575, 24
        %s578 = scalar_lea.vmem %s0, %s577
        %s579 = smul.u32 5, %s34
        %s580 = smul.u32 80, %s34
        %p581 = scmp.lt.s32.totalorder %s580, 399
        %s582 = scalar_select %p581, %s580, 399
        %s583 = smul.addr %s582, 16
        %s584 = smul.addr %s583, 4
        %s585 = scalar_lea.vmem %s1, %s584
        %s586 = smul.u32 80, %s34
        %p588 = scmp.eq.s32.totalorder %s34, 0
        // Predicated region
        $region89: #{policy_forward.7} parent=87 // pred_check
          %p589 = pneg %p588
        $region90: #{policy_forward.7} parent=87 // pred_check_branch
          %591 = sbr.rel (%p589) target = $region92
        $region91: #{policy_forward.7} parent=87 // pred_region
          %592 = vst [vmem:[#allocation2] sm:$0xff] 0.0
          %593 = vst [vmem:[#allocation2 + $0x8] sm:$0xff] 0.0
        $region92: #{policy_forward.7} parent=87 // pred_fallthru
          _
        %v594 = vld [vmem:[#allocation2] sm:$0xff]
        %v595 = vld [vmem:[#allocation2 + $0x8] sm:$0xff]
        %v596 = vld [vmem:[%s578] sm:$0x1f]
        %v597 = vld [vmem:[%s585] sm:$0xff]
        %v598 = vld [vmem:[%s585 + $0x8] sm:$0xff]
        %v599 = vld [vmem:[%s585 + $0x10] sm:$0xff]
        %v600 = vld [vmem:[%s585 + $0x18] sm:$0xff]
        %v601 = vld [vmem:[%s585 + $0x20] sm:$0xff]
        %v602 = vld [vmem:[%s585 + $0x28] sm:$0xff]
        %v603 = vld [vmem:[%s585 + $0x30] sm:$0xff]
        %v604 = vld [vmem:[%s585 + $0x38] sm:$0xff]
        %v605 = vld [vmem:[%s585 + $0x40] sm:$0xff]
        %v606 = vld [vmem:[%s585 + $0x48] sm:$0xff]
        %v607 = vld [vmem:[%s585 + $0x50] sm:$0xff]
        %v608 = vld [vmem:[%s585 + $0x58] sm:$0xff]
        %v609 = vld [vmem:[%s585 + $0x60] sm:$0xff]
        %v610 = vld [vmem:[%s585 + $0x68] sm:$0xff]
        %v611 = vld [vmem:[%s585 + $0x70] sm:$0xff]
        %v612 = vld [vmem:[%s585 + $0x78] sm:$0xff]
        %v613 = vld [vmem:[%s585 + $0x80] sm:$0xff]
        %v614 = vld [vmem:[%s585 + $0x88] sm:$0xff]
        %v615 = vld [vmem:[%s585 + $0x90] sm:$0xff]
        %v616 = vld [vmem:[%s585 + $0x98] sm:$0xff]
        %v617 = vld [vmem:[%s585 + $0xa0] sm:$0xff]
        %v618 = vld [vmem:[%s585 + $0xa8] sm:$0xff]
        %v619 = vld [vmem:[%s585 + $0xb0] sm:$0xff]
        %v620 = vld [vmem:[%s585 + $0xb8] sm:$0xff]
        %v621 = vld [vmem:[%s585 + $0xc0] sm:$0xff]
        %v622 = vld [vmem:[%s585 + $0xc8] sm:$0xff]
        %v623 = vld [vmem:[%s585 + $0xd0] sm:$0xff]
        %v624 = vld [vmem:[%s585 + $0xd8] sm:$0xff]
        %v625 = vld [vmem:[%s585 + $0xe0] sm:$0xff]
        %v626 = vld [vmem:[%s585 + $0xe8] sm:$0xff]
        %v627 = vld [vmem:[%s585 + $0xf0] sm:$0xff]
        %v628 = vld [vmem:[%s585 + $0xf8] sm:$0xff]
        %v629 = vld [vmem:[%s585 + $0x100] sm:$0xff]
        %v630 = vld [vmem:[%s585 + $0x108] sm:$0xff]
        %v631 = vld [vmem:[%s585 + $0x110] sm:$0xff]
        %v632 = vld [vmem:[%s585 + $0x118] sm:$0xff]
        %v633 = vld [vmem:[%s585 + $0x120] sm:$0xff]
        %v634 = vld [vmem:[%s585 + $0x128] sm:$0xff]
        %v635 = vld [vmem:[%s585 + $0x130] sm:$0xff]
        %v636 = vld [vmem:[%s585 + $0x138] sm:$0xff]
        %v637 = vld [vmem:[%s585 + $0x140] sm:$0xff]
        %v638 = vld [vmem:[%s585 + $0x148] sm:$0xff]
        %v639 = vld [vmem:[%s585 + $0x150] sm:$0xff]
        %v640 = vld [vmem:[%s585 + $0x158] sm:$0xff]
        %v641 = vld [vmem:[%s585 + $0x160] sm:$0xff]
        %v642 = vld [vmem:[%s585 + $0x168] sm:$0xff]
        %v643 = vld [vmem:[%s585 + $0x170] sm:$0xff]
        %v644 = vld [vmem:[%s585 + $0x178] sm:$0xff]
        %v645 = vld [vmem:[%s585 + $0x180] sm:$0xff]
        %v646 = vld [vmem:[%s585 + $0x188] sm:$0xff]
        %v647 = vld [vmem:[%s585 + $0x190] sm:$0xff]
        %v648 = vld [vmem:[%s585 + $0x198] sm:$0xff]
        %v649 = vld [vmem:[%s585 + $0x1a0] sm:$0xff]
        %v650 = vld [vmem:[%s585 + $0x1a8] sm:$0xff]
        %v651 = vld [vmem:[%s585 + $0x1b0] sm:$0xff]
        %v652 = vld [vmem:[%s585 + $0x1b8] sm:$0xff]
        %v653 = vld [vmem:[%s585 + $0x1c0] sm:$0xff]
        %v654 = vld [vmem:[%s585 + $0x1c8] sm:$0xff]
        %v655 = vld [vmem:[%s585 + $0x1d0] sm:$0xff]
        %v656 = vld [vmem:[%s585 + $0x1d8] sm:$0xff]
        %v657 = vld [vmem:[%s585 + $0x1e0] sm:$0xff]
        %v658 = vld [vmem:[%s585 + $0x1e8] sm:$0xff]
        %v659 = vld [vmem:[%s585 + $0x1f0] sm:$0xff]
        %v660 = vld [vmem:[%s585 + $0x1f8] sm:$0xff]
        %v661 = vld [vmem:[%s585 + $0x200] sm:$0xff]
        %v662 = vld [vmem:[%s585 + $0x208] sm:$0xff]
        %v663 = vld [vmem:[%s585 + $0x210] sm:$0xff]
        %v664 = vld [vmem:[%s585 + $0x218] sm:$0xff]
        %v665 = vld [vmem:[%s585 + $0x220] sm:$0xff]
        %v666 = vld [vmem:[%s585 + $0x228] sm:$0xff]
        %v667 = vld [vmem:[%s585 + $0x230] sm:$0xff]
        %v668 = vld [vmem:[%s585 + $0x238] sm:$0xff]
        %v669 = vld [vmem:[%s585 + $0x240] sm:$0xff]
        %v670 = vld [vmem:[%s585 + $0x248] sm:$0xff]
        %v671 = vld [vmem:[%s585 + $0x250] sm:$0xff]
        %v672 = vld [vmem:[%s585 + $0x258] sm:$0xff]
        %v673 = vld [vmem:[%s585 + $0x260] sm:$0xff]
        %v674 = vld [vmem:[%s585 + $0x268] sm:$0xff]
        %v675 = vld [vmem:[%s585 + $0x270] sm:$0xff]
        %v676 = vld [vmem:[%s585 + $0x278] sm:$0xff]
        %v677 = vld [vmem:[%s585 + $0x280] sm:$0xff]
        %v678 = vld [vmem:[%s585 + $0x288] sm:$0xff]
        %v679 = vld [vmem:[%s585 + $0x290] sm:$0xff]
        %v680 = vld [vmem:[%s585 + $0x298] sm:$0xff]
        %v681 = vld [vmem:[%s585 + $0x2a0] sm:$0xff]
        %v682 = vld [vmem:[%s585 + $0x2a8] sm:$0xff]
        %v683 = vld [vmem:[%s585 + $0x2b0] sm:$0xff]
        %v684 = vld [vmem:[%s585 + $0x2b8] sm:$0xff]
        %v685 = vld [vmem:[%s585 + $0x2c0] sm:$0xff]
        %v686 = vld [vmem:[%s585 + $0x2c8] sm:$0xff]
        %v687 = vld [vmem:[%s585 + $0x2d0] sm:$0xff]
        %v688 = vld [vmem:[%s585 + $0x2d8] sm:$0xff]
        %v689 = vld [vmem:[%s585 + $0x2e0] sm:$0xff]
        %v690 = vld [vmem:[%s585 + $0x2e8] sm:$0xff]
        %v691 = vld [vmem:[%s585 + $0x2f0] sm:$0xff]
        %v692 = vld [vmem:[%s585 + $0x2f8] sm:$0xff]
        %v693 = vld [vmem:[%s585 + $0x300] sm:$0xff]
        %v694 = vld [vmem:[%s585 + $0x308] sm:$0xff]
        %v695 = vld [vmem:[%s585 + $0x310] sm:$0xff]
        %v696 = vld [vmem:[%s585 + $0x318] sm:$0xff]
        %v697 = vld [vmem:[%s585 + $0x320] sm:$0xff]
        %v698 = vld [vmem:[%s585 + $0x328] sm:$0xff]
        %v699 = vld [vmem:[%s585 + $0x330] sm:$0xff]
        %v700 = vld [vmem:[%s585 + $0x338] sm:$0xff]
        %v701 = vld [vmem:[%s585 + $0x340] sm:$0xff]
        %v702 = vld [vmem:[%s585 + $0x348] sm:$0xff]
        %v703 = vld [vmem:[%s585 + $0x350] sm:$0xff]
        %v704 = vld [vmem:[%s585 + $0x358] sm:$0xff]
        %v705 = vld [vmem:[%s585 + $0x360] sm:$0xff]
        %v706 = vld [vmem:[%s585 + $0x368] sm:$0xff]
        %v707 = vld [vmem:[%s585 + $0x370] sm:$0xff]
        %v708 = vld [vmem:[%s585 + $0x378] sm:$0xff]
        %v709 = vld [vmem:[%s585 + $0x380] sm:$0xff]
        %v710 = vld [vmem:[%s585 + $0x388] sm:$0xff]
        %v711 = vld [vmem:[%s585 + $0x390] sm:$0xff]
        %v712 = vld [vmem:[%s585 + $0x398] sm:$0xff]
        %v713 = vld [vmem:[%s585 + $0x3a0] sm:$0xff]
        %v714 = vld [vmem:[%s585 + $0x3a8] sm:$0xff]
        %v715 = vld [vmem:[%s585 + $0x3b0] sm:$0xff]
        %v716 = vld [vmem:[%s585 + $0x3b8] sm:$0xff]
        %v717 = vld [vmem:[%s585 + $0x3c0] sm:$0xff]
        %v718 = vld [vmem:[%s585 + $0x3c8] sm:$0xff]
        %v719 = vld [vmem:[%s585 + $0x3d0] sm:$0xff]
        %v720 = vld [vmem:[%s585 + $0x3d8] sm:$0xff]
        %v721 = vld [vmem:[%s585 + $0x3e0] sm:$0xff]
        %v722 = vld [vmem:[%s585 + $0x3e8] sm:$0xff]
        %v723 = vld [vmem:[%s585 + $0x3f0] sm:$0xff]
        %v724 = vld [vmem:[%s585 + $0x3f8] sm:$0xff]
        %v725 = vld [vmem:[%s585 + $0x400] sm:$0xff]
        %v726 = vld [vmem:[%s585 + $0x408] sm:$0xff]
        %v727 = vld [vmem:[%s585 + $0x410] sm:$0xff]
        %v728 = vld [vmem:[%s585 + $0x418] sm:$0xff]
        %v729 = vld [vmem:[%s585 + $0x420] sm:$0xff]
        %v730 = vld [vmem:[%s585 + $0x428] sm:$0xff]
        %v731 = vld [vmem:[%s585 + $0x430] sm:$0xff]
        %v732 = vld [vmem:[%s585 + $0x438] sm:$0xff]
        %v733 = vld [vmem:[%s585 + $0x440] sm:$0xff]
        %v734 = vld [vmem:[%s585 + $0x448] sm:$0xff]
        %v735 = vld [vmem:[%s585 + $0x450] sm:$0xff]
        %v736 = vld [vmem:[%s585 + $0x458] sm:$0xff]
        %v737 = vld [vmem:[%s585 + $0x460] sm:$0xff]
        %v738 = vld [vmem:[%s585 + $0x468] sm:$0xff]
        %v739 = vld [vmem:[%s585 + $0x470] sm:$0xff]
        %v740 = vld [vmem:[%s585 + $0x478] sm:$0xff]
        %v741 = vld [vmem:[%s585 + $0x480] sm:$0xff]
        %v742 = vld [vmem:[%s585 + $0x488] sm:$0xff]
        %v743 = vld [vmem:[%s585 + $0x490] sm:$0xff]
        %v744 = vld [vmem:[%s585 + $0x498] sm:$0xff]
        %v745 = vld [vmem:[%s585 + $0x4a0] sm:$0xff]
        %v746 = vld [vmem:[%s585 + $0x4a8] sm:$0xff]
        %v747 = vld [vmem:[%s585 + $0x4b0] sm:$0xff]
        %v748 = vld [vmem:[%s585 + $0x4b8] sm:$0xff]
        %v749 = vld [vmem:[%s585 + $0x4c0] sm:$0xff]
        %v750 = vld [vmem:[%s585 + $0x4c8] sm:$0xff]
        %v751 = vld [vmem:[%s585 + $0x4d0] sm:$0xff]
        %v752 = vld [vmem:[%s585 + $0x4d8] sm:$0xff]
        %v753 = vld [vmem:[%s585 + $0x4e0] sm:$0xff]
        %v754 = vld [vmem:[%s585 + $0x4e8] sm:$0xff]
        %v755 = vld [vmem:[%s585 + $0x4f0] sm:$0xff]
        %v756 = vld [vmem:[%s585 + $0x4f8] sm:$0xff]
        %v757 = vld [vmem:[%s585 + $0x500] sm:$0xff]
        %v758 = vld [vmem:[%s585 + $0x508] sm:$0xff]
        %v759 = vld [vmem:[%s585 + $0x510] sm:$0xff]
        %v760 = vld [vmem:[%s585 + $0x518] sm:$0xff]
        %v761 = vld [vmem:[%s585 + $0x520] sm:$0xff]
        %v762 = vld [vmem:[%s585 + $0x528] sm:$0xff]
        %v763 = vld [vmem:[%s585 + $0x530] sm:$0xff]
        %v764 = vld [vmem:[%s585 + $0x538] sm:$0xff]
        %v765 = vld [vmem:[%s585 + $0x540] sm:$0xff]
        %v766 = vld [vmem:[%s585 + $0x548] sm:$0xff]
        %v767 = vld [vmem:[%s585 + $0x550] sm:$0xff]
        %v768 = vld [vmem:[%s585 + $0x558] sm:$0xff]
        %v769 = vld [vmem:[%s585 + $0x560] sm:$0xff]
        %v770 = vld [vmem:[%s585 + $0x568] sm:$0xff]
        %v771 = vld [vmem:[%s585 + $0x570] sm:$0xff]
        %v772 = vld [vmem:[%s585 + $0x578] sm:$0xff]
        %v773 = vld [vmem:[%s585 + $0x580] sm:$0xff]
        %v774 = vld [vmem:[%s585 + $0x588] sm:$0xff]
        %v775 = vld [vmem:[%s585 + $0x590] sm:$0xff]
        %v776 = vld [vmem:[%s585 + $0x598] sm:$0xff]
        %v777 = vld [vmem:[%s585 + $0x5a0] sm:$0xff]
        %v778 = vld [vmem:[%s585 + $0x5a8] sm:$0xff]
        %v779 = vld [vmem:[%s585 + $0x5b0] sm:$0xff]
        %v780 = vld [vmem:[%s585 + $0x5b8] sm:$0xff]
        %v781 = vld [vmem:[%s585 + $0x5c0] sm:$0xff]
        %v782 = vld [vmem:[%s585 + $0x5c8] sm:$0xff]
        %v783 = vld [vmem:[%s585 + $0x5d0] sm:$0xff]
        %v784 = vld [vmem:[%s585 + $0x5d8] sm:$0xff]
        %v785 = vld [vmem:[%s585 + $0x5e0] sm:$0xff]
        %v786 = vld [vmem:[%s585 + $0x5e8] sm:$0xff]
        %v787 = vld [vmem:[%s585 + $0x5f0] sm:$0xff]
        %v788 = vld [vmem:[%s585 + $0x5f8] sm:$0xff]
        %v789 = vld [vmem:[%s585 + $0x600] sm:$0xff]
        %v790 = vld [vmem:[%s585 + $0x608] sm:$0xff]
        %v791 = vld [vmem:[%s585 + $0x610] sm:$0xff]
        %v792 = vld [vmem:[%s585 + $0x618] sm:$0xff]
        %v793 = vld [vmem:[%s585 + $0x620] sm:$0xff]
        %v794 = vld [vmem:[%s585 + $0x628] sm:$0xff]
        %v795 = vld [vmem:[%s585 + $0x630] sm:$0xff]
        %v796 = vld [vmem:[%s585 + $0x638] sm:$0xff]
        %v797 = vld [vmem:[%s585 + $0x640] sm:$0xff]
        %v798 = vld [vmem:[%s585 + $0x648] sm:$0xff]
        %v799 = vld [vmem:[%s585 + $0x650] sm:$0xff]
        %v800 = vld [vmem:[%s585 + $0x658] sm:$0xff]
        %v801 = vld [vmem:[%s585 + $0x660] sm:$0xff]
        %v802 = vld [vmem:[%s585 + $0x668] sm:$0xff]
        %v803 = vld [vmem:[%s585 + $0x670] sm:$0xff]
        %v804 = vld [vmem:[%s585 + $0x678] sm:$0xff]
        %v805 = vld [vmem:[%s585 + $0x680] sm:$0xff]
        %v806 = vld [vmem:[%s585 + $0x688] sm:$0xff]
        %v807 = vld [vmem:[%s585 + $0x690] sm:$0xff]
        %v808 = vld [vmem:[%s585 + $0x698] sm:$0xff]
        %v809 = vld [vmem:[%s585 + $0x6a0] sm:$0xff]
        %v810 = vld [vmem:[%s585 + $0x6a8] sm:$0xff]
        %v811 = vld [vmem:[%s585 + $0x6b0] sm:$0xff]
        %v812 = vld [vmem:[%s585 + $0x6b8] sm:$0xff]
        %v813 = vld [vmem:[%s585 + $0x6c0] sm:$0xff]
        %v814 = vld [vmem:[%s585 + $0x6c8] sm:$0xff]
        %v815 = vld [vmem:[%s585 + $0x6d0] sm:$0xff]
        %v816 = vld [vmem:[%s585 + $0x6d8] sm:$0xff]
        %v817 = vld [vmem:[%s585 + $0x6e0] sm:$0xff]
        %v818 = vld [vmem:[%s585 + $0x6e8] sm:$0xff]
        %v819 = vld [vmem:[%s585 + $0x6f0] sm:$0xff]
        %v820 = vld [vmem:[%s585 + $0x6f8] sm:$0xff]
        %v821 = vld [vmem:[%s585 + $0x700] sm:$0xff]
        %v822 = vld [vmem:[%s585 + $0x708] sm:$0xff]
        %v823 = vld [vmem:[%s585 + $0x710] sm:$0xff]
        %v824 = vld [vmem:[%s585 + $0x718] sm:$0xff]
        %v825 = vld [vmem:[%s585 + $0x720] sm:$0xff]
        %v826 = vld [vmem:[%s585 + $0x728] sm:$0xff]
        %v827 = vld [vmem:[%s585 + $0x730] sm:$0xff]
        %v828 = vld [vmem:[%s585 + $0x738] sm:$0xff]
        %v829 = vld [vmem:[%s585 + $0x740] sm:$0xff]
        %v830 = vld [vmem:[%s585 + $0x748] sm:$0xff]
        %v831 = vld [vmem:[%s585 + $0x750] sm:$0xff]
        %v832 = vld [vmem:[%s585 + $0x758] sm:$0xff]
        %v833 = vld [vmem:[%s585 + $0x760] sm:$0xff]
        %v834 = vld [vmem:[%s585 + $0x768] sm:$0xff]
        %v835 = vld [vmem:[%s585 + $0x770] sm:$0xff]
        %v836 = vld [vmem:[%s585 + $0x778] sm:$0xff]
        %v837 = vld [vmem:[%s585 + $0x780] sm:$0xff]
        %v838 = vld [vmem:[%s585 + $0x788] sm:$0xff]
        %v839 = vld [vmem:[%s585 + $0x790] sm:$0xff]
        %v840 = vld [vmem:[%s585 + $0x798] sm:$0xff]
        %v841 = vld [vmem:[%s585 + $0x7a0] sm:$0xff]
        %v842 = vld [vmem:[%s585 + $0x7a8] sm:$0xff]
        %v843 = vld [vmem:[%s585 + $0x7b0] sm:$0xff]
        %v844 = vld [vmem:[%s585 + $0x7b8] sm:$0xff]
        %v845 = vld [vmem:[%s585 + $0x7c0] sm:$0xff]
        %v846 = vld [vmem:[%s585 + $0x7c8] sm:$0xff]
        %v847 = vld [vmem:[%s585 + $0x7d0] sm:$0xff]
        %v848 = vld [vmem:[%s585 + $0x7d8] sm:$0xff]
        %v849 = vld [vmem:[%s585 + $0x7e0] sm:$0xff]
        %v850 = vld [vmem:[%s585 + $0x7e8] sm:$0xff]
        %v851 = vld [vmem:[%s585 + $0x7f0] sm:$0xff]
        %v852 = vld [vmem:[%s585 + $0x7f8] sm:$0xff]
        %v853 = vld [vmem:[%s585 + $0x800] sm:$0xff]
        %v854 = vld [vmem:[%s585 + $0x808] sm:$0xff]
        %v855 = vld [vmem:[%s585 + $0x810] sm:$0xff]
        %v856 = vld [vmem:[%s585 + $0x818] sm:$0xff]
        %v857 = vld [vmem:[%s585 + $0x820] sm:$0xff]
        %v858 = vld [vmem:[%s585 + $0x828] sm:$0xff]
        %v859 = vld [vmem:[%s585 + $0x830] sm:$0xff]
        %v860 = vld [vmem:[%s585 + $0x838] sm:$0xff]
        %v861 = vld [vmem:[%s585 + $0x840] sm:$0xff]
        %v862 = vld [vmem:[%s585 + $0x848] sm:$0xff]
        %v863 = vld [vmem:[%s585 + $0x850] sm:$0xff]
        %v864 = vld [vmem:[%s585 + $0x858] sm:$0xff]
        %v865 = vld [vmem:[%s585 + $0x860] sm:$0xff]
        %v866 = vld [vmem:[%s585 + $0x868] sm:$0xff]
        %v867 = vld [vmem:[%s585 + $0x870] sm:$0xff]
        %v868 = vld [vmem:[%s585 + $0x878] sm:$0xff]
        %v869 = vld [vmem:[%s585 + $0x880] sm:$0xff]
        %v870 = vld [vmem:[%s585 + $0x888] sm:$0xff]
        %v871 = vld [vmem:[%s585 + $0x890] sm:$0xff]
        %v872 = vld [vmem:[%s585 + $0x898] sm:$0xff]
        %v873 = vld [vmem:[%s585 + $0x8a0] sm:$0xff]
        %v874 = vld [vmem:[%s585 + $0x8a8] sm:$0xff]
        %v875 = vld [vmem:[%s585 + $0x8b0] sm:$0xff]
        %v876 = vld [vmem:[%s585 + $0x8b8] sm:$0xff]
        %v877 = vld [vmem:[%s585 + $0x8c0] sm:$0xff]
        %v878 = vld [vmem:[%s585 + $0x8c8] sm:$0xff]
        %v879 = vld [vmem:[%s585 + $0x8d0] sm:$0xff]
        %v880 = vld [vmem:[%s585 + $0x8d8] sm:$0xff]
        %v881 = vld [vmem:[%s585 + $0x8e0] sm:$0xff]
        %v882 = vld [vmem:[%s585 + $0x8e8] sm:$0xff]
        %v883 = vld [vmem:[%s585 + $0x8f0] sm:$0xff]
        %v884 = vld [vmem:[%s585 + $0x8f8] sm:$0xff]
        %v885 = vld [vmem:[%s585 + $0x900] sm:$0xff]
        %v886 = vld [vmem:[%s585 + $0x908] sm:$0xff]
        %v887 = vld [vmem:[%s585 + $0x910] sm:$0xff]
        %v888 = vld [vmem:[%s585 + $0x918] sm:$0xff]
        %v889 = vld [vmem:[%s585 + $0x920] sm:$0xff]
        %v890 = vld [vmem:[%s585 + $0x928] sm:$0xff]
        %v891 = vld [vmem:[%s585 + $0x930] sm:$0xff]
        %v892 = vld [vmem:[%s585 + $0x938] sm:$0xff]
        %v893 = vld [vmem:[%s585 + $0x940] sm:$0xff]
        %v894 = vld [vmem:[%s585 + $0x948] sm:$0xff]
        %v895 = vld [vmem:[%s585 + $0x950] sm:$0xff]
        %v896 = vld [vmem:[%s585 + $0x958] sm:$0xff]
        %v897 = vld [vmem:[%s585 + $0x960] sm:$0xff]
        %v898 = vld [vmem:[%s585 + $0x968] sm:$0xff]
        %v899 = vld [vmem:[%s585 + $0x970] sm:$0xff]
        %v900 = vld [vmem:[%s585 + $0x978] sm:$0xff]
        %v901 = vld [vmem:[%s585 + $0x980] sm:$0xff]
        %v902 = vld [vmem:[%s585 + $0x988] sm:$0xff]
        %v903 = vld [vmem:[%s585 + $0x990] sm:$0xff]
        %v904 = vld [vmem:[%s585 + $0x998] sm:$0xff]
        %v905 = vld [vmem:[%s585 + $0x9a0] sm:$0xff]
        %v906 = vld [vmem:[%s585 + $0x9a8] sm:$0xff]
        %v907 = vld [vmem:[%s585 + $0x9b0] sm:$0xff]
        %v908 = vld [vmem:[%s585 + $0x9b8] sm:$0xff]
        %v909 = vld [vmem:[%s585 + $0x9c0] sm:$0xff]
        %v910 = vld [vmem:[%s585 + $0x9c8] sm:$0xff]
        %v911 = vld [vmem:[%s585 + $0x9d0] sm:$0xff]
        %v912 = vld [vmem:[%s585 + $0x9d8] sm:$0xff]
        %v913 = vld [vmem:[%s585 + $0x9e0] sm:$0xff]
        %v914 = vld [vmem:[%s585 + $0x9e8] sm:$0xff]
        %v915 = vld [vmem:[%s585 + $0x9f0] sm:$0xff]
        %v916 = vld [vmem:[%s585 + $0x9f8] sm:$0xff]
        %v917 = vld [vmem:[%s585 + $0xa00] sm:$0xff]
        %v918 = vld [vmem:[%s585 + $0xa08] sm:$0xff]
        %v919 = vld [vmem:[%s585 + $0xa10] sm:$0xff]
        %v920 = vld [vmem:[%s585 + $0xa18] sm:$0xff]
        %v921 = vld [vmem:[%s585 + $0xa20] sm:$0xff]
        %v922 = vld [vmem:[%s585 + $0xa28] sm:$0xff]
        %v923 = vld [vmem:[%s585 + $0xa30] sm:$0xff]
        %v924 = vld [vmem:[%s585 + $0xa38] sm:$0xff]
        %v925 = vld [vmem:[%s585 + $0xa40] sm:$0xff]
        %v926 = vld [vmem:[%s585 + $0xa48] sm:$0xff]
        %v927 = vld [vmem:[%s585 + $0xa50] sm:$0xff]
        %v928 = vld [vmem:[%s585 + $0xa58] sm:$0xff]
        %v929 = vld [vmem:[%s585 + $0xa60] sm:$0xff]
        %v930 = vld [vmem:[%s585 + $0xa68] sm:$0xff]
        %v931 = vld [vmem:[%s585 + $0xa70] sm:$0xff]
        %v932 = vld [vmem:[%s585 + $0xa78] sm:$0xff]
        %v933 = vld [vmem:[%s585 + $0xa80] sm:$0xff]
        %v934 = vld [vmem:[%s585 + $0xa88] sm:$0xff]
        %v935 = vld [vmem:[%s585 + $0xa90] sm:$0xff]
        %v936 = vld [vmem:[%s585 + $0xa98] sm:$0xff]
        %v937 = vld [vmem:[%s585 + $0xaa0] sm:$0xff]
        %v938 = vld [vmem:[%s585 + $0xaa8] sm:$0xff]
        %v939 = vld [vmem:[%s585 + $0xab0] sm:$0xff]
        %v940 = vld [vmem:[%s585 + $0xab8] sm:$0xff]
        %v941 = vld [vmem:[%s585 + $0xac0] sm:$0xff]
        %v942 = vld [vmem:[%s585 + $0xac8] sm:$0xff]
        %v943 = vld [vmem:[%s585 + $0xad0] sm:$0xff]
        %v944 = vld [vmem:[%s585 + $0xad8] sm:$0xff]
        %v945 = vld [vmem:[%s585 + $0xae0] sm:$0xff]
        %v946 = vld [vmem:[%s585 + $0xae8] sm:$0xff]
        %v947 = vld [vmem:[%s585 + $0xaf0] sm:$0xff]
        %v948 = vld [vmem:[%s585 + $0xaf8] sm:$0xff]
        %v949 = vld [vmem:[%s585 + $0xb00] sm:$0xff]
        %v950 = vld [vmem:[%s585 + $0xb08] sm:$0xff]
        %v951 = vld [vmem:[%s585 + $0xb10] sm:$0xff]
        %v952 = vld [vmem:[%s585 + $0xb18] sm:$0xff]
        %v953 = vld [vmem:[%s585 + $0xb20] sm:$0xff]
        %v954 = vld [vmem:[%s585 + $0xb28] sm:$0xff]
        %v955 = vld [vmem:[%s585 + $0xb30] sm:$0xff]
        %v956 = vld [vmem:[%s585 + $0xb38] sm:$0xff]
        %v957 = vld [vmem:[%s585 + $0xb40] sm:$0xff]
        %v958 = vld [vmem:[%s585 + $0xb48] sm:$0xff]
        %v959 = vld [vmem:[%s585 + $0xb50] sm:$0xff]
        %v960 = vld [vmem:[%s585 + $0xb58] sm:$0xff]
        %v961 = vld [vmem:[%s585 + $0xb60] sm:$0xff]
        %v962 = vld [vmem:[%s585 + $0xb68] sm:$0xff]
        %v963 = vld [vmem:[%s585 + $0xb70] sm:$0xff]
        %v964 = vld [vmem:[%s585 + $0xb78] sm:$0xff]
        %v965 = vld [vmem:[%s585 + $0xb80] sm:$0xff]
        %v966 = vld [vmem:[%s585 + $0xb88] sm:$0xff]
        %v967 = vld [vmem:[%s585 + $0xb90] sm:$0xff]
        %v968 = vld [vmem:[%s585 + $0xb98] sm:$0xff]
        %v969 = vld [vmem:[%s585 + $0xba0] sm:$0xff]
        %v970 = vld [vmem:[%s585 + $0xba8] sm:$0xff]
        %v971 = vld [vmem:[%s585 + $0xbb0] sm:$0xff]
        %v972 = vld [vmem:[%s585 + $0xbb8] sm:$0xff]
        %v973 = vld [vmem:[%s585 + $0xbc0] sm:$0xff]
        %v974 = vld [vmem:[%s585 + $0xbc8] sm:$0xff]
        %v975 = vld [vmem:[%s585 + $0xbd0] sm:$0xff]
        %v976 = vld [vmem:[%s585 + $0xbd8] sm:$0xff]
        %v977 = vld [vmem:[%s585 + $0xbe0] sm:$0xff]
        %v978 = vld [vmem:[%s585 + $0xbe8] sm:$0xff]
        %v979 = vld [vmem:[%s585 + $0xbf0] sm:$0xff]
        %v980 = vld [vmem:[%s585 + $0xbf8] sm:$0xff]
        %v981 = vld [vmem:[%s585 + $0xc00] sm:$0xff]
        %v982 = vld [vmem:[%s585 + $0xc08] sm:$0xff]
        %v983 = vld [vmem:[%s585 + $0xc10] sm:$0xff]
        %v984 = vld [vmem:[%s585 + $0xc18] sm:$0xff]
        %v985 = vld [vmem:[%s585 + $0xc20] sm:$0xff]
        %v986 = vld [vmem:[%s585 + $0xc28] sm:$0xff]
        %v987 = vld [vmem:[%s585 + $0xc30] sm:$0xff]
        %v988 = vld [vmem:[%s585 + $0xc38] sm:$0xff]
        %v989 = vld [vmem:[%s585 + $0xc40] sm:$0xff]
        %v990 = vld [vmem:[%s585 + $0xc48] sm:$0xff]
        %v991 = vld [vmem:[%s585 + $0xc50] sm:$0xff]
        %v992 = vld [vmem:[%s585 + $0xc58] sm:$0xff]
        %v993 = vld [vmem:[%s585 + $0xc60] sm:$0xff]
        %v994 = vld [vmem:[%s585 + $0xc68] sm:$0xff]
        %v995 = vld [vmem:[%s585 + $0xc70] sm:$0xff]
        %v996 = vld [vmem:[%s585 + $0xc78] sm:$0xff]
        %v997 = vld [vmem:[%s585 + $0xc80] sm:$0xff]
        %v998 = vld [vmem:[%s585 + $0xc88] sm:$0xff]
        %v999 = vld [vmem:[%s585 + $0xc90] sm:$0xff]
        %v1000 = vld [vmem:[%s585 + $0xc98] sm:$0xff]
        %v1001 = vld [vmem:[%s585 + $0xca0] sm:$0xff]
        %v1002 = vld [vmem:[%s585 + $0xca8] sm:$0xff]
        %v1003 = vld [vmem:[%s585 + $0xcb0] sm:$0xff]
        %v1004 = vld [vmem:[%s585 + $0xcb8] sm:$0xff]
        %v1005 = vld [vmem:[%s585 + $0xcc0] sm:$0xff]
        %v1006 = vld [vmem:[%s585 + $0xcc8] sm:$0xff]
        %v1007 = vld [vmem:[%s585 + $0xcd0] sm:$0xff]
        %v1008 = vld [vmem:[%s585 + $0xcd8] sm:$0xff]
        %v1009 = vld [vmem:[%s585 + $0xce0] sm:$0xff]
        %v1010 = vld [vmem:[%s585 + $0xce8] sm:$0xff]
        %v1011 = vld [vmem:[%s585 + $0xcf0] sm:$0xff]
        %v1012 = vld [vmem:[%s585 + $0xcf8] sm:$0xff]
        %v1013 = vld [vmem:[%s585 + $0xd00] sm:$0xff]
        %v1014 = vld [vmem:[%s585 + $0xd08] sm:$0xff]
        %v1015 = vld [vmem:[%s585 + $0xd10] sm:$0xff]
        %v1016 = vld [vmem:[%s585 + $0xd18] sm:$0xff]
        %v1017 = vld [vmem:[%s585 + $0xd20] sm:$0xff]
        %v1018 = vld [vmem:[%s585 + $0xd28] sm:$0xff]
        %v1019 = vld [vmem:[%s585 + $0xd30] sm:$0xff]
        %v1020 = vld [vmem:[%s585 + $0xd38] sm:$0xff]
        %v1021 = vld [vmem:[%s585 + $0xd40] sm:$0xff]
        %v1022 = vld [vmem:[%s585 + $0xd48] sm:$0xff]
        %v1023 = vld [vmem:[%s585 + $0xd50] sm:$0xff]
        %v1024 = vld [vmem:[%s585 + $0xd58] sm:$0xff]
        %v1025 = vld [vmem:[%s585 + $0xd60] sm:$0xff]
        %v1026 = vld [vmem:[%s585 + $0xd68] sm:$0xff]
        %v1027 = vld [vmem:[%s585 + $0xd70] sm:$0xff]
        %v1028 = vld [vmem:[%s585 + $0xd78] sm:$0xff]
        %v1029 = vld [vmem:[%s585 + $0xd80] sm:$0xff]
        %v1030 = vld [vmem:[%s585 + $0xd88] sm:$0xff]
        %v1031 = vld [vmem:[%s585 + $0xd90] sm:$0xff]
        %v1032 = vld [vmem:[%s585 + $0xd98] sm:$0xff]
        %v1033 = vld [vmem:[%s585 + $0xda0] sm:$0xff]
        %v1034 = vld [vmem:[%s585 + $0xda8] sm:$0xff]
        %v1035 = vld [vmem:[%s585 + $0xdb0] sm:$0xff]
        %v1036 = vld [vmem:[%s585 + $0xdb8] sm:$0xff]
        %v1037 = vld [vmem:[%s585 + $0xdc0] sm:$0xff]
        %v1038 = vld [vmem:[%s585 + $0xdc8] sm:$0xff]
        %v1039 = vld [vmem:[%s585 + $0xdd0] sm:$0xff]
        %v1040 = vld [vmem:[%s585 + $0xdd8] sm:$0xff]
        %v1041 = vld [vmem:[%s585 + $0xde0] sm:$0xff]
        %v1042 = vld [vmem:[%s585 + $0xde8] sm:$0xff]
        %v1043 = vld [vmem:[%s585 + $0xdf0] sm:$0xff]
        %v1044 = vld [vmem:[%s585 + $0xdf8] sm:$0xff]
        %v1045 = vld [vmem:[%s585 + $0xe00] sm:$0xff]
        %v1046 = vld [vmem:[%s585 + $0xe08] sm:$0xff]
        %v1047 = vld [vmem:[%s585 + $0xe10] sm:$0xff]
        %v1048 = vld [vmem:[%s585 + $0xe18] sm:$0xff]
        %v1049 = vld [vmem:[%s585 + $0xe20] sm:$0xff]
        %v1050 = vld [vmem:[%s585 + $0xe28] sm:$0xff]
        %v1051 = vld [vmem:[%s585 + $0xe30] sm:$0xff]
        %v1052 = vld [vmem:[%s585 + $0xe38] sm:$0xff]
        %v1053 = vld [vmem:[%s585 + $0xe40] sm:$0xff]
        %v1054 = vld [vmem:[%s585 + $0xe48] sm:$0xff]
        %v1055 = vld [vmem:[%s585 + $0xe50] sm:$0xff]
        %v1056 = vld [vmem:[%s585 + $0xe58] sm:$0xff]
        %v1057 = vld [vmem:[%s585 + $0xe60] sm:$0xff]
        %v1058 = vld [vmem:[%s585 + $0xe68] sm:$0xff]
        %v1059 = vld [vmem:[%s585 + $0xe70] sm:$0xff]
        %v1060 = vld [vmem:[%s585 + $0xe78] sm:$0xff]
        %v1061 = vld [vmem:[%s585 + $0xe80] sm:$0xff]
        %v1062 = vld [vmem:[%s585 + $0xe88] sm:$0xff]
        %v1063 = vld [vmem:[%s585 + $0xe90] sm:$0xff]
        %v1064 = vld [vmem:[%s585 + $0xe98] sm:$0xff]
        %v1065 = vld [vmem:[%s585 + $0xea0] sm:$0xff]
        %v1066 = vld [vmem:[%s585 + $0xea8] sm:$0xff]
        %v1067 = vld [vmem:[%s585 + $0xeb0] sm:$0xff]
        %v1068 = vld [vmem:[%s585 + $0xeb8] sm:$0xff]
        %v1069 = vld [vmem:[%s585 + $0xec0] sm:$0xff]
        %v1070 = vld [vmem:[%s585 + $0xec8] sm:$0xff]
        %v1071 = vld [vmem:[%s585 + $0xed0] sm:$0xff]
        %v1072 = vld [vmem:[%s585 + $0xed8] sm:$0xff]
        %v1073 = vld [vmem:[%s585 + $0xee0] sm:$0xff]
        %v1074 = vld [vmem:[%s585 + $0xee8] sm:$0xff]
        %v1075 = vld [vmem:[%s585 + $0xef0] sm:$0xff]
        %v1076 = vld [vmem:[%s585 + $0xef8] sm:$0xff]
        %v1077 = vld [vmem:[%s585 + $0xf00] sm:$0xff]
        %v1078 = vld [vmem:[%s585 + $0xf08] sm:$0xff]
        %v1079 = vld [vmem:[%s585 + $0xf10] sm:$0xff]
        %v1080 = vld [vmem:[%s585 + $0xf18] sm:$0xff]
        %v1081 = vld [vmem:[%s585 + $0xf20] sm:$0xff]
        %v1082 = vld [vmem:[%s585 + $0xf28] sm:$0xff]
        %v1083 = vld [vmem:[%s585 + $0xf30] sm:$0xff]
        %v1084 = vld [vmem:[%s585 + $0xf38] sm:$0xff]
        %v1085 = vld [vmem:[%s585 + $0xf40] sm:$0xff]
        %v1086 = vld [vmem:[%s585 + $0xf48] sm:$0xff]
        %v1087 = vld [vmem:[%s585 + $0xf50] sm:$0xff]
        %v1088 = vld [vmem:[%s585 + $0xf58] sm:$0xff]
        %v1089 = vld [vmem:[%s585 + $0xf60] sm:$0xff]
        %v1090 = vld [vmem:[%s585 + $0xf68] sm:$0xff]
        %v1091 = vld [vmem:[%s585 + $0xf70] sm:$0xff]
        %v1092 = vld [vmem:[%s585 + $0xf78] sm:$0xff]
        %v1093 = vld [vmem:[%s585 + $0xf80] sm:$0xff]
        %v1094 = vld [vmem:[%s585 + $0xf88] sm:$0xff]
        %v1095 = vld [vmem:[%s585 + $0xf90] sm:$0xff]
        %v1096 = vld [vmem:[%s585 + $0xf98] sm:$0xff]
        %v1097 = vld [vmem:[%s585 + $0xfa0] sm:$0xff]
        %v1098 = vld [vmem:[%s585 + $0xfa8] sm:$0xff]
        %v1099 = vld [vmem:[%s585 + $0xfb0] sm:$0xff]
        %v1100 = vld [vmem:[%s585 + $0xfb8] sm:$0xff]
        %v1101 = vld [vmem:[%s585 + $0xfc0] sm:$0xff]
        %v1102 = vld [vmem:[%s585 + $0xfc8] sm:$0xff]
        %v1103 = vld [vmem:[%s585 + $0xfd0] sm:$0xff]
        %v1104 = vld [vmem:[%s585 + $0xfd8] sm:$0xff]
        %v1105 = vld [vmem:[%s585 + $0xfe0] sm:$0xff]
        %v1106 = vld [vmem:[%s585 + $0xfe8] sm:$0xff]
        %v1107 = vld [vmem:[%s585 + $0xff0] sm:$0xff]
        %v1108 = vld [vmem:[%s585 + $0xff8] sm:$0xff]
        %v1109 = vld [vmem:[%s585 + $0x1000] sm:$0xff]
        %v1110 = vld [vmem:[%s585 + $0x1008] sm:$0xff]
        %v1111 = vld [vmem:[%s585 + $0x1010] sm:$0xff]
        %v1112 = vld [vmem:[%s585 + $0x1018] sm:$0xff]
        %v1113 = vld [vmem:[%s585 + $0x1020] sm:$0xff]
        %v1114 = vld [vmem:[%s585 + $0x1028] sm:$0xff]
        %v1115 = vld [vmem:[%s585 + $0x1030] sm:$0xff]
        %v1116 = vld [vmem:[%s585 + $0x1038] sm:$0xff]
        %v1117 = vld [vmem:[%s585 + $0x1040] sm:$0xff]
        %v1118 = vld [vmem:[%s585 + $0x1048] sm:$0xff]
        %v1119 = vld [vmem:[%s585 + $0x1050] sm:$0xff]
        %v1120 = vld [vmem:[%s585 + $0x1058] sm:$0xff]
        %v1121 = vld [vmem:[%s585 + $0x1060] sm:$0xff]
        %v1122 = vld [vmem:[%s585 + $0x1068] sm:$0xff]
        %v1123 = vld [vmem:[%s585 + $0x1070] sm:$0xff]
        %v1124 = vld [vmem:[%s585 + $0x1078] sm:$0xff]
        %v1125 = vld [vmem:[%s585 + $0x1080] sm:$0xff]
        %v1126 = vld [vmem:[%s585 + $0x1088] sm:$0xff]
        %v1127 = vld [vmem:[%s585 + $0x1090] sm:$0xff]
        %v1128 = vld [vmem:[%s585 + $0x1098] sm:$0xff]
        %v1129 = vld [vmem:[%s585 + $0x10a0] sm:$0xff]
        %v1130 = vld [vmem:[%s585 + $0x10a8] sm:$0xff]
        %v1131 = vld [vmem:[%s585 + $0x10b0] sm:$0xff]
        %v1132 = vld [vmem:[%s585 + $0x10b8] sm:$0xff]
        %v1133 = vld [vmem:[%s585 + $0x10c0] sm:$0xff]
        %v1134 = vld [vmem:[%s585 + $0x10c8] sm:$0xff]
        %v1135 = vld [vmem:[%s585 + $0x10d0] sm:$0xff]
        %v1136 = vld [vmem:[%s585 + $0x10d8] sm:$0xff]
        %v1137 = vld [vmem:[%s585 + $0x10e0] sm:$0xff]
        %v1138 = vld [vmem:[%s585 + $0x10e8] sm:$0xff]
        %v1139 = vld [vmem:[%s585 + $0x10f0] sm:$0xff]
        %v1140 = vld [vmem:[%s585 + $0x10f8] sm:$0xff]
        %v1141 = vld [vmem:[%s585 + $0x1100] sm:$0xff]
        %v1142 = vld [vmem:[%s585 + $0x1108] sm:$0xff]
        %v1143 = vld [vmem:[%s585 + $0x1110] sm:$0xff]
        %v1144 = vld [vmem:[%s585 + $0x1118] sm:$0xff]
        %v1145 = vld [vmem:[%s585 + $0x1120] sm:$0xff]
        %v1146 = vld [vmem:[%s585 + $0x1128] sm:$0xff]
        %v1147 = vld [vmem:[%s585 + $0x1130] sm:$0xff]
        %v1148 = vld [vmem:[%s585 + $0x1138] sm:$0xff]
        %v1149 = vld [vmem:[%s585 + $0x1140] sm:$0xff]
        %v1150 = vld [vmem:[%s585 + $0x1148] sm:$0xff]
        %v1151 = vld [vmem:[%s585 + $0x1150] sm:$0xff]
        %v1152 = vld [vmem:[%s585 + $0x1158] sm:$0xff]
        %v1153 = vld [vmem:[%s585 + $0x1160] sm:$0xff]
        %v1154 = vld [vmem:[%s585 + $0x1168] sm:$0xff]
        %v1155 = vld [vmem:[%s585 + $0x1170] sm:$0xff]
        %v1156 = vld [vmem:[%s585 + $0x1178] sm:$0xff]
        %v1157 = vld [vmem:[%s585 + $0x1180] sm:$0xff]
        %v1158 = vld [vmem:[%s585 + $0x1188] sm:$0xff]
        %v1159 = vld [vmem:[%s585 + $0x1190] sm:$0xff]
        %v1160 = vld [vmem:[%s585 + $0x1198] sm:$0xff]
        %v1161 = vld [vmem:[%s585 + $0x11a0] sm:$0xff]
        %v1162 = vld [vmem:[%s585 + $0x11a8] sm:$0xff]
        %v1163 = vld [vmem:[%s585 + $0x11b0] sm:$0xff]
        %v1164 = vld [vmem:[%s585 + $0x11b8] sm:$0xff]
        %v1165 = vld [vmem:[%s585 + $0x11c0] sm:$0xff]
        %v1166 = vld [vmem:[%s585 + $0x11c8] sm:$0xff]
        %v1167 = vld [vmem:[%s585 + $0x11d0] sm:$0xff]
        %v1168 = vld [vmem:[%s585 + $0x11d8] sm:$0xff]
        %v1169 = vld [vmem:[%s585 + $0x11e0] sm:$0xff]
        %v1170 = vld [vmem:[%s585 + $0x11e8] sm:$0xff]
        %v1171 = vld [vmem:[%s585 + $0x11f0] sm:$0xff]
        %v1172 = vld [vmem:[%s585 + $0x11f8] sm:$0xff]
        %v1173 = vld [vmem:[%s585 + $0x1200] sm:$0xff]
        %v1174 = vld [vmem:[%s585 + $0x1208] sm:$0xff]
        %v1175 = vld [vmem:[%s585 + $0x1210] sm:$0xff]
        %v1176 = vld [vmem:[%s585 + $0x1218] sm:$0xff]
        %v1177 = vld [vmem:[%s585 + $0x1220] sm:$0xff]
        %v1178 = vld [vmem:[%s585 + $0x1228] sm:$0xff]
        %v1179 = vld [vmem:[%s585 + $0x1230] sm:$0xff]
        %v1180 = vld [vmem:[%s585 + $0x1238] sm:$0xff]
        %v1181 = vld [vmem:[%s585 + $0x1240] sm:$0xff]
        %v1182 = vld [vmem:[%s585 + $0x1248] sm:$0xff]
        %v1183 = vld [vmem:[%s585 + $0x1250] sm:$0xff]
        %v1184 = vld [vmem:[%s585 + $0x1258] sm:$0xff]
        %v1185 = vld [vmem:[%s585 + $0x1260] sm:$0xff]
        %v1186 = vld [vmem:[%s585 + $0x1268] sm:$0xff]
        %v1187 = vld [vmem:[%s585 + $0x1270] sm:$0xff]
        %v1188 = vld [vmem:[%s585 + $0x1278] sm:$0xff]
        %v1189 = vld [vmem:[%s585 + $0x1280] sm:$0xff]
        %v1190 = vld [vmem:[%s585 + $0x1288] sm:$0xff]
        %v1191 = vld [vmem:[%s585 + $0x1290] sm:$0xff]
        %v1192 = vld [vmem:[%s585 + $0x1298] sm:$0xff]
        %v1193 = vld [vmem:[%s585 + $0x12a0] sm:$0xff]
        %v1194 = vld [vmem:[%s585 + $0x12a8] sm:$0xff]
        %v1195 = vld [vmem:[%s585 + $0x12b0] sm:$0xff]
        %v1196 = vld [vmem:[%s585 + $0x12b8] sm:$0xff]
        %v1197 = vld [vmem:[%s585 + $0x12c0] sm:$0xff]
        %v1198 = vld [vmem:[%s585 + $0x12c8] sm:$0xff]
        %v1199 = vld [vmem:[%s585 + $0x12d0] sm:$0xff]
        %v1200 = vld [vmem:[%s585 + $0x12d8] sm:$0xff]
        %v1201 = vld [vmem:[%s585 + $0x12e0] sm:$0xff]
        %v1202 = vld [vmem:[%s585 + $0x12e8] sm:$0xff]
        %v1203 = vld [vmem:[%s585 + $0x12f0] sm:$0xff]
        %v1204 = vld [vmem:[%s585 + $0x12f8] sm:$0xff]
        %v1205 = vld [vmem:[%s585 + $0x1300] sm:$0xff]
        %v1206 = vld [vmem:[%s585 + $0x1308] sm:$0xff]
        %v1207 = vld [vmem:[%s585 + $0x1310] sm:$0xff]
        %v1208 = vld [vmem:[%s585 + $0x1318] sm:$0xff]
        %v1209 = vld [vmem:[%s585 + $0x1320] sm:$0xff]
        %v1210 = vld [vmem:[%s585 + $0x1328] sm:$0xff]
        %v1211 = vld [vmem:[%s585 + $0x1330] sm:$0xff]
        %v1212 = vld [vmem:[%s585 + $0x1338] sm:$0xff]
        %v1213 = vld [vmem:[%s585 + $0x1340] sm:$0xff]
        %v1214 = vld [vmem:[%s585 + $0x1348] sm:$0xff]
        %v1215 = vld [vmem:[%s585 + $0x1350] sm:$0xff]
        %v1216 = vld [vmem:[%s585 + $0x1358] sm:$0xff]
        %v1217 = vld [vmem:[%s585 + $0x1360] sm:$0xff]
        %v1218 = vld [vmem:[%s585 + $0x1368] sm:$0xff]
        %v1219 = vld [vmem:[%s585 + $0x1370] sm:$0xff]
        %v1220 = vld [vmem:[%s585 + $0x1378] sm:$0xff]
        %v1221 = vld [vmem:[%s585 + $0x1380] sm:$0xff]
        %v1222 = vld [vmem:[%s585 + $0x1388] sm:$0xff]
        %v1223 = vld [vmem:[%s585 + $0x1390] sm:$0xff]
        %v1224 = vld [vmem:[%s585 + $0x1398] sm:$0xff]
        %v1225 = vld [vmem:[%s585 + $0x13a0] sm:$0xff]
        %v1226 = vld [vmem:[%s585 + $0x13a8] sm:$0xff]
        %v1227 = vld [vmem:[%s585 + $0x13b0] sm:$0xff]
        %v1228 = vld [vmem:[%s585 + $0x13b8] sm:$0xff]
        %v1229 = vld [vmem:[%s585 + $0x13c0] sm:$0xff]
        %v1230 = vld [vmem:[%s585 + $0x13c8] sm:$0xff]
        %v1231 = vld [vmem:[%s585 + $0x13d0] sm:$0xff]
        %v1232 = vld [vmem:[%s585 + $0x13d8] sm:$0xff]
        %v1233 = vld [vmem:[%s585 + $0x13e0] sm:$0xff]
        %v1234 = vld [vmem:[%s585 + $0x13e8] sm:$0xff]
        %v1235 = vld [vmem:[%s585 + $0x13f0] sm:$0xff]
        %v1236 = vld [vmem:[%s585 + $0x13f8] sm:$0xff]
        %1238 = vst [vmem:[#allocation1] ss:$9 sm:$0xff] %v596
        %v1239 = vld [vmem:[#allocation1] sm:$0xff]
        %v1240 = vld [vmem:[#allocation1 + $0x9] sm:$0xff]
        %v1241 = vld [vmem:[#allocation1 + $0x12] sm:$0xff]
        %v1242 = vld [vmem:[#allocation1 + $0x1b] sm:$0xff]
        %v1243 = vld [vmem:[#allocation1 + $0x24] sm:$0xff]
        %v1889 = vunpack.c.l.b16 %v597
        %v1890 = vunpack.c.h.b16 %v597
        %v1891 = vunpack.c.l.b16 %v598
        %v1892 = vunpack.c.h.b16 %v598
        %v1893 = vunpack.c.l.b16 %v599
        %v1894 = vunpack.c.h.b16 %v599
        %v1895 = vunpack.c.l.b16 %v600
        %v1896 = vunpack.c.h.b16 %v600
        %v1897 = vunpack.c.l.b16 %v601
        %v1898 = vunpack.c.h.b16 %v601
        %v1899 = vunpack.c.l.b16 %v602
        %v1900 = vunpack.c.h.b16 %v602
        %v1901 = vunpack.c.l.b16 %v603
        %v1902 = vunpack.c.h.b16 %v603
        %v1903 = vunpack.c.l.b16 %v604
        %v1904 = vunpack.c.h.b16 %v604
        %v1905 = vunpack.c.l.b16 %v605
        %v1906 = vunpack.c.h.b16 %v605
        %v1907 = vunpack.c.l.b16 %v606
        %v1908 = vunpack.c.h.b16 %v606
        %v1909 = vunpack.c.l.b16 %v607
        %v1910 = vunpack.c.h.b16 %v607
        %v1911 = vunpack.c.l.b16 %v608
        %v1912 = vunpack.c.h.b16 %v608
        %v1913 = vunpack.c.l.b16 %v609
        %v1914 = vunpack.c.h.b16 %v609
        %v1915 = vunpack.c.l.b16 %v610
        %v1916 = vunpack.c.h.b16 %v610
        %v1917 = vunpack.c.l.b16 %v611
        %v1918 = vunpack.c.h.b16 %v611
        %v1919 = vunpack.c.l.b16 %v612
        %v1920 = vunpack.c.h.b16 %v612
        %v1921 = vunpack.c.l.b16 %v613
        %v1922 = vunpack.c.h.b16 %v613
        %v1923 = vunpack.c.l.b16 %v614
        %v1924 = vunpack.c.h.b16 %v614
        %v1925 = vunpack.c.l.b16 %v615
        %v1926 = vunpack.c.h.b16 %v615
        %v1927 = vunpack.c.l.b16 %v616
        %v1928 = vunpack.c.h.b16 %v616
        %v1929 = vunpack.c.l.b16 %v617
        %v1930 = vunpack.c.h.b16 %v617
        %v1931 = vunpack.c.l.b16 %v618
        %v1932 = vunpack.c.h.b16 %v618
        %v1933 = vunpack.c.l.b16 %v619
        %v1934 = vunpack.c.h.b16 %v619
        %v1935 = vunpack.c.l.b16 %v620
        %v1936 = vunpack.c.h.b16 %v620
        %v1937 = vunpack.c.l.b16 %v621
        %v1938 = vunpack.c.h.b16 %v621
        %v1939 = vunpack.c.l.b16 %v622
        %v1940 = vunpack.c.h.b16 %v622
        %v1941 = vunpack.c.l.b16 %v623
        %v1942 = vunpack.c.h.b16 %v623
        %v1943 = vunpack.c.l.b16 %v624
        %v1944 = vunpack.c.h.b16 %v624
        %v1945 = vunpack.c.l.b16 %v625
        %v1946 = vunpack.c.h.b16 %v625
        %v1947 = vunpack.c.l.b16 %v626
        %v1948 = vunpack.c.h.b16 %v626
        %v1949 = vunpack.c.l.b16 %v627
        %v1950 = vunpack.c.h.b16 %v627
        %v1951 = vunpack.c.l.b16 %v628
        %v1952 = vunpack.c.h.b16 %v628
        %v1953 = vunpack.c.l.b16 %v629
        %v1954 = vunpack.c.h.b16 %v629
        %v1955 = vunpack.c.l.b16 %v630
        %v1956 = vunpack.c.h.b16 %v630
        %v1957 = vunpack.c.l.b16 %v631
        %v1958 = vunpack.c.h.b16 %v631
        %v1959 = vunpack.c.l.b16 %v632
        %v1960 = vunpack.c.h.b16 %v632
        %v1961 = vunpack.c.l.b16 %v633
        %v1962 = vunpack.c.h.b16 %v633
        %v1963 = vunpack.c.l.b16 %v634
        %v1964 = vunpack.c.h.b16 %v634
        %v1965 = vunpack.c.l.b16 %v635
        %v1966 = vunpack.c.h.b16 %v635
        %v1967 = vunpack.c.l.b16 %v636
        %v1968 = vunpack.c.h.b16 %v636
        %v1969 = vunpack.c.l.b16 %v637
        %v1970 = vunpack.c.h.b16 %v637
        %v1971 = vunpack.c.l.b16 %v638
        %v1972 = vunpack.c.h.b16 %v638
        %v1973 = vunpack.c.l.b16 %v639
        %v1974 = vunpack.c.h.b16 %v639
        %v1975 = vunpack.c.l.b16 %v640
        %v1976 = vunpack.c.h.b16 %v640
        %v1977 = vunpack.c.l.b16 %v641
        %v1978 = vunpack.c.h.b16 %v641
        %v1979 = vunpack.c.l.b16 %v642
        %v1980 = vunpack.c.h.b16 %v642
        %v1981 = vunpack.c.l.b16 %v643
        %v1982 = vunpack.c.h.b16 %v643
        %v1983 = vunpack.c.l.b16 %v644
        %v1984 = vunpack.c.h.b16 %v644
        %v1985 = vunpack.c.l.b16 %v645
        %v1986 = vunpack.c.h.b16 %v645
        %v1987 = vunpack.c.l.b16 %v646
        %v1988 = vunpack.c.h.b16 %v646
        %v1989 = vunpack.c.l.b16 %v647
        %v1990 = vunpack.c.h.b16 %v647
        %v1991 = vunpack.c.l.b16 %v648
        %v1992 = vunpack.c.h.b16 %v648
        %v1993 = vunpack.c.l.b16 %v649
        %v1994 = vunpack.c.h.b16 %v649
        %v1995 = vunpack.c.l.b16 %v650
        %v1996 = vunpack.c.h.b16 %v650
        %v1997 = vunpack.c.l.b16 %v651
        %v1998 = vunpack.c.h.b16 %v651
        %v1999 = vunpack.c.l.b16 %v652
        %v2000 = vunpack.c.h.b16 %v652
        %v2001 = vunpack.c.l.b16 %v653
        %v2002 = vunpack.c.h.b16 %v653
        %v2003 = vunpack.c.l.b16 %v654
        %v2004 = vunpack.c.h.b16 %v654
        %v2005 = vunpack.c.l.b16 %v655
        %v2006 = vunpack.c.h.b16 %v655
        %v2007 = vunpack.c.l.b16 %v656
        %v2008 = vunpack.c.h.b16 %v656
        %v2009 = vunpack.c.l.b16 %v657
        %v2010 = vunpack.c.h.b16 %v657
        %v2011 = vunpack.c.l.b16 %v658
        %v2012 = vunpack.c.h.b16 %v658
        %v2013 = vunpack.c.l.b16 %v659
        %v2014 = vunpack.c.h.b16 %v659
        %v2015 = vunpack.c.l.b16 %v660
        %v2016 = vunpack.c.h.b16 %v660
        %v2017 = vunpack.c.l.b16 %v661
        %v2018 = vunpack.c.h.b16 %v661
        %v2019 = vunpack.c.l.b16 %v662
        %v2020 = vunpack.c.h.b16 %v662
        %v2021 = vunpack.c.l.b16 %v663
        %v2022 = vunpack.c.h.b16 %v663
        %v2023 = vunpack.c.l.b16 %v664
        %v2024 = vunpack.c.h.b16 %v664
        %v2025 = vunpack.c.l.b16 %v665
        %v2026 = vunpack.c.h.b16 %v665
        %v2027 = vunpack.c.l.b16 %v666
        %v2028 = vunpack.c.h.b16 %v666
        %v2029 = vunpack.c.l.b16 %v667
        %v2030 = vunpack.c.h.b16 %v667
        %v2031 = vunpack.c.l.b16 %v668
        %v2032 = vunpack.c.h.b16 %v668
        %v2033 = vunpack.c.l.b16 %v669
        %v2034 = vunpack.c.h.b16 %v669
        %v2035 = vunpack.c.l.b16 %v670
        %v2036 = vunpack.c.h.b16 %v670
        %v2037 = vunpack.c.l.b16 %v671
        %v2038 = vunpack.c.h.b16 %v671
        %v2039 = vunpack.c.l.b16 %v672
        %v2040 = vunpack.c.h.b16 %v672
        %v2041 = vunpack.c.l.b16 %v673
        %v2042 = vunpack.c.h.b16 %v673
        %v2043 = vunpack.c.l.b16 %v674
        %v2044 = vunpack.c.h.b16 %v674
        %v2045 = vunpack.c.l.b16 %v675
        %v2046 = vunpack.c.h.b16 %v675
        %v2047 = vunpack.c.l.b16 %v676
        %v2048 = vunpack.c.h.b16 %v676
        %v2049 = vunpack.c.l.b16 %v677
        %v2050 = vunpack.c.h.b16 %v677
        %v2051 = vunpack.c.l.b16 %v678
        %v2052 = vunpack.c.h.b16 %v678
        %v2053 = vunpack.c.l.b16 %v679
        %v2054 = vunpack.c.h.b16 %v679
        %v2055 = vunpack.c.l.b16 %v680
        %v2056 = vunpack.c.h.b16 %v680
        %v2057 = vunpack.c.l.b16 %v681
        %v2058 = vunpack.c.h.b16 %v681
        %v2059 = vunpack.c.l.b16 %v682
        %v2060 = vunpack.c.h.b16 %v682
        %v2061 = vunpack.c.l.b16 %v683
        %v2062 = vunpack.c.h.b16 %v683
        %v2063 = vunpack.c.l.b16 %v684
        %v2064 = vunpack.c.h.b16 %v684
        %v2065 = vunpack.c.l.b16 %v685
        %v2066 = vunpack.c.h.b16 %v685
        %v2067 = vunpack.c.l.b16 %v686
        %v2068 = vunpack.c.h.b16 %v686
        %v2069 = vunpack.c.l.b16 %v687
        %v2070 = vunpack.c.h.b16 %v687
        %v2071 = vunpack.c.l.b16 %v688
        %v2072 = vunpack.c.h.b16 %v688
        %v2073 = vunpack.c.l.b16 %v689
        %v2074 = vunpack.c.h.b16 %v689
        %v2075 = vunpack.c.l.b16 %v690
        %v2076 = vunpack.c.h.b16 %v690
        %v2077 = vunpack.c.l.b16 %v691
        %v2078 = vunpack.c.h.b16 %v691
        %v2079 = vunpack.c.l.b16 %v692
        %v2080 = vunpack.c.h.b16 %v692
        %v2081 = vunpack.c.l.b16 %v693
        %v2082 = vunpack.c.h.b16 %v693
        %v2083 = vunpack.c.l.b16 %v694
        %v2084 = vunpack.c.h.b16 %v694
        %v2085 = vunpack.c.l.b16 %v695
        %v2086 = vunpack.c.h.b16 %v695
        %v2087 = vunpack.c.l.b16 %v696
        %v2088 = vunpack.c.h.b16 %v696
        %v2089 = vunpack.c.l.b16 %v697
        %v2090 = vunpack.c.h.b16 %v697
        %v2091 = vunpack.c.l.b16 %v698
        %v2092 = vunpack.c.h.b16 %v698
        %v2093 = vunpack.c.l.b16 %v699
        %v2094 = vunpack.c.h.b16 %v699
        %v2095 = vunpack.c.l.b16 %v700
        %v2096 = vunpack.c.h.b16 %v700
        %v2097 = vunpack.c.l.b16 %v701
        %v2098 = vunpack.c.h.b16 %v701
        %v2099 = vunpack.c.l.b16 %v702
        %v2100 = vunpack.c.h.b16 %v702
        %v2101 = vunpack.c.l.b16 %v703
        %v2102 = vunpack.c.h.b16 %v703
        %v2103 = vunpack.c.l.b16 %v704
        %v2104 = vunpack.c.h.b16 %v704
        %v2105 = vunpack.c.l.b16 %v705
        %v2106 = vunpack.c.h.b16 %v705
        %v2107 = vunpack.c.l.b16 %v706
        %v2108 = vunpack.c.h.b16 %v706
        %v2109 = vunpack.c.l.b16 %v707
        %v2110 = vunpack.c.h.b16 %v707
        %v2111 = vunpack.c.l.b16 %v708
        %v2112 = vunpack.c.h.b16 %v708
        %v2113 = vunpack.c.l.b16 %v709
        %v2114 = vunpack.c.h.b16 %v709
        %v2115 = vunpack.c.l.b16 %v710
        %v2116 = vunpack.c.h.b16 %v710
        %v2117 = vunpack.c.l.b16 %v711
        %v2118 = vunpack.c.h.b16 %v711
        %v2119 = vunpack.c.l.b16 %v712
        %v2120 = vunpack.c.h.b16 %v712
        %v2121 = vunpack.c.l.b16 %v713
        %v2122 = vunpack.c.h.b16 %v713
        %v2123 = vunpack.c.l.b16 %v714
        %v2124 = vunpack.c.h.b16 %v714
        %v2125 = vunpack.c.l.b16 %v715
        %v2126 = vunpack.c.h.b16 %v715
        %v2127 = vunpack.c.l.b16 %v716
        %v2128 = vunpack.c.h.b16 %v716
        %v2129 = vunpack.c.l.b16 %v717
        %v2130 = vunpack.c.h.b16 %v717
        %v2131 = vunpack.c.l.b16 %v718
        %v2132 = vunpack.c.h.b16 %v718
        %v2133 = vunpack.c.l.b16 %v719
        %v2134 = vunpack.c.h.b16 %v719
        %v2135 = vunpack.c.l.b16 %v720
        %v2136 = vunpack.c.h.b16 %v720
        %v2137 = vunpack.c.l.b16 %v721
        %v2138 = vunpack.c.h.b16 %v721
        %v2139 = vunpack.c.l.b16 %v722
        %v2140 = vunpack.c.h.b16 %v722
        %v2141 = vunpack.c.l.b16 %v723
        %v2142 = vunpack.c.h.b16 %v723
        %v2143 = vunpack.c.l.b16 %v724
        %v2144 = vunpack.c.h.b16 %v724
        %v2145 = vunpack.c.l.b16 %v725
        %v2146 = vunpack.c.h.b16 %v725
        %v2147 = vunpack.c.l.b16 %v726
        %v2148 = vunpack.c.h.b16 %v726
        %v2149 = vunpack.c.l.b16 %v727
        %v2150 = vunpack.c.h.b16 %v727
        %v2151 = vunpack.c.l.b16 %v728
        %v2152 = vunpack.c.h.b16 %v728
        %v2153 = vunpack.c.l.b16 %v729
        %v2154 = vunpack.c.h.b16 %v729
        %v2155 = vunpack.c.l.b16 %v730
        %v2156 = vunpack.c.h.b16 %v730
        %v2157 = vunpack.c.l.b16 %v731
        %v2158 = vunpack.c.h.b16 %v731
        %v2159 = vunpack.c.l.b16 %v732
        %v2160 = vunpack.c.h.b16 %v732
        %v2161 = vunpack.c.l.b16 %v733
        %v2162 = vunpack.c.h.b16 %v733
        %v2163 = vunpack.c.l.b16 %v734
        %v2164 = vunpack.c.h.b16 %v734
        %v2165 = vunpack.c.l.b16 %v735
        %v2166 = vunpack.c.h.b16 %v735
        %v2167 = vunpack.c.l.b16 %v736
        %v2168 = vunpack.c.h.b16 %v736
        %v2169 = vunpack.c.l.b16 %v737
        %v2170 = vunpack.c.h.b16 %v737
        %v2171 = vunpack.c.l.b16 %v738
        %v2172 = vunpack.c.h.b16 %v738
        %v2173 = vunpack.c.l.b16 %v739
        %v2174 = vunpack.c.h.b16 %v739
        %v2175 = vunpack.c.l.b16 %v740
        %v2176 = vunpack.c.h.b16 %v740
        %v2177 = vunpack.c.l.b16 %v741
        %v2178 = vunpack.c.h.b16 %v741
        %v2179 = vunpack.c.l.b16 %v742
        %v2180 = vunpack.c.h.b16 %v742
        %v2181 = vunpack.c.l.b16 %v743
        %v2182 = vunpack.c.h.b16 %v743
        %v2183 = vunpack.c.l.b16 %v744
        %v2184 = vunpack.c.h.b16 %v744
        %v2185 = vunpack.c.l.b16 %v745
        %v2186 = vunpack.c.h.b16 %v745
        %v2187 = vunpack.c.l.b16 %v746
        %v2188 = vunpack.c.h.b16 %v746
        %v2189 = vunpack.c.l.b16 %v747
        %v2190 = vunpack.c.h.b16 %v747
        %v2191 = vunpack.c.l.b16 %v748
        %v2192 = vunpack.c.h.b16 %v748
        %v2193 = vunpack.c.l.b16 %v749
        %v2194 = vunpack.c.h.b16 %v749
        %v2195 = vunpack.c.l.b16 %v750
        %v2196 = vunpack.c.h.b16 %v750
        %v2197 = vunpack.c.l.b16 %v751
        %v2198 = vunpack.c.h.b16 %v751
        %v2199 = vunpack.c.l.b16 %v752
        %v2200 = vunpack.c.h.b16 %v752
        %v2201 = vunpack.c.l.b16 %v753
        %v2202 = vunpack.c.h.b16 %v753
        %v2203 = vunpack.c.l.b16 %v754
        %v2204 = vunpack.c.h.b16 %v754
        %v2205 = vunpack.c.l.b16 %v755
        %v2206 = vunpack.c.h.b16 %v755
        %v2207 = vunpack.c.l.b16 %v756
        %v2208 = vunpack.c.h.b16 %v756
        %v2209 = vunpack.c.l.b16 %v757
        %v2210 = vunpack.c.h.b16 %v757
        %v2211 = vunpack.c.l.b16 %v758
        %v2212 = vunpack.c.h.b16 %v758
        %v2213 = vunpack.c.l.b16 %v759
        %v2214 = vunpack.c.h.b16 %v759
        %v2215 = vunpack.c.l.b16 %v760
        %v2216 = vunpack.c.h.b16 %v760
        %v2217 = vunpack.c.l.b16 %v761
        %v2218 = vunpack.c.h.b16 %v761
        %v2219 = vunpack.c.l.b16 %v762
        %v2220 = vunpack.c.h.b16 %v762
        %v2221 = vunpack.c.l.b16 %v763
        %v2222 = vunpack.c.h.b16 %v763
        %v2223 = vunpack.c.l.b16 %v764
        %v2224 = vunpack.c.h.b16 %v764
        %v2225 = vunpack.c.l.b16 %v765
        %v2226 = vunpack.c.h.b16 %v765
        %v2227 = vunpack.c.l.b16 %v766
        %v2228 = vunpack.c.h.b16 %v766
        %v2229 = vunpack.c.l.b16 %v767
        %v2230 = vunpack.c.h.b16 %v767
        %v2231 = vunpack.c.l.b16 %v768
        %v2232 = vunpack.c.h.b16 %v768
        %v2233 = vunpack.c.l.b16 %v769
        %v2234 = vunpack.c.h.b16 %v769
        %v2235 = vunpack.c.l.b16 %v770
        %v2236 = vunpack.c.h.b16 %v770
        %v2237 = vunpack.c.l.b16 %v771
        %v2238 = vunpack.c.h.b16 %v771
        %v2239 = vunpack.c.l.b16 %v772
        %v2240 = vunpack.c.h.b16 %v772
        %v2241 = vunpack.c.l.b16 %v773
        %v2242 = vunpack.c.h.b16 %v773
        %v2243 = vunpack.c.l.b16 %v774
        %v2244 = vunpack.c.h.b16 %v774
        %v2245 = vunpack.c.l.b16 %v775
        %v2246 = vunpack.c.h.b16 %v775
        %v2247 = vunpack.c.l.b16 %v776
        %v2248 = vunpack.c.h.b16 %v776
        %v2249 = vunpack.c.l.b16 %v777
        %v2250 = vunpack.c.h.b16 %v777
        %v2251 = vunpack.c.l.b16 %v778
        %v2252 = vunpack.c.h.b16 %v778
        %v2253 = vunpack.c.l.b16 %v779
        %v2254 = vunpack.c.h.b16 %v779
        %v2255 = vunpack.c.l.b16 %v780
        %v2256 = vunpack.c.h.b16 %v780
        %v2257 = vunpack.c.l.b16 %v781
        %v2258 = vunpack.c.h.b16 %v781
        %v2259 = vunpack.c.l.b16 %v782
        %v2260 = vunpack.c.h.b16 %v782
        %v2261 = vunpack.c.l.b16 %v783
        %v2262 = vunpack.c.h.b16 %v783
        %v2263 = vunpack.c.l.b16 %v784
        %v2264 = vunpack.c.h.b16 %v784
        %v2265 = vunpack.c.l.b16 %v785
        %v2266 = vunpack.c.h.b16 %v785
        %v2267 = vunpack.c.l.b16 %v786
        %v2268 = vunpack.c.h.b16 %v786
        %v2269 = vunpack.c.l.b16 %v787
        %v2270 = vunpack.c.h.b16 %v787
        %v2271 = vunpack.c.l.b16 %v788
        %v2272 = vunpack.c.h.b16 %v788
        %v2273 = vunpack.c.l.b16 %v789
        %v2274 = vunpack.c.h.b16 %v789
        %v2275 = vunpack.c.l.b16 %v790
        %v2276 = vunpack.c.h.b16 %v790
        %v2277 = vunpack.c.l.b16 %v791
        %v2278 = vunpack.c.h.b16 %v791
        %v2279 = vunpack.c.l.b16 %v792
        %v2280 = vunpack.c.h.b16 %v792
        %v2281 = vunpack.c.l.b16 %v793
        %v2282 = vunpack.c.h.b16 %v793
        %v2283 = vunpack.c.l.b16 %v794
        %v2284 = vunpack.c.h.b16 %v794
        %v2285 = vunpack.c.l.b16 %v795
        %v2286 = vunpack.c.h.b16 %v795
        %v2287 = vunpack.c.l.b16 %v796
        %v2288 = vunpack.c.h.b16 %v796
        %v2289 = vunpack.c.l.b16 %v797
        %v2290 = vunpack.c.h.b16 %v797
        %v2291 = vunpack.c.l.b16 %v798
        %v2292 = vunpack.c.h.b16 %v798
        %v2293 = vunpack.c.l.b16 %v799
        %v2294 = vunpack.c.h.b16 %v799
        %v2295 = vunpack.c.l.b16 %v800
        %v2296 = vunpack.c.h.b16 %v800
        %v2297 = vunpack.c.l.b16 %v801
        %v2298 = vunpack.c.h.b16 %v801
        %v2299 = vunpack.c.l.b16 %v802
        %v2300 = vunpack.c.h.b16 %v802
        %v2301 = vunpack.c.l.b16 %v803
        %v2302 = vunpack.c.h.b16 %v803
        %v2303 = vunpack.c.l.b16 %v804
        %v2304 = vunpack.c.h.b16 %v804
        %v2305 = vunpack.c.l.b16 %v805
        %v2306 = vunpack.c.h.b16 %v805
        %v2307 = vunpack.c.l.b16 %v806
        %v2308 = vunpack.c.h.b16 %v806
        %v2309 = vunpack.c.l.b16 %v807
        %v2310 = vunpack.c.h.b16 %v807
        %v2311 = vunpack.c.l.b16 %v808
        %v2312 = vunpack.c.h.b16 %v808
        %v2313 = vunpack.c.l.b16 %v809
        %v2314 = vunpack.c.h.b16 %v809
        %v2315 = vunpack.c.l.b16 %v810
        %v2316 = vunpack.c.h.b16 %v810
        %v2317 = vunpack.c.l.b16 %v811
        %v2318 = vunpack.c.h.b16 %v811
        %v2319 = vunpack.c.l.b16 %v812
        %v2320 = vunpack.c.h.b16 %v812
        %v2321 = vunpack.c.l.b16 %v813
        %v2322 = vunpack.c.h.b16 %v813
        %v2323 = vunpack.c.l.b16 %v814
        %v2324 = vunpack.c.h.b16 %v814
        %v2325 = vunpack.c.l.b16 %v815
        %v2326 = vunpack.c.h.b16 %v815
        %v2327 = vunpack.c.l.b16 %v816
        %v2328 = vunpack.c.h.b16 %v816
        %v2329 = vunpack.c.l.b16 %v817
        %v2330 = vunpack.c.h.b16 %v817
        %v2331 = vunpack.c.l.b16 %v818
        %v2332 = vunpack.c.h.b16 %v818
        %v2333 = vunpack.c.l.b16 %v819
        %v2334 = vunpack.c.h.b16 %v819
        %v2335 = vunpack.c.l.b16 %v820
        %v2336 = vunpack.c.h.b16 %v820
        %v2337 = vunpack.c.l.b16 %v821
        %v2338 = vunpack.c.h.b16 %v821
        %v2339 = vunpack.c.l.b16 %v822
        %v2340 = vunpack.c.h.b16 %v822
        %v2341 = vunpack.c.l.b16 %v823
        %v2342 = vunpack.c.h.b16 %v823
        %v2343 = vunpack.c.l.b16 %v824
        %v2344 = vunpack.c.h.b16 %v824
        %v2345 = vunpack.c.l.b16 %v825
        %v2346 = vunpack.c.h.b16 %v825
        %v2347 = vunpack.c.l.b16 %v826
        %v2348 = vunpack.c.h.b16 %v826
        %v2349 = vunpack.c.l.b16 %v827
        %v2350 = vunpack.c.h.b16 %v827
        %v2351 = vunpack.c.l.b16 %v828
        %v2352 = vunpack.c.h.b16 %v828
        %v2353 = vunpack.c.l.b16 %v829
        %v2354 = vunpack.c.h.b16 %v829
        %v2355 = vunpack.c.l.b16 %v830
        %v2356 = vunpack.c.h.b16 %v830
        %v2357 = vunpack.c.l.b16 %v831
        %v2358 = vunpack.c.h.b16 %v831
        %v2359 = vunpack.c.l.b16 %v832
        %v2360 = vunpack.c.h.b16 %v832
        %v2361 = vunpack.c.l.b16 %v833
        %v2362 = vunpack.c.h.b16 %v833
        %v2363 = vunpack.c.l.b16 %v834
        %v2364 = vunpack.c.h.b16 %v834
        %v2365 = vunpack.c.l.b16 %v835
        %v2366 = vunpack.c.h.b16 %v835
        %v2367 = vunpack.c.l.b16 %v836
        %v2368 = vunpack.c.h.b16 %v836
        %v2369 = vunpack.c.l.b16 %v837
        %v2370 = vunpack.c.h.b16 %v837
        %v2371 = vunpack.c.l.b16 %v838
        %v2372 = vunpack.c.h.b16 %v838
        %v2373 = vunpack.c.l.b16 %v839
        %v2374 = vunpack.c.h.b16 %v839
        %v2375 = vunpack.c.l.b16 %v840
        %v2376 = vunpack.c.h.b16 %v840
        %v2377 = vunpack.c.l.b16 %v841
        %v2378 = vunpack.c.h.b16 %v841
        %v2379 = vunpack.c.l.b16 %v842
        %v2380 = vunpack.c.h.b16 %v842
        %v2381 = vunpack.c.l.b16 %v843
        %v2382 = vunpack.c.h.b16 %v843
        %v2383 = vunpack.c.l.b16 %v844
        %v2384 = vunpack.c.h.b16 %v844
        %v2385 = vunpack.c.l.b16 %v845
        %v2386 = vunpack.c.h.b16 %v845
        %v2387 = vunpack.c.l.b16 %v846
        %v2388 = vunpack.c.h.b16 %v846
        %v2389 = vunpack.c.l.b16 %v847
        %v2390 = vunpack.c.h.b16 %v847
        %v2391 = vunpack.c.l.b16 %v848
        %v2392 = vunpack.c.h.b16 %v848
        %v2393 = vunpack.c.l.b16 %v849
        %v2394 = vunpack.c.h.b16 %v849
        %v2395 = vunpack.c.l.b16 %v850
        %v2396 = vunpack.c.h.b16 %v850
        %v2397 = vunpack.c.l.b16 %v851
        %v2398 = vunpack.c.h.b16 %v851
        %v2399 = vunpack.c.l.b16 %v852
        %v2400 = vunpack.c.h.b16 %v852
        %v2401 = vunpack.c.l.b16 %v853
        %v2402 = vunpack.c.h.b16 %v853
        %v2403 = vunpack.c.l.b16 %v854
        %v2404 = vunpack.c.h.b16 %v854
        %v2405 = vunpack.c.l.b16 %v855
        %v2406 = vunpack.c.h.b16 %v855
        %v2407 = vunpack.c.l.b16 %v856
        %v2408 = vunpack.c.h.b16 %v856
        %v2409 = vunpack.c.l.b16 %v857
        %v2410 = vunpack.c.h.b16 %v857
        %v2411 = vunpack.c.l.b16 %v858
        %v2412 = vunpack.c.h.b16 %v858
        %v2413 = vunpack.c.l.b16 %v859
        %v2414 = vunpack.c.h.b16 %v859
        %v2415 = vunpack.c.l.b16 %v860
        %v2416 = vunpack.c.h.b16 %v860
        %v2417 = vunpack.c.l.b16 %v861
        %v2418 = vunpack.c.h.b16 %v861
        %v2419 = vunpack.c.l.b16 %v862
        %v2420 = vunpack.c.h.b16 %v862
        %v2421 = vunpack.c.l.b16 %v863
        %v2422 = vunpack.c.h.b16 %v863
        %v2423 = vunpack.c.l.b16 %v864
        %v2424 = vunpack.c.h.b16 %v864
        %v2425 = vunpack.c.l.b16 %v865
        %v2426 = vunpack.c.h.b16 %v865
        %v2427 = vunpack.c.l.b16 %v866
        %v2428 = vunpack.c.h.b16 %v866
        %v2429 = vunpack.c.l.b16 %v867
        %v2430 = vunpack.c.h.b16 %v867
        %v2431 = vunpack.c.l.b16 %v868
        %v2432 = vunpack.c.h.b16 %v868
        %v2433 = vunpack.c.l.b16 %v869
        %v2434 = vunpack.c.h.b16 %v869
        %v2435 = vunpack.c.l.b16 %v870
        %v2436 = vunpack.c.h.b16 %v870
        %v2437 = vunpack.c.l.b16 %v871
        %v2438 = vunpack.c.h.b16 %v871
        %v2439 = vunpack.c.l.b16 %v872
        %v2440 = vunpack.c.h.b16 %v872
        %v2441 = vunpack.c.l.b16 %v873
        %v2442 = vunpack.c.h.b16 %v873
        %v2443 = vunpack.c.l.b16 %v874
        %v2444 = vunpack.c.h.b16 %v874
        %v2445 = vunpack.c.l.b16 %v875
        %v2446 = vunpack.c.h.b16 %v875
        %v2447 = vunpack.c.l.b16 %v876
        %v2448 = vunpack.c.h.b16 %v876
        %v2449 = vunpack.c.l.b16 %v877
        %v2450 = vunpack.c.h.b16 %v877
        %v2451 = vunpack.c.l.b16 %v878
        %v2452 = vunpack.c.h.b16 %v878
        %v2453 = vunpack.c.l.b16 %v879
        %v2454 = vunpack.c.h.b16 %v879
        %v2455 = vunpack.c.l.b16 %v880
        %v2456 = vunpack.c.h.b16 %v880
        %v2457 = vunpack.c.l.b16 %v881
        %v2458 = vunpack.c.h.b16 %v881
        %v2459 = vunpack.c.l.b16 %v882
        %v2460 = vunpack.c.h.b16 %v882
        %v2461 = vunpack.c.l.b16 %v883
        %v2462 = vunpack.c.h.b16 %v883
        %v2463 = vunpack.c.l.b16 %v884
        %v2464 = vunpack.c.h.b16 %v884
        %v2465 = vunpack.c.l.b16 %v885
        %v2466 = vunpack.c.h.b16 %v885
        %v2467 = vunpack.c.l.b16 %v886
        %v2468 = vunpack.c.h.b16 %v886
        %v2469 = vunpack.c.l.b16 %v887
        %v2470 = vunpack.c.h.b16 %v887
        %v2471 = vunpack.c.l.b16 %v888
        %v2472 = vunpack.c.h.b16 %v888
        %v2473 = vunpack.c.l.b16 %v889
        %v2474 = vunpack.c.h.b16 %v889
        %v2475 = vunpack.c.l.b16 %v890
        %v2476 = vunpack.c.h.b16 %v890
        %v2477 = vunpack.c.l.b16 %v891
        %v2478 = vunpack.c.h.b16 %v891
        %v2479 = vunpack.c.l.b16 %v892
        %v2480 = vunpack.c.h.b16 %v892
        %v2481 = vunpack.c.l.b16 %v893
        %v2482 = vunpack.c.h.b16 %v893
        %v2483 = vunpack.c.l.b16 %v894
        %v2484 = vunpack.c.h.b16 %v894
        %v2485 = vunpack.c.l.b16 %v895
        %v2486 = vunpack.c.h.b16 %v895
        %v2487 = vunpack.c.l.b16 %v896
        %v2488 = vunpack.c.h.b16 %v896
        %v2489 = vunpack.c.l.b16 %v897
        %v2490 = vunpack.c.h.b16 %v897
        %v2491 = vunpack.c.l.b16 %v898
        %v2492 = vunpack.c.h.b16 %v898
        %v2493 = vunpack.c.l.b16 %v899
        %v2494 = vunpack.c.h.b16 %v899
        %v2495 = vunpack.c.l.b16 %v900
        %v2496 = vunpack.c.h.b16 %v900
        %v2497 = vunpack.c.l.b16 %v901
        %v2498 = vunpack.c.h.b16 %v901
        %v2499 = vunpack.c.l.b16 %v902
        %v2500 = vunpack.c.h.b16 %v902
        %v2501 = vunpack.c.l.b16 %v903
        %v2502 = vunpack.c.h.b16 %v903
        %v2503 = vunpack.c.l.b16 %v904
        %v2504 = vunpack.c.h.b16 %v904
        %v2505 = vunpack.c.l.b16 %v905
        %v2506 = vunpack.c.h.b16 %v905
        %v2507 = vunpack.c.l.b16 %v906
        %v2508 = vunpack.c.h.b16 %v906
        %v2509 = vunpack.c.l.b16 %v907
        %v2510 = vunpack.c.h.b16 %v907
        %v2511 = vunpack.c.l.b16 %v908
        %v2512 = vunpack.c.h.b16 %v908
        %v2513 = vunpack.c.l.b16 %v909
        %v2514 = vunpack.c.h.b16 %v909
        %v2515 = vunpack.c.l.b16 %v910
        %v2516 = vunpack.c.h.b16 %v910
        %v2517 = vunpack.c.l.b16 %v911
        %v2518 = vunpack.c.h.b16 %v911
        %v2519 = vunpack.c.l.b16 %v912
        %v2520 = vunpack.c.h.b16 %v912
        %v2521 = vunpack.c.l.b16 %v913
        %v2522 = vunpack.c.h.b16 %v913
        %v2523 = vunpack.c.l.b16 %v914
        %v2524 = vunpack.c.h.b16 %v914
        %v2525 = vunpack.c.l.b16 %v915
        %v2526 = vunpack.c.h.b16 %v915
        %v2527 = vunpack.c.l.b16 %v916
        %v2528 = vunpack.c.h.b16 %v916
        %v2529 = vunpack.c.l.b16 %v917
        %v2530 = vunpack.c.h.b16 %v917
        %v2531 = vunpack.c.l.b16 %v918
        %v2532 = vunpack.c.h.b16 %v918
        %v2533 = vunpack.c.l.b16 %v919
        %v2534 = vunpack.c.h.b16 %v919
        %v2535 = vunpack.c.l.b16 %v920
        %v2536 = vunpack.c.h.b16 %v920
        %v2537 = vunpack.c.l.b16 %v921
        %v2538 = vunpack.c.h.b16 %v921
        %v2539 = vunpack.c.l.b16 %v922
        %v2540 = vunpack.c.h.b16 %v922
        %v2541 = vunpack.c.l.b16 %v923
        %v2542 = vunpack.c.h.b16 %v923
        %v2543 = vunpack.c.l.b16 %v924
        %v2544 = vunpack.c.h.b16 %v924
        %v2545 = vunpack.c.l.b16 %v925
        %v2546 = vunpack.c.h.b16 %v925
        %v2547 = vunpack.c.l.b16 %v926
        %v2548 = vunpack.c.h.b16 %v926
        %v2549 = vunpack.c.l.b16 %v927
        %v2550 = vunpack.c.h.b16 %v927
        %v2551 = vunpack.c.l.b16 %v928
        %v2552 = vunpack.c.h.b16 %v928
        %v2553 = vunpack.c.l.b16 %v929
        %v2554 = vunpack.c.h.b16 %v929
        %v2555 = vunpack.c.l.b16 %v930
        %v2556 = vunpack.c.h.b16 %v930
        %v2557 = vunpack.c.l.b16 %v931
        %v2558 = vunpack.c.h.b16 %v931
        %v2559 = vunpack.c.l.b16 %v932
        %v2560 = vunpack.c.h.b16 %v932
        %v2561 = vunpack.c.l.b16 %v933
        %v2562 = vunpack.c.h.b16 %v933
        %v2563 = vunpack.c.l.b16 %v934
        %v2564 = vunpack.c.h.b16 %v934
        %v2565 = vunpack.c.l.b16 %v935
        %v2566 = vunpack.c.h.b16 %v935
        %v2567 = vunpack.c.l.b16 %v936
        %v2568 = vunpack.c.h.b16 %v936
        %v2569 = vunpack.c.l.b16 %v937
        %v2570 = vunpack.c.h.b16 %v937
        %v2571 = vunpack.c.l.b16 %v938
        %v2572 = vunpack.c.h.b16 %v938
        %v2573 = vunpack.c.l.b16 %v939
        %v2574 = vunpack.c.h.b16 %v939
        %v2575 = vunpack.c.l.b16 %v940
        %v2576 = vunpack.c.h.b16 %v940
        %v2577 = vunpack.c.l.b16 %v941
        %v2578 = vunpack.c.h.b16 %v941
        %v2579 = vunpack.c.l.b16 %v942
        %v2580 = vunpack.c.h.b16 %v942
        %v2581 = vunpack.c.l.b16 %v943
        %v2582 = vunpack.c.h.b16 %v943
        %v2583 = vunpack.c.l.b16 %v944
        %v2584 = vunpack.c.h.b16 %v944
        %v2585 = vunpack.c.l.b16 %v945
        %v2586 = vunpack.c.h.b16 %v945
        %v2587 = vunpack.c.l.b16 %v946
        %v2588 = vunpack.c.h.b16 %v946
        %v2589 = vunpack.c.l.b16 %v947
        %v2590 = vunpack.c.h.b16 %v947
        %v2591 = vunpack.c.l.b16 %v948
        %v2592 = vunpack.c.h.b16 %v948
        %v2593 = vunpack.c.l.b16 %v949
        %v2594 = vunpack.c.h.b16 %v949
        %v2595 = vunpack.c.l.b16 %v950
        %v2596 = vunpack.c.h.b16 %v950
        %v2597 = vunpack.c.l.b16 %v951
        %v2598 = vunpack.c.h.b16 %v951
        %v2599 = vunpack.c.l.b16 %v952
        %v2600 = vunpack.c.h.b16 %v952
        %v2601 = vunpack.c.l.b16 %v953
        %v2602 = vunpack.c.h.b16 %v953
        %v2603 = vunpack.c.l.b16 %v954
        %v2604 = vunpack.c.h.b16 %v954
        %v2605 = vunpack.c.l.b16 %v955
        %v2606 = vunpack.c.h.b16 %v955
        %v2607 = vunpack.c.l.b16 %v956
        %v2608 = vunpack.c.h.b16 %v956
        %v2609 = vunpack.c.l.b16 %v957
        %v2610 = vunpack.c.h.b16 %v957
        %v2611 = vunpack.c.l.b16 %v958
        %v2612 = vunpack.c.h.b16 %v958
        %v2613 = vunpack.c.l.b16 %v959
        %v2614 = vunpack.c.h.b16 %v959
        %v2615 = vunpack.c.l.b16 %v960
        %v2616 = vunpack.c.h.b16 %v960
        %v2617 = vunpack.c.l.b16 %v961
        %v2618 = vunpack.c.h.b16 %v961
        %v2619 = vunpack.c.l.b16 %v962
        %v2620 = vunpack.c.h.b16 %v962
        %v2621 = vunpack.c.l.b16 %v963
        %v2622 = vunpack.c.h.b16 %v963
        %v2623 = vunpack.c.l.b16 %v964
        %v2624 = vunpack.c.h.b16 %v964
        %v2625 = vunpack.c.l.b16 %v965
        %v2626 = vunpack.c.h.b16 %v965
        %v2627 = vunpack.c.l.b16 %v966
        %v2628 = vunpack.c.h.b16 %v966
        %v2629 = vunpack.c.l.b16 %v967
        %v2630 = vunpack.c.h.b16 %v967
        %v2631 = vunpack.c.l.b16 %v968
        %v2632 = vunpack.c.h.b16 %v968
        %v2633 = vunpack.c.l.b16 %v969
        %v2634 = vunpack.c.h.b16 %v969
        %v2635 = vunpack.c.l.b16 %v970
        %v2636 = vunpack.c.h.b16 %v970
        %v2637 = vunpack.c.l.b16 %v971
        %v2638 = vunpack.c.h.b16 %v971
        %v2639 = vunpack.c.l.b16 %v972
        %v2640 = vunpack.c.h.b16 %v972
        %v2641 = vunpack.c.l.b16 %v973
        %v2642 = vunpack.c.h.b16 %v973
        %v2643 = vunpack.c.l.b16 %v974
        %v2644 = vunpack.c.h.b16 %v974
        %v2645 = vunpack.c.l.b16 %v975
        %v2646 = vunpack.c.h.b16 %v975
        %v2647 = vunpack.c.l.b16 %v976
        %v2648 = vunpack.c.h.b16 %v976
        %v2649 = vunpack.c.l.b16 %v977
        %v2650 = vunpack.c.h.b16 %v977
        %v2651 = vunpack.c.l.b16 %v978
        %v2652 = vunpack.c.h.b16 %v978
        %v2653 = vunpack.c.l.b16 %v979
        %v2654 = vunpack.c.h.b16 %v979
        %v2655 = vunpack.c.l.b16 %v980
        %v2656 = vunpack.c.h.b16 %v980
        %v2657 = vunpack.c.l.b16 %v981
        %v2658 = vunpack.c.h.b16 %v981
        %v2659 = vunpack.c.l.b16 %v982
        %v2660 = vunpack.c.h.b16 %v982
        %v2661 = vunpack.c.l.b16 %v983
        %v2662 = vunpack.c.h.b16 %v983
        %v2663 = vunpack.c.l.b16 %v984
        %v2664 = vunpack.c.h.b16 %v984
        %v2665 = vunpack.c.l.b16 %v985
        %v2666 = vunpack.c.h.b16 %v985
        %v2667 = vunpack.c.l.b16 %v986
        %v2668 = vunpack.c.h.b16 %v986
        %v2669 = vunpack.c.l.b16 %v987
        %v2670 = vunpack.c.h.b16 %v987
        %v2671 = vunpack.c.l.b16 %v988
        %v2672 = vunpack.c.h.b16 %v988
        %v2673 = vunpack.c.l.b16 %v989
        %v2674 = vunpack.c.h.b16 %v989
        %v2675 = vunpack.c.l.b16 %v990
        %v2676 = vunpack.c.h.b16 %v990
        %v2677 = vunpack.c.l.b16 %v991
        %v2678 = vunpack.c.h.b16 %v991
        %v2679 = vunpack.c.l.b16 %v992
        %v2680 = vunpack.c.h.b16 %v992
        %v2681 = vunpack.c.l.b16 %v993
        %v2682 = vunpack.c.h.b16 %v993
        %v2683 = vunpack.c.l.b16 %v994
        %v2684 = vunpack.c.h.b16 %v994
        %v2685 = vunpack.c.l.b16 %v995
        %v2686 = vunpack.c.h.b16 %v995
        %v2687 = vunpack.c.l.b16 %v996
        %v2688 = vunpack.c.h.b16 %v996
        %v2689 = vunpack.c.l.b16 %v997
        %v2690 = vunpack.c.h.b16 %v997
        %v2691 = vunpack.c.l.b16 %v998
        %v2692 = vunpack.c.h.b16 %v998
        %v2693 = vunpack.c.l.b16 %v999
        %v2694 = vunpack.c.h.b16 %v999
        %v2695 = vunpack.c.l.b16 %v1000
        %v2696 = vunpack.c.h.b16 %v1000
        %v2697 = vunpack.c.l.b16 %v1001
        %v2698 = vunpack.c.h.b16 %v1001
        %v2699 = vunpack.c.l.b16 %v1002
        %v2700 = vunpack.c.h.b16 %v1002
        %v2701 = vunpack.c.l.b16 %v1003
        %v2702 = vunpack.c.h.b16 %v1003
        %v2703 = vunpack.c.l.b16 %v1004
        %v2704 = vunpack.c.h.b16 %v1004
        %v2705 = vunpack.c.l.b16 %v1005
        %v2706 = vunpack.c.h.b16 %v1005
        %v2707 = vunpack.c.l.b16 %v1006
        %v2708 = vunpack.c.h.b16 %v1006
        %v2709 = vunpack.c.l.b16 %v1007
        %v2710 = vunpack.c.h.b16 %v1007
        %v2711 = vunpack.c.l.b16 %v1008
        %v2712 = vunpack.c.h.b16 %v1008
        %v2713 = vunpack.c.l.b16 %v1009
        %v2714 = vunpack.c.h.b16 %v1009
        %v2715 = vunpack.c.l.b16 %v1010
        %v2716 = vunpack.c.h.b16 %v1010
        %v2717 = vunpack.c.l.b16 %v1011
        %v2718 = vunpack.c.h.b16 %v1011
        %v2719 = vunpack.c.l.b16 %v1012
        %v2720 = vunpack.c.h.b16 %v1012
        %v2721 = vunpack.c.l.b16 %v1013
        %v2722 = vunpack.c.h.b16 %v1013
        %v2723 = vunpack.c.l.b16 %v1014
        %v2724 = vunpack.c.h.b16 %v1014
        %v2725 = vunpack.c.l.b16 %v1015
        %v2726 = vunpack.c.h.b16 %v1015
        %v2727 = vunpack.c.l.b16 %v1016
        %v2728 = vunpack.c.h.b16 %v1016
        %v2729 = vunpack.c.l.b16 %v1017
        %v2730 = vunpack.c.h.b16 %v1017
        %v2731 = vunpack.c.l.b16 %v1018
        %v2732 = vunpack.c.h.b16 %v1018
        %v2733 = vunpack.c.l.b16 %v1019
        %v2734 = vunpack.c.h.b16 %v1019
        %v2735 = vunpack.c.l.b16 %v1020
        %v2736 = vunpack.c.h.b16 %v1020
        %v2737 = vunpack.c.l.b16 %v1021
        %v2738 = vunpack.c.h.b16 %v1021
        %v2739 = vunpack.c.l.b16 %v1022
        %v2740 = vunpack.c.h.b16 %v1022
        %v2741 = vunpack.c.l.b16 %v1023
        %v2742 = vunpack.c.h.b16 %v1023
        %v2743 = vunpack.c.l.b16 %v1024
        %v2744 = vunpack.c.h.b16 %v1024
        %v2745 = vunpack.c.l.b16 %v1025
        %v2746 = vunpack.c.h.b16 %v1025
        %v2747 = vunpack.c.l.b16 %v1026
        %v2748 = vunpack.c.h.b16 %v1026
        %v2749 = vunpack.c.l.b16 %v1027
        %v2750 = vunpack.c.h.b16 %v1027
        %v2751 = vunpack.c.l.b16 %v1028
        %v2752 = vunpack.c.h.b16 %v1028
        %v2753 = vunpack.c.l.b16 %v1029
        %v2754 = vunpack.c.h.b16 %v1029
        %v2755 = vunpack.c.l.b16 %v1030
        %v2756 = vunpack.c.h.b16 %v1030
        %v2757 = vunpack.c.l.b16 %v1031
        %v2758 = vunpack.c.h.b16 %v1031
        %v2759 = vunpack.c.l.b16 %v1032
        %v2760 = vunpack.c.h.b16 %v1032
        %v2761 = vunpack.c.l.b16 %v1033
        %v2762 = vunpack.c.h.b16 %v1033
        %v2763 = vunpack.c.l.b16 %v1034
        %v2764 = vunpack.c.h.b16 %v1034
        %v2765 = vunpack.c.l.b16 %v1035
        %v2766 = vunpack.c.h.b16 %v1035
        %v2767 = vunpack.c.l.b16 %v1036
        %v2768 = vunpack.c.h.b16 %v1036
        %v2769 = vunpack.c.l.b16 %v1037
        %v2770 = vunpack.c.h.b16 %v1037
        %v2771 = vunpack.c.l.b16 %v1038
        %v2772 = vunpack.c.h.b16 %v1038
        %v2773 = vunpack.c.l.b16 %v1039
        %v2774 = vunpack.c.h.b16 %v1039
        %v2775 = vunpack.c.l.b16 %v1040
        %v2776 = vunpack.c.h.b16 %v1040
        %v2777 = vunpack.c.l.b16 %v1041
        %v2778 = vunpack.c.h.b16 %v1041
        %v2779 = vunpack.c.l.b16 %v1042
        %v2780 = vunpack.c.h.b16 %v1042
        %v2781 = vunpack.c.l.b16 %v1043
        %v2782 = vunpack.c.h.b16 %v1043
        %v2783 = vunpack.c.l.b16 %v1044
        %v2784 = vunpack.c.h.b16 %v1044
        %v2785 = vunpack.c.l.b16 %v1045
        %v2786 = vunpack.c.h.b16 %v1045
        %v2787 = vunpack.c.l.b16 %v1046
        %v2788 = vunpack.c.h.b16 %v1046
        %v2789 = vunpack.c.l.b16 %v1047
        %v2790 = vunpack.c.h.b16 %v1047
        %v2791 = vunpack.c.l.b16 %v1048
        %v2792 = vunpack.c.h.b16 %v1048
        %v2793 = vunpack.c.l.b16 %v1049
        %v2794 = vunpack.c.h.b16 %v1049
        %v2795 = vunpack.c.l.b16 %v1050
        %v2796 = vunpack.c.h.b16 %v1050
        %v2797 = vunpack.c.l.b16 %v1051
        %v2798 = vunpack.c.h.b16 %v1051
        %v2799 = vunpack.c.l.b16 %v1052
        %v2800 = vunpack.c.h.b16 %v1052
        %v2801 = vunpack.c.l.b16 %v1053
        %v2802 = vunpack.c.h.b16 %v1053
        %v2803 = vunpack.c.l.b16 %v1054
        %v2804 = vunpack.c.h.b16 %v1054
        %v2805 = vunpack.c.l.b16 %v1055
        %v2806 = vunpack.c.h.b16 %v1055
        %v2807 = vunpack.c.l.b16 %v1056
        %v2808 = vunpack.c.h.b16 %v1056
        %v2809 = vunpack.c.l.b16 %v1057
        %v2810 = vunpack.c.h.b16 %v1057
        %v2811 = vunpack.c.l.b16 %v1058
        %v2812 = vunpack.c.h.b16 %v1058
        %v2813 = vunpack.c.l.b16 %v1059
        %v2814 = vunpack.c.h.b16 %v1059
        %v2815 = vunpack.c.l.b16 %v1060
        %v2816 = vunpack.c.h.b16 %v1060
        %v2817 = vunpack.c.l.b16 %v1061
        %v2818 = vunpack.c.h.b16 %v1061
        %v2819 = vunpack.c.l.b16 %v1062
        %v2820 = vunpack.c.h.b16 %v1062
        %v2821 = vunpack.c.l.b16 %v1063
        %v2822 = vunpack.c.h.b16 %v1063
        %v2823 = vunpack.c.l.b16 %v1064
        %v2824 = vunpack.c.h.b16 %v1064
        %v2825 = vunpack.c.l.b16 %v1065
        %v2826 = vunpack.c.h.b16 %v1065
        %v2827 = vunpack.c.l.b16 %v1066
        %v2828 = vunpack.c.h.b16 %v1066
        %v2829 = vunpack.c.l.b16 %v1067
        %v2830 = vunpack.c.h.b16 %v1067
        %v2831 = vunpack.c.l.b16 %v1068
        %v2832 = vunpack.c.h.b16 %v1068
        %v2833 = vunpack.c.l.b16 %v1069
        %v2834 = vunpack.c.h.b16 %v1069
        %v2835 = vunpack.c.l.b16 %v1070
        %v2836 = vunpack.c.h.b16 %v1070
        %v2837 = vunpack.c.l.b16 %v1071
        %v2838 = vunpack.c.h.b16 %v1071
        %v2839 = vunpack.c.l.b16 %v1072
        %v2840 = vunpack.c.h.b16 %v1072
        %v2841 = vunpack.c.l.b16 %v1073
        %v2842 = vunpack.c.h.b16 %v1073
        %v2843 = vunpack.c.l.b16 %v1074
        %v2844 = vunpack.c.h.b16 %v1074
        %v2845 = vunpack.c.l.b16 %v1075
        %v2846 = vunpack.c.h.b16 %v1075
        %v2847 = vunpack.c.l.b16 %v1076
        %v2848 = vunpack.c.h.b16 %v1076
        %v2849 = vunpack.c.l.b16 %v1077
        %v2850 = vunpack.c.h.b16 %v1077
        %v2851 = vunpack.c.l.b16 %v1078
        %v2852 = vunpack.c.h.b16 %v1078
        %v2853 = vunpack.c.l.b16 %v1079
        %v2854 = vunpack.c.h.b16 %v1079
        %v2855 = vunpack.c.l.b16 %v1080
        %v2856 = vunpack.c.h.b16 %v1080
        %v2857 = vunpack.c.l.b16 %v1081
        %v2858 = vunpack.c.h.b16 %v1081
        %v2859 = vunpack.c.l.b16 %v1082
        %v2860 = vunpack.c.h.b16 %v1082
        %v2861 = vunpack.c.l.b16 %v1083
        %v2862 = vunpack.c.h.b16 %v1083
        %v2863 = vunpack.c.l.b16 %v1084
        %v2864 = vunpack.c.h.b16 %v1084
        %v2865 = vunpack.c.l.b16 %v1085
        %v2866 = vunpack.c.h.b16 %v1085
        %v2867 = vunpack.c.l.b16 %v1086
        %v2868 = vunpack.c.h.b16 %v1086
        %v2869 = vunpack.c.l.b16 %v1087
        %v2870 = vunpack.c.h.b16 %v1087
        %v2871 = vunpack.c.l.b16 %v1088
        %v2872 = vunpack.c.h.b16 %v1088
        %v2873 = vunpack.c.l.b16 %v1089
        %v2874 = vunpack.c.h.b16 %v1089
        %v2875 = vunpack.c.l.b16 %v1090
        %v2876 = vunpack.c.h.b16 %v1090
        %v2877 = vunpack.c.l.b16 %v1091
        %v2878 = vunpack.c.h.b16 %v1091
        %v2879 = vunpack.c.l.b16 %v1092
        %v2880 = vunpack.c.h.b16 %v1092
        %v2881 = vunpack.c.l.b16 %v1093
        %v2882 = vunpack.c.h.b16 %v1093
        %v2883 = vunpack.c.l.b16 %v1094
        %v2884 = vunpack.c.h.b16 %v1094
        %v2885 = vunpack.c.l.b16 %v1095
        %v2886 = vunpack.c.h.b16 %v1095
        %v2887 = vunpack.c.l.b16 %v1096
        %v2888 = vunpack.c.h.b16 %v1096
        %v2889 = vunpack.c.l.b16 %v1097
        %v2890 = vunpack.c.h.b16 %v1097
        %v2891 = vunpack.c.l.b16 %v1098
        %v2892 = vunpack.c.h.b16 %v1098
        %v2893 = vunpack.c.l.b16 %v1099
        %v2894 = vunpack.c.h.b16 %v1099
        %v2895 = vunpack.c.l.b16 %v1100
        %v2896 = vunpack.c.h.b16 %v1100
        %v2897 = vunpack.c.l.b16 %v1101
        %v2898 = vunpack.c.h.b16 %v1101
        %v2899 = vunpack.c.l.b16 %v1102
        %v2900 = vunpack.c.h.b16 %v1102
        %v2901 = vunpack.c.l.b16 %v1103
        %v2902 = vunpack.c.h.b16 %v1103
        %v2903 = vunpack.c.l.b16 %v1104
        %v2904 = vunpack.c.h.b16 %v1104
        %v2905 = vunpack.c.l.b16 %v1105
        %v2906 = vunpack.c.h.b16 %v1105
        %v2907 = vunpack.c.l.b16 %v1106
        %v2908 = vunpack.c.h.b16 %v1106
        %v2909 = vunpack.c.l.b16 %v1107
        %v2910 = vunpack.c.h.b16 %v1107
        %v2911 = vunpack.c.l.b16 %v1108
        %v2912 = vunpack.c.h.b16 %v1108
        %v2913 = vunpack.c.l.b16 %v1109
        %v2914 = vunpack.c.h.b16 %v1109
        %v2915 = vunpack.c.l.b16 %v1110
        %v2916 = vunpack.c.h.b16 %v1110
        %v2917 = vunpack.c.l.b16 %v1111
        %v2918 = vunpack.c.h.b16 %v1111
        %v2919 = vunpack.c.l.b16 %v1112
        %v2920 = vunpack.c.h.b16 %v1112
        %v2921 = vunpack.c.l.b16 %v1113
        %v2922 = vunpack.c.h.b16 %v1113
        %v2923 = vunpack.c.l.b16 %v1114
        %v2924 = vunpack.c.h.b16 %v1114
        %v2925 = vunpack.c.l.b16 %v1115
        %v2926 = vunpack.c.h.b16 %v1115
        %v2927 = vunpack.c.l.b16 %v1116
        %v2928 = vunpack.c.h.b16 %v1116
        %v2929 = vunpack.c.l.b16 %v1117
        %v2930 = vunpack.c.h.b16 %v1117
        %v2931 = vunpack.c.l.b16 %v1118
        %v2932 = vunpack.c.h.b16 %v1118
        %v2933 = vunpack.c.l.b16 %v1119
        %v2934 = vunpack.c.h.b16 %v1119
        %v2935 = vunpack.c.l.b16 %v1120
        %v2936 = vunpack.c.h.b16 %v1120
        %v2937 = vunpack.c.l.b16 %v1121
        %v2938 = vunpack.c.h.b16 %v1121
        %v2939 = vunpack.c.l.b16 %v1122
        %v2940 = vunpack.c.h.b16 %v1122
        %v2941 = vunpack.c.l.b16 %v1123
        %v2942 = vunpack.c.h.b16 %v1123
        %v2943 = vunpack.c.l.b16 %v1124
        %v2944 = vunpack.c.h.b16 %v1124
        %v2945 = vunpack.c.l.b16 %v1125
        %v2946 = vunpack.c.h.b16 %v1125
        %v2947 = vunpack.c.l.b16 %v1126
        %v2948 = vunpack.c.h.b16 %v1126
        %v2949 = vunpack.c.l.b16 %v1127
        %v2950 = vunpack.c.h.b16 %v1127
        %v2951 = vunpack.c.l.b16 %v1128
        %v2952 = vunpack.c.h.b16 %v1128
        %v2953 = vunpack.c.l.b16 %v1129
        %v2954 = vunpack.c.h.b16 %v1129
        %v2955 = vunpack.c.l.b16 %v1130
        %v2956 = vunpack.c.h.b16 %v1130
        %v2957 = vunpack.c.l.b16 %v1131
        %v2958 = vunpack.c.h.b16 %v1131
        %v2959 = vunpack.c.l.b16 %v1132
        %v2960 = vunpack.c.h.b16 %v1132
        %v2961 = vunpack.c.l.b16 %v1133
        %v2962 = vunpack.c.h.b16 %v1133
        %v2963 = vunpack.c.l.b16 %v1134
        %v2964 = vunpack.c.h.b16 %v1134
        %v2965 = vunpack.c.l.b16 %v1135
        %v2966 = vunpack.c.h.b16 %v1135
        %v2967 = vunpack.c.l.b16 %v1136
        %v2968 = vunpack.c.h.b16 %v1136
        %v2969 = vunpack.c.l.b16 %v1137
        %v2970 = vunpack.c.h.b16 %v1137
        %v2971 = vunpack.c.l.b16 %v1138
        %v2972 = vunpack.c.h.b16 %v1138
        %v2973 = vunpack.c.l.b16 %v1139
        %v2974 = vunpack.c.h.b16 %v1139
        %v2975 = vunpack.c.l.b16 %v1140
        %v2976 = vunpack.c.h.b16 %v1140
        %v2977 = vunpack.c.l.b16 %v1141
        %v2978 = vunpack.c.h.b16 %v1141
        %v2979 = vunpack.c.l.b16 %v1142
        %v2980 = vunpack.c.h.b16 %v1142
        %v2981 = vunpack.c.l.b16 %v1143
        %v2982 = vunpack.c.h.b16 %v1143
        %v2983 = vunpack.c.l.b16 %v1144
        %v2984 = vunpack.c.h.b16 %v1144
        %v2985 = vunpack.c.l.b16 %v1145
        %v2986 = vunpack.c.h.b16 %v1145
        %v2987 = vunpack.c.l.b16 %v1146
        %v2988 = vunpack.c.h.b16 %v1146
        %v2989 = vunpack.c.l.b16 %v1147
        %v2990 = vunpack.c.h.b16 %v1147
        %v2991 = vunpack.c.l.b16 %v1148
        %v2992 = vunpack.c.h.b16 %v1148
        %v2993 = vunpack.c.l.b16 %v1149
        %v2994 = vunpack.c.h.b16 %v1149
        %v2995 = vunpack.c.l.b16 %v1150
        %v2996 = vunpack.c.h.b16 %v1150
        %v2997 = vunpack.c.l.b16 %v1151
        %v2998 = vunpack.c.h.b16 %v1151
        %v2999 = vunpack.c.l.b16 %v1152
        %v3000 = vunpack.c.h.b16 %v1152
        %v3001 = vunpack.c.l.b16 %v1153
        %v3002 = vunpack.c.h.b16 %v1153
        %v3003 = vunpack.c.l.b16 %v1154
        %v3004 = vunpack.c.h.b16 %v1154
        %v3005 = vunpack.c.l.b16 %v1155
        %v3006 = vunpack.c.h.b16 %v1155
        %v3007 = vunpack.c.l.b16 %v1156
        %v3008 = vunpack.c.h.b16 %v1156
        %v3009 = vunpack.c.l.b16 %v1157
        %v3010 = vunpack.c.h.b16 %v1157
        %v3011 = vunpack.c.l.b16 %v1158
        %v3012 = vunpack.c.h.b16 %v1158
        %v3013 = vunpack.c.l.b16 %v1159
        %v3014 = vunpack.c.h.b16 %v1159
        %v3015 = vunpack.c.l.b16 %v1160
        %v3016 = vunpack.c.h.b16 %v1160
        %v3017 = vunpack.c.l.b16 %v1161
        %v3018 = vunpack.c.h.b16 %v1161
        %v3019 = vunpack.c.l.b16 %v1162
        %v3020 = vunpack.c.h.b16 %v1162
        %v3021 = vunpack.c.l.b16 %v1163
        %v3022 = vunpack.c.h.b16 %v1163
        %v3023 = vunpack.c.l.b16 %v1164
        %v3024 = vunpack.c.h.b16 %v1164
        %v3025 = vunpack.c.l.b16 %v1165
        %v3026 = vunpack.c.h.b16 %v1165
        %v3027 = vunpack.c.l.b16 %v1166
        %v3028 = vunpack.c.h.b16 %v1166
        %v3029 = vunpack.c.l.b16 %v1167
        %v3030 = vunpack.c.h.b16 %v1167
        %v3031 = vunpack.c.l.b16 %v1168
        %v3032 = vunpack.c.h.b16 %v1168
        %v3033 = vunpack.c.l.b16 %v1169
        %v3034 = vunpack.c.h.b16 %v1169
        %v3035 = vunpack.c.l.b16 %v1170
        %v3036 = vunpack.c.h.b16 %v1170
        %v3037 = vunpack.c.l.b16 %v1171
        %v3038 = vunpack.c.h.b16 %v1171
        %v3039 = vunpack.c.l.b16 %v1172
        %v3040 = vunpack.c.h.b16 %v1172
        %v3041 = vunpack.c.l.b16 %v1173
        %v3042 = vunpack.c.h.b16 %v1173
        %v3043 = vunpack.c.l.b16 %v1174
        %v3044 = vunpack.c.h.b16 %v1174
        %v3045 = vunpack.c.l.b16 %v1175
        %v3046 = vunpack.c.h.b16 %v1175
        %v3047 = vunpack.c.l.b16 %v1176
        %v3048 = vunpack.c.h.b16 %v1176
        %v3049 = vunpack.c.l.b16 %v1177
        %v3050 = vunpack.c.h.b16 %v1177
        %v3051 = vunpack.c.l.b16 %v1178
        %v3052 = vunpack.c.h.b16 %v1178
        %v3053 = vunpack.c.l.b16 %v1179
        %v3054 = vunpack.c.h.b16 %v1179
        %v3055 = vunpack.c.l.b16 %v1180
        %v3056 = vunpack.c.h.b16 %v1180
        %v3057 = vunpack.c.l.b16 %v1181
        %v3058 = vunpack.c.h.b16 %v1181
        %v3059 = vunpack.c.l.b16 %v1182
        %v3060 = vunpack.c.h.b16 %v1182
        %v3061 = vunpack.c.l.b16 %v1183
        %v3062 = vunpack.c.h.b16 %v1183
        %v3063 = vunpack.c.l.b16 %v1184
        %v3064 = vunpack.c.h.b16 %v1184
        %v3065 = vunpack.c.l.b16 %v1185
        %v3066 = vunpack.c.h.b16 %v1185
        %v3067 = vunpack.c.l.b16 %v1186
        %v3068 = vunpack.c.h.b16 %v1186
        %v3069 = vunpack.c.l.b16 %v1187
        %v3070 = vunpack.c.h.b16 %v1187
        %v3071 = vunpack.c.l.b16 %v1188
        %v3072 = vunpack.c.h.b16 %v1188
        %v3073 = vunpack.c.l.b16 %v1189
        %v3074 = vunpack.c.h.b16 %v1189
        %v3075 = vunpack.c.l.b16 %v1190
        %v3076 = vunpack.c.h.b16 %v1190
        %v3077 = vunpack.c.l.b16 %v1191
        %v3078 = vunpack.c.h.b16 %v1191
        %v3079 = vunpack.c.l.b16 %v1192
        %v3080 = vunpack.c.h.b16 %v1192
        %v3081 = vunpack.c.l.b16 %v1193
        %v3082 = vunpack.c.h.b16 %v1193
        %v3083 = vunpack.c.l.b16 %v1194
        %v3084 = vunpack.c.h.b16 %v1194
        %v3085 = vunpack.c.l.b16 %v1195
        %v3086 = vunpack.c.h.b16 %v1195
        %v3087 = vunpack.c.l.b16 %v1196
        %v3088 = vunpack.c.h.b16 %v1196
        %v3089 = vunpack.c.l.b16 %v1197
        %v3090 = vunpack.c.h.b16 %v1197
        %v3091 = vunpack.c.l.b16 %v1198
        %v3092 = vunpack.c.h.b16 %v1198
        %v3093 = vunpack.c.l.b16 %v1199
        %v3094 = vunpack.c.h.b16 %v1199
        %v3095 = vunpack.c.l.b16 %v1200
        %v3096 = vunpack.c.h.b16 %v1200
        %v3097 = vunpack.c.l.b16 %v1201
        %v3098 = vunpack.c.h.b16 %v1201
        %v3099 = vunpack.c.l.b16 %v1202
        %v3100 = vunpack.c.h.b16 %v1202
        %v3101 = vunpack.c.l.b16 %v1203
        %v3102 = vunpack.c.h.b16 %v1203
        %v3103 = vunpack.c.l.b16 %v1204
        %v3104 = vunpack.c.h.b16 %v1204
        %v3105 = vunpack.c.l.b16 %v1205
        %v3106 = vunpack.c.h.b16 %v1205
        %v3107 = vunpack.c.l.b16 %v1206
        %v3108 = vunpack.c.h.b16 %v1206
        %v3109 = vunpack.c.l.b16 %v1207
        %v3110 = vunpack.c.h.b16 %v1207
        %v3111 = vunpack.c.l.b16 %v1208
        %v3112 = vunpack.c.h.b16 %v1208
        %v3113 = vunpack.c.l.b16 %v1209
        %v3114 = vunpack.c.h.b16 %v1209
        %v3115 = vunpack.c.l.b16 %v1210
        %v3116 = vunpack.c.h.b16 %v1210
        %v3117 = vunpack.c.l.b16 %v1211
        %v3118 = vunpack.c.h.b16 %v1211
        %v3119 = vunpack.c.l.b16 %v1212
        %v3120 = vunpack.c.h.b16 %v1212
        %v3121 = vunpack.c.l.b16 %v1213
        %v3122 = vunpack.c.h.b16 %v1213
        %v3123 = vunpack.c.l.b16 %v1214
        %v3124 = vunpack.c.h.b16 %v1214
        %v3125 = vunpack.c.l.b16 %v1215
        %v3126 = vunpack.c.h.b16 %v1215
        %v3127 = vunpack.c.l.b16 %v1216
        %v3128 = vunpack.c.h.b16 %v1216
        %v3129 = vunpack.c.l.b16 %v1217
        %v3130 = vunpack.c.h.b16 %v1217
        %v3131 = vunpack.c.l.b16 %v1218
        %v3132 = vunpack.c.h.b16 %v1218
        %v3133 = vunpack.c.l.b16 %v1219
        %v3134 = vunpack.c.h.b16 %v1219
        %v3135 = vunpack.c.l.b16 %v1220
        %v3136 = vunpack.c.h.b16 %v1220
        %v3137 = vunpack.c.l.b16 %v1221
        %v3138 = vunpack.c.h.b16 %v1221
        %v3139 = vunpack.c.l.b16 %v1222
        %v3140 = vunpack.c.h.b16 %v1222
        %v3141 = vunpack.c.l.b16 %v1223
        %v3142 = vunpack.c.h.b16 %v1223
        %v3143 = vunpack.c.l.b16 %v1224
        %v3144 = vunpack.c.h.b16 %v1224
        %v3145 = vunpack.c.l.b16 %v1225
        %v3146 = vunpack.c.h.b16 %v1225
        %v3147 = vunpack.c.l.b16 %v1226
        %v3148 = vunpack.c.h.b16 %v1226
        %v3149 = vunpack.c.l.b16 %v1227
        %v3150 = vunpack.c.h.b16 %v1227
        %v3151 = vunpack.c.l.b16 %v1228
        %v3152 = vunpack.c.h.b16 %v1228
        %v3153 = vunpack.c.l.b16 %v1229
        %v3154 = vunpack.c.h.b16 %v1229
        %v3155 = vunpack.c.l.b16 %v1230
        %v3156 = vunpack.c.h.b16 %v1230
        %v3157 = vunpack.c.l.b16 %v1231
        %v3158 = vunpack.c.h.b16 %v1231
        %v3159 = vunpack.c.l.b16 %v1232
        %v3160 = vunpack.c.h.b16 %v1232
        %v3161 = vunpack.c.l.b16 %v1233
        %v3162 = vunpack.c.h.b16 %v1233
        %v3163 = vunpack.c.l.b16 %v1234
        %v3164 = vunpack.c.h.b16 %v1234
        %v3165 = vunpack.c.l.b16 %v1235
        %v3166 = vunpack.c.h.b16 %v1235
        %v3167 = vunpack.c.l.b16 %v1236
        %v3168 = vunpack.c.h.b16 %v1236
        %v3169 = vpack.c.b16 %v1905, %v1889
        %v3170 = vpack.c.b16 %v1906, %v1890
        %v3171 = vpack.c.b16 %v1907, %v1891
        %v3172 = vpack.c.b16 %v1908, %v1892
        %v3173 = vpack.c.b16 %v1909, %v1893
        %v3174 = vpack.c.b16 %v1910, %v1894
        %v3175 = vpack.c.b16 %v1911, %v1895
        %v3176 = vpack.c.b16 %v1912, %v1896
        %v3177 = vpack.c.b16 %v1913, %v1897
        %v3178 = vpack.c.b16 %v1914, %v1898
        %v3179 = vpack.c.b16 %v1915, %v1899
        %v3180 = vpack.c.b16 %v1916, %v1900
        %v3181 = vpack.c.b16 %v1917, %v1901
        %v3182 = vpack.c.b16 %v1918, %v1902
        %v3183 = vpack.c.b16 %v1919, %v1903
        %v3184 = vpack.c.b16 %v1920, %v1904
        %v3185 = vpack.c.b16 %v1937, %v1921
        %v3186 = vpack.c.b16 %v1938, %v1922
        %v3187 = vpack.c.b16 %v1939, %v1923
        %v3188 = vpack.c.b16 %v1940, %v1924
        %v3189 = vpack.c.b16 %v1941, %v1925
        %v3190 = vpack.c.b16 %v1942, %v1926
        %v3191 = vpack.c.b16 %v1943, %v1927
        %v3192 = vpack.c.b16 %v1944, %v1928
        %v3193 = vpack.c.b16 %v1945, %v1929
        %v3194 = vpack.c.b16 %v1946, %v1930
        %v3195 = vpack.c.b16 %v1947, %v1931
        %v3196 = vpack.c.b16 %v1948, %v1932
        %v3197 = vpack.c.b16 %v1949, %v1933
        %v3198 = vpack.c.b16 %v1950, %v1934
        %v3199 = vpack.c.b16 %v1951, %v1935
        %v3200 = vpack.c.b16 %v1952, %v1936
        %v3201 = vpack.c.b16 %v1969, %v1953
        %v3202 = vpack.c.b16 %v1970, %v1954
        %v3203 = vpack.c.b16 %v1971, %v1955
        %v3204 = vpack.c.b16 %v1972, %v1956
        %v3205 = vpack.c.b16 %v1973, %v1957
        %v3206 = vpack.c.b16 %v1974, %v1958
        %v3207 = vpack.c.b16 %v1975, %v1959
        %v3208 = vpack.c.b16 %v1976, %v1960
        %v3209 = vpack.c.b16 %v1977, %v1961
        %v3210 = vpack.c.b16 %v1978, %v1962
        %v3211 = vpack.c.b16 %v1979, %v1963
        %v3212 = vpack.c.b16 %v1980, %v1964
        %v3213 = vpack.c.b16 %v1981, %v1965
        %v3214 = vpack.c.b16 %v1982, %v1966
        %v3215 = vpack.c.b16 %v1983, %v1967
        %v3216 = vpack.c.b16 %v1984, %v1968
        %v3217 = vpack.c.b16 %v2001, %v1985
        %v3218 = vpack.c.b16 %v2002, %v1986
        %v3219 = vpack.c.b16 %v2003, %v1987
        %v3220 = vpack.c.b16 %v2004, %v1988
        %v3221 = vpack.c.b16 %v2005, %v1989
        %v3222 = vpack.c.b16 %v2006, %v1990
        %v3223 = vpack.c.b16 %v2007, %v1991
        %v3224 = vpack.c.b16 %v2008, %v1992
        %v3225 = vpack.c.b16 %v2009, %v1993
        %v3226 = vpack.c.b16 %v2010, %v1994
        %v3227 = vpack.c.b16 %v2011, %v1995
        %v3228 = vpack.c.b16 %v2012, %v1996
        %v3229 = vpack.c.b16 %v2013, %v1997
        %v3230 = vpack.c.b16 %v2014, %v1998
        %v3231 = vpack.c.b16 %v2015, %v1999
        %v3232 = vpack.c.b16 %v2016, %v2000
        %v3233 = vpack.c.b16 %v2033, %v2017
        %v3234 = vpack.c.b16 %v2034, %v2018
        %v3235 = vpack.c.b16 %v2035, %v2019
        %v3236 = vpack.c.b16 %v2036, %v2020
        %v3237 = vpack.c.b16 %v2037, %v2021
        %v3238 = vpack.c.b16 %v2038, %v2022
        %v3239 = vpack.c.b16 %v2039, %v2023
        %v3240 = vpack.c.b16 %v2040, %v2024
        %v3241 = vpack.c.b16 %v2041, %v2025
        %v3242 = vpack.c.b16 %v2042, %v2026
        %v3243 = vpack.c.b16 %v2043, %v2027
        %v3244 = vpack.c.b16 %v2044, %v2028
        %v3245 = vpack.c.b16 %v2045, %v2029
        %v3246 = vpack.c.b16 %v2046, %v2030
        %v3247 = vpack.c.b16 %v2047, %v2031
        %v3248 = vpack.c.b16 %v2048, %v2032
        %v3249 = vpack.c.b16 %v2065, %v2049
        %v3250 = vpack.c.b16 %v2066, %v2050
        %v3251 = vpack.c.b16 %v2067, %v2051
        %v3252 = vpack.c.b16 %v2068, %v2052
        %v3253 = vpack.c.b16 %v2069, %v2053
        %v3254 = vpack.c.b16 %v2070, %v2054
        %v3255 = vpack.c.b16 %v2071, %v2055
        %v3256 = vpack.c.b16 %v2072, %v2056
        %v3257 = vpack.c.b16 %v2073, %v2057
        %v3258 = vpack.c.b16 %v2074, %v2058
        %v3259 = vpack.c.b16 %v2075, %v2059
        %v3260 = vpack.c.b16 %v2076, %v2060
        %v3261 = vpack.c.b16 %v2077, %v2061
        %v3262 = vpack.c.b16 %v2078, %v2062
        %v3263 = vpack.c.b16 %v2079, %v2063
        %v3264 = vpack.c.b16 %v2080, %v2064
        %v3265 = vpack.c.b16 %v2097, %v2081
        %v3266 = vpack.c.b16 %v2098, %v2082
        %v3267 = vpack.c.b16 %v2099, %v2083
        %v3268 = vpack.c.b16 %v2100, %v2084
        %v3269 = vpack.c.b16 %v2101, %v2085
        %v3270 = vpack.c.b16 %v2102, %v2086
        %v3271 = vpack.c.b16 %v2103, %v2087
        %v3272 = vpack.c.b16 %v2104, %v2088
        %v3273 = vpack.c.b16 %v2105, %v2089
        %v3274 = vpack.c.b16 %v2106, %v2090
        %v3275 = vpack.c.b16 %v2107, %v2091
        %v3276 = vpack.c.b16 %v2108, %v2092
        %v3277 = vpack.c.b16 %v2109, %v2093
        %v3278 = vpack.c.b16 %v2110, %v2094
        %v3279 = vpack.c.b16 %v2111, %v2095
        %v3280 = vpack.c.b16 %v2112, %v2096
        %v3281 = vpack.c.b16 %v2129, %v2113
        %v3282 = vpack.c.b16 %v2130, %v2114
        %v3283 = vpack.c.b16 %v2131, %v2115
        %v3284 = vpack.c.b16 %v2132, %v2116
        %v3285 = vpack.c.b16 %v2133, %v2117
        %v3286 = vpack.c.b16 %v2134, %v2118
        %v3287 = vpack.c.b16 %v2135, %v2119
        %v3288 = vpack.c.b16 %v2136, %v2120
        %v3289 = vpack.c.b16 %v2137, %v2121
        %v3290 = vpack.c.b16 %v2138, %v2122
        %v3291 = vpack.c.b16 %v2139, %v2123
        %v3292 = vpack.c.b16 %v2140, %v2124
        %v3293 = vpack.c.b16 %v2141, %v2125
        %v3294 = vpack.c.b16 %v2142, %v2126
        %v3295 = vpack.c.b16 %v2143, %v2127
        %v3296 = vpack.c.b16 %v2144, %v2128
        %v3297 = vpack.c.b16 %v2161, %v2145
        %v3298 = vpack.c.b16 %v2162, %v2146
        %v3299 = vpack.c.b16 %v2163, %v2147
        %v3300 = vpack.c.b16 %v2164, %v2148
        %v3301 = vpack.c.b16 %v2165, %v2149
        %v3302 = vpack.c.b16 %v2166, %v2150
        %v3303 = vpack.c.b16 %v2167, %v2151
        %v3304 = vpack.c.b16 %v2168, %v2152
        %v3305 = vpack.c.b16 %v2169, %v2153
        %v3306 = vpack.c.b16 %v2170, %v2154
        %v3307 = vpack.c.b16 %v2171, %v2155
        %v3308 = vpack.c.b16 %v2172, %v2156
        %v3309 = vpack.c.b16 %v2173, %v2157
        %v3310 = vpack.c.b16 %v2174, %v2158
        %v3311 = vpack.c.b16 %v2175, %v2159
        %v3312 = vpack.c.b16 %v2176, %v2160
        %v3313 = vpack.c.b16 %v2193, %v2177
        %v3314 = vpack.c.b16 %v2194, %v2178
        %v3315 = vpack.c.b16 %v2195, %v2179
        %v3316 = vpack.c.b16 %v2196, %v2180
        %v3317 = vpack.c.b16 %v2197, %v2181
        %v3318 = vpack.c.b16 %v2198, %v2182
        %v3319 = vpack.c.b16 %v2199, %v2183
        %v3320 = vpack.c.b16 %v2200, %v2184
        %v3321 = vpack.c.b16 %v2201, %v2185
        %v3322 = vpack.c.b16 %v2202, %v2186
        %v3323 = vpack.c.b16 %v2203, %v2187
        %v3324 = vpack.c.b16 %v2204, %v2188
        %v3325 = vpack.c.b16 %v2205, %v2189
        %v3326 = vpack.c.b16 %v2206, %v2190
        %v3327 = vpack.c.b16 %v2207, %v2191
        %v3328 = vpack.c.b16 %v2208, %v2192
        %v3329 = vpack.c.b16 %v2225, %v2209
        %v3330 = vpack.c.b16 %v2226, %v2210
        %v3331 = vpack.c.b16 %v2227, %v2211
        %v3332 = vpack.c.b16 %v2228, %v2212
        %v3333 = vpack.c.b16 %v2229, %v2213
        %v3334 = vpack.c.b16 %v2230, %v2214
        %v3335 = vpack.c.b16 %v2231, %v2215
        %v3336 = vpack.c.b16 %v2232, %v2216
        %v3337 = vpack.c.b16 %v2233, %v2217
        %v3338 = vpack.c.b16 %v2234, %v2218
        %v3339 = vpack.c.b16 %v2235, %v2219
        %v3340 = vpack.c.b16 %v2236, %v2220
        %v3341 = vpack.c.b16 %v2237, %v2221
        %v3342 = vpack.c.b16 %v2238, %v2222
        %v3343 = vpack.c.b16 %v2239, %v2223
        %v3344 = vpack.c.b16 %v2240, %v2224
        %v3345 = vpack.c.b16 %v2257, %v2241
        %v3346 = vpack.c.b16 %v2258, %v2242
        %v3347 = vpack.c.b16 %v2259, %v2243
        %v3348 = vpack.c.b16 %v2260, %v2244
        %v3349 = vpack.c.b16 %v2261, %v2245
        %v3350 = vpack.c.b16 %v2262, %v2246
        %v3351 = vpack.c.b16 %v2263, %v2247
        %v3352 = vpack.c.b16 %v2264, %v2248
        %v3353 = vpack.c.b16 %v2265, %v2249
        %v3354 = vpack.c.b16 %v2266, %v2250
        %v3355 = vpack.c.b16 %v2267, %v2251
        %v3356 = vpack.c.b16 %v2268, %v2252
        %v3357 = vpack.c.b16 %v2269, %v2253
        %v3358 = vpack.c.b16 %v2270, %v2254
        %v3359 = vpack.c.b16 %v2271, %v2255
        %v3360 = vpack.c.b16 %v2272, %v2256
        %v3361 = vpack.c.b16 %v2289, %v2273
        %v3362 = vpack.c.b16 %v2290, %v2274
        %v3363 = vpack.c.b16 %v2291, %v2275
        %v3364 = vpack.c.b16 %v2292, %v2276
        %v3365 = vpack.c.b16 %v2293, %v2277
        %v3366 = vpack.c.b16 %v2294, %v2278
        %v3367 = vpack.c.b16 %v2295, %v2279
        %v3368 = vpack.c.b16 %v2296, %v2280
        %v3369 = vpack.c.b16 %v2297, %v2281
        %v3370 = vpack.c.b16 %v2298, %v2282
        %v3371 = vpack.c.b16 %v2299, %v2283
        %v3372 = vpack.c.b16 %v2300, %v2284
        %v3373 = vpack.c.b16 %v2301, %v2285
        %v3374 = vpack.c.b16 %v2302, %v2286
        %v3375 = vpack.c.b16 %v2303, %v2287
        %v3376 = vpack.c.b16 %v2304, %v2288
        %v3377 = vpack.c.b16 %v2321, %v2305
        %v3378 = vpack.c.b16 %v2322, %v2306
        %v3379 = vpack.c.b16 %v2323, %v2307
        %v3380 = vpack.c.b16 %v2324, %v2308
        %v3381 = vpack.c.b16 %v2325, %v2309
        %v3382 = vpack.c.b16 %v2326, %v2310
        %v3383 = vpack.c.b16 %v2327, %v2311
        %v3384 = vpack.c.b16 %v2328, %v2312
        %v3385 = vpack.c.b16 %v2329, %v2313
        %v3386 = vpack.c.b16 %v2330, %v2314
        %v3387 = vpack.c.b16 %v2331, %v2315
        %v3388 = vpack.c.b16 %v2332, %v2316
        %v3389 = vpack.c.b16 %v2333, %v2317
        %v3390 = vpack.c.b16 %v2334, %v2318
        %v3391 = vpack.c.b16 %v2335, %v2319
        %v3392 = vpack.c.b16 %v2336, %v2320
        %v3393 = vpack.c.b16 %v2353, %v2337
        %v3394 = vpack.c.b16 %v2354, %v2338
        %v3395 = vpack.c.b16 %v2355, %v2339
        %v3396 = vpack.c.b16 %v2356, %v2340
        %v3397 = vpack.c.b16 %v2357, %v2341
        %v3398 = vpack.c.b16 %v2358, %v2342
        %v3399 = vpack.c.b16 %v2359, %v2343
        %v3400 = vpack.c.b16 %v2360, %v2344
        %v3401 = vpack.c.b16 %v2361, %v2345
        %v3402 = vpack.c.b16 %v2362, %v2346
        %v3403 = vpack.c.b16 %v2363, %v2347
        %v3404 = vpack.c.b16 %v2364, %v2348
        %v3405 = vpack.c.b16 %v2365, %v2349
        %v3406 = vpack.c.b16 %v2366, %v2350
        %v3407 = vpack.c.b16 %v2367, %v2351
        %v3408 = vpack.c.b16 %v2368, %v2352
        %v3409 = vpack.c.b16 %v2385, %v2369
        %v3410 = vpack.c.b16 %v2386, %v2370
        %v3411 = vpack.c.b16 %v2387, %v2371
        %v3412 = vpack.c.b16 %v2388, %v2372
        %v3413 = vpack.c.b16 %v2389, %v2373
        %v3414 = vpack.c.b16 %v2390, %v2374
        %v3415 = vpack.c.b16 %v2391, %v2375
        %v3416 = vpack.c.b16 %v2392, %v2376
        %v3417 = vpack.c.b16 %v2393, %v2377
        %v3418 = vpack.c.b16 %v2394, %v2378
        %v3419 = vpack.c.b16 %v2395, %v2379
        %v3420 = vpack.c.b16 %v2396, %v2380
        %v3421 = vpack.c.b16 %v2397, %v2381
        %v3422 = vpack.c.b16 %v2398, %v2382
        %v3423 = vpack.c.b16 %v2399, %v2383
        %v3424 = vpack.c.b16 %v2400, %v2384
        %v3425 = vpack.c.b16 %v2417, %v2401
        %v3426 = vpack.c.b16 %v2418, %v2402
        %v3427 = vpack.c.b16 %v2419, %v2403
        %v3428 = vpack.c.b16 %v2420, %v2404
        %v3429 = vpack.c.b16 %v2421, %v2405
        %v3430 = vpack.c.b16 %v2422, %v2406
        %v3431 = vpack.c.b16 %v2423, %v2407
        %v3432 = vpack.c.b16 %v2424, %v2408
        %v3433 = vpack.c.b16 %v2425, %v2409
        %v3434 = vpack.c.b16 %v2426, %v2410
        %v3435 = vpack.c.b16 %v2427, %v2411
        %v3436 = vpack.c.b16 %v2428, %v2412
        %v3437 = vpack.c.b16 %v2429, %v2413
        %v3438 = vpack.c.b16 %v2430, %v2414
        %v3439 = vpack.c.b16 %v2431, %v2415
        %v3440 = vpack.c.b16 %v2432, %v2416
        %v3441 = vpack.c.b16 %v2449, %v2433
        %v3442 = vpack.c.b16 %v2450, %v2434
        %v3443 = vpack.c.b16 %v2451, %v2435
        %v3444 = vpack.c.b16 %v2452, %v2436
        %v3445 = vpack.c.b16 %v2453, %v2437
        %v3446 = vpack.c.b16 %v2454, %v2438
        %v3447 = vpack.c.b16 %v2455, %v2439
        %v3448 = vpack.c.b16 %v2456, %v2440
        %v3449 = vpack.c.b16 %v2457, %v2441
        %v3450 = vpack.c.b16 %v2458, %v2442
        %v3451 = vpack.c.b16 %v2459, %v2443
        %v3452 = vpack.c.b16 %v2460, %v2444
        %v3453 = vpack.c.b16 %v2461, %v2445
        %v3454 = vpack.c.b16 %v2462, %v2446
        %v3455 = vpack.c.b16 %v2463, %v2447
        %v3456 = vpack.c.b16 %v2464, %v2448
        %v3457 = vpack.c.b16 %v2481, %v2465
        %v3458 = vpack.c.b16 %v2482, %v2466
        %v3459 = vpack.c.b16 %v2483, %v2467
        %v3460 = vpack.c.b16 %v2484, %v2468
        %v3461 = vpack.c.b16 %v2485, %v2469
        %v3462 = vpack.c.b16 %v2486, %v2470
        %v3463 = vpack.c.b16 %v2487, %v2471
        %v3464 = vpack.c.b16 %v2488, %v2472
        %v3465 = vpack.c.b16 %v2489, %v2473
        %v3466 = vpack.c.b16 %v2490, %v2474
        %v3467 = vpack.c.b16 %v2491, %v2475
        %v3468 = vpack.c.b16 %v2492, %v2476
        %v3469 = vpack.c.b16 %v2493, %v2477
        %v3470 = vpack.c.b16 %v2494, %v2478
        %v3471 = vpack.c.b16 %v2495, %v2479
        %v3472 = vpack.c.b16 %v2496, %v2480
        %v3473 = vpack.c.b16 %v2513, %v2497
        %v3474 = vpack.c.b16 %v2514, %v2498
        %v3475 = vpack.c.b16 %v2515, %v2499
        %v3476 = vpack.c.b16 %v2516, %v2500
        %v3477 = vpack.c.b16 %v2517, %v2501
        %v3478 = vpack.c.b16 %v2518, %v2502
        %v3479 = vpack.c.b16 %v2519, %v2503
        %v3480 = vpack.c.b16 %v2520, %v2504
        %v3481 = vpack.c.b16 %v2521, %v2505
        %v3482 = vpack.c.b16 %v2522, %v2506
        %v3483 = vpack.c.b16 %v2523, %v2507
        %v3484 = vpack.c.b16 %v2524, %v2508
        %v3485 = vpack.c.b16 %v2525, %v2509
        %v3486 = vpack.c.b16 %v2526, %v2510
        %v3487 = vpack.c.b16 %v2527, %v2511
        %v3488 = vpack.c.b16 %v2528, %v2512
        %v3489 = vpack.c.b16 %v2545, %v2529
        %v3490 = vpack.c.b16 %v2546, %v2530
        %v3491 = vpack.c.b16 %v2547, %v2531
        %v3492 = vpack.c.b16 %v2548, %v2532
        %v3493 = vpack.c.b16 %v2549, %v2533
        %v3494 = vpack.c.b16 %v2550, %v2534
        %v3495 = vpack.c.b16 %v2551, %v2535
        %v3496 = vpack.c.b16 %v2552, %v2536
        %v3497 = vpack.c.b16 %v2553, %v2537
        %v3498 = vpack.c.b16 %v2554, %v2538
        %v3499 = vpack.c.b16 %v2555, %v2539
        %v3500 = vpack.c.b16 %v2556, %v2540
        %v3501 = vpack.c.b16 %v2557, %v2541
        %v3502 = vpack.c.b16 %v2558, %v2542
        %v3503 = vpack.c.b16 %v2559, %v2543
        %v3504 = vpack.c.b16 %v2560, %v2544
        %v3505 = vpack.c.b16 %v2577, %v2561
        %v3506 = vpack.c.b16 %v2578, %v2562
        %v3507 = vpack.c.b16 %v2579, %v2563
        %v3508 = vpack.c.b16 %v2580, %v2564
        %v3509 = vpack.c.b16 %v2581, %v2565
        %v3510 = vpack.c.b16 %v2582, %v2566
        %v3511 = vpack.c.b16 %v2583, %v2567
        %v3512 = vpack.c.b16 %v2584, %v2568
        %v3513 = vpack.c.b16 %v2585, %v2569
        %v3514 = vpack.c.b16 %v2586, %v2570
        %v3515 = vpack.c.b16 %v2587, %v2571
        %v3516 = vpack.c.b16 %v2588, %v2572
        %v3517 = vpack.c.b16 %v2589, %v2573
        %v3518 = vpack.c.b16 %v2590, %v2574
        %v3519 = vpack.c.b16 %v2591, %v2575
        %v3520 = vpack.c.b16 %v2592, %v2576
        %v3521 = vpack.c.b16 %v2609, %v2593
        %v3522 = vpack.c.b16 %v2610, %v2594
        %v3523 = vpack.c.b16 %v2611, %v2595
        %v3524 = vpack.c.b16 %v2612, %v2596
        %v3525 = vpack.c.b16 %v2613, %v2597
        %v3526 = vpack.c.b16 %v2614, %v2598
        %v3527 = vpack.c.b16 %v2615, %v2599
        %v3528 = vpack.c.b16 %v2616, %v2600
        %v3529 = vpack.c.b16 %v2617, %v2601
        %v3530 = vpack.c.b16 %v2618, %v2602
        %v3531 = vpack.c.b16 %v2619, %v2603
        %v3532 = vpack.c.b16 %v2620, %v2604
        %v3533 = vpack.c.b16 %v2621, %v2605
        %v3534 = vpack.c.b16 %v2622, %v2606
        %v3535 = vpack.c.b16 %v2623, %v2607
        %v3536 = vpack.c.b16 %v2624, %v2608
        %v3537 = vpack.c.b16 %v2641, %v2625
        %v3538 = vpack.c.b16 %v2642, %v2626
        %v3539 = vpack.c.b16 %v2643, %v2627
        %v3540 = vpack.c.b16 %v2644, %v2628
        %v3541 = vpack.c.b16 %v2645, %v2629
        %v3542 = vpack.c.b16 %v2646, %v2630
        %v3543 = vpack.c.b16 %v2647, %v2631
        %v3544 = vpack.c.b16 %v2648, %v2632
        %v3545 = vpack.c.b16 %v2649, %v2633
        %v3546 = vpack.c.b16 %v2650, %v2634
        %v3547 = vpack.c.b16 %v2651, %v2635
        %v3548 = vpack.c.b16 %v2652, %v2636
        %v3549 = vpack.c.b16 %v2653, %v2637
        %v3550 = vpack.c.b16 %v2654, %v2638
        %v3551 = vpack.c.b16 %v2655, %v2639
        %v3552 = vpack.c.b16 %v2656, %v2640
        %v3553 = vpack.c.b16 %v2673, %v2657
        %v3554 = vpack.c.b16 %v2674, %v2658
        %v3555 = vpack.c.b16 %v2675, %v2659
        %v3556 = vpack.c.b16 %v2676, %v2660
        %v3557 = vpack.c.b16 %v2677, %v2661
        %v3558 = vpack.c.b16 %v2678, %v2662
        %v3559 = vpack.c.b16 %v2679, %v2663
        %v3560 = vpack.c.b16 %v2680, %v2664
        %v3561 = vpack.c.b16 %v2681, %v2665
        %v3562 = vpack.c.b16 %v2682, %v2666
        %v3563 = vpack.c.b16 %v2683, %v2667
        %v3564 = vpack.c.b16 %v2684, %v2668
        %v3565 = vpack.c.b16 %v2685, %v2669
        %v3566 = vpack.c.b16 %v2686, %v2670
        %v3567 = vpack.c.b16 %v2687, %v2671
        %v3568 = vpack.c.b16 %v2688, %v2672
        %v3569 = vpack.c.b16 %v2705, %v2689
        %v3570 = vpack.c.b16 %v2706, %v2690
        %v3571 = vpack.c.b16 %v2707, %v2691
        %v3572 = vpack.c.b16 %v2708, %v2692
        %v3573 = vpack.c.b16 %v2709, %v2693
        %v3574 = vpack.c.b16 %v2710, %v2694
        %v3575 = vpack.c.b16 %v2711, %v2695
        %v3576 = vpack.c.b16 %v2712, %v2696
        %v3577 = vpack.c.b16 %v2713, %v2697
        %v3578 = vpack.c.b16 %v2714, %v2698
        %v3579 = vpack.c.b16 %v2715, %v2699
        %v3580 = vpack.c.b16 %v2716, %v2700
        %v3581 = vpack.c.b16 %v2717, %v2701
        %v3582 = vpack.c.b16 %v2718, %v2702
        %v3583 = vpack.c.b16 %v2719, %v2703
        %v3584 = vpack.c.b16 %v2720, %v2704
        %v3585 = vpack.c.b16 %v2737, %v2721
        %v3586 = vpack.c.b16 %v2738, %v2722
        %v3587 = vpack.c.b16 %v2739, %v2723
        %v3588 = vpack.c.b16 %v2740, %v2724
        %v3589 = vpack.c.b16 %v2741, %v2725
        %v3590 = vpack.c.b16 %v2742, %v2726
        %v3591 = vpack.c.b16 %v2743, %v2727
        %v3592 = vpack.c.b16 %v2744, %v2728
        %v3593 = vpack.c.b16 %v2745, %v2729
        %v3594 = vpack.c.b16 %v2746, %v2730
        %v3595 = vpack.c.b16 %v2747, %v2731
        %v3596 = vpack.c.b16 %v2748, %v2732
        %v3597 = vpack.c.b16 %v2749, %v2733
        %v3598 = vpack.c.b16 %v2750, %v2734
        %v3599 = vpack.c.b16 %v2751, %v2735
        %v3600 = vpack.c.b16 %v2752, %v2736
        %v3601 = vpack.c.b16 %v2769, %v2753
        %v3602 = vpack.c.b16 %v2770, %v2754
        %v3603 = vpack.c.b16 %v2771, %v2755
        %v3604 = vpack.c.b16 %v2772, %v2756
        %v3605 = vpack.c.b16 %v2773, %v2757
        %v3606 = vpack.c.b16 %v2774, %v2758
        %v3607 = vpack.c.b16 %v2775, %v2759
        %v3608 = vpack.c.b16 %v2776, %v2760
        %v3609 = vpack.c.b16 %v2777, %v2761
        %v3610 = vpack.c.b16 %v2778, %v2762
        %v3611 = vpack.c.b16 %v2779, %v2763
        %v3612 = vpack.c.b16 %v2780, %v2764
        %v3613 = vpack.c.b16 %v2781, %v2765
        %v3614 = vpack.c.b16 %v2782, %v2766
        %v3615 = vpack.c.b16 %v2783, %v2767
        %v3616 = vpack.c.b16 %v2784, %v2768
        %v3617 = vpack.c.b16 %v2801, %v2785
        %v3618 = vpack.c.b16 %v2802, %v2786
        %v3619 = vpack.c.b16 %v2803, %v2787
        %v3620 = vpack.c.b16 %v2804, %v2788
        %v3621 = vpack.c.b16 %v2805, %v2789
        %v3622 = vpack.c.b16 %v2806, %v2790
        %v3623 = vpack.c.b16 %v2807, %v2791
        %v3624 = vpack.c.b16 %v2808, %v2792
        %v3625 = vpack.c.b16 %v2809, %v2793
        %v3626 = vpack.c.b16 %v2810, %v2794
        %v3627 = vpack.c.b16 %v2811, %v2795
        %v3628 = vpack.c.b16 %v2812, %v2796
        %v3629 = vpack.c.b16 %v2813, %v2797
        %v3630 = vpack.c.b16 %v2814, %v2798
        %v3631 = vpack.c.b16 %v2815, %v2799
        %v3632 = vpack.c.b16 %v2816, %v2800
        %v3633 = vpack.c.b16 %v2833, %v2817
        %v3634 = vpack.c.b16 %v2834, %v2818
        %v3635 = vpack.c.b16 %v2835, %v2819
        %v3636 = vpack.c.b16 %v2836, %v2820
        %v3637 = vpack.c.b16 %v2837, %v2821
        %v3638 = vpack.c.b16 %v2838, %v2822
        %v3639 = vpack.c.b16 %v2839, %v2823
        %v3640 = vpack.c.b16 %v2840, %v2824
        %v3641 = vpack.c.b16 %v2841, %v2825
        %v3642 = vpack.c.b16 %v2842, %v2826
        %v3643 = vpack.c.b16 %v2843, %v2827
        %v3644 = vpack.c.b16 %v2844, %v2828
        %v3645 = vpack.c.b16 %v2845, %v2829
        %v3646 = vpack.c.b16 %v2846, %v2830
        %v3647 = vpack.c.b16 %v2847, %v2831
        %v3648 = vpack.c.b16 %v2848, %v2832
        %v3649 = vpack.c.b16 %v2865, %v2849
        %v3650 = vpack.c.b16 %v2866, %v2850
        %v3651 = vpack.c.b16 %v2867, %v2851
        %v3652 = vpack.c.b16 %v2868, %v2852
        %v3653 = vpack.c.b16 %v2869, %v2853
        %v3654 = vpack.c.b16 %v2870, %v2854
        %v3655 = vpack.c.b16 %v2871, %v2855
        %v3656 = vpack.c.b16 %v2872, %v2856
        %v3657 = vpack.c.b16 %v2873, %v2857
        %v3658 = vpack.c.b16 %v2874, %v2858
        %v3659 = vpack.c.b16 %v2875, %v2859
        %v3660 = vpack.c.b16 %v2876, %v2860
        %v3661 = vpack.c.b16 %v2877, %v2861
        %v3662 = vpack.c.b16 %v2878, %v2862
        %v3663 = vpack.c.b16 %v2879, %v2863
        %v3664 = vpack.c.b16 %v2880, %v2864
        %v3665 = vpack.c.b16 %v2897, %v2881
        %v3666 = vpack.c.b16 %v2898, %v2882
        %v3667 = vpack.c.b16 %v2899, %v2883
        %v3668 = vpack.c.b16 %v2900, %v2884
        %v3669 = vpack.c.b16 %v2901, %v2885
        %v3670 = vpack.c.b16 %v2902, %v2886
        %v3671 = vpack.c.b16 %v2903, %v2887
        %v3672 = vpack.c.b16 %v2904, %v2888
        %v3673 = vpack.c.b16 %v2905, %v2889
        %v3674 = vpack.c.b16 %v2906, %v2890
        %v3675 = vpack.c.b16 %v2907, %v2891
        %v3676 = vpack.c.b16 %v2908, %v2892
        %v3677 = vpack.c.b16 %v2909, %v2893
        %v3678 = vpack.c.b16 %v2910, %v2894
        %v3679 = vpack.c.b16 %v2911, %v2895
        %v3680 = vpack.c.b16 %v2912, %v2896
        %v3681 = vpack.c.b16 %v2929, %v2913
        %v3682 = vpack.c.b16 %v2930, %v2914
        %v3683 = vpack.c.b16 %v2931, %v2915
        %v3684 = vpack.c.b16 %v2932, %v2916
        %v3685 = vpack.c.b16 %v2933, %v2917
        %v3686 = vpack.c.b16 %v2934, %v2918
        %v3687 = vpack.c.b16 %v2935, %v2919
        %v3688 = vpack.c.b16 %v2936, %v2920
        %v3689 = vpack.c.b16 %v2937, %v2921
        %v3690 = vpack.c.b16 %v2938, %v2922
        %v3691 = vpack.c.b16 %v2939, %v2923
        %v3692 = vpack.c.b16 %v2940, %v2924
        %v3693 = vpack.c.b16 %v2941, %v2925
        %v3694 = vpack.c.b16 %v2942, %v2926
        %v3695 = vpack.c.b16 %v2943, %v2927
        %v3696 = vpack.c.b16 %v2944, %v2928
        %v3697 = vpack.c.b16 %v2961, %v2945
        %v3698 = vpack.c.b16 %v2962, %v2946
        %v3699 = vpack.c.b16 %v2963, %v2947
        %v3700 = vpack.c.b16 %v2964, %v2948
        %v3701 = vpack.c.b16 %v2965, %v2949
        %v3702 = vpack.c.b16 %v2966, %v2950
        %v3703 = vpack.c.b16 %v2967, %v2951
        %v3704 = vpack.c.b16 %v2968, %v2952
        %v3705 = vpack.c.b16 %v2969, %v2953
        %v3706 = vpack.c.b16 %v2970, %v2954
        %v3707 = vpack.c.b16 %v2971, %v2955
        %v3708 = vpack.c.b16 %v2972, %v2956
        %v3709 = vpack.c.b16 %v2973, %v2957
        %v3710 = vpack.c.b16 %v2974, %v2958
        %v3711 = vpack.c.b16 %v2975, %v2959
        %v3712 = vpack.c.b16 %v2976, %v2960
        %v3713 = vpack.c.b16 %v2993, %v2977
        %v3714 = vpack.c.b16 %v2994, %v2978
        %v3715 = vpack.c.b16 %v2995, %v2979
        %v3716 = vpack.c.b16 %v2996, %v2980
        %v3717 = vpack.c.b16 %v2997, %v2981
        %v3718 = vpack.c.b16 %v2998, %v2982
        %v3719 = vpack.c.b16 %v2999, %v2983
        %v3720 = vpack.c.b16 %v3000, %v2984
        %v3721 = vpack.c.b16 %v3001, %v2985
        %v3722 = vpack.c.b16 %v3002, %v2986
        %v3723 = vpack.c.b16 %v3003, %v2987
        %v3724 = vpack.c.b16 %v3004, %v2988
        %v3725 = vpack.c.b16 %v3005, %v2989
        %v3726 = vpack.c.b16 %v3006, %v2990
        %v3727 = vpack.c.b16 %v3007, %v2991
        %v3728 = vpack.c.b16 %v3008, %v2992
        %v3729 = vpack.c.b16 %v3025, %v3009
        %v3730 = vpack.c.b16 %v3026, %v3010
        %v3731 = vpack.c.b16 %v3027, %v3011
        %v3732 = vpack.c.b16 %v3028, %v3012
        %v3733 = vpack.c.b16 %v3029, %v3013
        %v3734 = vpack.c.b16 %v3030, %v3014
        %v3735 = vpack.c.b16 %v3031, %v3015
        %v3736 = vpack.c.b16 %v3032, %v3016
        %v3737 = vpack.c.b16 %v3033, %v3017
        %v3738 = vpack.c.b16 %v3034, %v3018
        %v3739 = vpack.c.b16 %v3035, %v3019
        %v3740 = vpack.c.b16 %v3036, %v3020
        %v3741 = vpack.c.b16 %v3037, %v3021
        %v3742 = vpack.c.b16 %v3038, %v3022
        %v3743 = vpack.c.b16 %v3039, %v3023
        %v3744 = vpack.c.b16 %v3040, %v3024
        %v3745 = vpack.c.b16 %v3057, %v3041
        %v3746 = vpack.c.b16 %v3058, %v3042
        %v3747 = vpack.c.b16 %v3059, %v3043
        %v3748 = vpack.c.b16 %v3060, %v3044
        %v3749 = vpack.c.b16 %v3061, %v3045
        %v3750 = vpack.c.b16 %v3062, %v3046
        %v3751 = vpack.c.b16 %v3063, %v3047
        %v3752 = vpack.c.b16 %v3064, %v3048
        %v3753 = vpack.c.b16 %v3065, %v3049
        %v3754 = vpack.c.b16 %v3066, %v3050
        %v3755 = vpack.c.b16 %v3067, %v3051
        %v3756 = vpack.c.b16 %v3068, %v3052
        %v3757 = vpack.c.b16 %v3069, %v3053
        %v3758 = vpack.c.b16 %v3070, %v3054
        %v3759 = vpack.c.b16 %v3071, %v3055
        %v3760 = vpack.c.b16 %v3072, %v3056
        %v3761 = vpack.c.b16 %v3089, %v3073
        %v3762 = vpack.c.b16 %v3090, %v3074
        %v3763 = vpack.c.b16 %v3091, %v3075
        %v3764 = vpack.c.b16 %v3092, %v3076
        %v3765 = vpack.c.b16 %v3093, %v3077
        %v3766 = vpack.c.b16 %v3094, %v3078
        %v3767 = vpack.c.b16 %v3095, %v3079
        %v3768 = vpack.c.b16 %v3096, %v3080
        %v3769 = vpack.c.b16 %v3097, %v3081
        %v3770 = vpack.c.b16 %v3098, %v3082
        %v3771 = vpack.c.b16 %v3099, %v3083
        %v3772 = vpack.c.b16 %v3100, %v3084
        %v3773 = vpack.c.b16 %v3101, %v3085
        %v3774 = vpack.c.b16 %v3102, %v3086
        %v3775 = vpack.c.b16 %v3103, %v3087
        %v3776 = vpack.c.b16 %v3104, %v3088
        %v3777 = vpack.c.b16 %v3121, %v3105
        %v3778 = vpack.c.b16 %v3122, %v3106
        %v3779 = vpack.c.b16 %v3123, %v3107
        %v3780 = vpack.c.b16 %v3124, %v3108
        %v3781 = vpack.c.b16 %v3125, %v3109
        %v3782 = vpack.c.b16 %v3126, %v3110
        %v3783 = vpack.c.b16 %v3127, %v3111
        %v3784 = vpack.c.b16 %v3128, %v3112
        %v3785 = vpack.c.b16 %v3129, %v3113
        %v3786 = vpack.c.b16 %v3130, %v3114
        %v3787 = vpack.c.b16 %v3131, %v3115
        %v3788 = vpack.c.b16 %v3132, %v3116
        %v3789 = vpack.c.b16 %v3133, %v3117
        %v3790 = vpack.c.b16 %v3134, %v3118
        %v3791 = vpack.c.b16 %v3135, %v3119
        %v3792 = vpack.c.b16 %v3136, %v3120
        %v3793 = vpack.c.b16 %v3153, %v3137
        %v3794 = vpack.c.b16 %v3154, %v3138
        %v3795 = vpack.c.b16 %v3155, %v3139
        %v3796 = vpack.c.b16 %v3156, %v3140
        %v3797 = vpack.c.b16 %v3157, %v3141
        %v3798 = vpack.c.b16 %v3158, %v3142
        %v3799 = vpack.c.b16 %v3159, %v3143
        %v3800 = vpack.c.b16 %v3160, %v3144
        %v3801 = vpack.c.b16 %v3161, %v3145
        %v3802 = vpack.c.b16 %v3162, %v3146
        %v3803 = vpack.c.b16 %v3163, %v3147
        %v3804 = vpack.c.b16 %v3164, %v3148
        %v3805 = vpack.c.b16 %v3165, %v3149
        %v3806 = vpack.c.b16 %v3166, %v3150
        %v3807 = vpack.c.b16 %v3167, %v3151
        %v3808 = vpack.c.b16 %v3168, %v3152
        %4449 = vmatpush.bf16.msra.mxu0 %v3281
        %4450 = vmatpush.bf16.msra.mxu0 %v3265
        %4451 = vmatpush.bf16.msra.mxu0 %v3249
        %4452 = vmatpush.bf16.msra.mxu0 %v3233
        %4453 = vmatpush.bf16.msra.mxu0 %v3217
        %4454 = vmatpush.bf16.msra.mxu0 %v3201
        %4455 = vmatpush.bf16.msra.mxu0 %v3185
        %4456 = vmatpush.bf16.msra.mxu0 %v3169
        %4457 = vmatmul.bf16.gmra.mxu0 %v1239
        %v4458 = vpop.f32.mrf.mxu0
        %v4459 = vadd.f32 0.0, %v4458
        %v4460 = vpop.f32.mrf.mxu0
        %4461 = vdwg.mxu0
        %4462 = vmatpush.bf16.msra.mxu0 %v3409
        %4463 = vmatpush.bf16.msra.mxu0 %v3393
        %4464 = vmatpush.bf16.msra.mxu0 %v3377
        %4465 = vmatpush.bf16.msra.mxu0 %v3361
        %4466 = vmatpush.bf16.msra.mxu0 %v3345
        %4467 = vmatpush.bf16.msra.mxu0 %v3329
        %4468 = vmatpush.bf16.msra.mxu0 %v3313
        %4469 = vmatpush.bf16.msra.mxu0 %v3297
        %4470 = vmatmul.bf16.gmra.mxu0 %v1240
        %v4471 = vpop.f32.mrf.mxu0
        %v4472 = vadd.f32 %v4459, %v4471
        %v4473 = vpop.f32.mrf.mxu0
        %4474 = vdwg.mxu0
        %4475 = vmatpush.bf16.msra.mxu0 %v3537
        %4476 = vmatpush.bf16.msra.mxu0 %v3521
        %4477 = vmatpush.bf16.msra.mxu0 %v3505
        %4478 = vmatpush.bf16.msra.mxu0 %v3489
        %4479 = vmatpush.bf16.msra.mxu0 %v3473
        %4480 = vmatpush.bf16.msra.mxu0 %v3457
        %4481 = vmatpush.bf16.msra.mxu0 %v3441
        %4482 = vmatpush.bf16.msra.mxu0 %v3425
        %4483 = vmatmul.bf16.gmra.mxu0 %v1241
        %v4484 = vpop.f32.mrf.mxu0
        %v4485 = vadd.f32 %v4472, %v4484
        %v4486 = vpop.f32.mrf.mxu0
        %4487 = vdwg.mxu0
        %4488 = vmatpush.bf16.msra.mxu0 %v3665
        %4489 = vmatpush.bf16.msra.mxu0 %v3649
        %4490 = vmatpush.bf16.msra.mxu0 %v3633
        %4491 = vmatpush.bf16.msra.mxu0 %v3617
        %4492 = vmatpush.bf16.msra.mxu0 %v3601
        %4493 = vmatpush.bf16.msra.mxu0 %v3585
        %4494 = vmatpush.bf16.msra.mxu0 %v3569
        %4495 = vmatpush.bf16.msra.mxu0 %v3553
        %4496 = vmatmul.bf16.gmra.mxu0 %v1242
        %v4497 = vpop.f32.mrf.mxu0
        %v4498 = vadd.f32 %v4485, %v4497
        %v4499 = vpop.f32.mrf.mxu0
        %4500 = vdwg.mxu0
        %4501 = vmatpush.bf16.msra.mxu0 %v3793
        %4502 = vmatpush.bf16.msra.mxu0 %v3777
        %4503 = vmatpush.bf16.msra.mxu0 %v3761
        %4504 = vmatpush.bf16.msra.mxu0 %v3745
        %4505 = vmatpush.bf16.msra.mxu0 %v3729
        %4506 = vmatpush.bf16.msra.mxu0 %v3713
        %4507 = vmatpush.bf16.msra.mxu0 %v3697
        %4508 = vmatpush.bf16.msra.mxu0 %v3681
        %4509 = vmatmul.bf16.gmra.mxu0 %v1243
        %v4510 = vpop.f32.mrf.mxu0
        %v4511 = vadd.f32 %v4498, %v4510
        %v4512 = vpop.f32.mrf.mxu0
        %4513 = vdwg.mxu0
        %4514 = vmatpush.bf16.msra.mxu0 %v3282
        %4515 = vmatpush.bf16.msra.mxu0 %v3266
        %4516 = vmatpush.bf16.msra.mxu0 %v3250
        %4517 = vmatpush.bf16.msra.mxu0 %v3234
        %4518 = vmatpush.bf16.msra.mxu0 %v3218
        %4519 = vmatpush.bf16.msra.mxu0 %v3202
        %4520 = vmatpush.bf16.msra.mxu0 %v3186
        %4521 = vmatpush.bf16.msra.mxu0 %v3170
        %4522 = vmatmul.bf16.gmra.mxu0 %v1239
        %v4523 = vpop.f32.mrf.mxu0
        %v4524 = vadd.f32 0.0, %v4523
        %v4525 = vpop.f32.mrf.mxu0
        %4526 = vdwg.mxu0
        %4527 = vmatpush.bf16.msra.mxu0 %v3410
        %4528 = vmatpush.bf16.msra.mxu0 %v3394
        %4529 = vmatpush.bf16.msra.mxu0 %v3378
        %4530 = vmatpush.bf16.msra.mxu0 %v3362
        %4531 = vmatpush.bf16.msra.mxu0 %v3346
        %4532 = vmatpush.bf16.msra.mxu0 %v3330
        %4533 = vmatpush.bf16.msra.mxu0 %v3314
        %4534 = vmatpush.bf16.msra.mxu0 %v3298
        %4535 = vmatmul.bf16.gmra.mxu0 %v1240
        %v4536 = vpop.f32.mrf.mxu0
        %v4537 = vadd.f32 %v4524, %v4536
        %v4538 = vpop.f32.mrf.mxu0
        %4539 = vdwg.mxu0
        %4540 = vmatpush.bf16.msra.mxu0 %v3538
        %4541 = vmatpush.bf16.msra.mxu0 %v3522
        %4542 = vmatpush.bf16.msra.mxu0 %v3506
        %4543 = vmatpush.bf16.msra.mxu0 %v3490
        %4544 = vmatpush.bf16.msra.mxu0 %v3474
        %4545 = vmatpush.bf16.msra.mxu0 %v3458
        %4546 = vmatpush.bf16.msra.mxu0 %v3442
        %4547 = vmatpush.bf16.msra.mxu0 %v3426
        %4548 = vmatmul.bf16.gmra.mxu0 %v1241
        %v4549 = vpop.f32.mrf.mxu0
        %v4550 = vadd.f32 %v4537, %v4549
        %v4551 = vpop.f32.mrf.mxu0
        %4552 = vdwg.mxu0
        %4553 = vmatpush.bf16.msra.mxu0 %v3666
        %4554 = vmatpush.bf16.msra.mxu0 %v3650
        %4555 = vmatpush.bf16.msra.mxu0 %v3634
        %4556 = vmatpush.bf16.msra.mxu0 %v3618
        %4557 = vmatpush.bf16.msra.mxu0 %v3602
        %4558 = vmatpush.bf16.msra.mxu0 %v3586
        %4559 = vmatpush.bf16.msra.mxu0 %v3570
        %4560 = vmatpush.bf16.msra.mxu0 %v3554
        %4561 = vmatmul.bf16.gmra.mxu0 %v1242
        %v4562 = vpop.f32.mrf.mxu0
        %v4563 = vadd.f32 %v4550, %v4562
        %v4564 = vpop.f32.mrf.mxu0
        %4565 = vdwg.mxu0
        %4566 = vmatpush.bf16.msra.mxu0 %v3794
        %4567 = vmatpush.bf16.msra.mxu0 %v3778
        %4568 = vmatpush.bf16.msra.mxu0 %v3762
        %4569 = vmatpush.bf16.msra.mxu0 %v3746
        %4570 = vmatpush.bf16.msra.mxu0 %v3730
        %4571 = vmatpush.bf16.msra.mxu0 %v3714
        %4572 = vmatpush.bf16.msra.mxu0 %v3698
        %4573 = vmatpush.bf16.msra.mxu0 %v3682
        %4574 = vmatmul.bf16.gmra.mxu0 %v1243
        %v4575 = vpop.f32.mrf.mxu0
        %v4576 = vadd.f32 %v4563, %v4575
        %v4577 = vpop.f32.mrf.mxu0
        %4578 = vdwg.mxu0
        %4579 = vmatpush.bf16.msra.mxu0 %v3283
        %4580 = vmatpush.bf16.msra.mxu0 %v3267
        %4581 = vmatpush.bf16.msra.mxu0 %v3251
        %4582 = vmatpush.bf16.msra.mxu0 %v3235
        %4583 = vmatpush.bf16.msra.mxu0 %v3219
        %4584 = vmatpush.bf16.msra.mxu0 %v3203
        %4585 = vmatpush.bf16.msra.mxu0 %v3187
        %4586 = vmatpush.bf16.msra.mxu0 %v3171
        %4587 = vmatmul.bf16.gmra.mxu0 %v1239
        %v4588 = vpop.f32.mrf.mxu0
        %v4589 = vadd.f32 0.0, %v4588
        %v4590 = vpop.f32.mrf.mxu0
        %4591 = vdwg.mxu0
        %4592 = vmatpush.bf16.msra.mxu0 %v3411
        %4593 = vmatpush.bf16.msra.mxu0 %v3395
        %4594 = vmatpush.bf16.msra.mxu0 %v3379
        %4595 = vmatpush.bf16.msra.mxu0 %v3363
        %4596 = vmatpush.bf16.msra.mxu0 %v3347
        %4597 = vmatpush.bf16.msra.mxu0 %v3331
        %4598 = vmatpush.bf16.msra.mxu0 %v3315
        %4599 = vmatpush.bf16.msra.mxu0 %v3299
        %4600 = vmatmul.bf16.gmra.mxu0 %v1240
        %v4601 = vpop.f32.mrf.mxu0
        %v4602 = vadd.f32 %v4589, %v4601
        %v4603 = vpop.f32.mrf.mxu0
        %4604 = vdwg.mxu0
        %4605 = vmatpush.bf16.msra.mxu0 %v3539
        %4606 = vmatpush.bf16.msra.mxu0 %v3523
        %4607 = vmatpush.bf16.msra.mxu0 %v3507
        %4608 = vmatpush.bf16.msra.mxu0 %v3491
        %4609 = vmatpush.bf16.msra.mxu0 %v3475
        %4610 = vmatpush.bf16.msra.mxu0 %v3459
        %4611 = vmatpush.bf16.msra.mxu0 %v3443
        %4612 = vmatpush.bf16.msra.mxu0 %v3427
        %4613 = vmatmul.bf16.gmra.mxu0 %v1241
        %v4614 = vpop.f32.mrf.mxu0
        %v4615 = vadd.f32 %v4602, %v4614
        %v4616 = vpop.f32.mrf.mxu0
        %4617 = vdwg.mxu0
        %4618 = vmatpush.bf16.msra.mxu0 %v3667
        %4619 = vmatpush.bf16.msra.mxu0 %v3651
        %4620 = vmatpush.bf16.msra.mxu0 %v3635
        %4621 = vmatpush.bf16.msra.mxu0 %v3619
        %4622 = vmatpush.bf16.msra.mxu0 %v3603
        %4623 = vmatpush.bf16.msra.mxu0 %v3587
        %4624 = vmatpush.bf16.msra.mxu0 %v3571
        %4625 = vmatpush.bf16.msra.mxu0 %v3555
        %4626 = vmatmul.bf16.gmra.mxu0 %v1242
        %v4627 = vpop.f32.mrf.mxu0
        %v4628 = vadd.f32 %v4615, %v4627
        %v4629 = vpop.f32.mrf.mxu0
        %4630 = vdwg.mxu0
        %4631 = vmatpush.bf16.msra.mxu0 %v3795
        %4632 = vmatpush.bf16.msra.mxu0 %v3779
        %4633 = vmatpush.bf16.msra.mxu0 %v3763
        %4634 = vmatpush.bf16.msra.mxu0 %v3747
        %4635 = vmatpush.bf16.msra.mxu0 %v3731
        %4636 = vmatpush.bf16.msra.mxu0 %v3715
        %4637 = vmatpush.bf16.msra.mxu0 %v3699
        %4638 = vmatpush.bf16.msra.mxu0 %v3683
        %4639 = vmatmul.bf16.gmra.mxu0 %v1243
        %v4640 = vpop.f32.mrf.mxu0
        %v4641 = vadd.f32 %v4628, %v4640
        %v4642 = vpop.f32.mrf.mxu0
        %4643 = vdwg.mxu0
        %4644 = vmatpush.bf16.msra.mxu0 %v3284
        %4645 = vmatpush.bf16.msra.mxu0 %v3268
        %4646 = vmatpush.bf16.msra.mxu0 %v3252
        %4647 = vmatpush.bf16.msra.mxu0 %v3236
        %4648 = vmatpush.bf16.msra.mxu0 %v3220
        %4649 = vmatpush.bf16.msra.mxu0 %v3204
        %4650 = vmatpush.bf16.msra.mxu0 %v3188
        %4651 = vmatpush.bf16.msra.mxu0 %v3172
        %4652 = vmatmul.bf16.gmra.mxu0 %v1239
        %v4653 = vpop.f32.mrf.mxu0
        %v4654 = vadd.f32 0.0, %v4653
        %v4655 = vpop.f32.mrf.mxu0
        %4656 = vdwg.mxu0
        %4657 = vmatpush.bf16.msra.mxu0 %v3412
        %4658 = vmatpush.bf16.msra.mxu0 %v3396
        %4659 = vmatpush.bf16.msra.mxu0 %v3380
        %4660 = vmatpush.bf16.msra.mxu0 %v3364
        %4661 = vmatpush.bf16.msra.mxu0 %v3348
        %4662 = vmatpush.bf16.msra.mxu0 %v3332
        %4663 = vmatpush.bf16.msra.mxu0 %v3316
        %4664 = vmatpush.bf16.msra.mxu0 %v3300
        %4665 = vmatmul.bf16.gmra.mxu0 %v1240
        %v4666 = vpop.f32.mrf.mxu0
        %v4667 = vadd.f32 %v4654, %v4666
        %v4668 = vpop.f32.mrf.mxu0
        %4669 = vdwg.mxu0
        %4670 = vmatpush.bf16.msra.mxu0 %v3540
        %4671 = vmatpush.bf16.msra.mxu0 %v3524
        %4672 = vmatpush.bf16.msra.mxu0 %v3508
        %4673 = vmatpush.bf16.msra.mxu0 %v3492
        %4674 = vmatpush.bf16.msra.mxu0 %v3476
        %4675 = vmatpush.bf16.msra.mxu0 %v3460
        %4676 = vmatpush.bf16.msra.mxu0 %v3444
        %4677 = vmatpush.bf16.msra.mxu0 %v3428
        %4678 = vmatmul.bf16.gmra.mxu0 %v1241
        %v4679 = vpop.f32.mrf.mxu0
        %v4680 = vadd.f32 %v4667, %v4679
        %v4681 = vpop.f32.mrf.mxu0
        %4682 = vdwg.mxu0
        %4683 = vmatpush.bf16.msra.mxu0 %v3668
        %4684 = vmatpush.bf16.msra.mxu0 %v3652
        %4685 = vmatpush.bf16.msra.mxu0 %v3636
        %4686 = vmatpush.bf16.msra.mxu0 %v3620
        %4687 = vmatpush.bf16.msra.mxu0 %v3604
        %4688 = vmatpush.bf16.msra.mxu0 %v3588
        %4689 = vmatpush.bf16.msra.mxu0 %v3572
        %4690 = vmatpush.bf16.msra.mxu0 %v3556
        %4691 = vmatmul.bf16.gmra.mxu0 %v1242
        %v4692 = vpop.f32.mrf.mxu0
        %v4693 = vadd.f32 %v4680, %v4692
        %v4694 = vpop.f32.mrf.mxu0
        %4695 = vdwg.mxu0
        %4696 = vmatpush.bf16.msra.mxu0 %v3796
        %4697 = vmatpush.bf16.msra.mxu0 %v3780
        %4698 = vmatpush.bf16.msra.mxu0 %v3764
        %4699 = vmatpush.bf16.msra.mxu0 %v3748
        %4700 = vmatpush.bf16.msra.mxu0 %v3732
        %4701 = vmatpush.bf16.msra.mxu0 %v3716
        %4702 = vmatpush.bf16.msra.mxu0 %v3700
        %4703 = vmatpush.bf16.msra.mxu0 %v3684
        %4704 = vmatmul.bf16.gmra.mxu0 %v1243
        %v4705 = vpop.f32.mrf.mxu0
        %v4706 = vadd.f32 %v4693, %v4705
        %v4707 = vpop.f32.mrf.mxu0
        %4708 = vdwg.mxu0
        %4709 = vmatpush.bf16.msra.mxu0 %v3285
        %4710 = vmatpush.bf16.msra.mxu0 %v3269
        %4711 = vmatpush.bf16.msra.mxu0 %v3253
        %4712 = vmatpush.bf16.msra.mxu0 %v3237
        %4713 = vmatpush.bf16.msra.mxu0 %v3221
        %4714 = vmatpush.bf16.msra.mxu0 %v3205
        %4715 = vmatpush.bf16.msra.mxu0 %v3189
        %4716 = vmatpush.bf16.msra.mxu0 %v3173
        %4717 = vmatmul.bf16.gmra.mxu0 %v1239
        %v4718 = vpop.f32.mrf.mxu0
        %v4719 = vadd.f32 0.0, %v4718
        %v4720 = vpop.f32.mrf.mxu0
        %4721 = vdwg.mxu0
        %4722 = vmatpush.bf16.msra.mxu0 %v3413
        %4723 = vmatpush.bf16.msra.mxu0 %v3397
        %4724 = vmatpush.bf16.msra.mxu0 %v3381
        %4725 = vmatpush.bf16.msra.mxu0 %v3365
        %4726 = vmatpush.bf16.msra.mxu0 %v3349
        %4727 = vmatpush.bf16.msra.mxu0 %v3333
        %4728 = vmatpush.bf16.msra.mxu0 %v3317
        %4729 = vmatpush.bf16.msra.mxu0 %v3301
        %4730 = vmatmul.bf16.gmra.mxu0 %v1240
        %v4731 = vpop.f32.mrf.mxu0
        %v4732 = vadd.f32 %v4719, %v4731
        %v4733 = vpop.f32.mrf.mxu0
        %4734 = vdwg.mxu0
        %4735 = vmatpush.bf16.msra.mxu0 %v3541
        %4736 = vmatpush.bf16.msra.mxu0 %v3525
        %4737 = vmatpush.bf16.msra.mxu0 %v3509
        %4738 = vmatpush.bf16.msra.mxu0 %v3493
        %4739 = vmatpush.bf16.msra.mxu0 %v3477
        %4740 = vmatpush.bf16.msra.mxu0 %v3461
        %4741 = vmatpush.bf16.msra.mxu0 %v3445
        %4742 = vmatpush.bf16.msra.mxu0 %v3429
        %4743 = vmatmul.bf16.gmra.mxu0 %v1241
        %v4744 = vpop.f32.mrf.mxu0
        %v4745 = vadd.f32 %v4732, %v4744
        %v4746 = vpop.f32.mrf.mxu0
        %4747 = vdwg.mxu0
        %4748 = vmatpush.bf16.msra.mxu0 %v3669
        %4749 = vmatpush.bf16.msra.mxu0 %v3653
        %4750 = vmatpush.bf16.msra.mxu0 %v3637
        %4751 = vmatpush.bf16.msra.mxu0 %v3621
        %4752 = vmatpush.bf16.msra.mxu0 %v3605
        %4753 = vmatpush.bf16.msra.mxu0 %v3589
        %4754 = vmatpush.bf16.msra.mxu0 %v3573
        %4755 = vmatpush.bf16.msra.mxu0 %v3557
        %4756 = vmatmul.bf16.gmra.mxu0 %v1242
        %v4757 = vpop.f32.mrf.mxu0
        %v4758 = vadd.f32 %v4745, %v4757
        %v4759 = vpop.f32.mrf.mxu0
        %4760 = vdwg.mxu0
        %4761 = vmatpush.bf16.msra.mxu0 %v3797
        %4762 = vmatpush.bf16.msra.mxu0 %v3781
        %4763 = vmatpush.bf16.msra.mxu0 %v3765
        %4764 = vmatpush.bf16.msra.mxu0 %v3749
        %4765 = vmatpush.bf16.msra.mxu0 %v3733
        %4766 = vmatpush.bf16.msra.mxu0 %v3717
        %4767 = vmatpush.bf16.msra.mxu0 %v3701
        %4768 = vmatpush.bf16.msra.mxu0 %v3685
        %4769 = vmatmul.bf16.gmra.mxu0 %v1243
        %v4770 = vpop.f32.mrf.mxu0
        %v4771 = vadd.f32 %v4758, %v4770
        %v4772 = vpop.f32.mrf.mxu0
        %4773 = vdwg.mxu0
        %4774 = vmatpush.bf16.msra.mxu0 %v3286
        %4775 = vmatpush.bf16.msra.mxu0 %v3270
        %4776 = vmatpush.bf16.msra.mxu0 %v3254
        %4777 = vmatpush.bf16.msra.mxu0 %v3238
        %4778 = vmatpush.bf16.msra.mxu0 %v3222
        %4779 = vmatpush.bf16.msra.mxu0 %v3206
        %4780 = vmatpush.bf16.msra.mxu0 %v3190
        %4781 = vmatpush.bf16.msra.mxu0 %v3174
        %4782 = vmatmul.bf16.gmra.mxu0 %v1239
        %v4783 = vpop.f32.mrf.mxu0
        %v4784 = vadd.f32 0.0, %v4783
        %v4785 = vpop.f32.mrf.mxu0
        %4786 = vdwg.mxu0
        %4787 = vmatpush.bf16.msra.mxu0 %v3414
        %4788 = vmatpush.bf16.msra.mxu0 %v3398
        %4789 = vmatpush.bf16.msra.mxu0 %v3382
        %4790 = vmatpush.bf16.msra.mxu0 %v3366
        %4791 = vmatpush.bf16.msra.mxu0 %v3350
        %4792 = vmatpush.bf16.msra.mxu0 %v3334
        %4793 = vmatpush.bf16.msra.mxu0 %v3318
        %4794 = vmatpush.bf16.msra.mxu0 %v3302
        %4795 = vmatmul.bf16.gmra.mxu0 %v1240
        %v4796 = vpop.f32.mrf.mxu0
        %v4797 = vadd.f32 %v4784, %v4796
        %v4798 = vpop.f32.mrf.mxu0
        %4799 = vdwg.mxu0
        %4800 = vmatpush.bf16.msra.mxu0 %v3542
        %4801 = vmatpush.bf16.msra.mxu0 %v3526
        %4802 = vmatpush.bf16.msra.mxu0 %v3510
        %4803 = vmatpush.bf16.msra.mxu0 %v3494
        %4804 = vmatpush.bf16.msra.mxu0 %v3478
        %4805 = vmatpush.bf16.msra.mxu0 %v3462
        %4806 = vmatpush.bf16.msra.mxu0 %v3446
        %4807 = vmatpush.bf16.msra.mxu0 %v3430
        %4808 = vmatmul.bf16.gmra.mxu0 %v1241
        %v4809 = vpop.f32.mrf.mxu0
        %v4810 = vadd.f32 %v4797, %v4809
        %v4811 = vpop.f32.mrf.mxu0
        %4812 = vdwg.mxu0
        %4813 = vmatpush.bf16.msra.mxu0 %v3670
        %4814 = vmatpush.bf16.msra.mxu0 %v3654
        %4815 = vmatpush.bf16.msra.mxu0 %v3638
        %4816 = vmatpush.bf16.msra.mxu0 %v3622
        %4817 = vmatpush.bf16.msra.mxu0 %v3606
        %4818 = vmatpush.bf16.msra.mxu0 %v3590
        %4819 = vmatpush.bf16.msra.mxu0 %v3574
        %4820 = vmatpush.bf16.msra.mxu0 %v3558
        %4821 = vmatmul.bf16.gmra.mxu0 %v1242
        %v4822 = vpop.f32.mrf.mxu0
        %v4823 = vadd.f32 %v4810, %v4822
        %v4824 = vpop.f32.mrf.mxu0
        %4825 = vdwg.mxu0
        %4826 = vmatpush.bf16.msra.mxu0 %v3798
        %4827 = vmatpush.bf16.msra.mxu0 %v3782
        %4828 = vmatpush.bf16.msra.mxu0 %v3766
        %4829 = vmatpush.bf16.msra.mxu0 %v3750
        %4830 = vmatpush.bf16.msra.mxu0 %v3734
        %4831 = vmatpush.bf16.msra.mxu0 %v3718
        %4832 = vmatpush.bf16.msra.mxu0 %v3702
        %4833 = vmatpush.bf16.msra.mxu0 %v3686
        %4834 = vmatmul.bf16.gmra.mxu0 %v1243
        %v4835 = vpop.f32.mrf.mxu0
        %v4836 = vadd.f32 %v4823, %v4835
        %v4837 = vpop.f32.mrf.mxu0
        %4838 = vdwg.mxu0
        %4839 = vmatpush.bf16.msra.mxu0 %v3287
        %4840 = vmatpush.bf16.msra.mxu0 %v3271
        %4841 = vmatpush.bf16.msra.mxu0 %v3255
        %4842 = vmatpush.bf16.msra.mxu0 %v3239
        %4843 = vmatpush.bf16.msra.mxu0 %v3223
        %4844 = vmatpush.bf16.msra.mxu0 %v3207
        %4845 = vmatpush.bf16.msra.mxu0 %v3191
        %4846 = vmatpush.bf16.msra.mxu0 %v3175
        %4847 = vmatmul.bf16.gmra.mxu0 %v1239
        %v4848 = vpop.f32.mrf.mxu0
        %v4849 = vadd.f32 0.0, %v4848
        %v4850 = vpop.f32.mrf.mxu0
        %4851 = vdwg.mxu0
        %4852 = vmatpush.bf16.msra.mxu0 %v3415
        %4853 = vmatpush.bf16.msra.mxu0 %v3399
        %4854 = vmatpush.bf16.msra.mxu0 %v3383
        %4855 = vmatpush.bf16.msra.mxu0 %v3367
        %4856 = vmatpush.bf16.msra.mxu0 %v3351
        %4857 = vmatpush.bf16.msra.mxu0 %v3335
        %4858 = vmatpush.bf16.msra.mxu0 %v3319
        %4859 = vmatpush.bf16.msra.mxu0 %v3303
        %4860 = vmatmul.bf16.gmra.mxu0 %v1240
        %v4861 = vpop.f32.mrf.mxu0
        %v4862 = vadd.f32 %v4849, %v4861
        %v4863 = vpop.f32.mrf.mxu0
        %4864 = vdwg.mxu0
        %4865 = vmatpush.bf16.msra.mxu0 %v3543
        %4866 = vmatpush.bf16.msra.mxu0 %v3527
        %4867 = vmatpush.bf16.msra.mxu0 %v3511
        %4868 = vmatpush.bf16.msra.mxu0 %v3495
        %4869 = vmatpush.bf16.msra.mxu0 %v3479
        %4870 = vmatpush.bf16.msra.mxu0 %v3463
        %4871 = vmatpush.bf16.msra.mxu0 %v3447
        %4872 = vmatpush.bf16.msra.mxu0 %v3431
        %4873 = vmatmul.bf16.gmra.mxu0 %v1241
        %v4874 = vpop.f32.mrf.mxu0
        %v4875 = vadd.f32 %v4862, %v4874
        %v4876 = vpop.f32.mrf.mxu0
        %4877 = vdwg.mxu0
        %4878 = vmatpush.bf16.msra.mxu0 %v3671
        %4879 = vmatpush.bf16.msra.mxu0 %v3655
        %4880 = vmatpush.bf16.msra.mxu0 %v3639
        %4881 = vmatpush.bf16.msra.mxu0 %v3623
        %4882 = vmatpush.bf16.msra.mxu0 %v3607
        %4883 = vmatpush.bf16.msra.mxu0 %v3591
        %4884 = vmatpush.bf16.msra.mxu0 %v3575
        %4885 = vmatpush.bf16.msra.mxu0 %v3559
        %4886 = vmatmul.bf16.gmra.mxu0 %v1242
        %v4887 = vpop.f32.mrf.mxu0
        %v4888 = vadd.f32 %v4875, %v4887
        %v4889 = vpop.f32.mrf.mxu0
        %4890 = vdwg.mxu0
        %4891 = vmatpush.bf16.msra.mxu0 %v3799
        %4892 = vmatpush.bf16.msra.mxu0 %v3783
        %4893 = vmatpush.bf16.msra.mxu0 %v3767
        %4894 = vmatpush.bf16.msra.mxu0 %v3751
        %4895 = vmatpush.bf16.msra.mxu0 %v3735
        %4896 = vmatpush.bf16.msra.mxu0 %v3719
        %4897 = vmatpush.bf16.msra.mxu0 %v3703
        %4898 = vmatpush.bf16.msra.mxu0 %v3687
        %4899 = vmatmul.bf16.gmra.mxu0 %v1243
        %v4900 = vpop.f32.mrf.mxu0
        %v4901 = vadd.f32 %v4888, %v4900
        %v4902 = vpop.f32.mrf.mxu0
        %4903 = vdwg.mxu0
        %4904 = vmatpush.bf16.msra.mxu0 %v3288
        %4905 = vmatpush.bf16.msra.mxu0 %v3272
        %4906 = vmatpush.bf16.msra.mxu0 %v3256
        %4907 = vmatpush.bf16.msra.mxu0 %v3240
        %4908 = vmatpush.bf16.msra.mxu0 %v3224
        %4909 = vmatpush.bf16.msra.mxu0 %v3208
        %4910 = vmatpush.bf16.msra.mxu0 %v3192
        %4911 = vmatpush.bf16.msra.mxu0 %v3176
        %4912 = vmatmul.bf16.gmra.mxu0 %v1239
        %v4913 = vpop.f32.mrf.mxu0
        %v4914 = vadd.f32 0.0, %v4913
        %v4915 = vpop.f32.mrf.mxu0
        %4916 = vdwg.mxu0
        %4917 = vmatpush.bf16.msra.mxu0 %v3416
        %4918 = vmatpush.bf16.msra.mxu0 %v3400
        %4919 = vmatpush.bf16.msra.mxu0 %v3384
        %4920 = vmatpush.bf16.msra.mxu0 %v3368
        %4921 = vmatpush.bf16.msra.mxu0 %v3352
        %4922 = vmatpush.bf16.msra.mxu0 %v3336
        %4923 = vmatpush.bf16.msra.mxu0 %v3320
        %4924 = vmatpush.bf16.msra.mxu0 %v3304
        %4925 = vmatmul.bf16.gmra.mxu0 %v1240
        %v4926 = vpop.f32.mrf.mxu0
        %v4927 = vadd.f32 %v4914, %v4926
        %v4928 = vpop.f32.mrf.mxu0
        %4929 = vdwg.mxu0
        %4930 = vmatpush.bf16.msra.mxu0 %v3544
        %4931 = vmatpush.bf16.msra.mxu0 %v3528
        %4932 = vmatpush.bf16.msra.mxu0 %v3512
        %4933 = vmatpush.bf16.msra.mxu0 %v3496
        %4934 = vmatpush.bf16.msra.mxu0 %v3480
        %4935 = vmatpush.bf16.msra.mxu0 %v3464
        %4936 = vmatpush.bf16.msra.mxu0 %v3448
        %4937 = vmatpush.bf16.msra.mxu0 %v3432
        %4938 = vmatmul.bf16.gmra.mxu0 %v1241
        %v4939 = vpop.f32.mrf.mxu0
        %v4940 = vadd.f32 %v4927, %v4939
        %v4941 = vpop.f32.mrf.mxu0
        %4942 = vdwg.mxu0
        %4943 = vmatpush.bf16.msra.mxu0 %v3672
        %4944 = vmatpush.bf16.msra.mxu0 %v3656
        %4945 = vmatpush.bf16.msra.mxu0 %v3640
        %4946 = vmatpush.bf16.msra.mxu0 %v3624
        %4947 = vmatpush.bf16.msra.mxu0 %v3608
        %4948 = vmatpush.bf16.msra.mxu0 %v3592
        %4949 = vmatpush.bf16.msra.mxu0 %v3576
        %4950 = vmatpush.bf16.msra.mxu0 %v3560
        %4951 = vmatmul.bf16.gmra.mxu0 %v1242
        %v4952 = vpop.f32.mrf.mxu0
        %v4953 = vadd.f32 %v4940, %v4952
        %v4954 = vpop.f32.mrf.mxu0
        %4955 = vdwg.mxu0
        %4956 = vmatpush.bf16.msra.mxu0 %v3800
        %4957 = vmatpush.bf16.msra.mxu0 %v3784
        %4958 = vmatpush.bf16.msra.mxu0 %v3768
        %4959 = vmatpush.bf16.msra.mxu0 %v3752
        %4960 = vmatpush.bf16.msra.mxu0 %v3736
        %4961 = vmatpush.bf16.msra.mxu0 %v3720
        %4962 = vmatpush.bf16.msra.mxu0 %v3704
        %4963 = vmatpush.bf16.msra.mxu0 %v3688
        %4964 = vmatmul.bf16.gmra.mxu0 %v1243
        %v4965 = vpop.f32.mrf.mxu0
        %v4966 = vadd.f32 %v4953, %v4965
        %v4967 = vpop.f32.mrf.mxu0
        %4968 = vdwg.mxu0
        %4969 = vmatpush.bf16.msra.mxu0 %v3289
        %4970 = vmatpush.bf16.msra.mxu0 %v3273
        %4971 = vmatpush.bf16.msra.mxu0 %v3257
        %4972 = vmatpush.bf16.msra.mxu0 %v3241
        %4973 = vmatpush.bf16.msra.mxu0 %v3225
        %4974 = vmatpush.bf16.msra.mxu0 %v3209
        %4975 = vmatpush.bf16.msra.mxu0 %v3193
        %4976 = vmatpush.bf16.msra.mxu0 %v3177
        %4977 = vmatmul.bf16.gmra.mxu0 %v1239
        %v4978 = vpop.f32.mrf.mxu0
        %v4979 = vadd.f32 0.0, %v4978
        %v4980 = vpop.f32.mrf.mxu0
        %4981 = vdwg.mxu0
        %4982 = vmatpush.bf16.msra.mxu0 %v3417
        %4983 = vmatpush.bf16.msra.mxu0 %v3401
        %4984 = vmatpush.bf16.msra.mxu0 %v3385
        %4985 = vmatpush.bf16.msra.mxu0 %v3369
        %4986 = vmatpush.bf16.msra.mxu0 %v3353
        %4987 = vmatpush.bf16.msra.mxu0 %v3337
        %4988 = vmatpush.bf16.msra.mxu0 %v3321
        %4989 = vmatpush.bf16.msra.mxu0 %v3305
        %4990 = vmatmul.bf16.gmra.mxu0 %v1240
        %v4991 = vpop.f32.mrf.mxu0
        %v4992 = vadd.f32 %v4979, %v4991
        %v4993 = vpop.f32.mrf.mxu0
        %4994 = vdwg.mxu0
        %4995 = vmatpush.bf16.msra.mxu0 %v3545
        %4996 = vmatpush.bf16.msra.mxu0 %v3529
        %4997 = vmatpush.bf16.msra.mxu0 %v3513
        %4998 = vmatpush.bf16.msra.mxu0 %v3497
        %4999 = vmatpush.bf16.msra.mxu0 %v3481
        %5000 = vmatpush.bf16.msra.mxu0 %v3465
        %5001 = vmatpush.bf16.msra.mxu0 %v3449
        %5002 = vmatpush.bf16.msra.mxu0 %v3433
        %5003 = vmatmul.bf16.gmra.mxu0 %v1241
        %v5004 = vpop.f32.mrf.mxu0
        %v5005 = vadd.f32 %v4992, %v5004
        %v5006 = vpop.f32.mrf.mxu0
        %5007 = vdwg.mxu0
        %5008 = vmatpush.bf16.msra.mxu0 %v3673
        %5009 = vmatpush.bf16.msra.mxu0 %v3657
        %5010 = vmatpush.bf16.msra.mxu0 %v3641
        %5011 = vmatpush.bf16.msra.mxu0 %v3625
        %5012 = vmatpush.bf16.msra.mxu0 %v3609
        %5013 = vmatpush.bf16.msra.mxu0 %v3593
        %5014 = vmatpush.bf16.msra.mxu0 %v3577
        %5015 = vmatpush.bf16.msra.mxu0 %v3561
        %5016 = vmatmul.bf16.gmra.mxu0 %v1242
        %v5017 = vpop.f32.mrf.mxu0
        %v5018 = vadd.f32 %v5005, %v5017
        %v5019 = vpop.f32.mrf.mxu0
        %5020 = vdwg.mxu0
        %5021 = vmatpush.bf16.msra.mxu0 %v3801
        %5022 = vmatpush.bf16.msra.mxu0 %v3785
        %5023 = vmatpush.bf16.msra.mxu0 %v3769
        %5024 = vmatpush.bf16.msra.mxu0 %v3753
        %5025 = vmatpush.bf16.msra.mxu0 %v3737
        %5026 = vmatpush.bf16.msra.mxu0 %v3721
        %5027 = vmatpush.bf16.msra.mxu0 %v3705
        %5028 = vmatpush.bf16.msra.mxu0 %v3689
        %5029 = vmatmul.bf16.gmra.mxu0 %v1243
        %v5030 = vpop.f32.mrf.mxu0
        %v5031 = vadd.f32 %v5018, %v5030
        %v5032 = vpop.f32.mrf.mxu0
        %5033 = vdwg.mxu0
        %5034 = vmatpush.bf16.msra.mxu0 %v3290
        %5035 = vmatpush.bf16.msra.mxu0 %v3274
        %5036 = vmatpush.bf16.msra.mxu0 %v3258
        %5037 = vmatpush.bf16.msra.mxu0 %v3242
        %5038 = vmatpush.bf16.msra.mxu0 %v3226
        %5039 = vmatpush.bf16.msra.mxu0 %v3210
        %5040 = vmatpush.bf16.msra.mxu0 %v3194
        %5041 = vmatpush.bf16.msra.mxu0 %v3178
        %5042 = vmatmul.bf16.gmra.mxu0 %v1239
        %v5043 = vpop.f32.mrf.mxu0
        %v5044 = vadd.f32 0.0, %v5043
        %v5045 = vpop.f32.mrf.mxu0
        %5046 = vdwg.mxu0
        %5047 = vmatpush.bf16.msra.mxu0 %v3418
        %5048 = vmatpush.bf16.msra.mxu0 %v3402
        %5049 = vmatpush.bf16.msra.mxu0 %v3386
        %5050 = vmatpush.bf16.msra.mxu0 %v3370
        %5051 = vmatpush.bf16.msra.mxu0 %v3354
        %5052 = vmatpush.bf16.msra.mxu0 %v3338
        %5053 = vmatpush.bf16.msra.mxu0 %v3322
        %5054 = vmatpush.bf16.msra.mxu0 %v3306
        %5055 = vmatmul.bf16.gmra.mxu0 %v1240
        %v5056 = vpop.f32.mrf.mxu0
        %v5057 = vadd.f32 %v5044, %v5056
        %v5058 = vpop.f32.mrf.mxu0
        %5059 = vdwg.mxu0
        %5060 = vmatpush.bf16.msra.mxu0 %v3546
        %5061 = vmatpush.bf16.msra.mxu0 %v3530
        %5062 = vmatpush.bf16.msra.mxu0 %v3514
        %5063 = vmatpush.bf16.msra.mxu0 %v3498
        %5064 = vmatpush.bf16.msra.mxu0 %v3482
        %5065 = vmatpush.bf16.msra.mxu0 %v3466
        %5066 = vmatpush.bf16.msra.mxu0 %v3450
        %5067 = vmatpush.bf16.msra.mxu0 %v3434
        %5068 = vmatmul.bf16.gmra.mxu0 %v1241
        %v5069 = vpop.f32.mrf.mxu0
        %v5070 = vadd.f32 %v5057, %v5069
        %v5071 = vpop.f32.mrf.mxu0
        %5072 = vdwg.mxu0
        %5073 = vmatpush.bf16.msra.mxu0 %v3674
        %5074 = vmatpush.bf16.msra.mxu0 %v3658
        %5075 = vmatpush.bf16.msra.mxu0 %v3642
        %5076 = vmatpush.bf16.msra.mxu0 %v3626
        %5077 = vmatpush.bf16.msra.mxu0 %v3610
        %5078 = vmatpush.bf16.msra.mxu0 %v3594
        %5079 = vmatpush.bf16.msra.mxu0 %v3578
        %5080 = vmatpush.bf16.msra.mxu0 %v3562
        %5081 = vmatmul.bf16.gmra.mxu0 %v1242
        %v5082 = vpop.f32.mrf.mxu0
        %v5083 = vadd.f32 %v5070, %v5082
        %v5084 = vpop.f32.mrf.mxu0
        %5085 = vdwg.mxu0
        %5086 = vmatpush.bf16.msra.mxu0 %v3802
        %5087 = vmatpush.bf16.msra.mxu0 %v3786
        %5088 = vmatpush.bf16.msra.mxu0 %v3770
        %5089 = vmatpush.bf16.msra.mxu0 %v3754
        %5090 = vmatpush.bf16.msra.mxu0 %v3738
        %5091 = vmatpush.bf16.msra.mxu0 %v3722
        %5092 = vmatpush.bf16.msra.mxu0 %v3706
        %5093 = vmatpush.bf16.msra.mxu0 %v3690
        %5094 = vmatmul.bf16.gmra.mxu0 %v1243
        %v5095 = vpop.f32.mrf.mxu0
        %v5096 = vadd.f32 %v5083, %v5095
        %v5097 = vpop.f32.mrf.mxu0
        %5098 = vdwg.mxu0
        %5099 = vmatpush.bf16.msra.mxu0 %v3291
        %5100 = vmatpush.bf16.msra.mxu0 %v3275
        %5101 = vmatpush.bf16.msra.mxu0 %v3259
        %5102 = vmatpush.bf16.msra.mxu0 %v3243
        %5103 = vmatpush.bf16.msra.mxu0 %v3227
        %5104 = vmatpush.bf16.msra.mxu0 %v3211
        %5105 = vmatpush.bf16.msra.mxu0 %v3195
        %5106 = vmatpush.bf16.msra.mxu0 %v3179
        %5107 = vmatmul.bf16.gmra.mxu0 %v1239
        %v5108 = vpop.f32.mrf.mxu0
        %v5109 = vadd.f32 0.0, %v5108
        %v5110 = vpop.f32.mrf.mxu0
        %5111 = vdwg.mxu0
        %5112 = vmatpush.bf16.msra.mxu0 %v3419
        %5113 = vmatpush.bf16.msra.mxu0 %v3403
        %5114 = vmatpush.bf16.msra.mxu0 %v3387
        %5115 = vmatpush.bf16.msra.mxu0 %v3371
        %5116 = vmatpush.bf16.msra.mxu0 %v3355
        %5117 = vmatpush.bf16.msra.mxu0 %v3339
        %5118 = vmatpush.bf16.msra.mxu0 %v3323
        %5119 = vmatpush.bf16.msra.mxu0 %v3307
        %5120 = vmatmul.bf16.gmra.mxu0 %v1240
        %v5121 = vpop.f32.mrf.mxu0
        %v5122 = vadd.f32 %v5109, %v5121
        %v5123 = vpop.f32.mrf.mxu0
        %5124 = vdwg.mxu0
        %5125 = vmatpush.bf16.msra.mxu0 %v3547
        %5126 = vmatpush.bf16.msra.mxu0 %v3531
        %5127 = vmatpush.bf16.msra.mxu0 %v3515
        %5128 = vmatpush.bf16.msra.mxu0 %v3499
        %5129 = vmatpush.bf16.msra.mxu0 %v3483
        %5130 = vmatpush.bf16.msra.mxu0 %v3467
        %5131 = vmatpush.bf16.msra.mxu0 %v3451
        %5132 = vmatpush.bf16.msra.mxu0 %v3435
        %5133 = vmatmul.bf16.gmra.mxu0 %v1241
        %v5134 = vpop.f32.mrf.mxu0
        %v5135 = vadd.f32 %v5122, %v5134
        %v5136 = vpop.f32.mrf.mxu0
        %5137 = vdwg.mxu0
        %5138 = vmatpush.bf16.msra.mxu0 %v3675
        %5139 = vmatpush.bf16.msra.mxu0 %v3659
        %5140 = vmatpush.bf16.msra.mxu0 %v3643
        %5141 = vmatpush.bf16.msra.mxu0 %v3627
        %5142 = vmatpush.bf16.msra.mxu0 %v3611
        %5143 = vmatpush.bf16.msra.mxu0 %v3595
        %5144 = vmatpush.bf16.msra.mxu0 %v3579
        %5145 = vmatpush.bf16.msra.mxu0 %v3563
        %5146 = vmatmul.bf16.gmra.mxu0 %v1242
        %v5147 = vpop.f32.mrf.mxu0
        %v5148 = vadd.f32 %v5135, %v5147
        %v5149 = vpop.f32.mrf.mxu0
        %5150 = vdwg.mxu0
        %5151 = vmatpush.bf16.msra.mxu0 %v3803
        %5152 = vmatpush.bf16.msra.mxu0 %v3787
        %5153 = vmatpush.bf16.msra.mxu0 %v3771
        %5154 = vmatpush.bf16.msra.mxu0 %v3755
        %5155 = vmatpush.bf16.msra.mxu0 %v3739
        %5156 = vmatpush.bf16.msra.mxu0 %v3723
        %5157 = vmatpush.bf16.msra.mxu0 %v3707
        %5158 = vmatpush.bf16.msra.mxu0 %v3691
        %5159 = vmatmul.bf16.gmra.mxu0 %v1243
        %v5160 = vpop.f32.mrf.mxu0
        %v5161 = vadd.f32 %v5148, %v5160
        %v5162 = vpop.f32.mrf.mxu0
        %5163 = vdwg.mxu0
        %5164 = vmatpush.bf16.msra.mxu0 %v3292
        %5165 = vmatpush.bf16.msra.mxu0 %v3276
        %5166 = vmatpush.bf16.msra.mxu0 %v3260
        %5167 = vmatpush.bf16.msra.mxu0 %v3244
        %5168 = vmatpush.bf16.msra.mxu0 %v3228
        %5169 = vmatpush.bf16.msra.mxu0 %v3212
        %5170 = vmatpush.bf16.msra.mxu0 %v3196
        %5171 = vmatpush.bf16.msra.mxu0 %v3180
        %5172 = vmatmul.bf16.gmra.mxu0 %v1239
        %v5173 = vpop.f32.mrf.mxu0
        %v5174 = vadd.f32 0.0, %v5173
        %v5175 = vpop.f32.mrf.mxu0
        %5176 = vdwg.mxu0
        %5177 = vmatpush.bf16.msra.mxu0 %v3420
        %5178 = vmatpush.bf16.msra.mxu0 %v3404
        %5179 = vmatpush.bf16.msra.mxu0 %v3388
        %5180 = vmatpush.bf16.msra.mxu0 %v3372
        %5181 = vmatpush.bf16.msra.mxu0 %v3356
        %5182 = vmatpush.bf16.msra.mxu0 %v3340
        %5183 = vmatpush.bf16.msra.mxu0 %v3324
        %5184 = vmatpush.bf16.msra.mxu0 %v3308
        %5185 = vmatmul.bf16.gmra.mxu0 %v1240
        %v5186 = vpop.f32.mrf.mxu0
        %v5187 = vadd.f32 %v5174, %v5186
        %v5188 = vpop.f32.mrf.mxu0
        %5189 = vdwg.mxu0
        %5190 = vmatpush.bf16.msra.mxu0 %v3548
        %5191 = vmatpush.bf16.msra.mxu0 %v3532
        %5192 = vmatpush.bf16.msra.mxu0 %v3516
        %5193 = vmatpush.bf16.msra.mxu0 %v3500
        %5194 = vmatpush.bf16.msra.mxu0 %v3484
        %5195 = vmatpush.bf16.msra.mxu0 %v3468
        %5196 = vmatpush.bf16.msra.mxu0 %v3452
        %5197 = vmatpush.bf16.msra.mxu0 %v3436
        %5198 = vmatmul.bf16.gmra.mxu0 %v1241
        %v5199 = vpop.f32.mrf.mxu0
        %v5200 = vadd.f32 %v5187, %v5199
        %v5201 = vpop.f32.mrf.mxu0
        %5202 = vdwg.mxu0
        %5203 = vmatpush.bf16.msra.mxu0 %v3676
        %5204 = vmatpush.bf16.msra.mxu0 %v3660
        %5205 = vmatpush.bf16.msra.mxu0 %v3644
        %5206 = vmatpush.bf16.msra.mxu0 %v3628
        %5207 = vmatpush.bf16.msra.mxu0 %v3612
        %5208 = vmatpush.bf16.msra.mxu0 %v3596
        %5209 = vmatpush.bf16.msra.mxu0 %v3580
        %5210 = vmatpush.bf16.msra.mxu0 %v3564
        %5211 = vmatmul.bf16.gmra.mxu0 %v1242
        %v5212 = vpop.f32.mrf.mxu0
        %v5213 = vadd.f32 %v5200, %v5212
        %v5214 = vpop.f32.mrf.mxu0
        %5215 = vdwg.mxu0
        %5216 = vmatpush.bf16.msra.mxu0 %v3804
        %5217 = vmatpush.bf16.msra.mxu0 %v3788
        %5218 = vmatpush.bf16.msra.mxu0 %v3772
        %5219 = vmatpush.bf16.msra.mxu0 %v3756
        %5220 = vmatpush.bf16.msra.mxu0 %v3740
        %5221 = vmatpush.bf16.msra.mxu0 %v3724
        %5222 = vmatpush.bf16.msra.mxu0 %v3708
        %5223 = vmatpush.bf16.msra.mxu0 %v3692
        %5224 = vmatmul.bf16.gmra.mxu0 %v1243
        %v5225 = vpop.f32.mrf.mxu0
        %v5226 = vadd.f32 %v5213, %v5225
        %v5227 = vpop.f32.mrf.mxu0
        %5228 = vdwg.mxu0
        %5229 = vmatpush.bf16.msra.mxu0 %v3293
        %5230 = vmatpush.bf16.msra.mxu0 %v3277
        %5231 = vmatpush.bf16.msra.mxu0 %v3261
        %5232 = vmatpush.bf16.msra.mxu0 %v3245
        %5233 = vmatpush.bf16.msra.mxu0 %v3229
        %5234 = vmatpush.bf16.msra.mxu0 %v3213
        %5235 = vmatpush.bf16.msra.mxu0 %v3197
        %5236 = vmatpush.bf16.msra.mxu0 %v3181
        %5237 = vmatmul.bf16.gmra.mxu0 %v1239
        %v5238 = vpop.f32.mrf.mxu0
        %v5239 = vadd.f32 0.0, %v5238
        %v5240 = vpop.f32.mrf.mxu0
        %5241 = vdwg.mxu0
        %5242 = vmatpush.bf16.msra.mxu0 %v3421
        %5243 = vmatpush.bf16.msra.mxu0 %v3405
        %5244 = vmatpush.bf16.msra.mxu0 %v3389
        %5245 = vmatpush.bf16.msra.mxu0 %v3373
        %5246 = vmatpush.bf16.msra.mxu0 %v3357
        %5247 = vmatpush.bf16.msra.mxu0 %v3341
        %5248 = vmatpush.bf16.msra.mxu0 %v3325
        %5249 = vmatpush.bf16.msra.mxu0 %v3309
        %5250 = vmatmul.bf16.gmra.mxu0 %v1240
        %v5251 = vpop.f32.mrf.mxu0
        %v5252 = vadd.f32 %v5239, %v5251
        %v5253 = vpop.f32.mrf.mxu0
        %5254 = vdwg.mxu0
        %5255 = vmatpush.bf16.msra.mxu0 %v3549
        %5256 = vmatpush.bf16.msra.mxu0 %v3533
        %5257 = vmatpush.bf16.msra.mxu0 %v3517
        %5258 = vmatpush.bf16.msra.mxu0 %v3501
        %5259 = vmatpush.bf16.msra.mxu0 %v3485
        %5260 = vmatpush.bf16.msra.mxu0 %v3469
        %5261 = vmatpush.bf16.msra.mxu0 %v3453
        %5262 = vmatpush.bf16.msra.mxu0 %v3437
        %5263 = vmatmul.bf16.gmra.mxu0 %v1241
        %v5264 = vpop.f32.mrf.mxu0
        %v5265 = vadd.f32 %v5252, %v5264
        %v5266 = vpop.f32.mrf.mxu0
        %5267 = vdwg.mxu0
        %5268 = vmatpush.bf16.msra.mxu0 %v3677
        %5269 = vmatpush.bf16.msra.mxu0 %v3661
        %5270 = vmatpush.bf16.msra.mxu0 %v3645
        %5271 = vmatpush.bf16.msra.mxu0 %v3629
        %5272 = vmatpush.bf16.msra.mxu0 %v3613
        %5273 = vmatpush.bf16.msra.mxu0 %v3597
        %5274 = vmatpush.bf16.msra.mxu0 %v3581
        %5275 = vmatpush.bf16.msra.mxu0 %v3565
        %5276 = vmatmul.bf16.gmra.mxu0 %v1242
        %v5277 = vpop.f32.mrf.mxu0
        %v5278 = vadd.f32 %v5265, %v5277
        %v5279 = vpop.f32.mrf.mxu0
        %5280 = vdwg.mxu0
        %5281 = vmatpush.bf16.msra.mxu0 %v3805
        %5282 = vmatpush.bf16.msra.mxu0 %v3789
        %5283 = vmatpush.bf16.msra.mxu0 %v3773
        %5284 = vmatpush.bf16.msra.mxu0 %v3757
        %5285 = vmatpush.bf16.msra.mxu0 %v3741
        %5286 = vmatpush.bf16.msra.mxu0 %v3725
        %5287 = vmatpush.bf16.msra.mxu0 %v3709
        %5288 = vmatpush.bf16.msra.mxu0 %v3693
        %5289 = vmatmul.bf16.gmra.mxu0 %v1243
        %v5290 = vpop.f32.mrf.mxu0
        %v5291 = vadd.f32 %v5278, %v5290
        %v5292 = vpop.f32.mrf.mxu0
        %5293 = vdwg.mxu0
        %5294 = vmatpush.bf16.msra.mxu0 %v3294
        %5295 = vmatpush.bf16.msra.mxu0 %v3278
        %5296 = vmatpush.bf16.msra.mxu0 %v3262
        %5297 = vmatpush.bf16.msra.mxu0 %v3246
        %5298 = vmatpush.bf16.msra.mxu0 %v3230
        %5299 = vmatpush.bf16.msra.mxu0 %v3214
        %5300 = vmatpush.bf16.msra.mxu0 %v3198
        %5301 = vmatpush.bf16.msra.mxu0 %v3182
        %5302 = vmatmul.bf16.gmra.mxu0 %v1239
        %v5303 = vpop.f32.mrf.mxu0
        %v5304 = vadd.f32 0.0, %v5303
        %v5305 = vpop.f32.mrf.mxu0
        %5306 = vdwg.mxu0
        %5307 = vmatpush.bf16.msra.mxu0 %v3422
        %5308 = vmatpush.bf16.msra.mxu0 %v3406
        %5309 = vmatpush.bf16.msra.mxu0 %v3390
        %5310 = vmatpush.bf16.msra.mxu0 %v3374
        %5311 = vmatpush.bf16.msra.mxu0 %v3358
        %5312 = vmatpush.bf16.msra.mxu0 %v3342
        %5313 = vmatpush.bf16.msra.mxu0 %v3326
        %5314 = vmatpush.bf16.msra.mxu0 %v3310
        %5315 = vmatmul.bf16.gmra.mxu0 %v1240
        %v5316 = vpop.f32.mrf.mxu0
        %v5317 = vadd.f32 %v5304, %v5316
        %v5318 = vpop.f32.mrf.mxu0
        %5319 = vdwg.mxu0
        %5320 = vmatpush.bf16.msra.mxu0 %v3550
        %5321 = vmatpush.bf16.msra.mxu0 %v3534
        %5322 = vmatpush.bf16.msra.mxu0 %v3518
        %5323 = vmatpush.bf16.msra.mxu0 %v3502
        %5324 = vmatpush.bf16.msra.mxu0 %v3486
        %5325 = vmatpush.bf16.msra.mxu0 %v3470
        %5326 = vmatpush.bf16.msra.mxu0 %v3454
        %5327 = vmatpush.bf16.msra.mxu0 %v3438
        %5328 = vmatmul.bf16.gmra.mxu0 %v1241
        %v5329 = vpop.f32.mrf.mxu0
        %v5330 = vadd.f32 %v5317, %v5329
        %v5331 = vpop.f32.mrf.mxu0
        %5332 = vdwg.mxu0
        %5333 = vmatpush.bf16.msra.mxu0 %v3678
        %5334 = vmatpush.bf16.msra.mxu0 %v3662
        %5335 = vmatpush.bf16.msra.mxu0 %v3646
        %5336 = vmatpush.bf16.msra.mxu0 %v3630
        %5337 = vmatpush.bf16.msra.mxu0 %v3614
        %5338 = vmatpush.bf16.msra.mxu0 %v3598
        %5339 = vmatpush.bf16.msra.mxu0 %v3582
        %5340 = vmatpush.bf16.msra.mxu0 %v3566
        %5341 = vmatmul.bf16.gmra.mxu0 %v1242
        %v5342 = vpop.f32.mrf.mxu0
        %v5343 = vadd.f32 %v5330, %v5342
        %v5344 = vpop.f32.mrf.mxu0
        %5345 = vdwg.mxu0
        %5346 = vmatpush.bf16.msra.mxu0 %v3806
        %5347 = vmatpush.bf16.msra.mxu0 %v3790
        %5348 = vmatpush.bf16.msra.mxu0 %v3774
        %5349 = vmatpush.bf16.msra.mxu0 %v3758
        %5350 = vmatpush.bf16.msra.mxu0 %v3742
        %5351 = vmatpush.bf16.msra.mxu0 %v3726
        %5352 = vmatpush.bf16.msra.mxu0 %v3710
        %5353 = vmatpush.bf16.msra.mxu0 %v3694
        %5354 = vmatmul.bf16.gmra.mxu0 %v1243
        %v5355 = vpop.f32.mrf.mxu0
        %v5356 = vadd.f32 %v5343, %v5355
        %v5357 = vpop.f32.mrf.mxu0
        %5358 = vdwg.mxu0
        %5359 = vmatpush.bf16.msra.mxu0 %v3295
        %5360 = vmatpush.bf16.msra.mxu0 %v3279
        %5361 = vmatpush.bf16.msra.mxu0 %v3263
        %5362 = vmatpush.bf16.msra.mxu0 %v3247
        %5363 = vmatpush.bf16.msra.mxu0 %v3231
        %5364 = vmatpush.bf16.msra.mxu0 %v3215
        %5365 = vmatpush.bf16.msra.mxu0 %v3199
        %5366 = vmatpush.bf16.msra.mxu0 %v3183
        %5367 = vmatmul.bf16.gmra.mxu0 %v1239
        %v5368 = vpop.f32.mrf.mxu0
        %v5369 = vadd.f32 0.0, %v5368
        %v5370 = vpop.f32.mrf.mxu0
        %5371 = vdwg.mxu0
        %5372 = vmatpush.bf16.msra.mxu0 %v3423
        %5373 = vmatpush.bf16.msra.mxu0 %v3407
        %5374 = vmatpush.bf16.msra.mxu0 %v3391
        %5375 = vmatpush.bf16.msra.mxu0 %v3375
        %5376 = vmatpush.bf16.msra.mxu0 %v3359
        %5377 = vmatpush.bf16.msra.mxu0 %v3343
        %5378 = vmatpush.bf16.msra.mxu0 %v3327
        %5379 = vmatpush.bf16.msra.mxu0 %v3311
        %5380 = vmatmul.bf16.gmra.mxu0 %v1240
        %v5381 = vpop.f32.mrf.mxu0
        %v5382 = vadd.f32 %v5369, %v5381
        %v5383 = vpop.f32.mrf.mxu0
        %5384 = vdwg.mxu0
        %5385 = vmatpush.bf16.msra.mxu0 %v3551
        %5386 = vmatpush.bf16.msra.mxu0 %v3535
        %5387 = vmatpush.bf16.msra.mxu0 %v3519
        %5388 = vmatpush.bf16.msra.mxu0 %v3503
        %5389 = vmatpush.bf16.msra.mxu0 %v3487
        %5390 = vmatpush.bf16.msra.mxu0 %v3471
        %5391 = vmatpush.bf16.msra.mxu0 %v3455
        %5392 = vmatpush.bf16.msra.mxu0 %v3439
        %5393 = vmatmul.bf16.gmra.mxu0 %v1241
        %v5394 = vpop.f32.mrf.mxu0
        %v5395 = vadd.f32 %v5382, %v5394
        %v5396 = vpop.f32.mrf.mxu0
        %5397 = vdwg.mxu0
        %5398 = vmatpush.bf16.msra.mxu0 %v3679
        %5399 = vmatpush.bf16.msra.mxu0 %v3663
        %5400 = vmatpush.bf16.msra.mxu0 %v3647
        %5401 = vmatpush.bf16.msra.mxu0 %v3631
        %5402 = vmatpush.bf16.msra.mxu0 %v3615
        %5403 = vmatpush.bf16.msra.mxu0 %v3599
        %5404 = vmatpush.bf16.msra.mxu0 %v3583
        %5405 = vmatpush.bf16.msra.mxu0 %v3567
        %5406 = vmatmul.bf16.gmra.mxu0 %v1242
        %v5407 = vpop.f32.mrf.mxu0
        %v5408 = vadd.f32 %v5395, %v5407
        %v5409 = vpop.f32.mrf.mxu0
        %5410 = vdwg.mxu0
        %5411 = vmatpush.bf16.msra.mxu0 %v3807
        %5412 = vmatpush.bf16.msra.mxu0 %v3791
        %5413 = vmatpush.bf16.msra.mxu0 %v3775
        %5414 = vmatpush.bf16.msra.mxu0 %v3759
        %5415 = vmatpush.bf16.msra.mxu0 %v3743
        %5416 = vmatpush.bf16.msra.mxu0 %v3727
        %5417 = vmatpush.bf16.msra.mxu0 %v3711
        %5418 = vmatpush.bf16.msra.mxu0 %v3695
        %5419 = vmatmul.bf16.gmra.mxu0 %v1243
        %v5420 = vpop.f32.mrf.mxu0
        %v5421 = vadd.f32 %v5408, %v5420
        %v5422 = vpop.f32.mrf.mxu0
        %5423 = vdwg.mxu0
        %5424 = vmatpush.bf16.msra.mxu0 %v3296
        %5425 = vmatpush.bf16.msra.mxu0 %v3280
        %5426 = vmatpush.bf16.msra.mxu0 %v3264
        %5427 = vmatpush.bf16.msra.mxu0 %v3248
        %5428 = vmatpush.bf16.msra.mxu0 %v3232
        %5429 = vmatpush.bf16.msra.mxu0 %v3216
        %5430 = vmatpush.bf16.msra.mxu0 %v3200
        %5431 = vmatpush.bf16.msra.mxu0 %v3184
        %5432 = vmatmul.bf16.gmra.mxu0 %v1239
        %v5433 = vpop.f32.mrf.mxu0
        %v5434 = vadd.f32 0.0, %v5433
        %v5435 = vpop.f32.mrf.mxu0
        %5436 = vdwg.mxu0
        %5437 = vmatpush.bf16.msra.mxu0 %v3424
        %5438 = vmatpush.bf16.msra.mxu0 %v3408
        %5439 = vmatpush.bf16.msra.mxu0 %v3392
        %5440 = vmatpush.bf16.msra.mxu0 %v3376
        %5441 = vmatpush.bf16.msra.mxu0 %v3360
        %5442 = vmatpush.bf16.msra.mxu0 %v3344
        %5443 = vmatpush.bf16.msra.mxu0 %v3328
        %5444 = vmatpush.bf16.msra.mxu0 %v3312
        %5445 = vmatmul.bf16.gmra.mxu0 %v1240
        %v5446 = vpop.f32.mrf.mxu0
        %v5447 = vadd.f32 %v5434, %v5446
        %v5448 = vpop.f32.mrf.mxu0
        %5449 = vdwg.mxu0
        %5450 = vmatpush.bf16.msra.mxu0 %v3552
        %5451 = vmatpush.bf16.msra.mxu0 %v3536
        %5452 = vmatpush.bf16.msra.mxu0 %v3520
        %5453 = vmatpush.bf16.msra.mxu0 %v3504
        %5454 = vmatpush.bf16.msra.mxu0 %v3488
        %5455 = vmatpush.bf16.msra.mxu0 %v3472
        %5456 = vmatpush.bf16.msra.mxu0 %v3456
        %5457 = vmatpush.bf16.msra.mxu0 %v3440
        %5458 = vmatmul.bf16.gmra.mxu0 %v1241
        %v5459 = vpop.f32.mrf.mxu0
        %v5460 = vadd.f32 %v5447, %v5459
        %v5461 = vpop.f32.mrf.mxu0
        %5462 = vdwg.mxu0
        %5463 = vmatpush.bf16.msra.mxu0 %v3680
        %5464 = vmatpush.bf16.msra.mxu0 %v3664
        %5465 = vmatpush.bf16.msra.mxu0 %v3648
        %5466 = vmatpush.bf16.msra.mxu0 %v3632
        %5467 = vmatpush.bf16.msra.mxu0 %v3616
        %5468 = vmatpush.bf16.msra.mxu0 %v3600
        %5469 = vmatpush.bf16.msra.mxu0 %v3584
        %5470 = vmatpush.bf16.msra.mxu0 %v3568
        %5471 = vmatmul.bf16.gmra.mxu0 %v1242
        %v5472 = vpop.f32.mrf.mxu0
        %v5473 = vadd.f32 %v5460, %v5472
        %v5474 = vpop.f32.mrf.mxu0
        %5475 = vdwg.mxu0
        %5476 = vmatpush.bf16.msra.mxu0 %v3808
        %5477 = vmatpush.bf16.msra.mxu0 %v3792
        %5478 = vmatpush.bf16.msra.mxu0 %v3776
        %5479 = vmatpush.bf16.msra.mxu0 %v3760
        %5480 = vmatpush.bf16.msra.mxu0 %v3744
        %5481 = vmatpush.bf16.msra.mxu0 %v3728
        %5482 = vmatpush.bf16.msra.mxu0 %v3712
        %5483 = vmatpush.bf16.msra.mxu0 %v3696
        %5484 = vmatmul.bf16.gmra.mxu0 %v1243
        %v5485 = vpop.f32.mrf.mxu0
        %v5486 = vadd.f32 %v5473, %v5485
        %v5487 = vpop.f32.mrf.mxu0
        %5488 = vdwg.mxu0
        %v5505 = vrot.slane %v4576, 7
        %v5506 = vrot.slane %v4641, 6
        %v5507 = vrot.slane %v4706, 5
        %v5508 = vrot.slane %v4771, 4
        %v5509 = vrot.slane %v4836, 3
        %v5510 = vrot.slane %v4901, 2
        %v5511 = vrot.slane %v4966, 1
        %v5512 = vrot.slane %v5096, 7
        %v5513 = vrot.slane %v5161, 6
        %v5514 = vrot.slane %v5226, 5
        %v5515 = vrot.slane %v5291, 4
        %v5516 = vrot.slane %v5356, 3
        %v5517 = vrot.slane %v5421, 2
        %v5518 = vrot.slane %v5486, 1
        %vm5519 = vcmask 1040384
        %v5520 = vsel %vm5519, %v4511, %v5505
        %vm5521 = vcmask 1042434
        %v5522 = vsel %vm5521, %v5506, %v5507
        %vm5523 = vcmask 1041408
        %v5524 = vsel %vm5523, %v5520, %v5522
        %vm5525 = vcmask 1044484
        %v5526 = vsel %vm5525, %v5508, %v5509
        %vm5527 = vcmask 1046534
        %v5528 = vsel %vm5527, %v5510, %v5511
        %vm5529 = vcmask 1045508
        %v5530 = vsel %vm5529, %v5526, %v5528
        %vm5531 = vcmask 1043456
        %v5532 = vsel %vm5531, %v5524, %v5530
        %v5533 = vsel %vm5519, %v5031, %v5512
        %v5534 = vsel %vm5521, %v5513, %v5514
        %v5535 = vsel %vm5523, %v5533, %v5534
        %v5536 = vsel %vm5525, %v5515, %v5516
        %v5537 = vsel %vm5527, %v5517, %v5518
        %v5538 = vsel %vm5529, %v5536, %v5537
        %v5539 = vsel %vm5531, %v5535, %v5538
        %v5542 = vadd.f32 %v594, %v5532
        %v5543 = vadd.f32 %v595, %v5539
        %5544 = vst [vmem:[#allocation2] sm:$0xff] %v5542
        %5545 = vst [vmem:[#allocation2 + $0x8] sm:$0xff] %v5543
        %p5546 = scmp.eq.s32.totalorder %s34, 4
        // Predicated region
        $region93: #{policy_forward.7} parent=87 // pred_check
          %p5547 = pneg %p5546
        $region94: #{policy_forward.7} parent=87 // pred_check_branch
          %5549 = sbr.rel (%p5547) target = $region96
        $region95: #{policy_forward.7} parent=87 // pred_region
          %v5550 = vld [vmem:[#allocation2] sm:$0xff]
          %v5551 = vld [vmem:[#allocation2 + $0x8] sm:$0xff]
          %v5552 = vld [vmem:[%s2] sm:$0xff]
          %v5553 = vld [vmem:[%s2 + $0x8] sm:$0xff]
          %v5554 = vadd.f32 %v5550, %v5552
          %v5555 = vadd.f32 %v5551, %v5553
          %v5556 = vxor.u32 %v5554, 2147483648
          %v5557 = vmul.f32 %v5556, 1.442695
          %v5558 = vpow.pop %v5557
          %v5559 = vadd.f32 %v5558, 1.0
          %v5560 = vrcp.pop %v5559
          %v5561 = vmul.f32 %v5559, %v5560
          %v5562 = vsub.f32 1.0, %v5561
          %v5563 = vmul.f32 %v5560, %v5562
          %v5564 = vadd.f32 %v5560, %v5563
          %vm5565 = vweird.f32 %v5559
          %vm5566 = vweird.f32 %v5560
          %vm5567 = vmor %vm5565, %vm5566
          %v5568 = vsel %vm5567, %v5560, %v5564
          %v5569 = vand.u32 2147483647, %v5559
          %vm5570 = vcmp.eq.f32.partialorder %v5569, 8.507059e+37
          %v5571 = vand.u32 %v5559, 2147483648
          %v5572 = vor.u32 1.1754944e-38, %v5571
          %v5573 = vsel %vm5570, %v5572, %v5568
          %v5574 = vmul.f32 1.0, %v5573
          %v5575 = vtanh.pop %v5555
          %v5577 = vrot.slane %v5555, 4
          %v5579 = vxor.u32 %v5577, 2147483648
          %v5580 = vmul.f32 %v5579, 1.442695
          %v5581 = vpow.pop %v5580
          %v5582 = vadd.f32 %v5581, 1.0
          %v5583 = vrcp.pop %v5582
          %v5584 = vmul.f32 %v5582, %v5583
          %v5585 = vsub.f32 1.0, %v5584
          %v5586 = vmul.f32 %v5583, %v5585
          %v5587 = vadd.f32 %v5583, %v5586
          %vm5588 = vweird.f32 %v5582
          %vm5589 = vweird.f32 %v5583
          %vm5590 = vmor %vm5588, %vm5589
          %v5591 = vsel %vm5590, %v5583, %v5587
          %v5592 = vand.u32 2147483647, %v5582
          %vm5593 = vcmp.eq.f32.partialorder %v5592, 8.507059e+37
          %v5594 = vand.u32 %v5582, 2147483648
          %v5595 = vor.u32 1.1754944e-38, %v5594
          %v5596 = vsel %vm5593, %v5595, %v5591
          %v5597 = vmul.f32 1.0, %v5596
          %v5598 = vmul.f32 %v5574, %v5575
          %v5599 = vtanh.pop %v5598
          %v5600 = vmul.f32 %v5597, %v5599
          %v5602 = vperm.slane %v5600, 0
          %v5603 = vperm.slane %v5600, 1
          %v5604 = vperm.slane %v5600, 2
          %v5605 = vperm.slane %v5600, 3
          %v5610 = vpack.c.bf16 %v5602, %v5602
          %v5611 = vpack.c.bf16 %v5603, %v5603
          %v5612 = vpack.c.bf16 %v5604, %v5604
          %v5613 = vpack.c.bf16 %v5605, %v5605
          %v5614 = vld [vmem:[%s3] sm:$0xff]
          %v5615 = vld [vmem:[%s3 + $0x8] sm:$0xff]
          %v5616 = vld [vmem:[%s3 + $0x20] sm:$0xff]
          %v5617 = vld [vmem:[%s3 + $0x28] sm:$0xff]
          %v5618 = vld [vmem:[%s3 + $0x30] sm:$0xff]
          %v5619 = vld [vmem:[%s3 + $0x38] sm:$0xff]
          %v5620 = vld [vmem:[%s3 + $0x40] sm:$0xff]
          %v5621 = vld [vmem:[%s3 + $0x48] sm:$0xff]
          %v5622 = vld [vmem:[%s3 + $0x60] sm:$0xff]
          %v5623 = vld [vmem:[%s3 + $0x68] sm:$0xff]
          %v5624 = vld [vmem:[%s3 + $0x70] sm:$0xff]
          %v5625 = vld [vmem:[%s3 + $0x78] sm:$0xff]
          %v5626 = vld [vmem:[%s3 + $0x80] sm:$0xff]
          %v5627 = vld [vmem:[%s3 + $0x88] sm:$0xff]
          %v5628 = vld [vmem:[%s3 + $0xa0] sm:$0xff]
          %v5629 = vld [vmem:[%s3 + $0xa8] sm:$0xff]
          %v5630 = vld [vmem:[%s3 + $0xb0] sm:$0xff]
          %v5631 = vld [vmem:[%s3 + $0xb8] sm:$0xff]
          %v5632 = vld [vmem:[%s3 + $0xc0] sm:$0xff]
          %v5633 = vld [vmem:[%s3 + $0xc8] sm:$0xff]
          %v5634 = vld [vmem:[%s3 + $0xe0] sm:$0xff]
          %v5635 = vld [vmem:[%s3 + $0xe8] sm:$0xff]
          %v5636 = vld [vmem:[%s3 + $0xf0] sm:$0xff]
          %v5637 = vld [vmem:[%s3 + $0xf8] sm:$0xff]
          %v5638 = vld [vmem:[%s3 + $0x100] sm:$0xff]
          %v5639 = vld [vmem:[%s3 + $0x108] sm:$0xff]
          %v5640 = vld [vmem:[%s3 + $0x120] sm:$0xff]
          %v5641 = vld [vmem:[%s3 + $0x128] sm:$0xff]
          %v5642 = vld [vmem:[%s3 + $0x130] sm:$0xff]
          %v5643 = vld [vmem:[%s3 + $0x138] sm:$0xff]
          %v5644 = vld [vmem:[%s3 + $0x140] sm:$0xff]
          %v5645 = vld [vmem:[%s3 + $0x148] sm:$0xff]
          %v5646 = vld [vmem:[%s3 + $0x160] sm:$0xff]
          %v5647 = vld [vmem:[%s3 + $0x168] sm:$0xff]
          %v5648 = vld [vmem:[%s3 + $0x170] sm:$0xff]
          %v5649 = vld [vmem:[%s3 + $0x178] sm:$0xff]
          %v5650 = vld [vmem:[%s3 + $0x180] sm:$0xff]
          %v5651 = vld [vmem:[%s3 + $0x188] sm:$0xff]
          %v5652 = vld [vmem:[%s3 + $0x1a0] sm:$0xff]
          %v5653 = vld [vmem:[%s3 + $0x1a8] sm:$0xff]
          %v5654 = vld [vmem:[%s3 + $0x1b0] sm:$0xff]
          %v5655 = vld [vmem:[%s3 + $0x1b8] sm:$0xff]
          %v5656 = vld [vmem:[%s3 + $0x1c0] sm:$0xff]
          %v5657 = vld [vmem:[%s3 + $0x1c8] sm:$0xff]
          %v5658 = vld [vmem:[%s3 + $0x1e0] sm:$0xff]
          %v5659 = vld [vmem:[%s3 + $0x1e8] sm:$0xff]
          %v5660 = vld [vmem:[%s3 + $0x1f0] sm:$0xff]
          %v5661 = vld [vmem:[%s3 + $0x1f8] sm:$0xff]
          %v5662 = vld [vmem:[%s3 + $0x200] sm:$0xff]
          %v5663 = vld [vmem:[%s3 + $0x208] sm:$0xff]
          %v5664 = vld [vmem:[%s3 + $0x220] sm:$0xff]
          %v5665 = vld [vmem:[%s3 + $0x228] sm:$0xff]
          %v5666 = vld [vmem:[%s3 + $0x230] sm:$0xff]
          %v5667 = vld [vmem:[%s3 + $0x238] sm:$0xff]
          %v5668 = vld [vmem:[%s3 + $0x240] sm:$0xff]
          %v5669 = vld [vmem:[%s3 + $0x248] sm:$0xff]
          %v5670 = vld [vmem:[%s3 + $0x260] sm:$0xff]
          %v5671 = vld [vmem:[%s3 + $0x268] sm:$0xff]
          %v5672 = vld [vmem:[%s3 + $0x270] sm:$0xff]
          %v5673 = vld [vmem:[%s3 + $0x278] sm:$0xff]
          %v5674 = vld [vmem:[%s3 + $0x280] sm:$0xff]
          %v5675 = vld [vmem:[%s3 + $0x288] sm:$0xff]
          %v5676 = vld [vmem:[%s3 + $0x2a0] sm:$0xff]
          %v5677 = vld [vmem:[%s3 + $0x2a8] sm:$0xff]
          %v5678 = vld [vmem:[%s3 + $0x2b0] sm:$0xff]
          %v5679 = vld [vmem:[%s3 + $0x2b8] sm:$0xff]
          %v5680 = vld [vmem:[%s3 + $0x2c0] sm:$0xff]
          %v5681 = vld [vmem:[%s3 + $0x2c8] sm:$0xff]
          %v5682 = vld [vmem:[%s3 + $0x2e0] sm:$0xff]
          %v5683 = vld [vmem:[%s3 + $0x2e8] sm:$0xff]
          %v5684 = vld [vmem:[%s3 + $0x2f0] sm:$0xff]
          %v5685 = vld [vmem:[%s3 + $0x2f8] sm:$0xff]
          %v5686 = vld [vmem:[%s3 + $0x300] sm:$0xff]
          %v5687 = vld [vmem:[%s3 + $0x308] sm:$0xff]
          %v5688 = vld [vmem:[%s3 + $0x320] sm:$0xff]
          %v5689 = vld [vmem:[%s3 + $0x328] sm:$0xff]
          %v5690 = vld [vmem:[%s3 + $0x330] sm:$0xff]
          %v5691 = vld [vmem:[%s3 + $0x338] sm:$0xff]
          %v5692 = vld [vmem:[%s3 + $0x340] sm:$0xff]
          %v5693 = vld [vmem:[%s3 + $0x348] sm:$0xff]
          %v5694 = vld [vmem:[%s3 + $0x360] sm:$0xff]
          %v5695 = vld [vmem:[%s3 + $0x368] sm:$0xff]
          %v5696 = vld [vmem:[%s3 + $0x370] sm:$0xff]
          %v5697 = vld [vmem:[%s3 + $0x378] sm:$0xff]
          %v5698 = vld [vmem:[%s3 + $0x380] sm:$0xff]
          %v5699 = vld [vmem:[%s3 + $0x388] sm:$0xff]
          %v5700 = vld [vmem:[%s3 + $0x3a0] sm:$0xff]
          %v5701 = vld [vmem:[%s3 + $0x3a8] sm:$0xff]
          %v5702 = vld [vmem:[%s3 + $0x3b0] sm:$0xff]
          %v5703 = vld [vmem:[%s3 + $0x3b8] sm:$0xff]
          %v5704 = vld [vmem:[%s3 + $0x3c0] sm:$0xff]
          %v5705 = vld [vmem:[%s3 + $0x3c8] sm:$0xff]
          %v5706 = vld [vmem:[%s3 + $0x3e0] sm:$0xff]
          %v5707 = vld [vmem:[%s3 + $0x3e8] sm:$0xff]
          %v5708 = vld [vmem:[%s3 + $0x3f0] sm:$0xff]
          %v5709 = vld [vmem:[%s3 + $0x3f8] sm:$0xff]
          %v5710 = vld [vmem:[%s3 + $0x400] sm:$0xff]
          %v5711 = vld [vmem:[%s3 + $0x408] sm:$0xff]
          %v5712 = vld [vmem:[%s3 + $0x420] sm:$0xff]
          %v5713 = vld [vmem:[%s3 + $0x428] sm:$0xff]
          %v5714 = vld [vmem:[%s3 + $0x430] sm:$0xff]
          %v5715 = vld [vmem:[%s3 + $0x438] sm:$0xff]
          %v5716 = vld [vmem:[%s3 + $0x440] sm:$0xff]
          %v5717 = vld [vmem:[%s3 + $0x448] sm:$0xff]
          %v5718 = vld [vmem:[%s3 + $0x460] sm:$0xff]
          %v5719 = vld [vmem:[%s3 + $0x468] sm:$0xff]
          %v5720 = vld [vmem:[%s3 + $0x470] sm:$0xff]
          %v5721 = vld [vmem:[%s3 + $0x478] sm:$0xff]
          %v5722 = vld [vmem:[%s3 + $0x480] sm:$0xff]
          %v5723 = vld [vmem:[%s3 + $0x488] sm:$0xff]
          %v5724 = vld [vmem:[%s3 + $0x4a0] sm:$0xff]
          %v5725 = vld [vmem:[%s3 + $0x4a8] sm:$0xff]
          %v5726 = vld [vmem:[%s3 + $0x4b0] sm:$0xff]
          %v5727 = vld [vmem:[%s3 + $0x4b8] sm:$0xff]
          %v5728 = vld [vmem:[%s3 + $0x4c0] sm:$0xff]
          %v5729 = vld [vmem:[%s3 + $0x4c8] sm:$0xff]
          %v5730 = vld [vmem:[%s3 + $0x4e0] sm:$0xff]
          %v5731 = vld [vmem:[%s3 + $0x4e8] sm:$0xff]
          %v5732 = vld [vmem:[%s3 + $0x4f0] sm:$0xff]
          %v5733 = vld [vmem:[%s3 + $0x4f8] sm:$0xff]
          %v5734 = vld [vmem:[%s3 + $0x500] sm:$0xff]
          %v5735 = vld [vmem:[%s3 + $0x508] sm:$0xff]
          %v5736 = vld [vmem:[%s3 + $0x520] sm:$0xff]
          %v5737 = vld [vmem:[%s3 + $0x528] sm:$0xff]
          %v5738 = vld [vmem:[%s3 + $0x530] sm:$0xff]
          %v5739 = vld [vmem:[%s3 + $0x538] sm:$0xff]
          %v5740 = vld [vmem:[%s3 + $0x540] sm:$0xff]
          %v5741 = vld [vmem:[%s3 + $0x548] sm:$0xff]
          %v5742 = vld [vmem:[%s3 + $0x560] sm:$0xff]
          %v5743 = vld [vmem:[%s3 + $0x568] sm:$0xff]
          %v5744 = vld [vmem:[%s3 + $0x570] sm:$0xff]
          %v5745 = vld [vmem:[%s3 + $0x578] sm:$0xff]
          %v5746 = vld [vmem:[%s3 + $0x580] sm:$0xff]
          %v5747 = vld [vmem:[%s3 + $0x588] sm:$0xff]
          %v5748 = vld [vmem:[%s3 + $0x5a0] sm:$0xff]
          %v5749 = vld [vmem:[%s3 + $0x5a8] sm:$0xff]
          %v5750 = vld [vmem:[%s3 + $0x5b0] sm:$0xff]
          %v5751 = vld [vmem:[%s3 + $0x5b8] sm:$0xff]
          %v5752 = vld [vmem:[%s3 + $0x5c0] sm:$0xff]
          %v5753 = vld [vmem:[%s3 + $0x5c8] sm:$0xff]
          %v5754 = vld [vmem:[%s3 + $0x5e0] sm:$0xff]
          %v5755 = vld [vmem:[%s3 + $0x5e8] sm:$0xff]
          %v5756 = vld [vmem:[%s3 + $0x5f0] sm:$0xff]
          %v5757 = vld [vmem:[%s3 + $0x5f8] sm:$0xff]
          %v5758 = vld [vmem:[%s3 + $0x600] sm:$0xff]
          %v5759 = vld [vmem:[%s3 + $0x608] sm:$0xff]
          %v5760 = vld [vmem:[%s3 + $0x620] sm:$0xff]
          %v5761 = vld [vmem:[%s3 + $0x628] sm:$0xff]
          %v5762 = vld [vmem:[%s3 + $0x630] sm:$0xff]
          %v5763 = vld [vmem:[%s3 + $0x638] sm:$0xff]
          %v5764 = vld [vmem:[%s3 + $0x640] sm:$0xff]
          %v5765 = vld [vmem:[%s3 + $0x648] sm:$0xff]
          %v5766 = vld [vmem:[%s3 + $0x660] sm:$0xff]
          %v5767 = vld [vmem:[%s3 + $0x668] sm:$0xff]
          %v5768 = vld [vmem:[%s3 + $0x670] sm:$0xff]
          %v5769 = vld [vmem:[%s3 + $0x678] sm:$0xff]
          %v5770 = vld [vmem:[%s3 + $0x680] sm:$0xff]
          %v5771 = vld [vmem:[%s3 + $0x688] sm:$0xff]
          %v5772 = vld [vmem:[%s3 + $0x6a0] sm:$0xff]
          %v5773 = vld [vmem:[%s3 + $0x6a8] sm:$0xff]
          %v5774 = vld [vmem:[%s3 + $0x6b0] sm:$0xff]
          %v5775 = vld [vmem:[%s3 + $0x6b8] sm:$0xff]
          %v5776 = vld [vmem:[%s3 + $0x6c0] sm:$0xff]
          %v5777 = vld [vmem:[%s3 + $0x6c8] sm:$0xff]
          %v5778 = vld [vmem:[%s3 + $0x6e0] sm:$0xff]
          %v5779 = vld [vmem:[%s3 + $0x6e8] sm:$0xff]
          %v5780 = vld [vmem:[%s3 + $0x6f0] sm:$0xff]
          %v5781 = vld [vmem:[%s3 + $0x6f8] sm:$0xff]
          %v5782 = vld [vmem:[%s3 + $0x700] sm:$0xff]
          %v5783 = vld [vmem:[%s3 + $0x708] sm:$0xff]
          %v5784 = vld [vmem:[%s3 + $0x720] sm:$0xff]
          %v5785 = vld [vmem:[%s3 + $0x728] sm:$0xff]
          %v5786 = vld [vmem:[%s3 + $0x730] sm:$0xff]
          %v5787 = vld [vmem:[%s3 + $0x738] sm:$0xff]
          %v5788 = vld [vmem:[%s3 + $0x740] sm:$0xff]
          %v5789 = vld [vmem:[%s3 + $0x748] sm:$0xff]
          %v5790 = vld [vmem:[%s3 + $0x760] sm:$0xff]
          %v5791 = vld [vmem:[%s3 + $0x768] sm:$0xff]
          %v5792 = vld [vmem:[%s3 + $0x770] sm:$0xff]
          %v5793 = vld [vmem:[%s3 + $0x778] sm:$0xff]
          %v5794 = vld [vmem:[%s3 + $0x780] sm:$0xff]
          %v5795 = vld [vmem:[%s3 + $0x788] sm:$0xff]
          %v5796 = vld [vmem:[%s3 + $0x7a0] sm:$0xff]
          %v5797 = vld [vmem:[%s3 + $0x7a8] sm:$0xff]
          %v5798 = vld [vmem:[%s3 + $0x7b0] sm:$0xff]
          %v5799 = vld [vmem:[%s3 + $0x7b8] sm:$0xff]
          %v5800 = vld [vmem:[%s3 + $0x7c0] sm:$0xff]
          %v5801 = vld [vmem:[%s3 + $0x7c8] sm:$0xff]
          %v5802 = vld [vmem:[%s3 + $0x7e0] sm:$0xff]
          %v5803 = vld [vmem:[%s3 + $0x7e8] sm:$0xff]
          %v5804 = vld [vmem:[%s3 + $0x7f0] sm:$0xff]
          %v5805 = vld [vmem:[%s3 + $0x7f8] sm:$0xff]
          %v5806 = vld [vmem:[%s3 + $0x800] sm:$0xff]
          %v5807 = vld [vmem:[%s3 + $0x808] sm:$0xff]
          %v5808 = vld [vmem:[%s3 + $0x820] sm:$0xff]
          %v5809 = vld [vmem:[%s3 + $0x828] sm:$0xff]
          %v5810 = vld [vmem:[%s3 + $0x830] sm:$0xff]
          %v5811 = vld [vmem:[%s3 + $0x838] sm:$0xff]
          %v5812 = vld [vmem:[%s3 + $0x840] sm:$0xff]
          %v5813 = vld [vmem:[%s3 + $0x848] sm:$0xff]
          %v5814 = vld [vmem:[%s3 + $0x860] sm:$0xff]
          %v5815 = vld [vmem:[%s3 + $0x868] sm:$0xff]
          %v5816 = vld [vmem:[%s3 + $0x870] sm:$0xff]
          %v5817 = vld [vmem:[%s3 + $0x878] sm:$0xff]
          %v5818 = vld [vmem:[%s3 + $0x880] sm:$0xff]
          %v5819 = vld [vmem:[%s3 + $0x888] sm:$0xff]
          %v5820 = vld [vmem:[%s3 + $0x8a0] sm:$0xff]
          %v5821 = vld [vmem:[%s3 + $0x8a8] sm:$0xff]
          %v5822 = vld [vmem:[%s3 + $0x8b0] sm:$0xff]
          %v5823 = vld [vmem:[%s3 + $0x8b8] sm:$0xff]
          %v5824 = vld [vmem:[%s3 + $0x8c0] sm:$0xff]
          %v5825 = vld [vmem:[%s3 + $0x8c8] sm:$0xff]
          %v5826 = vld [vmem:[%s3 + $0x8e0] sm:$0xff]
          %v5827 = vld [vmem:[%s3 + $0x8e8] sm:$0xff]
          %v5828 = vld [vmem:[%s3 + $0x8f0] sm:$0xff]
          %v5829 = vld [vmem:[%s3 + $0x8f8] sm:$0xff]
          %v5830 = vld [vmem:[%s3 + $0x900] sm:$0xff]
          %v5831 = vld [vmem:[%s3 + $0x908] sm:$0xff]
          %v5832 = vld [vmem:[%s3 + $0x920] sm:$0xff]
          %v5833 = vld [vmem:[%s3 + $0x928] sm:$0xff]
          %v5834 = vld [vmem:[%s3 + $0x930] sm:$0xff]
          %v5835 = vld [vmem:[%s3 + $0x938] sm:$0xff]
          %v5836 = vld [vmem:[%s3 + $0x940] sm:$0xff]
          %v5837 = vld [vmem:[%s3 + $0x948] sm:$0xff]
          %v5838 = vld [vmem:[%s3 + $0x960] sm:$0xff]
          %v5839 = vld [vmem:[%s3 + $0x968] sm:$0xff]
          %v5840 = vld [vmem:[%s3 + $0x970] sm:$0xff]
          %v5841 = vld [vmem:[%s3 + $0x978] sm:$0xff]
          %v5842 = vld [vmem:[%s3 + $0x980] sm:$0xff]
          %v5843 = vld [vmem:[%s3 + $0x988] sm:$0xff]
          %v5844 = vld [vmem:[%s3 + $0x9a0] sm:$0xff]
          %v5845 = vld [vmem:[%s3 + $0x9a8] sm:$0xff]
          %v5846 = vld [vmem:[%s3 + $0x9b0] sm:$0xff]
          %v5847 = vld [vmem:[%s3 + $0x9b8] sm:$0xff]
          %v5848 = vld [vmem:[%s3 + $0x9c0] sm:$0xff]
          %v5849 = vld [vmem:[%s3 + $0x9c8] sm:$0xff]
          %v5850 = vld [vmem:[%s3 + $0x9e0] sm:$0xff]
          %v5851 = vld [vmem:[%s3 + $0x9e8] sm:$0xff]
          %v5852 = vld [vmem:[%s3 + $0x9f0] sm:$0xff]
          %v5853 = vld [vmem:[%s3 + $0x9f8] sm:$0xff]
          %v5854 = vld [vmem:[%s3 + $0xa00] sm:$0xff]
          %v5855 = vld [vmem:[%s3 + $0xa08] sm:$0xff]
          %v5856 = vld [vmem:[%s3 + $0xa20] sm:$0xff]
          %v5857 = vld [vmem:[%s3 + $0xa28] sm:$0xff]
          %v5858 = vld [vmem:[%s3 + $0xa30] sm:$0xff]
          %v5859 = vld [vmem:[%s3 + $0xa38] sm:$0xff]
          %v5860 = vld [vmem:[%s3 + $0xa40] sm:$0xff]
          %v5861 = vld [vmem:[%s3 + $0xa48] sm:$0xff]
          %v5862 = vld [vmem:[%s3 + $0xa60] sm:$0xff]
          %v5863 = vld [vmem:[%s3 + $0xa68] sm:$0xff]
          %v5864 = vld [vmem:[%s3 + $0xa70] sm:$0xff]
          %v5865 = vld [vmem:[%s3 + $0xa78] sm:$0xff]
          %v5866 = vld [vmem:[%s3 + $0xa80] sm:$0xff]
          %v5867 = vld [vmem:[%s3 + $0xa88] sm:$0xff]
          %v5868 = vld [vmem:[%s3 + $0xaa0] sm:$0xff]
          %v5869 = vld [vmem:[%s3 + $0xaa8] sm:$0xff]
          %v5870 = vld [vmem:[%s3 + $0xab0] sm:$0xff]
          %v5871 = vld [vmem:[%s3 + $0xab8] sm:$0xff]
          %v5872 = vld [vmem:[%s3 + $0xac0] sm:$0xff]
          %v5873 = vld [vmem:[%s3 + $0xac8] sm:$0xff]
          %v5874 = vld [vmem:[%s3 + $0xae0] sm:$0xff]
          %v5875 = vld [vmem:[%s3 + $0xae8] sm:$0xff]
          %v5876 = vld [vmem:[%s3 + $0xaf0] sm:$0xff]
          %v5877 = vld [vmem:[%s3 + $0xaf8] sm:$0xff]
          %v5878 = vld [vmem:[%s3 + $0xb00] sm:$0xff]
          %v5879 = vld [vmem:[%s3 + $0xb08] sm:$0xff]
          %v5880 = vld [vmem:[%s3 + $0xb20] sm:$0xff]
          %v5881 = vld [vmem:[%s3 + $0xb28] sm:$0xff]
          %v5882 = vld [vmem:[%s3 + $0xb30] sm:$0xff]
          %v5883 = vld [vmem:[%s3 + $0xb38] sm:$0xff]
          %v5884 = vld [vmem:[%s3 + $0xb40] sm:$0xff]
          %v5885 = vld [vmem:[%s3 + $0xb48] sm:$0xff]
          %v5886 = vld [vmem:[%s3 + $0xb60] sm:$0xff]
          %v5887 = vld [vmem:[%s3 + $0xb68] sm:$0xff]
          %v5888 = vld [vmem:[%s3 + $0xb70] sm:$0xff]
          %v5889 = vld [vmem:[%s3 + $0xb78] sm:$0xff]
          %v5890 = vld [vmem:[%s3 + $0xb80] sm:$0xff]
          %v5891 = vld [vmem:[%s3 + $0xb88] sm:$0xff]
          %v5892 = vld [vmem:[%s3 + $0xba0] sm:$0xff]
          %v5893 = vld [vmem:[%s3 + $0xba8] sm:$0xff]
          %v5894 = vld [vmem:[%s3 + $0xbb0] sm:$0xff]
          %v5895 = vld [vmem:[%s3 + $0xbb8] sm:$0xff]
          %v5896 = vld [vmem:[%s3 + $0xbc0] sm:$0xff]
          %v5897 = vld [vmem:[%s3 + $0xbc8] sm:$0xff]
          %v5898 = vld [vmem:[%s3 + $0xbe0] sm:$0xff]
          %v5899 = vld [vmem:[%s3 + $0xbe8] sm:$0xff]
          %v5900 = vld [vmem:[%s3 + $0xbf0] sm:$0xff]
          %v5901 = vld [vmem:[%s3 + $0xbf8] sm:$0xff]
          %v5902 = vld [vmem:[%s3 + $0xc00] sm:$0xff]
          %v5903 = vld [vmem:[%s3 + $0xc08] sm:$0xff]
          %v5904 = vld [vmem:[%s3 + $0xc20] sm:$0xff]
          %v5905 = vld [vmem:[%s3 + $0xc28] sm:$0xff]
          %v5906 = vld [vmem:[%s3 + $0xc30] sm:$0xff]
          %v5907 = vld [vmem:[%s3 + $0xc38] sm:$0xff]
          %v5908 = vld [vmem:[%s3 + $0xc40] sm:$0xff]
          %v5909 = vld [vmem:[%s3 + $0xc48] sm:$0xff]
          %v5910 = vld [vmem:[%s3 + $0xc60] sm:$0xff]
          %v5911 = vld [vmem:[%s3 + $0xc68] sm:$0xff]
          %v5912 = vld [vmem:[%s3 + $0xc70] sm:$0xff]
          %v5913 = vld [vmem:[%s3 + $0xc78] sm:$0xff]
          %v5914 = vld [vmem:[%s3 + $0xc80] sm:$0xff]
          %v5915 = vld [vmem:[%s3 + $0xc88] sm:$0xff]
          %v5916 = vld [vmem:[%s3 + $0xca0] sm:$0xff]
          %v5917 = vld [vmem:[%s3 + $0xca8] sm:$0xff]
          %v5918 = vld [vmem:[%s3 + $0xcb0] sm:$0xff]
          %v5919 = vld [vmem:[%s3 + $0xcb8] sm:$0xff]
          %v5920 = vld [vmem:[%s3 + $0xcc0] sm:$0xff]
          %v5921 = vld [vmem:[%s3 + $0xcc8] sm:$0xff]
          %v5922 = vld [vmem:[%s3 + $0xce0] sm:$0xff]
          %v5923 = vld [vmem:[%s3 + $0xce8] sm:$0xff]
          %v5924 = vld [vmem:[%s3 + $0xcf0] sm:$0xff]
          %v5925 = vld [vmem:[%s3 + $0xcf8] sm:$0xff]
          %v5926 = vld [vmem:[%s3 + $0xd00] sm:$0xff]
          %v5927 = vld [vmem:[%s3 + $0xd08] sm:$0xff]
          %v5928 = vld [vmem:[%s3 + $0xd20] sm:$0xff]
          %v5929 = vld [vmem:[%s3 + $0xd28] sm:$0xff]
          %v5930 = vld [vmem:[%s3 + $0xd30] sm:$0xff]
          %v5931 = vld [vmem:[%s3 + $0xd38] sm:$0xff]
          %v5932 = vld [vmem:[%s3 + $0xd40] sm:$0xff]
          %v5933 = vld [vmem:[%s3 + $0xd48] sm:$0xff]
          %v5934 = vld [vmem:[%s3 + $0xd60] sm:$0xff]
          %v5935 = vld [vmem:[%s3 + $0xd68] sm:$0xff]
          %v5936 = vld [vmem:[%s3 + $0xd70] sm:$0xff]
          %v5937 = vld [vmem:[%s3 + $0xd78] sm:$0xff]
          %v5938 = vld [vmem:[%s3 + $0xd80] sm:$0xff]
          %v5939 = vld [vmem:[%s3 + $0xd88] sm:$0xff]
          %v5940 = vld [vmem:[%s3 + $0xda0] sm:$0xff]
          %v5941 = vld [vmem:[%s3 + $0xda8] sm:$0xff]
          %v5942 = vld [vmem:[%s3 + $0xdb0] sm:$0xff]
          %v5943 = vld [vmem:[%s3 + $0xdb8] sm:$0xff]
          %v5944 = vld [vmem:[%s3 + $0xdc0] sm:$0xff]
          %v5945 = vld [vmem:[%s3 + $0xdc8] sm:$0xff]
          %v5946 = vld [vmem:[%s3 + $0xde0] sm:$0xff]
          %v5947 = vld [vmem:[%s3 + $0xde8] sm:$0xff]
          %v5948 = vld [vmem:[%s3 + $0xdf0] sm:$0xff]
          %v5949 = vld [vmem:[%s3 + $0xdf8] sm:$0xff]
          %v5950 = vld [vmem:[%s3 + $0xe00] sm:$0xff]
          %v5951 = vld [vmem:[%s3 + $0xe08] sm:$0xff]
          %v5952 = vld [vmem:[%s3 + $0xe20] sm:$0xff]
          %v5953 = vld [vmem:[%s3 + $0xe28] sm:$0xff]
          %v5954 = vld [vmem:[%s3 + $0xe30] sm:$0xff]
          %v5955 = vld [vmem:[%s3 + $0xe38] sm:$0xff]
          %v5956 = vld [vmem:[%s3 + $0xe40] sm:$0xff]
          %v5957 = vld [vmem:[%s3 + $0xe48] sm:$0xff]
          %v5958 = vld [vmem:[%s3 + $0xe60] sm:$0xff]
          %v5959 = vld [vmem:[%s3 + $0xe68] sm:$0xff]
          %v5960 = vld [vmem:[%s3 + $0xe70] sm:$0xff]
          %v5961 = vld [vmem:[%s3 + $0xe78] sm:$0xff]
          %v5962 = vld [vmem:[%s3 + $0xe80] sm:$0xff]
          %v5963 = vld [vmem:[%s3 + $0xe88] sm:$0xff]
          %v5964 = vld [vmem:[%s3 + $0xea0] sm:$0xff]
          %v5965 = vld [vmem:[%s3 + $0xea8] sm:$0xff]
          %v5966 = vld [vmem:[%s3 + $0xeb0] sm:$0xff]
          %v5967 = vld [vmem:[%s3 + $0xeb8] sm:$0xff]
          %v5968 = vld [vmem:[%s3 + $0xec0] sm:$0xff]
          %v5969 = vld [vmem:[%s3 + $0xec8] sm:$0xff]
          %v5970 = vld [vmem:[%s3 + $0xee0] sm:$0xff]
          %v5971 = vld [vmem:[%s3 + $0xee8] sm:$0xff]
          %v5972 = vld [vmem:[%s3 + $0xef0] sm:$0xff]
          %v5973 = vld [vmem:[%s3 + $0xef8] sm:$0xff]
          %v5974 = vld [vmem:[%s3 + $0xf00] sm:$0xff]
          %v5975 = vld [vmem:[%s3 + $0xf08] sm:$0xff]
          %v5976 = vld [vmem:[%s3 + $0xf20] sm:$0xff]
          %v5977 = vld [vmem:[%s3 + $0xf28] sm:$0xff]
          %v5978 = vld [vmem:[%s3 + $0xf30] sm:$0xff]
          %v5979 = vld [vmem:[%s3 + $0xf38] sm:$0xff]
          %v5980 = vld [vmem:[%s3 + $0xf40] sm:$0xff]
          %v5981 = vld [vmem:[%s3 + $0xf48] sm:$0xff]
          %v5982 = vld [vmem:[%s3 + $0xf60] sm:$0xff]
          %v5983 = vld [vmem:[%s3 + $0xf68] sm:$0xff]
          %v5984 = vld [vmem:[%s3 + $0xf70] sm:$0xff]
          %v5985 = vld [vmem:[%s3 + $0xf78] sm:$0xff]
          %v5986 = vld [vmem:[%s3 + $0xf80] sm:$0xff]
          %v5987 = vld [vmem:[%s3 + $0xf88] sm:$0xff]
          %v5988 = vld [vmem:[%s3 + $0xfa0] sm:$0xff]
          %v5989 = vld [vmem:[%s3 + $0xfa8] sm:$0xff]
          %v5990 = vld [vmem:[%s3 + $0xfb0] sm:$0xff]
          %v5991 = vld [vmem:[%s3 + $0xfb8] sm:$0xff]
          %v5992 = vld [vmem:[%s3 + $0xfc0] sm:$0xff]
          %v5993 = vld [vmem:[%s3 + $0xfc8] sm:$0xff]
          %v5994 = vld [vmem:[%s3 + $0xfe0] sm:$0xff]
          %v5995 = vld [vmem:[%s3 + $0xfe8] sm:$0xff]
          %v5996 = vld [vmem:[%s3 + $0xff0] sm:$0xff]
          %v5997 = vld [vmem:[%s3 + $0xff8] sm:$0xff]
          %v5998 = vld [vmem:[%s4] sm:$0xff]
          %v5999 = vld [vmem:[%s4 + $0x8] sm:$0xff]
          %v6384 = vunpack.c.l.b16 %v5614
          %v6385 = vunpack.c.h.b16 %v5614
          %v6386 = vunpack.c.l.b16 %v5615
          %v6387 = vunpack.c.h.b16 %v5615
          %v6388 = vunpack.c.l.b16 %v5616
          %v6389 = vunpack.c.h.b16 %v5616
          %v6390 = vunpack.c.l.b16 %v5617
          %v6391 = vunpack.c.h.b16 %v5617
          %v6392 = vunpack.c.l.b16 %v5618
          %v6393 = vunpack.c.h.b16 %v5618
          %v6394 = vunpack.c.l.b16 %v5619
          %v6395 = vunpack.c.h.b16 %v5619
          %v6396 = vunpack.c.l.b16 %v5620
          %v6397 = vunpack.c.h.b16 %v5620
          %v6398 = vunpack.c.l.b16 %v5621
          %v6399 = vunpack.c.h.b16 %v5621
          %v6400 = vunpack.c.l.b16 %v5622
          %v6401 = vunpack.c.h.b16 %v5622
          %v6402 = vunpack.c.l.b16 %v5623
          %v6403 = vunpack.c.h.b16 %v5623
          %v6404 = vunpack.c.l.b16 %v5624
          %v6405 = vunpack.c.h.b16 %v5624
          %v6406 = vunpack.c.l.b16 %v5625
          %v6407 = vunpack.c.h.b16 %v5625
          %v6408 = vunpack.c.l.b16 %v5626
          %v6409 = vunpack.c.h.b16 %v5626
          %v6410 = vunpack.c.l.b16 %v5627
          %v6411 = vunpack.c.h.b16 %v5627
          %v6412 = vunpack.c.l.b16 %v5628
          %v6413 = vunpack.c.h.b16 %v5628
          %v6414 = vunpack.c.l.b16 %v5629
          %v6415 = vunpack.c.h.b16 %v5629
          %v6416 = vunpack.c.l.b16 %v5630
          %v6417 = vunpack.c.h.b16 %v5630
          %v6418 = vunpack.c.l.b16 %v5631
          %v6419 = vunpack.c.h.b16 %v5631
          %v6420 = vunpack.c.l.b16 %v5632
          %v6421 = vunpack.c.h.b16 %v5632
          %v6422 = vunpack.c.l.b16 %v5633
          %v6423 = vunpack.c.h.b16 %v5633
          %v6424 = vunpack.c.l.b16 %v5634
          %v6425 = vunpack.c.h.b16 %v5634
          %v6426 = vunpack.c.l.b16 %v5635
          %v6427 = vunpack.c.h.b16 %v5635
          %v6428 = vunpack.c.l.b16 %v5636
          %v6429 = vunpack.c.h.b16 %v5636
          %v6430 = vunpack.c.l.b16 %v5637
          %v6431 = vunpack.c.h.b16 %v5637
          %v6432 = vunpack.c.l.b16 %v5638
          %v6433 = vunpack.c.h.b16 %v5638
          %v6434 = vunpack.c.l.b16 %v5639
          %v6435 = vunpack.c.h.b16 %v5639
          %v6436 = vunpack.c.l.b16 %v5640
          %v6437 = vunpack.c.h.b16 %v5640
          %v6438 = vunpack.c.l.b16 %v5641
          %v6439 = vunpack.c.h.b16 %v5641
          %v6440 = vunpack.c.l.b16 %v5642
          %v6441 = vunpack.c.h.b16 %v5642
          %v6442 = vunpack.c.l.b16 %v5643
          %v6443 = vunpack.c.h.b16 %v5643
          %v6444 = vunpack.c.l.b16 %v5644
          %v6445 = vunpack.c.h.b16 %v5644
          %v6446 = vunpack.c.l.b16 %v5645
          %v6447 = vunpack.c.h.b16 %v5645
          %v6448 = vunpack.c.l.b16 %v5646
          %v6449 = vunpack.c.h.b16 %v5646
          %v6450 = vunpack.c.l.b16 %v5647
          %v6451 = vunpack.c.h.b16 %v5647
          %v6452 = vunpack.c.l.b16 %v5648
          %v6453 = vunpack.c.h.b16 %v5648
          %v6454 = vunpack.c.l.b16 %v5649
          %v6455 = vunpack.c.h.b16 %v5649
          %v6456 = vunpack.c.l.b16 %v5650
          %v6457 = vunpack.c.h.b16 %v5650
          %v6458 = vunpack.c.l.b16 %v5651
          %v6459 = vunpack.c.h.b16 %v5651
          %v6460 = vunpack.c.l.b16 %v5652
          %v6461 = vunpack.c.h.b16 %v5652
          %v6462 = vunpack.c.l.b16 %v5653
          %v6463 = vunpack.c.h.b16 %v5653
          %v6464 = vunpack.c.l.b16 %v5654
          %v6465 = vunpack.c.h.b16 %v5654
          %v6466 = vunpack.c.l.b16 %v5655
          %v6467 = vunpack.c.h.b16 %v5655
          %v6468 = vunpack.c.l.b16 %v5656
          %v6469 = vunpack.c.h.b16 %v5656
          %v6470 = vunpack.c.l.b16 %v5657
          %v6471 = vunpack.c.h.b16 %v5657
          %v6472 = vunpack.c.l.b16 %v5658
          %v6473 = vunpack.c.h.b16 %v5658
          %v6474 = vunpack.c.l.b16 %v5659
          %v6475 = vunpack.c.h.b16 %v5659
          %v6476 = vunpack.c.l.b16 %v5660
          %v6477 = vunpack.c.h.b16 %v5660
          %v6478 = vunpack.c.l.b16 %v5661
          %v6479 = vunpack.c.h.b16 %v5661
          %v6480 = vunpack.c.l.b16 %v5662
          %v6481 = vunpack.c.h.b16 %v5662
          %v6482 = vunpack.c.l.b16 %v5663
          %v6483 = vunpack.c.h.b16 %v5663
          %v6484 = vunpack.c.l.b16 %v5664
          %v6485 = vunpack.c.h.b16 %v5664
          %v6486 = vunpack.c.l.b16 %v5665
          %v6487 = vunpack.c.h.b16 %v5665
          %v6488 = vunpack.c.l.b16 %v5666
          %v6489 = vunpack.c.h.b16 %v5666
          %v6490 = vunpack.c.l.b16 %v5667
          %v6491 = vunpack.c.h.b16 %v5667
          %v6492 = vunpack.c.l.b16 %v5668
          %v6493 = vunpack.c.h.b16 %v5668
          %v6494 = vunpack.c.l.b16 %v5669
          %v6495 = vunpack.c.h.b16 %v5669
          %v6496 = vunpack.c.l.b16 %v5670
          %v6497 = vunpack.c.h.b16 %v5670
          %v6498 = vunpack.c.l.b16 %v5671
          %v6499 = vunpack.c.h.b16 %v5671
          %v6500 = vunpack.c.l.b16 %v5672
          %v6501 = vunpack.c.h.b16 %v5672
          %v6502 = vunpack.c.l.b16 %v5673
          %v6503 = vunpack.c.h.b16 %v5673
          %v6504 = vunpack.c.l.b16 %v5674
          %v6505 = vunpack.c.h.b16 %v5674
          %v6506 = vunpack.c.l.b16 %v5675
          %v6507 = vunpack.c.h.b16 %v5675
          %v6508 = vunpack.c.l.b16 %v5676
          %v6509 = vunpack.c.h.b16 %v5676
          %v6510 = vunpack.c.l.b16 %v5677
          %v6511 = vunpack.c.h.b16 %v5677
          %v6512 = vunpack.c.l.b16 %v5678
          %v6513 = vunpack.c.h.b16 %v5678
          %v6514 = vunpack.c.l.b16 %v5679
          %v6515 = vunpack.c.h.b16 %v5679
          %v6516 = vunpack.c.l.b16 %v5680
          %v6517 = vunpack.c.h.b16 %v5680
          %v6518 = vunpack.c.l.b16 %v5681
          %v6519 = vunpack.c.h.b16 %v5681
          %v6520 = vunpack.c.l.b16 %v5682
          %v6521 = vunpack.c.h.b16 %v5682
          %v6522 = vunpack.c.l.b16 %v5683
          %v6523 = vunpack.c.h.b16 %v5683
          %v6524 = vunpack.c.l.b16 %v5684
          %v6525 = vunpack.c.h.b16 %v5684
          %v6526 = vunpack.c.l.b16 %v5685
          %v6527 = vunpack.c.h.b16 %v5685
          %v6528 = vunpack.c.l.b16 %v5686
          %v6529 = vunpack.c.h.b16 %v5686
          %v6530 = vunpack.c.l.b16 %v5687
          %v6531 = vunpack.c.h.b16 %v5687
          %v6532 = vunpack.c.l.b16 %v5688
          %v6533 = vunpack.c.h.b16 %v5688
          %v6534 = vunpack.c.l.b16 %v5689
          %v6535 = vunpack.c.h.b16 %v5689
          %v6536 = vunpack.c.l.b16 %v5690
          %v6537 = vunpack.c.h.b16 %v5690
          %v6538 = vunpack.c.l.b16 %v5691
          %v6539 = vunpack.c.h.b16 %v5691
          %v6540 = vunpack.c.l.b16 %v5692
          %v6541 = vunpack.c.h.b16 %v5692
          %v6542 = vunpack.c.l.b16 %v5693
          %v6543 = vunpack.c.h.b16 %v5693
          %v6544 = vunpack.c.l.b16 %v5694
          %v6545 = vunpack.c.h.b16 %v5694
          %v6546 = vunpack.c.l.b16 %v5695
          %v6547 = vunpack.c.h.b16 %v5695
          %v6548 = vunpack.c.l.b16 %v5696
          %v6549 = vunpack.c.h.b16 %v5696
          %v6550 = vunpack.c.l.b16 %v5697
          %v6551 = vunpack.c.h.b16 %v5697
          %v6552 = vunpack.c.l.b16 %v5698
          %v6553 = vunpack.c.h.b16 %v5698
          %v6554 = vunpack.c.l.b16 %v5699
          %v6555 = vunpack.c.h.b16 %v5699
          %v6556 = vunpack.c.l.b16 %v5700
          %v6557 = vunpack.c.h.b16 %v5700
          %v6558 = vunpack.c.l.b16 %v5701
          %v6559 = vunpack.c.h.b16 %v5701
          %v6560 = vunpack.c.l.b16 %v5702
          %v6561 = vunpack.c.h.b16 %v5702
          %v6562 = vunpack.c.l.b16 %v5703
          %v6563 = vunpack.c.h.b16 %v5703
          %v6564 = vunpack.c.l.b16 %v5704
          %v6565 = vunpack.c.h.b16 %v5704
          %v6566 = vunpack.c.l.b16 %v5705
          %v6567 = vunpack.c.h.b16 %v5705
          %v6568 = vunpack.c.l.b16 %v5706
          %v6569 = vunpack.c.h.b16 %v5706
          %v6570 = vunpack.c.l.b16 %v5707
          %v6571 = vunpack.c.h.b16 %v5707
          %v6572 = vunpack.c.l.b16 %v5708
          %v6573 = vunpack.c.h.b16 %v5708
          %v6574 = vunpack.c.l.b16 %v5709
          %v6575 = vunpack.c.h.b16 %v5709
          %v6576 = vunpack.c.l.b16 %v5710
          %v6577 = vunpack.c.h.b16 %v5710
          %v6578 = vunpack.c.l.b16 %v5711
          %v6579 = vunpack.c.h.b16 %v5711
          %v6580 = vunpack.c.l.b16 %v5712
          %v6581 = vunpack.c.h.b16 %v5712
          %v6582 = vunpack.c.l.b16 %v5713
          %v6583 = vunpack.c.h.b16 %v5713
          %v6584 = vunpack.c.l.b16 %v5714
          %v6585 = vunpack.c.h.b16 %v5714
          %v6586 = vunpack.c.l.b16 %v5715
          %v6587 = vunpack.c.h.b16 %v5715
          %v6588 = vunpack.c.l.b16 %v5716
          %v6589 = vunpack.c.h.b16 %v5716
          %v6590 = vunpack.c.l.b16 %v5717
          %v6591 = vunpack.c.h.b16 %v5717
          %v6592 = vunpack.c.l.b16 %v5718
          %v6593 = vunpack.c.h.b16 %v5718
          %v6594 = vunpack.c.l.b16 %v5719
          %v6595 = vunpack.c.h.b16 %v5719
          %v6596 = vunpack.c.l.b16 %v5720
          %v6597 = vunpack.c.h.b16 %v5720
          %v6598 = vunpack.c.l.b16 %v5721
          %v6599 = vunpack.c.h.b16 %v5721
          %v6600 = vunpack.c.l.b16 %v5722
          %v6601 = vunpack.c.h.b16 %v5722
          %v6602 = vunpack.c.l.b16 %v5723
          %v6603 = vunpack.c.h.b16 %v5723
          %v6604 = vunpack.c.l.b16 %v5724
          %v6605 = vunpack.c.h.b16 %v5724
          %v6606 = vunpack.c.l.b16 %v5725
          %v6607 = vunpack.c.h.b16 %v5725
          %v6608 = vunpack.c.l.b16 %v5726
          %v6609 = vunpack.c.h.b16 %v5726
          %v6610 = vunpack.c.l.b16 %v5727
          %v6611 = vunpack.c.h.b16 %v5727
          %v6612 = vunpack.c.l.b16 %v5728
          %v6613 = vunpack.c.h.b16 %v5728
          %v6614 = vunpack.c.l.b16 %v5729
          %v6615 = vunpack.c.h.b16 %v5729
          %v6616 = vunpack.c.l.b16 %v5730
          %v6617 = vunpack.c.h.b16 %v5730
          %v6618 = vunpack.c.l.b16 %v5731
          %v6619 = vunpack.c.h.b16 %v5731
          %v6620 = vunpack.c.l.b16 %v5732
          %v6621 = vunpack.c.h.b16 %v5732
          %v6622 = vunpack.c.l.b16 %v5733
          %v6623 = vunpack.c.h.b16 %v5733
          %v6624 = vunpack.c.l.b16 %v5734
          %v6625 = vunpack.c.h.b16 %v5734
          %v6626 = vunpack.c.l.b16 %v5735
          %v6627 = vunpack.c.h.b16 %v5735
          %v6628 = vunpack.c.l.b16 %v5736
          %v6629 = vunpack.c.h.b16 %v5736
          %v6630 = vunpack.c.l.b16 %v5737
          %v6631 = vunpack.c.h.b16 %v5737
          %v6632 = vunpack.c.l.b16 %v5738
          %v6633 = vunpack.c.h.b16 %v5738
          %v6634 = vunpack.c.l.b16 %v5739
          %v6635 = vunpack.c.h.b16 %v5739
          %v6636 = vunpack.c.l.b16 %v5740
          %v6637 = vunpack.c.h.b16 %v5740
          %v6638 = vunpack.c.l.b16 %v5741
          %v6639 = vunpack.c.h.b16 %v5741
          %v6640 = vunpack.c.l.b16 %v5742
          %v6641 = vunpack.c.h.b16 %v5742
          %v6642 = vunpack.c.l.b16 %v5743
          %v6643 = vunpack.c.h.b16 %v5743
          %v6644 = vunpack.c.l.b16 %v5744
          %v6645 = vunpack.c.h.b16 %v5744
          %v6646 = vunpack.c.l.b16 %v5745
          %v6647 = vunpack.c.h.b16 %v5745
          %v6648 = vunpack.c.l.b16 %v5746
          %v6649 = vunpack.c.h.b16 %v5746
          %v6650 = vunpack.c.l.b16 %v5747
          %v6651 = vunpack.c.h.b16 %v5747
          %v6652 = vunpack.c.l.b16 %v5748
          %v6653 = vunpack.c.h.b16 %v5748
          %v6654 = vunpack.c.l.b16 %v5749
          %v6655 = vunpack.c.h.b16 %v5749
          %v6656 = vunpack.c.l.b16 %v5750
          %v6657 = vunpack.c.h.b16 %v5750
          %v6658 = vunpack.c.l.b16 %v5751
          %v6659 = vunpack.c.h.b16 %v5751
          %v6660 = vunpack.c.l.b16 %v5752
          %v6661 = vunpack.c.h.b16 %v5752
          %v6662 = vunpack.c.l.b16 %v5753
          %v6663 = vunpack.c.h.b16 %v5753
          %v6664 = vunpack.c.l.b16 %v5754
          %v6665 = vunpack.c.h.b16 %v5754
          %v6666 = vunpack.c.l.b16 %v5755
          %v6667 = vunpack.c.h.b16 %v5755
          %v6668 = vunpack.c.l.b16 %v5756
          %v6669 = vunpack.c.h.b16 %v5756
          %v6670 = vunpack.c.l.b16 %v5757
          %v6671 = vunpack.c.h.b16 %v5757
          %v6672 = vunpack.c.l.b16 %v5758
          %v6673 = vunpack.c.h.b16 %v5758
          %v6674 = vunpack.c.l.b16 %v5759
          %v6675 = vunpack.c.h.b16 %v5759
          %v6676 = vunpack.c.l.b16 %v5760
          %v6677 = vunpack.c.h.b16 %v5760
          %v6678 = vunpack.c.l.b16 %v5761
          %v6679 = vunpack.c.h.b16 %v5761
          %v6680 = vunpack.c.l.b16 %v5762
          %v6681 = vunpack.c.h.b16 %v5762
          %v6682 = vunpack.c.l.b16 %v5763
          %v6683 = vunpack.c.h.b16 %v5763
          %v6684 = vunpack.c.l.b16 %v5764
          %v6685 = vunpack.c.h.b16 %v5764
          %v6686 = vunpack.c.l.b16 %v5765
          %v6687 = vunpack.c.h.b16 %v5765
          %v6688 = vunpack.c.l.b16 %v5766
          %v6689 = vunpack.c.h.b16 %v5766
          %v6690 = vunpack.c.l.b16 %v5767
          %v6691 = vunpack.c.h.b16 %v5767
          %v6692 = vunpack.c.l.b16 %v5768
          %v6693 = vunpack.c.h.b16 %v5768
          %v6694 = vunpack.c.l.b16 %v5769
          %v6695 = vunpack.c.h.b16 %v5769
          %v6696 = vunpack.c.l.b16 %v5770
          %v6697 = vunpack.c.h.b16 %v5770
          %v6698 = vunpack.c.l.b16 %v5771
          %v6699 = vunpack.c.h.b16 %v5771
          %v6700 = vunpack.c.l.b16 %v5772
          %v6701 = vunpack.c.h.b16 %v5772
          %v6702 = vunpack.c.l.b16 %v5773
          %v6703 = vunpack.c.h.b16 %v5773
          %v6704 = vunpack.c.l.b16 %v5774
          %v6705 = vunpack.c.h.b16 %v5774
          %v6706 = vunpack.c.l.b16 %v5775
          %v6707 = vunpack.c.h.b16 %v5775
          %v6708 = vunpack.c.l.b16 %v5776
          %v6709 = vunpack.c.h.b16 %v5776
          %v6710 = vunpack.c.l.b16 %v5777
          %v6711 = vunpack.c.h.b16 %v5777
          %v6712 = vunpack.c.l.b16 %v5778
          %v6713 = vunpack.c.h.b16 %v5778
          %v6714 = vunpack.c.l.b16 %v5779
          %v6715 = vunpack.c.h.b16 %v5779
          %v6716 = vunpack.c.l.b16 %v5780
          %v6717 = vunpack.c.h.b16 %v5780
          %v6718 = vunpack.c.l.b16 %v5781
          %v6719 = vunpack.c.h.b16 %v5781
          %v6720 = vunpack.c.l.b16 %v5782
          %v6721 = vunpack.c.h.b16 %v5782
          %v6722 = vunpack.c.l.b16 %v5783
          %v6723 = vunpack.c.h.b16 %v5783
          %v6724 = vunpack.c.l.b16 %v5784
          %v6725 = vunpack.c.h.b16 %v5784
          %v6726 = vunpack.c.l.b16 %v5785
          %v6727 = vunpack.c.h.b16 %v5785
          %v6728 = vunpack.c.l.b16 %v5786
          %v6729 = vunpack.c.h.b16 %v5786
          %v6730 = vunpack.c.l.b16 %v5787
          %v6731 = vunpack.c.h.b16 %v5787
          %v6732 = vunpack.c.l.b16 %v5788
          %v6733 = vunpack.c.h.b16 %v5788
          %v6734 = vunpack.c.l.b16 %v5789
          %v6735 = vunpack.c.h.b16 %v5789
          %v6736 = vunpack.c.l.b16 %v5790
          %v6737 = vunpack.c.h.b16 %v5790
          %v6738 = vunpack.c.l.b16 %v5791
          %v6739 = vunpack.c.h.b16 %v5791
          %v6740 = vunpack.c.l.b16 %v5792
          %v6741 = vunpack.c.h.b16 %v5792
          %v6742 = vunpack.c.l.b16 %v5793
          %v6743 = vunpack.c.h.b16 %v5793
          %v6744 = vunpack.c.l.b16 %v5794
          %v6745 = vunpack.c.h.b16 %v5794
          %v6746 = vunpack.c.l.b16 %v5795
          %v6747 = vunpack.c.h.b16 %v5795
          %v6748 = vunpack.c.l.b16 %v5796
          %v6749 = vunpack.c.h.b16 %v5796
          %v6750 = vunpack.c.l.b16 %v5797
          %v6751 = vunpack.c.h.b16 %v5797
          %v6752 = vunpack.c.l.b16 %v5798
          %v6753 = vunpack.c.h.b16 %v5798
          %v6754 = vunpack.c.l.b16 %v5799
          %v6755 = vunpack.c.h.b16 %v5799
          %v6756 = vunpack.c.l.b16 %v5800
          %v6757 = vunpack.c.h.b16 %v5800
          %v6758 = vunpack.c.l.b16 %v5801
          %v6759 = vunpack.c.h.b16 %v5801
          %v6760 = vunpack.c.l.b16 %v5802
          %v6761 = vunpack.c.h.b16 %v5802
          %v6762 = vunpack.c.l.b16 %v5803
          %v6763 = vunpack.c.h.b16 %v5803
          %v6764 = vunpack.c.l.b16 %v5804
          %v6765 = vunpack.c.h.b16 %v5804
          %v6766 = vunpack.c.l.b16 %v5805
          %v6767 = vunpack.c.h.b16 %v5805
          %v6768 = vunpack.c.l.b16 %v5806
          %v6769 = vunpack.c.h.b16 %v5806
          %v6770 = vunpack.c.l.b16 %v5807
          %v6771 = vunpack.c.h.b16 %v5807
          %v6772 = vunpack.c.l.b16 %v5808
          %v6773 = vunpack.c.h.b16 %v5808
          %v6774 = vunpack.c.l.b16 %v5809
          %v6775 = vunpack.c.h.b16 %v5809
          %v6776 = vunpack.c.l.b16 %v5810
          %v6777 = vunpack.c.h.b16 %v5810
          %v6778 = vunpack.c.l.b16 %v5811
          %v6779 = vunpack.c.h.b16 %v5811
          %v6780 = vunpack.c.l.b16 %v5812
          %v6781 = vunpack.c.h.b16 %v5812
          %v6782 = vunpack.c.l.b16 %v5813
          %v6783 = vunpack.c.h.b16 %v5813
          %v6784 = vunpack.c.l.b16 %v5814
          %v6785 = vunpack.c.h.b16 %v5814
          %v6786 = vunpack.c.l.b16 %v5815
          %v6787 = vunpack.c.h.b16 %v5815
          %v6788 = vunpack.c.l.b16 %v5816
          %v6789 = vunpack.c.h.b16 %v5816
          %v6790 = vunpack.c.l.b16 %v5817
          %v6791 = vunpack.c.h.b16 %v5817
          %v6792 = vunpack.c.l.b16 %v5818
          %v6793 = vunpack.c.h.b16 %v5818
          %v6794 = vunpack.c.l.b16 %v5819
          %v6795 = vunpack.c.h.b16 %v5819
          %v6796 = vunpack.c.l.b16 %v5820
          %v6797 = vunpack.c.h.b16 %v5820
          %v6798 = vunpack.c.l.b16 %v5821
          %v6799 = vunpack.c.h.b16 %v5821
          %v6800 = vunpack.c.l.b16 %v5822
          %v6801 = vunpack.c.h.b16 %v5822
          %v6802 = vunpack.c.l.b16 %v5823
          %v6803 = vunpack.c.h.b16 %v5823
          %v6804 = vunpack.c.l.b16 %v5824
          %v6805 = vunpack.c.h.b16 %v5824
          %v6806 = vunpack.c.l.b16 %v5825
          %v6807 = vunpack.c.h.b16 %v5825
          %v6808 = vunpack.c.l.b16 %v5826
          %v6809 = vunpack.c.h.b16 %v5826
          %v6810 = vunpack.c.l.b16 %v5827
          %v6811 = vunpack.c.h.b16 %v5827
          %v6812 = vunpack.c.l.b16 %v5828
          %v6813 = vunpack.c.h.b16 %v5828
          %v6814 = vunpack.c.l.b16 %v5829
          %v6815 = vunpack.c.h.b16 %v5829
          %v6816 = vunpack.c.l.b16 %v5830
          %v6817 = vunpack.c.h.b16 %v5830
          %v6818 = vunpack.c.l.b16 %v5831
          %v6819 = vunpack.c.h.b16 %v5831
          %v6820 = vunpack.c.l.b16 %v5832
          %v6821 = vunpack.c.h.b16 %v5832
          %v6822 = vunpack.c.l.b16 %v5833
          %v6823 = vunpack.c.h.b16 %v5833
          %v6824 = vunpack.c.l.b16 %v5834
          %v6825 = vunpack.c.h.b16 %v5834
          %v6826 = vunpack.c.l.b16 %v5835
          %v6827 = vunpack.c.h.b16 %v5835
          %v6828 = vunpack.c.l.b16 %v5836
          %v6829 = vunpack.c.h.b16 %v5836
          %v6830 = vunpack.c.l.b16 %v5837
          %v6831 = vunpack.c.h.b16 %v5837
          %v6832 = vunpack.c.l.b16 %v5838
          %v6833 = vunpack.c.h.b16 %v5838
          %v6834 = vunpack.c.l.b16 %v5839
          %v6835 = vunpack.c.h.b16 %v5839
          %v6836 = vunpack.c.l.b16 %v5840
          %v6837 = vunpack.c.h.b16 %v5840
          %v6838 = vunpack.c.l.b16 %v5841
          %v6839 = vunpack.c.h.b16 %v5841
          %v6840 = vunpack.c.l.b16 %v5842
          %v6841 = vunpack.c.h.b16 %v5842
          %v6842 = vunpack.c.l.b16 %v5843
          %v6843 = vunpack.c.h.b16 %v5843
          %v6844 = vunpack.c.l.b16 %v5844
          %v6845 = vunpack.c.h.b16 %v5844
          %v6846 = vunpack.c.l.b16 %v5845
          %v6847 = vunpack.c.h.b16 %v5845
          %v6848 = vunpack.c.l.b16 %v5846
          %v6849 = vunpack.c.h.b16 %v5846
          %v6850 = vunpack.c.l.b16 %v5847
          %v6851 = vunpack.c.h.b16 %v5847
          %v6852 = vunpack.c.l.b16 %v5848
          %v6853 = vunpack.c.h.b16 %v5848
          %v6854 = vunpack.c.l.b16 %v5849
          %v6855 = vunpack.c.h.b16 %v5849
          %v6856 = vunpack.c.l.b16 %v5850
          %v6857 = vunpack.c.h.b16 %v5850
          %v6858 = vunpack.c.l.b16 %v5851
          %v6859 = vunpack.c.h.b16 %v5851
          %v6860 = vunpack.c.l.b16 %v5852
          %v6861 = vunpack.c.h.b16 %v5852
          %v6862 = vunpack.c.l.b16 %v5853
          %v6863 = vunpack.c.h.b16 %v5853
          %v6864 = vunpack.c.l.b16 %v5854
          %v6865 = vunpack.c.h.b16 %v5854
          %v6866 = vunpack.c.l.b16 %v5855
          %v6867 = vunpack.c.h.b16 %v5855
          %v6868 = vunpack.c.l.b16 %v5856
          %v6869 = vunpack.c.h.b16 %v5856
          %v6870 = vunpack.c.l.b16 %v5857
          %v6871 = vunpack.c.h.b16 %v5857
          %v6872 = vunpack.c.l.b16 %v5858
          %v6873 = vunpack.c.h.b16 %v5858
          %v6874 = vunpack.c.l.b16 %v5859
          %v6875 = vunpack.c.h.b16 %v5859
          %v6876 = vunpack.c.l.b16 %v5860
          %v6877 = vunpack.c.h.b16 %v5860
          %v6878 = vunpack.c.l.b16 %v5861
          %v6879 = vunpack.c.h.b16 %v5861
          %v6880 = vunpack.c.l.b16 %v5862
          %v6881 = vunpack.c.h.b16 %v5862
          %v6882 = vunpack.c.l.b16 %v5863
          %v6883 = vunpack.c.h.b16 %v5863
          %v6884 = vunpack.c.l.b16 %v5864
          %v6885 = vunpack.c.h.b16 %v5864
          %v6886 = vunpack.c.l.b16 %v5865
          %v6887 = vunpack.c.h.b16 %v5865
          %v6888 = vunpack.c.l.b16 %v5866
          %v6889 = vunpack.c.h.b16 %v5866
          %v6890 = vunpack.c.l.b16 %v5867
          %v6891 = vunpack.c.h.b16 %v5867
          %v6892 = vunpack.c.l.b16 %v5868
          %v6893 = vunpack.c.h.b16 %v5868
          %v6894 = vunpack.c.l.b16 %v5869
          %v6895 = vunpack.c.h.b16 %v5869
          %v6896 = vunpack.c.l.b16 %v5870
          %v6897 = vunpack.c.h.b16 %v5870
          %v6898 = vunpack.c.l.b16 %v5871
          %v6899 = vunpack.c.h.b16 %v5871
          %v6900 = vunpack.c.l.b16 %v5872
          %v6901 = vunpack.c.h.b16 %v5872
          %v6902 = vunpack.c.l.b16 %v5873
          %v6903 = vunpack.c.h.b16 %v5873
          %v6904 = vunpack.c.l.b16 %v5874
          %v6905 = vunpack.c.h.b16 %v5874
          %v6906 = vunpack.c.l.b16 %v5875
          %v6907 = vunpack.c.h.b16 %v5875
          %v6908 = vunpack.c.l.b16 %v5876
          %v6909 = vunpack.c.h.b16 %v5876
          %v6910 = vunpack.c.l.b16 %v5877
          %v6911 = vunpack.c.h.b16 %v5877
          %v6912 = vunpack.c.l.b16 %v5878
          %v6913 = vunpack.c.h.b16 %v5878
          %v6914 = vunpack.c.l.b16 %v5879
          %v6915 = vunpack.c.h.b16 %v5879
          %v6916 = vunpack.c.l.b16 %v5880
          %v6917 = vunpack.c.h.b16 %v5880
          %v6918 = vunpack.c.l.b16 %v5881
          %v6919 = vunpack.c.h.b16 %v5881
          %v6920 = vunpack.c.l.b16 %v5882
          %v6921 = vunpack.c.h.b16 %v5882
          %v6922 = vunpack.c.l.b16 %v5883
          %v6923 = vunpack.c.h.b16 %v5883
          %v6924 = vunpack.c.l.b16 %v5884
          %v6925 = vunpack.c.h.b16 %v5884
          %v6926 = vunpack.c.l.b16 %v5885
          %v6927 = vunpack.c.h.b16 %v5885
          %v6928 = vunpack.c.l.b16 %v5886
          %v6929 = vunpack.c.h.b16 %v5886
          %v6930 = vunpack.c.l.b16 %v5887
          %v6931 = vunpack.c.h.b16 %v5887
          %v6932 = vunpack.c.l.b16 %v5888
          %v6933 = vunpack.c.h.b16 %v5888
          %v6934 = vunpack.c.l.b16 %v5889
          %v6935 = vunpack.c.h.b16 %v5889
          %v6936 = vunpack.c.l.b16 %v5890
          %v6937 = vunpack.c.h.b16 %v5890
          %v6938 = vunpack.c.l.b16 %v5891
          %v6939 = vunpack.c.h.b16 %v5891
          %v6940 = vunpack.c.l.b16 %v5892
          %v6941 = vunpack.c.h.b16 %v5892
          %v6942 = vunpack.c.l.b16 %v5893
          %v6943 = vunpack.c.h.b16 %v5893
          %v6944 = vunpack.c.l.b16 %v5894
          %v6945 = vunpack.c.h.b16 %v5894
          %v6946 = vunpack.c.l.b16 %v5895
          %v6947 = vunpack.c.h.b16 %v5895
          %v6948 = vunpack.c.l.b16 %v5896
          %v6949 = vunpack.c.h.b16 %v5896
          %v6950 = vunpack.c.l.b16 %v5897
          %v6951 = vunpack.c.h.b16 %v5897
          %v6952 = vunpack.c.l.b16 %v5898
          %v6953 = vunpack.c.h.b16 %v5898
          %v6954 = vunpack.c.l.b16 %v5899
          %v6955 = vunpack.c.h.b16 %v5899
          %v6956 = vunpack.c.l.b16 %v5900
          %v6957 = vunpack.c.h.b16 %v5900
          %v6958 = vunpack.c.l.b16 %v5901
          %v6959 = vunpack.c.h.b16 %v5901
          %v6960 = vunpack.c.l.b16 %v5902
          %v6961 = vunpack.c.h.b16 %v5902
          %v6962 = vunpack.c.l.b16 %v5903
          %v6963 = vunpack.c.h.b16 %v5903
          %v6964 = vunpack.c.l.b16 %v5904
          %v6965 = vunpack.c.h.b16 %v5904
          %v6966 = vunpack.c.l.b16 %v5905
          %v6967 = vunpack.c.h.b16 %v5905
          %v6968 = vunpack.c.l.b16 %v5906
          %v6969 = vunpack.c.h.b16 %v5906
          %v6970 = vunpack.c.l.b16 %v5907
          %v6971 = vunpack.c.h.b16 %v5907
          %v6972 = vunpack.c.l.b16 %v5908
          %v6973 = vunpack.c.h.b16 %v5908
          %v6974 = vunpack.c.l.b16 %v5909
          %v6975 = vunpack.c.h.b16 %v5909
          %v6976 = vunpack.c.l.b16 %v5910
          %v6977 = vunpack.c.h.b16 %v5910
          %v6978 = vunpack.c.l.b16 %v5911
          %v6979 = vunpack.c.h.b16 %v5911
          %v6980 = vunpack.c.l.b16 %v5912
          %v6981 = vunpack.c.h.b16 %v5912
          %v6982 = vunpack.c.l.b16 %v5913
          %v6983 = vunpack.c.h.b16 %v5913
          %v6984 = vunpack.c.l.b16 %v5914
          %v6985 = vunpack.c.h.b16 %v5914
          %v6986 = vunpack.c.l.b16 %v5915
          %v6987 = vunpack.c.h.b16 %v5915
          %v6988 = vunpack.c.l.b16 %v5916
          %v6989 = vunpack.c.h.b16 %v5916
          %v6990 = vunpack.c.l.b16 %v5917
          %v6991 = vunpack.c.h.b16 %v5917
          %v6992 = vunpack.c.l.b16 %v5918
          %v6993 = vunpack.c.h.b16 %v5918
          %v6994 = vunpack.c.l.b16 %v5919
          %v6995 = vunpack.c.h.b16 %v5919
          %v6996 = vunpack.c.l.b16 %v5920
          %v6997 = vunpack.c.h.b16 %v5920
          %v6998 = vunpack.c.l.b16 %v5921
          %v6999 = vunpack.c.h.b16 %v5921
          %v7000 = vunpack.c.l.b16 %v5922
          %v7001 = vunpack.c.h.b16 %v5922
          %v7002 = vunpack.c.l.b16 %v5923
          %v7003 = vunpack.c.h.b16 %v5923
          %v7004 = vunpack.c.l.b16 %v5924
          %v7005 = vunpack.c.h.b16 %v5924
          %v7006 = vunpack.c.l.b16 %v5925
          %v7007 = vunpack.c.h.b16 %v5925
          %v7008 = vunpack.c.l.b16 %v5926
          %v7009 = vunpack.c.h.b16 %v5926
          %v7010 = vunpack.c.l.b16 %v5927
          %v7011 = vunpack.c.h.b16 %v5927
          %v7012 = vunpack.c.l.b16 %v5928
          %v7013 = vunpack.c.h.b16 %v5928
          %v7014 = vunpack.c.l.b16 %v5929
          %v7015 = vunpack.c.h.b16 %v5929
          %v7016 = vunpack.c.l.b16 %v5930
          %v7017 = vunpack.c.h.b16 %v5930
          %v7018 = vunpack.c.l.b16 %v5931
          %v7019 = vunpack.c.h.b16 %v5931
          %v7020 = vunpack.c.l.b16 %v5932
          %v7021 = vunpack.c.h.b16 %v5932
          %v7022 = vunpack.c.l.b16 %v5933
          %v7023 = vunpack.c.h.b16 %v5933
          %v7024 = vunpack.c.l.b16 %v5934
          %v7025 = vunpack.c.h.b16 %v5934
          %v7026 = vunpack.c.l.b16 %v5935
          %v7027 = vunpack.c.h.b16 %v5935
          %v7028 = vunpack.c.l.b16 %v5936
          %v7029 = vunpack.c.h.b16 %v5936
          %v7030 = vunpack.c.l.b16 %v5937
          %v7031 = vunpack.c.h.b16 %v5937
          %v7032 = vunpack.c.l.b16 %v5938
          %v7033 = vunpack.c.h.b16 %v5938
          %v7034 = vunpack.c.l.b16 %v5939
          %v7035 = vunpack.c.h.b16 %v5939
          %v7036 = vunpack.c.l.b16 %v5940
          %v7037 = vunpack.c.h.b16 %v5940
          %v7038 = vunpack.c.l.b16 %v5941
          %v7039 = vunpack.c.h.b16 %v5941
          %v7040 = vunpack.c.l.b16 %v5942
          %v7041 = vunpack.c.h.b16 %v5942
          %v7042 = vunpack.c.l.b16 %v5943
          %v7043 = vunpack.c.h.b16 %v5943
          %v7044 = vunpack.c.l.b16 %v5944
          %v7045 = vunpack.c.h.b16 %v5944
          %v7046 = vunpack.c.l.b16 %v5945
          %v7047 = vunpack.c.h.b16 %v5945
          %v7048 = vunpack.c.l.b16 %v5946
          %v7049 = vunpack.c.h.b16 %v5946
          %v7050 = vunpack.c.l.b16 %v5947
          %v7051 = vunpack.c.h.b16 %v5947
          %v7052 = vunpack.c.l.b16 %v5948
          %v7053 = vunpack.c.h.b16 %v5948
          %v7054 = vunpack.c.l.b16 %v5949
          %v7055 = vunpack.c.h.b16 %v5949
          %v7056 = vunpack.c.l.b16 %v5950
          %v7057 = vunpack.c.h.b16 %v5950
          %v7058 = vunpack.c.l.b16 %v5951
          %v7059 = vunpack.c.h.b16 %v5951
          %v7060 = vunpack.c.l.b16 %v5952
          %v7061 = vunpack.c.h.b16 %v5952
          %v7062 = vunpack.c.l.b16 %v5953
          %v7063 = vunpack.c.h.b16 %v5953
          %v7064 = vunpack.c.l.b16 %v5954
          %v7065 = vunpack.c.h.b16 %v5954
          %v7066 = vunpack.c.l.b16 %v5955
          %v7067 = vunpack.c.h.b16 %v5955
          %v7068 = vunpack.c.l.b16 %v5956
          %v7069 = vunpack.c.h.b16 %v5956
          %v7070 = vunpack.c.l.b16 %v5957
          %v7071 = vunpack.c.h.b16 %v5957
          %v7072 = vunpack.c.l.b16 %v5958
          %v7073 = vunpack.c.h.b16 %v5958
          %v7074 = vunpack.c.l.b16 %v5959
          %v7075 = vunpack.c.h.b16 %v5959
          %v7076 = vunpack.c.l.b16 %v5960
          %v7077 = vunpack.c.h.b16 %v5960
          %v7078 = vunpack.c.l.b16 %v5961
          %v7079 = vunpack.c.h.b16 %v5961
          %v7080 = vunpack.c.l.b16 %v5962
          %v7081 = vunpack.c.h.b16 %v5962
          %v7082 = vunpack.c.l.b16 %v5963
          %v7083 = vunpack.c.h.b16 %v5963
          %v7084 = vunpack.c.l.b16 %v5964
          %v7085 = vunpack.c.h.b16 %v5964
          %v7086 = vunpack.c.l.b16 %v5965
          %v7087 = vunpack.c.h.b16 %v5965
          %v7088 = vunpack.c.l.b16 %v5966
          %v7089 = vunpack.c.h.b16 %v5966
          %v7090 = vunpack.c.l.b16 %v5967
          %v7091 = vunpack.c.h.b16 %v5967
          %v7092 = vunpack.c.l.b16 %v5968
          %v7093 = vunpack.c.h.b16 %v5968
          %v7094 = vunpack.c.l.b16 %v5969
          %v7095 = vunpack.c.h.b16 %v5969
          %v7096 = vunpack.c.l.b16 %v5970
          %v7097 = vunpack.c.h.b16 %v5970
          %v7098 = vunpack.c.l.b16 %v5971
          %v7099 = vunpack.c.h.b16 %v5971
          %v7100 = vunpack.c.l.b16 %v5972
          %v7101 = vunpack.c.h.b16 %v5972
          %v7102 = vunpack.c.l.b16 %v5973
          %v7103 = vunpack.c.h.b16 %v5973
          %v7104 = vunpack.c.l.b16 %v5974
          %v7105 = vunpack.c.h.b16 %v5974
          %v7106 = vunpack.c.l.b16 %v5975
          %v7107 = vunpack.c.h.b16 %v5975
          %v7108 = vunpack.c.l.b16 %v5976
          %v7109 = vunpack.c.h.b16 %v5976
          %v7110 = vunpack.c.l.b16 %v5977
          %v7111 = vunpack.c.h.b16 %v5977
          %v7112 = vunpack.c.l.b16 %v5978
          %v7113 = vunpack.c.h.b16 %v5978
          %v7114 = vunpack.c.l.b16 %v5979
          %v7115 = vunpack.c.h.b16 %v5979
          %v7116 = vunpack.c.l.b16 %v5980
          %v7117 = vunpack.c.h.b16 %v5980
          %v7118 = vunpack.c.l.b16 %v5981
          %v7119 = vunpack.c.h.b16 %v5981
          %v7120 = vunpack.c.l.b16 %v5982
          %v7121 = vunpack.c.h.b16 %v5982
          %v7122 = vunpack.c.l.b16 %v5983
          %v7123 = vunpack.c.h.b16 %v5983
          %v7124 = vunpack.c.l.b16 %v5984
          %v7125 = vunpack.c.h.b16 %v5984
          %v7126 = vunpack.c.l.b16 %v5985
          %v7127 = vunpack.c.h.b16 %v5985
          %v7128 = vunpack.c.l.b16 %v5986
          %v7129 = vunpack.c.h.b16 %v5986
          %v7130 = vunpack.c.l.b16 %v5987
          %v7131 = vunpack.c.h.b16 %v5987
          %v7132 = vunpack.c.l.b16 %v5988
          %v7133 = vunpack.c.h.b16 %v5988
          %v7134 = vunpack.c.l.b16 %v5989
          %v7135 = vunpack.c.h.b16 %v5989
          %v7136 = vunpack.c.l.b16 %v5990
          %v7137 = vunpack.c.h.b16 %v5990
          %v7138 = vunpack.c.l.b16 %v5991
          %v7139 = vunpack.c.h.b16 %v5991
          %v7140 = vunpack.c.l.b16 %v5992
          %v7141 = vunpack.c.h.b16 %v5992
          %v7142 = vunpack.c.l.b16 %v5993
          %v7143 = vunpack.c.h.b16 %v5993
          %v7144 = vunpack.c.l.b16 %v5994
          %v7145 = vunpack.c.h.b16 %v5994
          %v7146 = vunpack.c.l.b16 %v5995
          %v7147 = vunpack.c.h.b16 %v5995
          %v7148 = vunpack.c.l.b16 %v5996
          %v7149 = vunpack.c.h.b16 %v5996
          %v7150 = vunpack.c.l.b16 %v5997
          %v7151 = vunpack.c.h.b16 %v5997
          %v7152 = vpack.c.b16 %v6396, %v6384
          %v7153 = vpack.c.b16 %v6397, %v6385
          %v7154 = vpack.c.b16 %v6398, %v6386
          %v7155 = vpack.c.b16 %v6399, %v6387
          %v7156 = vpack.c.b16 %v6400, %v6388
          %v7157 = vpack.c.b16 %v6401, %v6389
          %v7158 = vpack.c.b16 %v6402, %v6390
          %v7159 = vpack.c.b16 %v6403, %v6391
          %v7160 = vpack.c.b16 %v6404, %v6392
          %v7161 = vpack.c.b16 %v6405, %v6393
          %v7162 = vpack.c.b16 %v6406, %v6394
          %v7163 = vpack.c.b16 %v6407, %v6395
          %v7164 = vpack.c.b16 %v6420, %v6408
          %v7165 = vpack.c.b16 %v6421, %v6409
          %v7166 = vpack.c.b16 %v6422, %v6410
          %v7167 = vpack.c.b16 %v6423, %v6411
          %v7168 = vpack.c.b16 %v6424, %v6412
          %v7169 = vpack.c.b16 %v6425, %v6413
          %v7170 = vpack.c.b16 %v6426, %v6414
          %v7171 = vpack.c.b16 %v6427, %v6415
          %v7172 = vpack.c.b16 %v6428, %v6416
          %v7173 = vpack.c.b16 %v6429, %v6417
          %v7174 = vpack.c.b16 %v6430, %v6418
          %v7175 = vpack.c.b16 %v6431, %v6419
          %v7176 = vpack.c.b16 %v6444, %v6432
          %v7177 = vpack.c.b16 %v6445, %v6433
          %v7178 = vpack.c.b16 %v6446, %v6434
          %v7179 = vpack.c.b16 %v6447, %v6435
          %v7180 = vpack.c.b16 %v6448, %v6436
          %v7181 = vpack.c.b16 %v6449, %v6437
          %v7182 = vpack.c.b16 %v6450, %v6438
          %v7183 = vpack.c.b16 %v6451, %v6439
          %v7184 = vpack.c.b16 %v6452, %v6440
          %v7185 = vpack.c.b16 %v6453, %v6441
          %v7186 = vpack.c.b16 %v6454, %v6442
          %v7187 = vpack.c.b16 %v6455, %v6443
          %v7188 = vpack.c.b16 %v6468, %v6456
          %v7189 = vpack.c.b16 %v6469, %v6457
          %v7190 = vpack.c.b16 %v6470, %v6458
          %v7191 = vpack.c.b16 %v6471, %v6459
          %v7192 = vpack.c.b16 %v6472, %v6460
          %v7193 = vpack.c.b16 %v6473, %v6461
          %v7194 = vpack.c.b16 %v6474, %v6462
          %v7195 = vpack.c.b16 %v6475, %v6463
          %v7196 = vpack.c.b16 %v6476, %v6464
          %v7197 = vpack.c.b16 %v6477, %v6465
          %v7198 = vpack.c.b16 %v6478, %v6466
          %v7199 = vpack.c.b16 %v6479, %v6467
          %v7200 = vpack.c.b16 %v6492, %v6480
          %v7201 = vpack.c.b16 %v6493, %v6481
          %v7202 = vpack.c.b16 %v6494, %v6482
          %v7203 = vpack.c.b16 %v6495, %v6483
          %v7204 = vpack.c.b16 %v6496, %v6484
          %v7205 = vpack.c.b16 %v6497, %v6485
          %v7206 = vpack.c.b16 %v6498, %v6486
          %v7207 = vpack.c.b16 %v6499, %v6487
          %v7208 = vpack.c.b16 %v6500, %v6488
          %v7209 = vpack.c.b16 %v6501, %v6489
          %v7210 = vpack.c.b16 %v6502, %v6490
          %v7211 = vpack.c.b16 %v6503, %v6491
          %v7212 = vpack.c.b16 %v6516, %v6504
          %v7213 = vpack.c.b16 %v6517, %v6505
          %v7214 = vpack.c.b16 %v6518, %v6506
          %v7215 = vpack.c.b16 %v6519, %v6507
          %v7216 = vpack.c.b16 %v6520, %v6508
          %v7217 = vpack.c.b16 %v6521, %v6509
          %v7218 = vpack.c.b16 %v6522, %v6510
          %v7219 = vpack.c.b16 %v6523, %v6511
          %v7220 = vpack.c.b16 %v6524, %v6512
          %v7221 = vpack.c.b16 %v6525, %v6513
          %v7222 = vpack.c.b16 %v6526, %v6514
          %v7223 = vpack.c.b16 %v6527, %v6515
          %v7224 = vpack.c.b16 %v6540, %v6528
          %v7225 = vpack.c.b16 %v6541, %v6529
          %v7226 = vpack.c.b16 %v6542, %v6530
          %v7227 = vpack.c.b16 %v6543, %v6531
          %v7228 = vpack.c.b16 %v6544, %v6532
          %v7229 = vpack.c.b16 %v6545, %v6533
          %v7230 = vpack.c.b16 %v6546, %v6534
          %v7231 = vpack.c.b16 %v6547, %v6535
          %v7232 = vpack.c.b16 %v6548, %v6536
          %v7233 = vpack.c.b16 %v6549, %v6537
          %v7234 = vpack.c.b16 %v6550, %v6538
          %v7235 = vpack.c.b16 %v6551, %v6539
          %v7236 = vpack.c.b16 %v6564, %v6552
          %v7237 = vpack.c.b16 %v6565, %v6553
          %v7238 = vpack.c.b16 %v6566, %v6554
          %v7239 = vpack.c.b16 %v6567, %v6555
          %v7240 = vpack.c.b16 %v6568, %v6556
          %v7241 = vpack.c.b16 %v6569, %v6557
          %v7242 = vpack.c.b16 %v6570, %v6558
          %v7243 = vpack.c.b16 %v6571, %v6559
          %v7244 = vpack.c.b16 %v6572, %v6560
          %v7245 = vpack.c.b16 %v6573, %v6561
          %v7246 = vpack.c.b16 %v6574, %v6562
          %v7247 = vpack.c.b16 %v6575, %v6563
          %v7248 = vpack.c.b16 %v6588, %v6576
          %v7249 = vpack.c.b16 %v6589, %v6577
          %v7250 = vpack.c.b16 %v6590, %v6578
          %v7251 = vpack.c.b16 %v6591, %v6579
          %v7252 = vpack.c.b16 %v6592, %v6580
          %v7253 = vpack.c.b16 %v6593, %v6581
          %v7254 = vpack.c.b16 %v6594, %v6582
          %v7255 = vpack.c.b16 %v6595, %v6583
          %v7256 = vpack.c.b16 %v6596, %v6584
          %v7257 = vpack.c.b16 %v6597, %v6585
          %v7258 = vpack.c.b16 %v6598, %v6586
          %v7259 = vpack.c.b16 %v6599, %v6587
          %v7260 = vpack.c.b16 %v6612, %v6600
          %v7261 = vpack.c.b16 %v6613, %v6601
          %v7262 = vpack.c.b16 %v6614, %v6602
          %v7263 = vpack.c.b16 %v6615, %v6603
          %v7264 = vpack.c.b16 %v6616, %v6604
          %v7265 = vpack.c.b16 %v6617, %v6605
          %v7266 = vpack.c.b16 %v6618, %v6606
          %v7267 = vpack.c.b16 %v6619, %v6607
          %v7268 = vpack.c.b16 %v6620, %v6608
          %v7269 = vpack.c.b16 %v6621, %v6609
          %v7270 = vpack.c.b16 %v6622, %v6610
          %v7271 = vpack.c.b16 %v6623, %v6611
          %v7272 = vpack.c.b16 %v6636, %v6624
          %v7273 = vpack.c.b16 %v6637, %v6625
          %v7274 = vpack.c.b16 %v6638, %v6626
          %v7275 = vpack.c.b16 %v6639, %v6627
          %v7276 = vpack.c.b16 %v6640, %v6628
          %v7277 = vpack.c.b16 %v6641, %v6629
          %v7278 = vpack.c.b16 %v6642, %v6630
          %v7279 = vpack.c.b16 %v6643, %v6631
          %v7280 = vpack.c.b16 %v6644, %v6632
          %v7281 = vpack.c.b16 %v6645, %v6633
          %v7282 = vpack.c.b16 %v6646, %v6634
          %v7283 = vpack.c.b16 %v6647, %v6635
          %v7284 = vpack.c.b16 %v6660, %v6648
          %v7285 = vpack.c.b16 %v6661, %v6649
          %v7286 = vpack.c.b16 %v6662, %v6650
          %v7287 = vpack.c.b16 %v6663, %v6651
          %v7288 = vpack.c.b16 %v6664, %v6652
          %v7289 = vpack.c.b16 %v6665, %v6653
          %v7290 = vpack.c.b16 %v6666, %v6654
          %v7291 = vpack.c.b16 %v6667, %v6655
          %v7292 = vpack.c.b16 %v6668, %v6656
          %v7293 = vpack.c.b16 %v6669, %v6657
          %v7294 = vpack.c.b16 %v6670, %v6658
          %v7295 = vpack.c.b16 %v6671, %v6659
          %v7296 = vpack.c.b16 %v6684, %v6672
          %v7297 = vpack.c.b16 %v6685, %v6673
          %v7298 = vpack.c.b16 %v6686, %v6674
          %v7299 = vpack.c.b16 %v6687, %v6675
          %v7300 = vpack.c.b16 %v6688, %v6676
          %v7301 = vpack.c.b16 %v6689, %v6677
          %v7302 = vpack.c.b16 %v6690, %v6678
          %v7303 = vpack.c.b16 %v6691, %v6679
          %v7304 = vpack.c.b16 %v6692, %v6680
          %v7305 = vpack.c.b16 %v6693, %v6681
          %v7306 = vpack.c.b16 %v6694, %v6682
          %v7307 = vpack.c.b16 %v6695, %v6683
          %v7308 = vpack.c.b16 %v6708, %v6696
          %v7309 = vpack.c.b16 %v6709, %v6697
          %v7310 = vpack.c.b16 %v6710, %v6698
          %v7311 = vpack.c.b16 %v6711, %v6699
          %v7312 = vpack.c.b16 %v6712, %v6700
          %v7313 = vpack.c.b16 %v6713, %v6701
          %v7314 = vpack.c.b16 %v6714, %v6702
          %v7315 = vpack.c.b16 %v6715, %v6703
          %v7316 = vpack.c.b16 %v6716, %v6704
          %v7317 = vpack.c.b16 %v6717, %v6705
          %v7318 = vpack.c.b16 %v6718, %v6706
          %v7319 = vpack.c.b16 %v6719, %v6707
          %v7320 = vpack.c.b16 %v6732, %v6720
          %v7321 = vpack.c.b16 %v6733, %v6721
          %v7322 = vpack.c.b16 %v6734, %v6722
          %v7323 = vpack.c.b16 %v6735, %v6723
          %v7324 = vpack.c.b16 %v6736, %v6724
          %v7325 = vpack.c.b16 %v6737, %v6725
          %v7326 = vpack.c.b16 %v6738, %v6726
          %v7327 = vpack.c.b16 %v6739, %v6727
          %v7328 = vpack.c.b16 %v6740, %v6728
          %v7329 = vpack.c.b16 %v6741, %v6729
          %v7330 = vpack.c.b16 %v6742, %v6730
          %v7331 = vpack.c.b16 %v6743, %v6731
          %v7332 = vpack.c.b16 %v6756, %v6744
          %v7333 = vpack.c.b16 %v6757, %v6745
          %v7334 = vpack.c.b16 %v6758, %v6746
          %v7335 = vpack.c.b16 %v6759, %v6747
          %v7336 = vpack.c.b16 %v6760, %v6748
          %v7337 = vpack.c.b16 %v6761, %v6749
          %v7338 = vpack.c.b16 %v6762, %v6750
          %v7339 = vpack.c.b16 %v6763, %v6751
          %v7340 = vpack.c.b16 %v6764, %v6752
          %v7341 = vpack.c.b16 %v6765, %v6753
          %v7342 = vpack.c.b16 %v6766, %v6754
          %v7343 = vpack.c.b16 %v6767, %v6755
          %v7344 = vpack.c.b16 %v6780, %v6768
          %v7345 = vpack.c.b16 %v6781, %v6769
          %v7346 = vpack.c.b16 %v6782, %v6770
          %v7347 = vpack.c.b16 %v6783, %v6771
          %v7348 = vpack.c.b16 %v6784, %v6772
          %v7349 = vpack.c.b16 %v6785, %v6773
          %v7350 = vpack.c.b16 %v6786, %v6774
          %v7351 = vpack.c.b16 %v6787, %v6775
          %v7352 = vpack.c.b16 %v6788, %v6776
          %v7353 = vpack.c.b16 %v6789, %v6777
          %v7354 = vpack.c.b16 %v6790, %v6778
          %v7355 = vpack.c.b16 %v6791, %v6779
          %v7356 = vpack.c.b16 %v6804, %v6792
          %v7357 = vpack.c.b16 %v6805, %v6793
          %v7358 = vpack.c.b16 %v6806, %v6794
          %v7359 = vpack.c.b16 %v6807, %v6795
          %v7360 = vpack.c.b16 %v6808, %v6796
          %v7361 = vpack.c.b16 %v6809, %v6797
          %v7362 = vpack.c.b16 %v6810, %v6798
          %v7363 = vpack.c.b16 %v6811, %v6799
          %v7364 = vpack.c.b16 %v6812, %v6800
          %v7365 = vpack.c.b16 %v6813, %v6801
          %v7366 = vpack.c.b16 %v6814, %v6802
          %v7367 = vpack.c.b16 %v6815, %v6803
          %v7368 = vpack.c.b16 %v6828, %v6816
          %v7369 = vpack.c.b16 %v6829, %v6817
          %v7370 = vpack.c.b16 %v6830, %v6818
          %v7371 = vpack.c.b16 %v6831, %v6819
          %v7372 = vpack.c.b16 %v6832, %v6820
          %v7373 = vpack.c.b16 %v6833, %v6821
          %v7374 = vpack.c.b16 %v6834, %v6822
          %v7375 = vpack.c.b16 %v6835, %v6823
          %v7376 = vpack.c.b16 %v6836, %v6824
          %v7377 = vpack.c.b16 %v6837, %v6825
          %v7378 = vpack.c.b16 %v6838, %v6826
          %v7379 = vpack.c.b16 %v6839, %v6827
          %v7380 = vpack.c.b16 %v6852, %v6840
          %v7381 = vpack.c.b16 %v6853, %v6841
          %v7382 = vpack.c.b16 %v6854, %v6842
          %v7383 = vpack.c.b16 %v6855, %v6843
          %v7384 = vpack.c.b16 %v6856, %v6844
          %v7385 = vpack.c.b16 %v6857, %v6845
          %v7386 = vpack.c.b16 %v6858, %v6846
          %v7387 = vpack.c.b16 %v6859, %v6847
          %v7388 = vpack.c.b16 %v6860, %v6848
          %v7389 = vpack.c.b16 %v6861, %v6849
          %v7390 = vpack.c.b16 %v6862, %v6850
          %v7391 = vpack.c.b16 %v6863, %v6851
          %v7392 = vpack.c.b16 %v6876, %v6864
          %v7393 = vpack.c.b16 %v6877, %v6865
          %v7394 = vpack.c.b16 %v6878, %v6866
          %v7395 = vpack.c.b16 %v6879, %v6867
          %v7396 = vpack.c.b16 %v6880, %v6868
          %v7397 = vpack.c.b16 %v6881, %v6869
          %v7398 = vpack.c.b16 %v6882, %v6870
          %v7399 = vpack.c.b16 %v6883, %v6871
          %v7400 = vpack.c.b16 %v6884, %v6872
          %v7401 = vpack.c.b16 %v6885, %v6873
          %v7402 = vpack.c.b16 %v6886, %v6874
          %v7403 = vpack.c.b16 %v6887, %v6875
          %v7404 = vpack.c.b16 %v6900, %v6888
          %v7405 = vpack.c.b16 %v6901, %v6889
          %v7406 = vpack.c.b16 %v6902, %v6890
          %v7407 = vpack.c.b16 %v6903, %v6891
          %v7408 = vpack.c.b16 %v6904, %v6892
          %v7409 = vpack.c.b16 %v6905, %v6893
          %v7410 = vpack.c.b16 %v6906, %v6894
          %v7411 = vpack.c.b16 %v6907, %v6895
          %v7412 = vpack.c.b16 %v6908, %v6896
          %v7413 = vpack.c.b16 %v6909, %v6897
          %v7414 = vpack.c.b16 %v6910, %v6898
          %v7415 = vpack.c.b16 %v6911, %v6899
          %v7416 = vpack.c.b16 %v6924, %v6912
          %v7417 = vpack.c.b16 %v6925, %v6913
          %v7418 = vpack.c.b16 %v6926, %v6914
          %v7419 = vpack.c.b16 %v6927, %v6915
          %v7420 = vpack.c.b16 %v6928, %v6916
          %v7421 = vpack.c.b16 %v6929, %v6917
          %v7422 = vpack.c.b16 %v6930, %v6918
          %v7423 = vpack.c.b16 %v6931, %v6919
          %v7424 = vpack.c.b16 %v6932, %v6920
          %v7425 = vpack.c.b16 %v6933, %v6921
          %v7426 = vpack.c.b16 %v6934, %v6922
          %v7427 = vpack.c.b16 %v6935, %v6923
          %v7428 = vpack.c.b16 %v6948, %v6936
          %v7429 = vpack.c.b16 %v6949, %v6937
          %v7430 = vpack.c.b16 %v6950, %v6938
          %v7431 = vpack.c.b16 %v6951, %v6939
          %v7432 = vpack.c.b16 %v6952, %v6940
          %v7433 = vpack.c.b16 %v6953, %v6941
          %v7434 = vpack.c.b16 %v6954, %v6942
          %v7435 = vpack.c.b16 %v6955, %v6943
          %v7436 = vpack.c.b16 %v6956, %v6944
          %v7437 = vpack.c.b16 %v6957, %v6945
          %v7438 = vpack.c.b16 %v6958, %v6946
          %v7439 = vpack.c.b16 %v6959, %v6947
          %v7440 = vpack.c.b16 %v6972, %v6960
          %v7441 = vpack.c.b16 %v6973, %v6961
          %v7442 = vpack.c.b16 %v6974, %v6962
          %v7443 = vpack.c.b16 %v6975, %v6963
          %v7444 = vpack.c.b16 %v6976, %v6964
          %v7445 = vpack.c.b16 %v6977, %v6965
          %v7446 = vpack.c.b16 %v6978, %v6966
          %v7447 = vpack.c.b16 %v6979, %v6967
          %v7448 = vpack.c.b16 %v6980, %v6968
          %v7449 = vpack.c.b16 %v6981, %v6969
          %v7450 = vpack.c.b16 %v6982, %v6970
          %v7451 = vpack.c.b16 %v6983, %v6971
          %v7452 = vpack.c.b16 %v6996, %v6984
          %v7453 = vpack.c.b16 %v6997, %v6985
          %v7454 = vpack.c.b16 %v6998, %v6986
          %v7455 = vpack.c.b16 %v6999, %v6987
          %v7456 = vpack.c.b16 %v7000, %v6988
          %v7457 = vpack.c.b16 %v7001, %v6989
          %v7458 = vpack.c.b16 %v7002, %v6990
          %v7459 = vpack.c.b16 %v7003, %v6991
          %v7460 = vpack.c.b16 %v7004, %v6992
          %v7461 = vpack.c.b16 %v7005, %v6993
          %v7462 = vpack.c.b16 %v7006, %v6994
          %v7463 = vpack.c.b16 %v7007, %v6995
          %v7464 = vpack.c.b16 %v7020, %v7008
          %v7465 = vpack.c.b16 %v7021, %v7009
          %v7466 = vpack.c.b16 %v7022, %v7010
          %v7467 = vpack.c.b16 %v7023, %v7011
          %v7468 = vpack.c.b16 %v7024, %v7012
          %v7469 = vpack.c.b16 %v7025, %v7013
          %v7470 = vpack.c.b16 %v7026, %v7014
          %v7471 = vpack.c.b16 %v7027, %v7015
          %v7472 = vpack.c.b16 %v7028, %v7016
          %v7473 = vpack.c.b16 %v7029, %v7017
          %v7474 = vpack.c.b16 %v7030, %v7018
          %v7475 = vpack.c.b16 %v7031, %v7019
          %v7476 = vpack.c.b16 %v7044, %v7032
          %v7477 = vpack.c.b16 %v7045, %v7033
          %v7478 = vpack.c.b16 %v7046, %v7034
          %v7479 = vpack.c.b16 %v7047, %v7035
          %v7480 = vpack.c.b16 %v7048, %v7036
          %v7481 = vpack.c.b16 %v7049, %v7037
          %v7482 = vpack.c.b16 %v7050, %v7038
          %v7483 = vpack.c.b16 %v7051, %v7039
          %v7484 = vpack.c.b16 %v7052, %v7040
          %v7485 = vpack.c.b16 %v7053, %v7041
          %v7486 = vpack.c.b16 %v7054, %v7042
          %v7487 = vpack.c.b16 %v7055, %v7043
          %v7488 = vpack.c.b16 %v7068, %v7056
          %v7489 = vpack.c.b16 %v7069, %v7057
          %v7490 = vpack.c.b16 %v7070, %v7058
          %v7491 = vpack.c.b16 %v7071, %v7059
          %v7492 = vpack.c.b16 %v7072, %v7060
          %v7493 = vpack.c.b16 %v7073, %v7061
          %v7494 = vpack.c.b16 %v7074, %v7062
          %v7495 = vpack.c.b16 %v7075, %v7063
          %v7496 = vpack.c.b16 %v7076, %v7064
          %v7497 = vpack.c.b16 %v7077, %v7065
          %v7498 = vpack.c.b16 %v7078, %v7066
          %v7499 = vpack.c.b16 %v7079, %v7067
          %v7500 = vpack.c.b16 %v7092, %v7080
          %v7501 = vpack.c.b16 %v7093, %v7081
          %v7502 = vpack.c.b16 %v7094, %v7082
          %v7503 = vpack.c.b16 %v7095, %v7083
          %v7504 = vpack.c.b16 %v7096, %v7084
          %v7505 = vpack.c.b16 %v7097, %v7085
          %v7506 = vpack.c.b16 %v7098, %v7086
          %v7507 = vpack.c.b16 %v7099, %v7087
          %v7508 = vpack.c.b16 %v7100, %v7088
          %v7509 = vpack.c.b16 %v7101, %v7089
          %v7510 = vpack.c.b16 %v7102, %v7090
          %v7511 = vpack.c.b16 %v7103, %v7091
          %v7512 = vpack.c.b16 %v7116, %v7104
          %v7513 = vpack.c.b16 %v7117, %v7105
          %v7514 = vpack.c.b16 %v7118, %v7106
          %v7515 = vpack.c.b16 %v7119, %v7107
          %v7516 = vpack.c.b16 %v7120, %v7108
          %v7517 = vpack.c.b16 %v7121, %v7109
          %v7518 = vpack.c.b16 %v7122, %v7110
          %v7519 = vpack.c.b16 %v7123, %v7111
          %v7520 = vpack.c.b16 %v7124, %v7112
          %v7521 = vpack.c.b16 %v7125, %v7113
          %v7522 = vpack.c.b16 %v7126, %v7114
          %v7523 = vpack.c.b16 %v7127, %v7115
          %v7524 = vpack.c.b16 %v7140, %v7128
          %v7525 = vpack.c.b16 %v7141, %v7129
          %v7526 = vpack.c.b16 %v7142, %v7130
          %v7527 = vpack.c.b16 %v7143, %v7131
          %v7528 = vpack.c.b16 %v7144, %v7132
          %v7529 = vpack.c.b16 %v7145, %v7133
          %v7530 = vpack.c.b16 %v7146, %v7134
          %v7531 = vpack.c.b16 %v7147, %v7135
          %v7532 = vpack.c.b16 %v7148, %v7136
          %v7533 = vpack.c.b16 %v7149, %v7137
          %v7534 = vpack.c.b16 %v7150, %v7138
          %v7535 = vpack.c.b16 %v7151, %v7139
          %v7922 = vperm.slane %v5998, 0
          %v7923 = vperm.slane %v5998, 1
          %v7924 = vperm.slane %v5998, 2
          %v7925 = vperm.slane %v5998, 3
          %v7926 = vperm.slane %v5999, 0
          %v7927 = vperm.slane %v5999, 1
          %v7928 = vperm.slane %v5999, 2
          %v7929 = vperm.slane %v5999, 3
          %v7930 = vperm.slane %v5999, 4
          %v7931 = vperm.slane %v5999, 5
          %v7932 = vperm.slane %v5999, 6
          %v7933 = vperm.slane %v5999, 7
          %7946 = vmatpush.bf16.msra.mxu0 %v7236
          %7947 = vmatpush.bf16.msra.mxu0 %v7224
          %7948 = vmatpush.bf16.msra.mxu0 %v7212
          %7949 = vmatpush.bf16.msra.mxu0 %v7200
          %7950 = vmatpush.bf16.msra.mxu0 %v7188
          %7951 = vmatpush.bf16.msra.mxu0 %v7176
          %7952 = vmatpush.bf16.msra.mxu0 %v7164
          %7953 = vmatpush.bf16.msra.mxu0 %v7152
          %7954 = vmatmul.bf16.gmra.mxu0 %v5610
          %v7955 = vpop.f32.mrf.mxu0
          %v7956 = vadd.f32 %v7922, %v7955
          %v7957 = vpop.f32.mrf.mxu0
          %7958 = vdwg.mxu0
          %7959 = vmatpush.bf16.msra.mxu0 %v7332
          %7960 = vmatpush.bf16.msra.mxu0 %v7320
          %7961 = vmatpush.bf16.msra.mxu0 %v7308
          %7962 = vmatpush.bf16.msra.mxu0 %v7296
          %7963 = vmatpush.bf16.msra.mxu0 %v7284
          %7964 = vmatpush.bf16.msra.mxu0 %v7272
          %7965 = vmatpush.bf16.msra.mxu0 %v7260
          %7966 = vmatpush.bf16.msra.mxu0 %v7248
          %7967 = vmatmul.bf16.gmra.mxu0 %v5611
          %v7968 = vpop.f32.mrf.mxu0
          %v7969 = vadd.f32 %v7956, %v7968
          %v7970 = vpop.f32.mrf.mxu0
          %7971 = vdwg.mxu0
          %7972 = vmatpush.bf16.msra.mxu0 %v7428
          %7973 = vmatpush.bf16.msra.mxu0 %v7416
          %7974 = vmatpush.bf16.msra.mxu0 %v7404
          %7975 = vmatpush.bf16.msra.mxu0 %v7392
          %7976 = vmatpush.bf16.msra.mxu0 %v7380
          %7977 = vmatpush.bf16.msra.mxu0 %v7368
          %7978 = vmatpush.bf16.msra.mxu0 %v7356
          %7979 = vmatpush.bf16.msra.mxu0 %v7344
          %7980 = vmatmul.bf16.gmra.mxu0 %v5612
          %v7981 = vpop.f32.mrf.mxu0
          %v7982 = vadd.f32 %v7969, %v7981
          %v7983 = vpop.f32.mrf.mxu0
          %7984 = vdwg.mxu0
          %7985 = vmatpush.bf16.msra.mxu0 %v7524
          %7986 = vmatpush.bf16.msra.mxu0 %v7512
          %7987 = vmatpush.bf16.msra.mxu0 %v7500
          %7988 = vmatpush.bf16.msra.mxu0 %v7488
          %7989 = vmatpush.bf16.msra.mxu0 %v7476
          %7990 = vmatpush.bf16.msra.mxu0 %v7464
          %7991 = vmatpush.bf16.msra.mxu0 %v7452
          %7992 = vmatpush.bf16.msra.mxu0 %v7440
          %7993 = vmatmul.bf16.gmra.mxu0 %v5613
          %v7994 = vpop.f32.mrf.mxu0
          %v7995 = vadd.f32 %v7982, %v7994
          %v7996 = vpop.f32.mrf.mxu0
          %7997 = vdwg.mxu0
          %7998 = vmatpush.bf16.msra.mxu0 %v7237
          %7999 = vmatpush.bf16.msra.mxu0 %v7225
          %8000 = vmatpush.bf16.msra.mxu0 %v7213
          %8001 = vmatpush.bf16.msra.mxu0 %v7201
          %8002 = vmatpush.bf16.msra.mxu0 %v7189
          %8003 = vmatpush.bf16.msra.mxu0 %v7177
          %8004 = vmatpush.bf16.msra.mxu0 %v7165
          %8005 = vmatpush.bf16.msra.mxu0 %v7153
          %8006 = vmatmul.bf16.gmra.mxu0 %v5610
          %v8007 = vpop.f32.mrf.mxu0
          %v8008 = vadd.f32 %v7923, %v8007
          %v8009 = vpop.f32.mrf.mxu0
          %8010 = vdwg.mxu0
          %8011 = vmatpush.bf16.msra.mxu0 %v7333
          %8012 = vmatpush.bf16.msra.mxu0 %v7321
          %8013 = vmatpush.bf16.msra.mxu0 %v7309
          %8014 = vmatpush.bf16.msra.mxu0 %v7297
          %8015 = vmatpush.bf16.msra.mxu0 %v7285
          %8016 = vmatpush.bf16.msra.mxu0 %v7273
          %8017 = vmatpush.bf16.msra.mxu0 %v7261
          %8018 = vmatpush.bf16.msra.mxu0 %v7249
          %8019 = vmatmul.bf16.gmra.mxu0 %v5611
          %v8020 = vpop.f32.mrf.mxu0
          %v8021 = vadd.f32 %v8008, %v8020
          %v8022 = vpop.f32.mrf.mxu0
          %8023 = vdwg.mxu0
          %8024 = vmatpush.bf16.msra.mxu0 %v7429
          %8025 = vmatpush.bf16.msra.mxu0 %v7417
          %8026 = vmatpush.bf16.msra.mxu0 %v7405
          %8027 = vmatpush.bf16.msra.mxu0 %v7393
          %8028 = vmatpush.bf16.msra.mxu0 %v7381
          %8029 = vmatpush.bf16.msra.mxu0 %v7369
          %8030 = vmatpush.bf16.msra.mxu0 %v7357
          %8031 = vmatpush.bf16.msra.mxu0 %v7345
          %8032 = vmatmul.bf16.gmra.mxu0 %v5612
          %v8033 = vpop.f32.mrf.mxu0
          %v8034 = vadd.f32 %v8021, %v8033
          %v8035 = vpop.f32.mrf.mxu0
          %8036 = vdwg.mxu0
          %8037 = vmatpush.bf16.msra.mxu0 %v7525
          %8038 = vmatpush.bf16.msra.mxu0 %v7513
          %8039 = vmatpush.bf16.msra.mxu0 %v7501
          %8040 = vmatpush.bf16.msra.mxu0 %v7489
          %8041 = vmatpush.bf16.msra.mxu0 %v7477
          %8042 = vmatpush.bf16.msra.mxu0 %v7465
          %8043 = vmatpush.bf16.msra.mxu0 %v7453
          %8044 = vmatpush.bf16.msra.mxu0 %v7441
          %8045 = vmatmul.bf16.gmra.mxu0 %v5613
          %v8046 = vpop.f32.mrf.mxu0
          %v8047 = vadd.f32 %v8034, %v8046
          %v8048 = vpop.f32.mrf.mxu0
          %8049 = vdwg.mxu0
          %8050 = vmatpush.bf16.msra.mxu0 %v7238
          %8051 = vmatpush.bf16.msra.mxu0 %v7226
          %8052 = vmatpush.bf16.msra.mxu0 %v7214
          %8053 = vmatpush.bf16.msra.mxu0 %v7202
          %8054 = vmatpush.bf16.msra.mxu0 %v7190
          %8055 = vmatpush.bf16.msra.mxu0 %v7178
          %8056 = vmatpush.bf16.msra.mxu0 %v7166
          %8057 = vmatpush.bf16.msra.mxu0 %v7154
          %8058 = vmatmul.bf16.gmra.mxu0 %v5610
          %v8059 = vpop.f32.mrf.mxu0
          %v8060 = vadd.f32 %v7924, %v8059
          %v8061 = vpop.f32.mrf.mxu0
          %8062 = vdwg.mxu0
          %8063 = vmatpush.bf16.msra.mxu0 %v7334
          %8064 = vmatpush.bf16.msra.mxu0 %v7322
          %8065 = vmatpush.bf16.msra.mxu0 %v7310
          %8066 = vmatpush.bf16.msra.mxu0 %v7298
          %8067 = vmatpush.bf16.msra.mxu0 %v7286
          %8068 = vmatpush.bf16.msra.mxu0 %v7274
          %8069 = vmatpush.bf16.msra.mxu0 %v7262
          %8070 = vmatpush.bf16.msra.mxu0 %v7250
          %8071 = vmatmul.bf16.gmra.mxu0 %v5611
          %v8072 = vpop.f32.mrf.mxu0
          %v8073 = vadd.f32 %v8060, %v8072
          %v8074 = vpop.f32.mrf.mxu0
          %8075 = vdwg.mxu0
          %8076 = vmatpush.bf16.msra.mxu0 %v7430
          %8077 = vmatpush.bf16.msra.mxu0 %v7418
          %8078 = vmatpush.bf16.msra.mxu0 %v7406
          %8079 = vmatpush.bf16.msra.mxu0 %v7394
          %8080 = vmatpush.bf16.msra.mxu0 %v7382
          %8081 = vmatpush.bf16.msra.mxu0 %v7370
          %8082 = vmatpush.bf16.msra.mxu0 %v7358
          %8083 = vmatpush.bf16.msra.mxu0 %v7346
          %8084 = vmatmul.bf16.gmra.mxu0 %v5612
          %v8085 = vpop.f32.mrf.mxu0
          %v8086 = vadd.f32 %v8073, %v8085
          %v8087 = vpop.f32.mrf.mxu0
          %8088 = vdwg.mxu0
          %8089 = vmatpush.bf16.msra.mxu0 %v7526
          %8090 = vmatpush.bf16.msra.mxu0 %v7514
          %8091 = vmatpush.bf16.msra.mxu0 %v7502
          %8092 = vmatpush.bf16.msra.mxu0 %v7490
          %8093 = vmatpush.bf16.msra.mxu0 %v7478
          %8094 = vmatpush.bf16.msra.mxu0 %v7466
          %8095 = vmatpush.bf16.msra.mxu0 %v7454
          %8096 = vmatpush.bf16.msra.mxu0 %v7442
          %8097 = vmatmul.bf16.gmra.mxu0 %v5613
          %v8098 = vpop.f32.mrf.mxu0
          %v8099 = vadd.f32 %v8086, %v8098
          %v8100 = vpop.f32.mrf.mxu0
          %8101 = vdwg.mxu0
          %8102 = vmatpush.bf16.msra.mxu0 %v7239
          %8103 = vmatpush.bf16.msra.mxu0 %v7227
          %8104 = vmatpush.bf16.msra.mxu0 %v7215
          %8105 = vmatpush.bf16.msra.mxu0 %v7203
          %8106 = vmatpush.bf16.msra.mxu0 %v7191
          %8107 = vmatpush.bf16.msra.mxu0 %v7179
          %8108 = vmatpush.bf16.msra.mxu0 %v7167
          %8109 = vmatpush.bf16.msra.mxu0 %v7155
          %8110 = vmatmul.bf16.gmra.mxu0 %v5610
          %v8111 = vpop.f32.mrf.mxu0
          %v8112 = vadd.f32 %v7925, %v8111
          %v8113 = vpop.f32.mrf.mxu0
          %8114 = vdwg.mxu0
          %8115 = vmatpush.bf16.msra.mxu0 %v7335
          %8116 = vmatpush.bf16.msra.mxu0 %v7323
          %8117 = vmatpush.bf16.msra.mxu0 %v7311
          %8118 = vmatpush.bf16.msra.mxu0 %v7299
          %8119 = vmatpush.bf16.msra.mxu0 %v7287
          %8120 = vmatpush.bf16.msra.mxu0 %v7275
          %8121 = vmatpush.bf16.msra.mxu0 %v7263
          %8122 = vmatpush.bf16.msra.mxu0 %v7251
          %8123 = vmatmul.bf16.gmra.mxu0 %v5611
          %v8124 = vpop.f32.mrf.mxu0
          %v8125 = vadd.f32 %v8112, %v8124
          %v8126 = vpop.f32.mrf.mxu0
          %8127 = vdwg.mxu0
          %8128 = vmatpush.bf16.msra.mxu0 %v7431
          %8129 = vmatpush.bf16.msra.mxu0 %v7419
          %8130 = vmatpush.bf16.msra.mxu0 %v7407
          %8131 = vmatpush.bf16.msra.mxu0 %v7395
          %8132 = vmatpush.bf16.msra.mxu0 %v7383
          %8133 = vmatpush.bf16.msra.mxu0 %v7371
          %8134 = vmatpush.bf16.msra.mxu0 %v7359
          %8135 = vmatpush.bf16.msra.mxu0 %v7347
          %8136 = vmatmul.bf16.gmra.mxu0 %v5612
          %v8137 = vpop.f32.mrf.mxu0
          %v8138 = vadd.f32 %v8125, %v8137
          %v8139 = vpop.f32.mrf.mxu0
          %8140 = vdwg.mxu0
          %8141 = vmatpush.bf16.msra.mxu0 %v7527
          %8142 = vmatpush.bf16.msra.mxu0 %v7515
          %8143 = vmatpush.bf16.msra.mxu0 %v7503
          %8144 = vmatpush.bf16.msra.mxu0 %v7491
          %8145 = vmatpush.bf16.msra.mxu0 %v7479
          %8146 = vmatpush.bf16.msra.mxu0 %v7467
          %8147 = vmatpush.bf16.msra.mxu0 %v7455
          %8148 = vmatpush.bf16.msra.mxu0 %v7443
          %8149 = vmatmul.bf16.gmra.mxu0 %v5613
          %v8150 = vpop.f32.mrf.mxu0
          %v8151 = vadd.f32 %v8138, %v8150
          %v8152 = vpop.f32.mrf.mxu0
          %8153 = vdwg.mxu0
          %8154 = vmatpush.bf16.msra.mxu0 %v7240
          %8155 = vmatpush.bf16.msra.mxu0 %v7228
          %8156 = vmatpush.bf16.msra.mxu0 %v7216
          %8157 = vmatpush.bf16.msra.mxu0 %v7204
          %8158 = vmatpush.bf16.msra.mxu0 %v7192
          %8159 = vmatpush.bf16.msra.mxu0 %v7180
          %8160 = vmatpush.bf16.msra.mxu0 %v7168
          %8161 = vmatpush.bf16.msra.mxu0 %v7156
          %8162 = vmatmul.bf16.gmra.mxu0 %v5610
          %v8163 = vpop.f32.mrf.mxu0
          %v8164 = vadd.f32 %v7926, %v8163
          %v8165 = vpop.f32.mrf.mxu0
          %8166 = vdwg.mxu0
          %8167 = vmatpush.bf16.msra.mxu0 %v7336
          %8168 = vmatpush.bf16.msra.mxu0 %v7324
          %8169 = vmatpush.bf16.msra.mxu0 %v7312
          %8170 = vmatpush.bf16.msra.mxu0 %v7300
          %8171 = vmatpush.bf16.msra.mxu0 %v7288
          %8172 = vmatpush.bf16.msra.mxu0 %v7276
          %8173 = vmatpush.bf16.msra.mxu0 %v7264
          %8174 = vmatpush.bf16.msra.mxu0 %v7252
          %8175 = vmatmul.bf16.gmra.mxu0 %v5611
          %v8176 = vpop.f32.mrf.mxu0
          %v8177 = vadd.f32 %v8164, %v8176
          %v8178 = vpop.f32.mrf.mxu0
          %8179 = vdwg.mxu0
          %8180 = vmatpush.bf16.msra.mxu0 %v7432
          %8181 = vmatpush.bf16.msra.mxu0 %v7420
          %8182 = vmatpush.bf16.msra.mxu0 %v7408
          %8183 = vmatpush.bf16.msra.mxu0 %v7396
          %8184 = vmatpush.bf16.msra.mxu0 %v7384
          %8185 = vmatpush.bf16.msra.mxu0 %v7372
          %8186 = vmatpush.bf16.msra.mxu0 %v7360
          %8187 = vmatpush.bf16.msra.mxu0 %v7348
          %8188 = vmatmul.bf16.gmra.mxu0 %v5612
          %v8189 = vpop.f32.mrf.mxu0
          %v8190 = vadd.f32 %v8177, %v8189
          %v8191 = vpop.f32.mrf.mxu0
          %8192 = vdwg.mxu0
          %8193 = vmatpush.bf16.msra.mxu0 %v7528
          %8194 = vmatpush.bf16.msra.mxu0 %v7516
          %8195 = vmatpush.bf16.msra.mxu0 %v7504
          %8196 = vmatpush.bf16.msra.mxu0 %v7492
          %8197 = vmatpush.bf16.msra.mxu0 %v7480
          %8198 = vmatpush.bf16.msra.mxu0 %v7468
          %8199 = vmatpush.bf16.msra.mxu0 %v7456
          %8200 = vmatpush.bf16.msra.mxu0 %v7444
          %8201 = vmatmul.bf16.gmra.mxu0 %v5613
          %v8202 = vpop.f32.mrf.mxu0
          %v8203 = vadd.f32 %v8190, %v8202
          %v8204 = vpop.f32.mrf.mxu0
          %8205 = vdwg.mxu0
          %8206 = vmatpush.bf16.msra.mxu0 %v7241
          %8207 = vmatpush.bf16.msra.mxu0 %v7229
          %8208 = vmatpush.bf16.msra.mxu0 %v7217
          %8209 = vmatpush.bf16.msra.mxu0 %v7205
          %8210 = vmatpush.bf16.msra.mxu0 %v7193
          %8211 = vmatpush.bf16.msra.mxu0 %v7181
          %8212 = vmatpush.bf16.msra.mxu0 %v7169
          %8213 = vmatpush.bf16.msra.mxu0 %v7157
          %8214 = vmatmul.bf16.gmra.mxu0 %v5610
          %v8215 = vpop.f32.mrf.mxu0
          %v8216 = vadd.f32 %v7927, %v8215
          %v8217 = vpop.f32.mrf.mxu0
          %8218 = vdwg.mxu0
          %8219 = vmatpush.bf16.msra.mxu0 %v7337
          %8220 = vmatpush.bf16.msra.mxu0 %v7325
          %8221 = vmatpush.bf16.msra.mxu0 %v7313
          %8222 = vmatpush.bf16.msra.mxu0 %v7301
          %8223 = vmatpush.bf16.msra.mxu0 %v7289
          %8224 = vmatpush.bf16.msra.mxu0 %v7277
          %8225 = vmatpush.bf16.msra.mxu0 %v7265
          %8226 = vmatpush.bf16.msra.mxu0 %v7253
          %8227 = vmatmul.bf16.gmra.mxu0 %v5611
          %v8228 = vpop.f32.mrf.mxu0
          %v8229 = vadd.f32 %v8216, %v8228
          %v8230 = vpop.f32.mrf.mxu0
          %8231 = vdwg.mxu0
          %8232 = vmatpush.bf16.msra.mxu0 %v7433
          %8233 = vmatpush.bf16.msra.mxu0 %v7421
          %8234 = vmatpush.bf16.msra.mxu0 %v7409
          %8235 = vmatpush.bf16.msra.mxu0 %v7397
          %8236 = vmatpush.bf16.msra.mxu0 %v7385
          %8237 = vmatpush.bf16.msra.mxu0 %v7373
          %8238 = vmatpush.bf16.msra.mxu0 %v7361
          %8239 = vmatpush.bf16.msra.mxu0 %v7349
          %8240 = vmatmul.bf16.gmra.mxu0 %v5612
          %v8241 = vpop.f32.mrf.mxu0
          %v8242 = vadd.f32 %v8229, %v8241
          %v8243 = vpop.f32.mrf.mxu0
          %8244 = vdwg.mxu0
          %8245 = vmatpush.bf16.msra.mxu0 %v7529
          %8246 = vmatpush.bf16.msra.mxu0 %v7517
          %8247 = vmatpush.bf16.msra.mxu0 %v7505
          %8248 = vmatpush.bf16.msra.mxu0 %v7493
          %8249 = vmatpush.bf16.msra.mxu0 %v7481
          %8250 = vmatpush.bf16.msra.mxu0 %v7469
          %8251 = vmatpush.bf16.msra.mxu0 %v7457
          %8252 = vmatpush.bf16.msra.mxu0 %v7445
          %8253 = vmatmul.bf16.gmra.mxu0 %v5613
          %v8254 = vpop.f32.mrf.mxu0
          %v8255 = vadd.f32 %v8242, %v8254
          %v8256 = vpop.f32.mrf.mxu0
          %8257 = vdwg.mxu0
          %8258 = vmatpush.bf16.msra.mxu0 %v7242
          %8259 = vmatpush.bf16.msra.mxu0 %v7230
          %8260 = vmatpush.bf16.msra.mxu0 %v7218
          %8261 = vmatpush.bf16.msra.mxu0 %v7206
          %8262 = vmatpush.bf16.msra.mxu0 %v7194
          %8263 = vmatpush.bf16.msra.mxu0 %v7182
          %8264 = vmatpush.bf16.msra.mxu0 %v7170
          %8265 = vmatpush.bf16.msra.mxu0 %v7158
          %8266 = vmatmul.bf16.gmra.mxu0 %v5610
          %v8267 = vpop.f32.mrf.mxu0
          %v8268 = vadd.f32 %v7928, %v8267
          %v8269 = vpop.f32.mrf.mxu0
          %8270 = vdwg.mxu0
          %8271 = vmatpush.bf16.msra.mxu0 %v7338
          %8272 = vmatpush.bf16.msra.mxu0 %v7326
          %8273 = vmatpush.bf16.msra.mxu0 %v7314
          %8274 = vmatpush.bf16.msra.mxu0 %v7302
          %8275 = vmatpush.bf16.msra.mxu0 %v7290
          %8276 = vmatpush.bf16.msra.mxu0 %v7278
          %8277 = vmatpush.bf16.msra.mxu0 %v7266
          %8278 = vmatpush.bf16.msra.mxu0 %v7254
          %8279 = vmatmul.bf16.gmra.mxu0 %v5611
          %v8280 = vpop.f32.mrf.mxu0
          %v8281 = vadd.f32 %v8268, %v8280
          %v8282 = vpop.f32.mrf.mxu0
          %8283 = vdwg.mxu0
          %8284 = vmatpush.bf16.msra.mxu0 %v7434
          %8285 = vmatpush.bf16.msra.mxu0 %v7422
          %8286 = vmatpush.bf16.msra.mxu0 %v7410
          %8287 = vmatpush.bf16.msra.mxu0 %v7398
          %8288 = vmatpush.bf16.msra.mxu0 %v7386
          %8289 = vmatpush.bf16.msra.mxu0 %v7374
          %8290 = vmatpush.bf16.msra.mxu0 %v7362
          %8291 = vmatpush.bf16.msra.mxu0 %v7350
          %8292 = vmatmul.bf16.gmra.mxu0 %v5612
          %v8293 = vpop.f32.mrf.mxu0
          %v8294 = vadd.f32 %v8281, %v8293
          %v8295 = vpop.f32.mrf.mxu0
          %8296 = vdwg.mxu0
          %8297 = vmatpush.bf16.msra.mxu0 %v7530
          %8298 = vmatpush.bf16.msra.mxu0 %v7518
          %8299 = vmatpush.bf16.msra.mxu0 %v7506
          %8300 = vmatpush.bf16.msra.mxu0 %v7494
          %8301 = vmatpush.bf16.msra.mxu0 %v7482
          %8302 = vmatpush.bf16.msra.mxu0 %v7470
          %8303 = vmatpush.bf16.msra.mxu0 %v7458
          %8304 = vmatpush.bf16.msra.mxu0 %v7446
          %8305 = vmatmul.bf16.gmra.mxu0 %v5613
          %v8306 = vpop.f32.mrf.mxu0
          %v8307 = vadd.f32 %v8294, %v8306
          %v8308 = vpop.f32.mrf.mxu0
          %8309 = vdwg.mxu0
          %8310 = vmatpush.bf16.msra.mxu0 %v7243
          %8311 = vmatpush.bf16.msra.mxu0 %v7231
          %8312 = vmatpush.bf16.msra.mxu0 %v7219
          %8313 = vmatpush.bf16.msra.mxu0 %v7207
          %8314 = vmatpush.bf16.msra.mxu0 %v7195
          %8315 = vmatpush.bf16.msra.mxu0 %v7183
          %8316 = vmatpush.bf16.msra.mxu0 %v7171
          %8317 = vmatpush.bf16.msra.mxu0 %v7159
          %8318 = vmatmul.bf16.gmra.mxu0 %v5610
          %v8319 = vpop.f32.mrf.mxu0
          %v8320 = vadd.f32 %v7929, %v8319
          %v8321 = vpop.f32.mrf.mxu0
          %8322 = vdwg.mxu0
          %8323 = vmatpush.bf16.msra.mxu0 %v7339
          %8324 = vmatpush.bf16.msra.mxu0 %v7327
          %8325 = vmatpush.bf16.msra.mxu0 %v7315
          %8326 = vmatpush.bf16.msra.mxu0 %v7303
          %8327 = vmatpush.bf16.msra.mxu0 %v7291
          %8328 = vmatpush.bf16.msra.mxu0 %v7279
          %8329 = vmatpush.bf16.msra.mxu0 %v7267
          %8330 = vmatpush.bf16.msra.mxu0 %v7255
          %8331 = vmatmul.bf16.gmra.mxu0 %v5611
          %v8332 = vpop.f32.mrf.mxu0
          %v8333 = vadd.f32 %v8320, %v8332
          %v8334 = vpop.f32.mrf.mxu0
          %8335 = vdwg.mxu0
          %8336 = vmatpush.bf16.msra.mxu0 %v7435
          %8337 = vmatpush.bf16.msra.mxu0 %v7423
          %8338 = vmatpush.bf16.msra.mxu0 %v7411
          %8339 = vmatpush.bf16.msra.mxu0 %v7399
          %8340 = vmatpush.bf16.msra.mxu0 %v7387
          %8341 = vmatpush.bf16.msra.mxu0 %v7375
          %8342 = vmatpush.bf16.msra.mxu0 %v7363
          %8343 = vmatpush.bf16.msra.mxu0 %v7351
          %8344 = vmatmul.bf16.gmra.mxu0 %v5612
          %v8345 = vpop.f32.mrf.mxu0
          %v8346 = vadd.f32 %v8333, %v8345
          %v8347 = vpop.f32.mrf.mxu0
          %8348 = vdwg.mxu0
          %8349 = vmatpush.bf16.msra.mxu0 %v7531
          %8350 = vmatpush.bf16.msra.mxu0 %v7519
          %8351 = vmatpush.bf16.msra.mxu0 %v7507
          %8352 = vmatpush.bf16.msra.mxu0 %v7495
          %8353 = vmatpush.bf16.msra.mxu0 %v7483
          %8354 = vmatpush.bf16.msra.mxu0 %v7471
          %8355 = vmatpush.bf16.msra.mxu0 %v7459
          %8356 = vmatpush.bf16.msra.mxu0 %v7447
          %8357 = vmatmul.bf16.gmra.mxu0 %v5613
          %v8358 = vpop.f32.mrf.mxu0
          %v8359 = vadd.f32 %v8346, %v8358
          %v8360 = vpop.f32.mrf.mxu0
          %8361 = vdwg.mxu0
          %8362 = vmatpush.bf16.msra.mxu0 %v7244
          %8363 = vmatpush.bf16.msra.mxu0 %v7232
          %8364 = vmatpush.bf16.msra.mxu0 %v7220
          %8365 = vmatpush.bf16.msra.mxu0 %v7208
          %8366 = vmatpush.bf16.msra.mxu0 %v7196
          %8367 = vmatpush.bf16.msra.mxu0 %v7184
          %8368 = vmatpush.bf16.msra.mxu0 %v7172
          %8369 = vmatpush.bf16.msra.mxu0 %v7160
          %8370 = vmatmul.bf16.gmra.mxu0 %v5610
          %v8371 = vpop.f32.mrf.mxu0
          %v8372 = vadd.f32 %v7930, %v8371
          %v8373 = vpop.f32.mrf.mxu0
          %8374 = vdwg.mxu0
          %8375 = vmatpush.bf16.msra.mxu0 %v7340
          %8376 = vmatpush.bf16.msra.mxu0 %v7328
          %8377 = vmatpush.bf16.msra.mxu0 %v7316
          %8378 = vmatpush.bf16.msra.mxu0 %v7304
          %8379 = vmatpush.bf16.msra.mxu0 %v7292
          %8380 = vmatpush.bf16.msra.mxu0 %v7280
          %8381 = vmatpush.bf16.msra.mxu0 %v7268
          %8382 = vmatpush.bf16.msra.mxu0 %v7256
          %8383 = vmatmul.bf16.gmra.mxu0 %v5611
          %v8384 = vpop.f32.mrf.mxu0
          %v8385 = vadd.f32 %v8372, %v8384
          %v8386 = vpop.f32.mrf.mxu0
          %8387 = vdwg.mxu0
          %8388 = vmatpush.bf16.msra.mxu0 %v7436
          %8389 = vmatpush.bf16.msra.mxu0 %v7424
          %8390 = vmatpush.bf16.msra.mxu0 %v7412
          %8391 = vmatpush.bf16.msra.mxu0 %v7400
          %8392 = vmatpush.bf16.msra.mxu0 %v7388
          %8393 = vmatpush.bf16.msra.mxu0 %v7376
          %8394 = vmatpush.bf16.msra.mxu0 %v7364
          %8395 = vmatpush.bf16.msra.mxu0 %v7352
          %8396 = vmatmul.bf16.gmra.mxu0 %v5612
          %v8397 = vpop.f32.mrf.mxu0
          %v8398 = vadd.f32 %v8385, %v8397
          %v8399 = vpop.f32.mrf.mxu0
          %8400 = vdwg.mxu0
          %8401 = vmatpush.bf16.msra.mxu0 %v7532
          %8402 = vmatpush.bf16.msra.mxu0 %v7520
          %8403 = vmatpush.bf16.msra.mxu0 %v7508
          %8404 = vmatpush.bf16.msra.mxu0 %v7496
          %8405 = vmatpush.bf16.msra.mxu0 %v7484
          %8406 = vmatpush.bf16.msra.mxu0 %v7472
          %8407 = vmatpush.bf16.msra.mxu0 %v7460
          %8408 = vmatpush.bf16.msra.mxu0 %v7448
          %8409 = vmatmul.bf16.gmra.mxu0 %v5613
          %v8410 = vpop.f32.mrf.mxu0
          %v8411 = vadd.f32 %v8398, %v8410
          %v8412 = vpop.f32.mrf.mxu0
          %8413 = vdwg.mxu0
          %8414 = vmatpush.bf16.msra.mxu0 %v7245
          %8415 = vmatpush.bf16.msra.mxu0 %v7233
          %8416 = vmatpush.bf16.msra.mxu0 %v7221
          %8417 = vmatpush.bf16.msra.mxu0 %v7209
          %8418 = vmatpush.bf16.msra.mxu0 %v7197
          %8419 = vmatpush.bf16.msra.mxu0 %v7185
          %8420 = vmatpush.bf16.msra.mxu0 %v7173
          %8421 = vmatpush.bf16.msra.mxu0 %v7161
          %8422 = vmatmul.bf16.gmra.mxu0 %v5610
          %v8423 = vpop.f32.mrf.mxu0
          %v8424 = vadd.f32 %v7931, %v8423
          %v8425 = vpop.f32.mrf.mxu0
          %8426 = vdwg.mxu0
          %8427 = vmatpush.bf16.msra.mxu0 %v7341
          %8428 = vmatpush.bf16.msra.mxu0 %v7329
          %8429 = vmatpush.bf16.msra.mxu0 %v7317
          %8430 = vmatpush.bf16.msra.mxu0 %v7305
          %8431 = vmatpush.bf16.msra.mxu0 %v7293
          %8432 = vmatpush.bf16.msra.mxu0 %v7281
          %8433 = vmatpush.bf16.msra.mxu0 %v7269
          %8434 = vmatpush.bf16.msra.mxu0 %v7257
          %8435 = vmatmul.bf16.gmra.mxu0 %v5611
          %v8436 = vpop.f32.mrf.mxu0
          %v8437 = vadd.f32 %v8424, %v8436
          %v8438 = vpop.f32.mrf.mxu0
          %8439 = vdwg.mxu0
          %8440 = vmatpush.bf16.msra.mxu0 %v7437
          %8441 = vmatpush.bf16.msra.mxu0 %v7425
          %8442 = vmatpush.bf16.msra.mxu0 %v7413
          %8443 = vmatpush.bf16.msra.mxu0 %v7401
          %8444 = vmatpush.bf16.msra.mxu0 %v7389
          %8445 = vmatpush.bf16.msra.mxu0 %v7377
          %8446 = vmatpush.bf16.msra.mxu0 %v7365
          %8447 = vmatpush.bf16.msra.mxu0 %v7353
          %8448 = vmatmul.bf16.gmra.mxu0 %v5612
          %v8449 = vpop.f32.mrf.mxu0
          %v8450 = vadd.f32 %v8437, %v8449
          %v8451 = vpop.f32.mrf.mxu0
          %8452 = vdwg.mxu0
          %8453 = vmatpush.bf16.msra.mxu0 %v7533
          %8454 = vmatpush.bf16.msra.mxu0 %v7521
          %8455 = vmatpush.bf16.msra.mxu0 %v7509
          %8456 = vmatpush.bf16.msra.mxu0 %v7497
          %8457 = vmatpush.bf16.msra.mxu0 %v7485
          %8458 = vmatpush.bf16.msra.mxu0 %v7473
          %8459 = vmatpush.bf16.msra.mxu0 %v7461
          %8460 = vmatpush.bf16.msra.mxu0 %v7449
          %8461 = vmatmul.bf16.gmra.mxu0 %v5613
          %v8462 = vpop.f32.mrf.mxu0
          %v8463 = vadd.f32 %v8450, %v8462
          %v8464 = vpop.f32.mrf.mxu0
          %8465 = vdwg.mxu0
          %8466 = vmatpush.bf16.msra.mxu0 %v7246
          %8467 = vmatpush.bf16.msra.mxu0 %v7234
          %8468 = vmatpush.bf16.msra.mxu0 %v7222
          %8469 = vmatpush.bf16.msra.mxu0 %v7210
          %8470 = vmatpush.bf16.msra.mxu0 %v7198
          %8471 = vmatpush.bf16.msra.mxu0 %v7186
          %8472 = vmatpush.bf16.msra.mxu0 %v7174
          %8473 = vmatpush.bf16.msra.mxu0 %v7162
          %8474 = vmatmul.bf16.gmra.mxu0 %v5610
          %v8475 = vpop.f32.mrf.mxu0
          %v8476 = vadd.f32 %v7932, %v8475
          %v8477 = vpop.f32.mrf.mxu0
          %8478 = vdwg.mxu0
          %8479 = vmatpush.bf16.msra.mxu0 %v7342
          %8480 = vmatpush.bf16.msra.mxu0 %v7330
          %8481 = vmatpush.bf16.msra.mxu0 %v7318
          %8482 = vmatpush.bf16.msra.mxu0 %v7306
          %8483 = vmatpush.bf16.msra.mxu0 %v7294
          %8484 = vmatpush.bf16.msra.mxu0 %v7282
          %8485 = vmatpush.bf16.msra.mxu0 %v7270
          %8486 = vmatpush.bf16.msra.mxu0 %v7258
          %8487 = vmatmul.bf16.gmra.mxu0 %v5611
          %v8488 = vpop.f32.mrf.mxu0
          %v8489 = vadd.f32 %v8476, %v8488
          %v8490 = vpop.f32.mrf.mxu0
          %8491 = vdwg.mxu0
          %8492 = vmatpush.bf16.msra.mxu0 %v7438
          %8493 = vmatpush.bf16.msra.mxu0 %v7426
          %8494 = vmatpush.bf16.msra.mxu0 %v7414
          %8495 = vmatpush.bf16.msra.mxu0 %v7402
          %8496 = vmatpush.bf16.msra.mxu0 %v7390
          %8497 = vmatpush.bf16.msra.mxu0 %v7378
          %8498 = vmatpush.bf16.msra.mxu0 %v7366
          %8499 = vmatpush.bf16.msra.mxu0 %v7354
          %8500 = vmatmul.bf16.gmra.mxu0 %v5612
          %v8501 = vpop.f32.mrf.mxu0
          %v8502 = vadd.f32 %v8489, %v8501
          %v8503 = vpop.f32.mrf.mxu0
          %8504 = vdwg.mxu0
          %8505 = vmatpush.bf16.msra.mxu0 %v7534
          %8506 = vmatpush.bf16.msra.mxu0 %v7522
          %8507 = vmatpush.bf16.msra.mxu0 %v7510
          %8508 = vmatpush.bf16.msra.mxu0 %v7498
          %8509 = vmatpush.bf16.msra.mxu0 %v7486
          %8510 = vmatpush.bf16.msra.mxu0 %v7474
          %8511 = vmatpush.bf16.msra.mxu0 %v7462
          %8512 = vmatpush.bf16.msra.mxu0 %v7450
          %8513 = vmatmul.bf16.gmra.mxu0 %v5613
          %v8514 = vpop.f32.mrf.mxu0
          %v8515 = vadd.f32 %v8502, %v8514
          %v8516 = vpop.f32.mrf.mxu0
          %8517 = vdwg.mxu0
          %8518 = vmatpush.bf16.msra.mxu0 %v7247
          %8519 = vmatpush.bf16.msra.mxu0 %v7235
          %8520 = vmatpush.bf16.msra.mxu0 %v7223
          %8521 = vmatpush.bf16.msra.mxu0 %v7211
          %8522 = vmatpush.bf16.msra.mxu0 %v7199
          %8523 = vmatpush.bf16.msra.mxu0 %v7187
          %8524 = vmatpush.bf16.msra.mxu0 %v7175
          %8525 = vmatpush.bf16.msra.mxu0 %v7163
          %8526 = vmatmul.bf16.gmra.mxu0 %v5610
          %v8527 = vpop.f32.mrf.mxu0
          %v8528 = vadd.f32 %v7933, %v8527
          %v8529 = vpop.f32.mrf.mxu0
          %8530 = vdwg.mxu0
          %8531 = vmatpush.bf16.msra.mxu0 %v7343
          %8532 = vmatpush.bf16.msra.mxu0 %v7331
          %8533 = vmatpush.bf16.msra.mxu0 %v7319
          %8534 = vmatpush.bf16.msra.mxu0 %v7307
          %8535 = vmatpush.bf16.msra.mxu0 %v7295
          %8536 = vmatpush.bf16.msra.mxu0 %v7283
          %8537 = vmatpush.bf16.msra.mxu0 %v7271
          %8538 = vmatpush.bf16.msra.mxu0 %v7259
          %8539 = vmatmul.bf16.gmra.mxu0 %v5611
          %v8540 = vpop.f32.mrf.mxu0
          %v8541 = vadd.f32 %v8528, %v8540
          %v8542 = vpop.f32.mrf.mxu0
          %8543 = vdwg.mxu0
          %8544 = vmatpush.bf16.msra.mxu0 %v7439
          %8545 = vmatpush.bf16.msra.mxu0 %v7427
          %8546 = vmatpush.bf16.msra.mxu0 %v7415
          %8547 = vmatpush.bf16.msra.mxu0 %v7403
          %8548 = vmatpush.bf16.msra.mxu0 %v7391
          %8549 = vmatpush.bf16.msra.mxu0 %v7379
          %8550 = vmatpush.bf16.msra.mxu0 %v7367
          %8551 = vmatpush.bf16.msra.mxu0 %v7355
          %8552 = vmatmul.bf16.gmra.mxu0 %v5612
          %v8553 = vpop.f32.mrf.mxu0
          %v8554 = vadd.f32 %v8541, %v8553
          %v8555 = vpop.f32.mrf.mxu0
          %8556 = vdwg.mxu0
          %8557 = vmatpush.bf16.msra.mxu0 %v7535
          %8558 = vmatpush.bf16.msra.mxu0 %v7523
          %8559 = vmatpush.bf16.msra.mxu0 %v7511
          %8560 = vmatpush.bf16.msra.mxu0 %v7499
          %8561 = vmatpush.bf16.msra.mxu0 %v7487
          %8562 = vmatpush.bf16.msra.mxu0 %v7475
          %8563 = vmatpush.bf16.msra.mxu0 %v7463
          %8564 = vmatpush.bf16.msra.mxu0 %v7451
          %8565 = vmatmul.bf16.gmra.mxu0 %v5613
          %v8566 = vpop.f32.mrf.mxu0
          %v8567 = vadd.f32 %v8554, %v8566
          %v8568 = vpop.f32.mrf.mxu0
          %8569 = vdwg.mxu0
          %v8570 = vxor.u32 %v7995, 2147483648
          %v8571 = vxor.u32 %v8047, 2147483648
          %v8572 = vxor.u32 %v8099, 2147483648
          %v8573 = vxor.u32 %v8151, 2147483648
          %v8574 = vmul.f32 %v8570, 1.442695
          %v8575 = vpow.pop %v8574
          %v8576 = vmul.f32 %v8571, 1.442695
          %v8577 = vpow.pop %v8576
          %v8578 = vmul.f32 %v8572, 1.442695
          %v8579 = vpow.pop %v8578
          %v8580 = vmul.f32 %v8573, 1.442695
          %v8581 = vpow.pop %v8580
          %v8582 = vadd.f32 %v8575, 1.0
          %v8583 = vadd.f32 %v8577, 1.0
          %v8584 = vadd.f32 %v8579, 1.0
          %v8585 = vadd.f32 %v8581, 1.0
          %v8586 = vrcp.pop %v8582
          %v8587 = vmul.f32 %v8582, %v8586
          %v8588 = vsub.f32 1.0, %v8587
          %v8589 = vmul.f32 %v8586, %v8588
          %v8590 = vadd.f32 %v8586, %v8589
          %vm8591 = vweird.f32 %v8582
          %vm8592 = vweird.f32 %v8586
          %vm8593 = vmor %vm8591, %vm8592
          %v8594 = vsel %vm8593, %v8586, %v8590
          %v8595 = vand.u32 2147483647, %v8582
          %vm8596 = vcmp.eq.f32.partialorder %v8595, 8.507059e+37
          %v8597 = vand.u32 %v8582, 2147483648
          %v8598 = vor.u32 1.1754944e-38, %v8597
          %v8599 = vsel %vm8596, %v8598, %v8594
          %v8600 = vmul.f32 1.0, %v8599
          %v8601 = vrcp.pop %v8583
          %v8602 = vmul.f32 %v8583, %v8601
          %v8603 = vsub.f32 1.0, %v8602
          %v8604 = vmul.f32 %v8601, %v8603
          %v8605 = vadd.f32 %v8601, %v8604
          %vm8606 = vweird.f32 %v8583
          %vm8607 = vweird.f32 %v8601
          %vm8608 = vmor %vm8606, %vm8607
          %v8609 = vsel %vm8608, %v8601, %v8605
          %v8610 = vand.u32 2147483647, %v8583
          %vm8611 = vcmp.eq.f32.partialorder %v8610, 8.507059e+37
          %v8612 = vand.u32 %v8583, 2147483648
          %v8613 = vor.u32 1.1754944e-38, %v8612
          %v8614 = vsel %vm8611, %v8613, %v8609
          %v8615 = vmul.f32 1.0, %v8614
          %v8616 = vrcp.pop %v8584
          %v8617 = vmul.f32 %v8584, %v8616
          %v8618 = vsub.f32 1.0, %v8617
          %v8619 = vmul.f32 %v8616, %v8618
          %v8620 = vadd.f32 %v8616, %v8619
          %vm8621 = vweird.f32 %v8584
          %vm8622 = vweird.f32 %v8616
          %vm8623 = vmor %vm8621, %vm8622
          %v8624 = vsel %vm8623, %v8616, %v8620
          %v8625 = vand.u32 2147483647, %v8584
          %vm8626 = vcmp.eq.f32.partialorder %v8625, 8.507059e+37
          %v8627 = vand.u32 %v8584, 2147483648
          %v8628 = vor.u32 1.1754944e-38, %v8627
          %v8629 = vsel %vm8626, %v8628, %v8624
          %v8630 = vmul.f32 1.0, %v8629
          %v8631 = vrcp.pop %v8585
          %v8632 = vmul.f32 %v8585, %v8631
          %v8633 = vsub.f32 1.0, %v8632
          %v8634 = vmul.f32 %v8631, %v8633
          %v8635 = vadd.f32 %v8631, %v8634
          %vm8636 = vweird.f32 %v8585
          %vm8637 = vweird.f32 %v8631
          %vm8638 = vmor %vm8636, %vm8637
          %v8639 = vsel %vm8638, %v8631, %v8635
          %v8640 = vand.u32 2147483647, %v8585
          %vm8641 = vcmp.eq.f32.partialorder %v8640, 8.507059e+37
          %v8642 = vand.u32 %v8585, 2147483648
          %v8643 = vor.u32 1.1754944e-38, %v8642
          %v8644 = vsel %vm8641, %v8643, %v8639
          %v8645 = vmul.f32 1.0, %v8644
          %v8646 = vtanh.pop %v8203
          %v8647 = vtanh.pop %v8255
          %v8648 = vtanh.pop %v8307
          %v8649 = vtanh.pop %v8359
          %v8650 = vxor.u32 %v8411, 2147483648
          %v8651 = vxor.u32 %v8463, 2147483648
          %v8652 = vxor.u32 %v8515, 2147483648
          %v8653 = vxor.u32 %v8567, 2147483648
          %v8654 = vmul.f32 %v8650, 1.442695
          %v8655 = vpow.pop %v8654
          %v8656 = vmul.f32 %v8651, 1.442695
          %v8657 = vpow.pop %v8656
          %v8658 = vmul.f32 %v8652, 1.442695
          %v8659 = vpow.pop %v8658
          %v8660 = vmul.f32 %v8653, 1.442695
          %v8661 = vpow.pop %v8660
          %v8662 = vadd.f32 %v8655, 1.0
          %v8663 = vadd.f32 %v8657, 1.0
          %v8664 = vadd.f32 %v8659, 1.0
          %v8665 = vadd.f32 %v8661, 1.0
          %v8666 = vrcp.pop %v8662
          %v8667 = vmul.f32 %v8662, %v8666
          %v8668 = vsub.f32 1.0, %v8667
          %v8669 = vmul.f32 %v8666, %v8668
          %v8670 = vadd.f32 %v8666, %v8669
          %vm8671 = vweird.f32 %v8662
          %vm8672 = vweird.f32 %v8666
          %vm8673 = vmor %vm8671, %vm8672
          %v8674 = vsel %vm8673, %v8666, %v8670
          %v8675 = vand.u32 2147483647, %v8662
          %vm8676 = vcmp.eq.f32.partialorder %v8675, 8.507059e+37
          %v8677 = vand.u32 %v8662, 2147483648
          %v8678 = vor.u32 1.1754944e-38, %v8677
          %v8679 = vsel %vm8676, %v8678, %v8674
          %v8680 = vmul.f32 1.0, %v8679
          %v8681 = vrcp.pop %v8663
          %v8682 = vmul.f32 %v8663, %v8681
          %v8683 = vsub.f32 1.0, %v8682
          %v8684 = vmul.f32 %v8681, %v8683
          %v8685 = vadd.f32 %v8681, %v8684
          %vm8686 = vweird.f32 %v8663
          %vm8687 = vweird.f32 %v8681
          %vm8688 = vmor %vm8686, %vm8687
          %v8689 = vsel %vm8688, %v8681, %v8685
          %v8690 = vand.u32 2147483647, %v8663
          %vm8691 = vcmp.eq.f32.partialorder %v8690, 8.507059e+37
          %v8692 = vand.u32 %v8663, 2147483648
          %v8693 = vor.u32 1.1754944e-38, %v8692
          %v8694 = vsel %vm8691, %v8693, %v8689
          %v8695 = vmul.f32 1.0, %v8694
          %v8696 = vrcp.pop %v8664
          %v8697 = vmul.f32 %v8664, %v8696
          %v8698 = vsub.f32 1.0, %v8697
          %v8699 = vmul.f32 %v8696, %v8698
          %v8700 = vadd.f32 %v8696, %v8699
          %vm8701 = vweird.f32 %v8664
          %vm8702 = vweird.f32 %v8696
          %vm8703 = vmor %vm8701, %vm8702
          %v8704 = vsel %vm8703, %v8696, %v8700
          %v8705 = vand.u32 2147483647, %v8664
          %vm8706 = vcmp.eq.f32.partialorder %v8705, 8.507059e+37
          %v8707 = vand.u32 %v8664, 2147483648
          %v8708 = vor.u32 1.1754944e-38, %v8707
          %v8709 = vsel %vm8706, %v8708, %v8704
          %v8710 = vmul.f32 1.0, %v8709
          %v8711 = vrcp.pop %v8665
          %v8712 = vmul.f32 %v8665, %v8711
          %v8713 = vsub.f32 1.0, %v8712
          %v8714 = vmul.f32 %v8711, %v8713
          %v8715 = vadd.f32 %v8711, %v8714
          %vm8716 = vweird.f32 %v8665
          %vm8717 = vweird.f32 %v8711
          %vm8718 = vmor %vm8716, %vm8717
          %v8719 = vsel %vm8718, %v8711, %v8715
          %v8720 = vand.u32 2147483647, %v8665
          %vm8721 = vcmp.eq.f32.partialorder %v8720, 8.507059e+37
          %v8722 = vand.u32 %v8665, 2147483648
          %v8723 = vor.u32 1.1754944e-38, %v8722
          %v8724 = vsel %vm8721, %v8723, %v8719
          %v8725 = vmul.f32 1.0, %v8724
          %v8726 = vmul.f32 %v8600, %v8646
          %v8727 = vmul.f32 %v8615, %v8647
          %v8728 = vmul.f32 %v8630, %v8648
          %v8729 = vmul.f32 %v8645, %v8649
          %v8730 = vtanh.pop %v8726
          %v8731 = vtanh.pop %v8727
          %v8732 = vtanh.pop %v8728
          %v8733 = vtanh.pop %v8729
          %v8734 = vmul.f32 %v8680, %v8730
          %v8735 = vmul.f32 %v8695, %v8731
          %v8736 = vmul.f32 %v8710, %v8732
          %v8737 = vmul.f32 %v8725, %v8733
          %v8738 = vpack.c.bf16 %v8734, %v8734
          %v8739 = vpack.c.bf16 %v8735, %v8735
          %v8740 = vpack.c.bf16 %v8736, %v8736
          %v8741 = vpack.c.bf16 %v8737, %v8737
          %v8742 = vld [vmem:[%s5] sm:$0xf]
          %v8743 = vld [vmem:[%s5 + $0x4] sm:$0xf]
          %v8744 = vld [vmem:[%s5 + $0x8] sm:$0xf]
          %v8745 = vld [vmem:[%s5 + $0xc] sm:$0xf]
          %v8746 = vld [vmem:[%s5 + $0x10] sm:$0xf]
          %v8747 = vld [vmem:[%s5 + $0x14] sm:$0xf]
          %v8748 = vld [vmem:[%s5 + $0x18] sm:$0xf]
          %v8749 = vld [vmem:[%s5 + $0x1c] sm:$0xf]
          %v8750 = vld [vmem:[%s5 + $0x20] sm:$0xf]
          %v8751 = vld [vmem:[%s5 + $0x24] sm:$0xf]
          %v8752 = vld [vmem:[%s5 + $0x28] sm:$0xf]
          %v8753 = vld [vmem:[%s5 + $0x2c] sm:$0xf]
          %v8754 = vld [vmem:[%s5 + $0x30] sm:$0xf]
          %v8755 = vld [vmem:[%s5 + $0x34] sm:$0xf]
          %v8756 = vld [vmem:[%s5 + $0x38] sm:$0xf]
          %v8757 = vld [vmem:[%s5 + $0x3c] sm:$0xf]
          %v8758 = vld [vmem:[%s5 + $0x40] sm:$0xf]
          %v8759 = vld [vmem:[%s5 + $0x44] sm:$0xf]
          %v8760 = vld [vmem:[%s5 + $0x48] sm:$0xf]
          %v8761 = vld [vmem:[%s5 + $0x4c] sm:$0xf]
          %v8762 = vld [vmem:[%s5 + $0x50] sm:$0xf]
          %v8763 = vld [vmem:[%s5 + $0x54] sm:$0xf]
          %v8764 = vld [vmem:[%s5 + $0x58] sm:$0xf]
          %v8765 = vld [vmem:[%s5 + $0x5c] sm:$0xf]
          %v8766 = vld [vmem:[%s5 + $0x60] sm:$0xf]
          %v8767 = vld [vmem:[%s5 + $0x64] sm:$0xf]
          %v8768 = vld [vmem:[%s5 + $0x68] sm:$0xf]
          %v8769 = vld [vmem:[%s5 + $0x6c] sm:$0xf]
          %v8770 = vld [vmem:[%s5 + $0x70] sm:$0xf]
          %v8771 = vld [vmem:[%s5 + $0x74] sm:$0xf]
          %v8772 = vld [vmem:[%s5 + $0x78] sm:$0xf]
          %v8773 = vld [vmem:[%s5 + $0x7c] sm:$0xf]
          %v8774 = vld [vmem:[%s5 + $0x80] sm:$0xf]
          %v8775 = vld [vmem:[%s5 + $0x84] sm:$0xf]
          %v8776 = vld [vmem:[%s5 + $0x88] sm:$0xf]
          %v8777 = vld [vmem:[%s5 + $0x8c] sm:$0xf]
          %v8778 = vld [vmem:[%s5 + $0x90] sm:$0xf]
          %v8779 = vld [vmem:[%s5 + $0x94] sm:$0xf]
          %v8780 = vld [vmem:[%s5 + $0x98] sm:$0xf]
          %v8781 = vld [vmem:[%s5 + $0x9c] sm:$0xf]
          %v8782 = vld [vmem:[%s5 + $0xa0] sm:$0xf]
          %v8783 = vld [vmem:[%s5 + $0xa4] sm:$0xf]
          %v8784 = vld [vmem:[%s5 + $0xa8] sm:$0xf]
          %v8785 = vld [vmem:[%s5 + $0xac] sm:$0xf]
          %v8786 = vld [vmem:[%s5 + $0xb0] sm:$0xf]
          %v8787 = vld [vmem:[%s5 + $0xb4] sm:$0xf]
          %v8788 = vld [vmem:[%s5 + $0xb8] sm:$0xf]
          %v8789 = vld [vmem:[%s5 + $0xbc] sm:$0xf]
          %v8790 = vld [vmem:[%s5 + $0xc0] sm:$0xf]
          %v8791 = vld [vmem:[%s5 + $0xc4] sm:$0xf]
          %v8792 = vld [vmem:[%s5 + $0xc8] sm:$0xf]
          %v8793 = vld [vmem:[%s5 + $0xcc] sm:$0xf]
          %v8794 = vld [vmem:[%s5 + $0xd0] sm:$0xf]
          %v8795 = vld [vmem:[%s5 + $0xd4] sm:$0xf]
          %v8796 = vld [vmem:[%s5 + $0xd8] sm:$0xf]
          %v8797 = vld [vmem:[%s5 + $0xdc] sm:$0xf]
          %v8798 = vld [vmem:[%s5 + $0xe0] sm:$0xf]
          %v8799 = vld [vmem:[%s5 + $0xe4] sm:$0xf]
          %v8800 = vld [vmem:[%s5 + $0xe8] sm:$0xf]
          %v8801 = vld [vmem:[%s5 + $0xec] sm:$0xf]
          %v8802 = vld [vmem:[%s5 + $0xf0] sm:$0xf]
          %v8803 = vld [vmem:[%s5 + $0xf4] sm:$0xf]
          %v8804 = vld [vmem:[%s5 + $0xf8] sm:$0xf]
          %v8805 = vld [vmem:[%s5 + $0xfc] sm:$0xf]
          %v8806 = vld [vmem:[%s6] sm:$0x1]
          %v8871 = vunpack.c.l.b16 %v8742
          %v8872 = vunpack.c.l.b16 %v8743
          %v8873 = vunpack.c.l.b16 %v8744
          %v8874 = vunpack.c.l.b16 %v8745
          %v8875 = vunpack.c.l.b16 %v8746
          %v8876 = vunpack.c.l.b16 %v8747
          %v8877 = vunpack.c.l.b16 %v8748
          %v8878 = vunpack.c.l.b16 %v8749
          %v8879 = vunpack.c.l.b16 %v8750
          %v8880 = vunpack.c.l.b16 %v8751
          %v8881 = vunpack.c.l.b16 %v8752
          %v8882 = vunpack.c.l.b16 %v8753
          %v8883 = vunpack.c.l.b16 %v8754
          %v8884 = vunpack.c.l.b16 %v8755
          %v8885 = vunpack.c.l.b16 %v8756
          %v8886 = vunpack.c.l.b16 %v8757
          %v8887 = vunpack.c.l.b16 %v8758
          %v8888 = vunpack.c.l.b16 %v8759
          %v8889 = vunpack.c.l.b16 %v8760
          %v8890 = vunpack.c.l.b16 %v8761
          %v8891 = vunpack.c.l.b16 %v8762
          %v8892 = vunpack.c.l.b16 %v8763
          %v8893 = vunpack.c.l.b16 %v8764
          %v8894 = vunpack.c.l.b16 %v8765
          %v8895 = vunpack.c.l.b16 %v8766
          %v8896 = vunpack.c.l.b16 %v8767
          %v8897 = vunpack.c.l.b16 %v8768
          %v8898 = vunpack.c.l.b16 %v8769
          %v8899 = vunpack.c.l.b16 %v8770
          %v8900 = vunpack.c.l.b16 %v8771
          %v8901 = vunpack.c.l.b16 %v8772
          %v8902 = vunpack.c.l.b16 %v8773
          %v8903 = vunpack.c.l.b16 %v8774
          %v8904 = vunpack.c.l.b16 %v8775
          %v8905 = vunpack.c.l.b16 %v8776
          %v8906 = vunpack.c.l.b16 %v8777
          %v8907 = vunpack.c.l.b16 %v8778
          %v8908 = vunpack.c.l.b16 %v8779
          %v8909 = vunpack.c.l.b16 %v8780
          %v8910 = vunpack.c.l.b16 %v8781
          %v8911 = vunpack.c.l.b16 %v8782
          %v8912 = vunpack.c.l.b16 %v8783
          %v8913 = vunpack.c.l.b16 %v8784
          %v8914 = vunpack.c.l.b16 %v8785
          %v8915 = vunpack.c.l.b16 %v8786
          %v8916 = vunpack.c.l.b16 %v8787
          %v8917 = vunpack.c.l.b16 %v8788
          %v8918 = vunpack.c.l.b16 %v8789
          %v8919 = vunpack.c.l.b16 %v8790
          %v8920 = vunpack.c.l.b16 %v8791
          %v8921 = vunpack.c.l.b16 %v8792
          %v8922 = vunpack.c.l.b16 %v8793
          %v8923 = vunpack.c.l.b16 %v8794
          %v8924 = vunpack.c.l.b16 %v8795
          %v8925 = vunpack.c.l.b16 %v8796
          %v8926 = vunpack.c.l.b16 %v8797
          %v8927 = vunpack.c.l.b16 %v8798
          %v8928 = vunpack.c.l.b16 %v8799
          %v8929 = vunpack.c.l.b16 %v8800
          %v8930 = vunpack.c.l.b16 %v8801
          %v8931 = vunpack.c.l.b16 %v8802
          %v8932 = vunpack.c.l.b16 %v8803
          %v8933 = vunpack.c.l.b16 %v8804
          %v8934 = vunpack.c.l.b16 %v8805
          %v8935 = vpack.c.b16 %v8872, %v8871
          %v8936 = vpack.c.b16 %v8874, %v8873
          %v8937 = vpack.c.b16 %v8876, %v8875
          %v8938 = vpack.c.b16 %v8878, %v8877
          %v8939 = vpack.c.b16 %v8880, %v8879
          %v8940 = vpack.c.b16 %v8882, %v8881
          %v8941 = vpack.c.b16 %v8884, %v8883
          %v8942 = vpack.c.b16 %v8886, %v8885
          %v8943 = vpack.c.b16 %v8888, %v8887
          %v8944 = vpack.c.b16 %v8890, %v8889
          %v8945 = vpack.c.b16 %v8892, %v8891
          %v8946 = vpack.c.b16 %v8894, %v8893
          %v8947 = vpack.c.b16 %v8896, %v8895
          %v8948 = vpack.c.b16 %v8898, %v8897
          %v8949 = vpack.c.b16 %v8900, %v8899
          %v8950 = vpack.c.b16 %v8902, %v8901
          %v8951 = vpack.c.b16 %v8904, %v8903
          %v8952 = vpack.c.b16 %v8906, %v8905
          %v8953 = vpack.c.b16 %v8908, %v8907
          %v8954 = vpack.c.b16 %v8910, %v8909
          %v8955 = vpack.c.b16 %v8912, %v8911
          %v8956 = vpack.c.b16 %v8914, %v8913
          %v8957 = vpack.c.b16 %v8916, %v8915
          %v8958 = vpack.c.b16 %v8918, %v8917
          %v8959 = vpack.c.b16 %v8920, %v8919
          %v8960 = vpack.c.b16 %v8922, %v8921
          %v8961 = vpack.c.b16 %v8924, %v8923
          %v8962 = vpack.c.b16 %v8926, %v8925
          %v8963 = vpack.c.b16 %v8928, %v8927
          %v8964 = vpack.c.b16 %v8930, %v8929
          %v8965 = vpack.c.b16 %v8932, %v8931
          %v8966 = vpack.c.b16 %v8934, %v8933
          %8999 = vmatpush.bf16.msra.mxu0 %v8942
          %9000 = vmatpush.bf16.msra.mxu0 %v8941
          %9001 = vmatpush.bf16.msra.mxu0 %v8940
          %9002 = vmatpush.bf16.msra.mxu0 %v8939
          %9003 = vmatpush.bf16.msra.mxu0 %v8938
          %9004 = vmatpush.bf16.msra.mxu0 %v8937
          %9005 = vmatpush.bf16.msra.mxu0 %v8936
          %9006 = vmatpush.bf16.msra.mxu0 %v8935
          %9007 = vmatmul.bf16.gmra.mxu0 %v8738
          %v9008 = vpop.f32.mrf.mxu0
          %v9009 = vadd.f32 %v8806, %v9008
          %v9010 = vpop.f32.mrf.mxu0
          %9011 = vdwg.mxu0
          %9012 = vmatpush.bf16.msra.mxu0 %v8950
          %9013 = vmatpush.bf16.msra.mxu0 %v8949
          %9014 = vmatpush.bf16.msra.mxu0 %v8948
          %9015 = vmatpush.bf16.msra.mxu0 %v8947
          %9016 = vmatpush.bf16.msra.mxu0 %v8946
          %9017 = vmatpush.bf16.msra.mxu0 %v8945
          %9018 = vmatpush.bf16.msra.mxu0 %v8944
          %9019 = vmatpush.bf16.msra.mxu0 %v8943
          %9020 = vmatmul.bf16.gmra.mxu0 %v8739
          %v9021 = vpop.f32.mrf.mxu0
          %v9022 = vadd.f32 %v9009, %v9021
          %v9023 = vpop.f32.mrf.mxu0
          %9024 = vdwg.mxu0
          %9025 = vmatpush.bf16.msra.mxu0 %v8958
          %9026 = vmatpush.bf16.msra.mxu0 %v8957
          %9027 = vmatpush.bf16.msra.mxu0 %v8956
          %9028 = vmatpush.bf16.msra.mxu0 %v8955
          %9029 = vmatpush.bf16.msra.mxu0 %v8954
          %9030 = vmatpush.bf16.msra.mxu0 %v8953
          %9031 = vmatpush.bf16.msra.mxu0 %v8952
          %9032 = vmatpush.bf16.msra.mxu0 %v8951
          %9033 = vmatmul.bf16.gmra.mxu0 %v8740
          %v9034 = vpop.f32.mrf.mxu0
          %v9035 = vadd.f32 %v9022, %v9034
          %v9036 = vpop.f32.mrf.mxu0
          %9037 = vdwg.mxu0
          %9038 = vmatpush.bf16.msra.mxu0 %v8966
          %9039 = vmatpush.bf16.msra.mxu0 %v8965
          %9040 = vmatpush.bf16.msra.mxu0 %v8964
          %9041 = vmatpush.bf16.msra.mxu0 %v8963
          %9042 = vmatpush.bf16.msra.mxu0 %v8962
          %9043 = vmatpush.bf16.msra.mxu0 %v8961
          %9044 = vmatpush.bf16.msra.mxu0 %v8960
          %9045 = vmatpush.bf16.msra.mxu0 %v8959
          %9046 = vmatmul.bf16.gmra.mxu0 %v8741
          %v9047 = vpop.f32.mrf.mxu0
          %v9048 = vadd.f32 %v9035, %v9047
          %v9049 = vpop.f32.mrf.mxu0
          %9050 = vdwg.mxu0
          %v9051 = vmax.f32 %v9048, 0.0
          %v9052 = vpack.c.bf16 %v9051, %v9051
          %v9053 = vld [vmem:[%s7] sm:$0xf]
          %v9054 = vld [vmem:[%s7 + $0x4] sm:$0xf]
          %v9055 = vld [vmem:[%s7 + $0x8] sm:$0xf]
          %v9056 = vld [vmem:[%s7 + $0xc] sm:$0xf]
          %v9057 = vld [vmem:[%s7 + $0x10] sm:$0xf]
          %v9058 = vld [vmem:[%s7 + $0x14] sm:$0xf]
          %v9059 = vld [vmem:[%s7 + $0x18] sm:$0xf]
          %v9060 = vld [vmem:[%s7 + $0x1c] sm:$0xf]
          %v9061 = vld [vmem:[%s7 + $0x20] sm:$0xf]
          %v9062 = vld [vmem:[%s7 + $0x24] sm:$0xf]
          %v9063 = vld [vmem:[%s7 + $0x28] sm:$0xf]
          %v9064 = vld [vmem:[%s7 + $0x2c] sm:$0xf]
          %v9065 = vld [vmem:[%s7 + $0x30] sm:$0xf]
          %v9066 = vld [vmem:[%s7 + $0x34] sm:$0xf]
          %v9067 = vld [vmem:[%s7 + $0x38] sm:$0xf]
          %v9068 = vld [vmem:[%s7 + $0x3c] sm:$0xf]
          %v9069 = vld [vmem:[%s8] sm:$0x1]
          %v9086 = vunpack.c.l.b16 %v9053
          %v9087 = vunpack.c.l.b16 %v9054
          %v9088 = vunpack.c.l.b16 %v9055
          %v9089 = vunpack.c.l.b16 %v9056
          %v9090 = vunpack.c.l.b16 %v9057
          %v9091 = vunpack.c.l.b16 %v9058
          %v9092 = vunpack.c.l.b16 %v9059
          %v9093 = vunpack.c.l.b16 %v9060
          %v9094 = vunpack.c.l.b16 %v9061
          %v9095 = vunpack.c.l.b16 %v9062
          %v9096 = vunpack.c.l.b16 %v9063
          %v9097 = vunpack.c.l.b16 %v9064
          %v9098 = vunpack.c.l.b16 %v9065
          %v9099 = vunpack.c.l.b16 %v9066
          %v9100 = vunpack.c.l.b16 %v9067
          %v9101 = vunpack.c.l.b16 %v9068
          %v9102 = vpack.c.b16 %v9087, %v9086
          %v9103 = vpack.c.b16 %v9089, %v9088
          %v9104 = vpack.c.b16 %v9091, %v9090
          %v9105 = vpack.c.b16 %v9093, %v9092
          %v9106 = vpack.c.b16 %v9095, %v9094
          %v9107 = vpack.c.b16 %v9097, %v9096
          %v9108 = vpack.c.b16 %v9099, %v9098
          %v9109 = vpack.c.b16 %v9101, %v9100
          %9118 = vmatpush.bf16.msra.mxu0 %v9109
          %9119 = vmatpush.bf16.msra.mxu0 %v9108
          %9120 = vmatpush.bf16.msra.mxu0 %v9107
          %9121 = vmatpush.bf16.msra.mxu0 %v9106
          %9122 = vmatpush.bf16.msra.mxu0 %v9105
          %9123 = vmatpush.bf16.msra.mxu0 %v9104
          %9124 = vmatpush.bf16.msra.mxu0 %v9103
          %9125 = vmatpush.bf16.msra.mxu0 %v9102
          %9126 = vmatmul.bf16.gmra.mxu0 %v9052
          %v9127 = vpop.f32.mrf.mxu0
          %v9128 = vadd.f32 %v9069, %v9127
          %v9129 = vpop.f32.mrf.mxu0
          %9130 = vdwg.mxu0
          %v9131 = vmax.f32 %v9128, 0.0
          %v9132 = vpack.c.bf16 %v9131, %v9131
          %v9133 = vld [vmem:[%s9] sm:$0xf]
          %v9134 = vld [vmem:[%s9 + $0x4] sm:$0xf]
          %v9135 = vld [vmem:[%s9 + $0x8] sm:$0xf]
          %v9136 = vld [vmem:[%s9 + $0xc] sm:$0xf]
          %v9137 = vld [vmem:[%s9 + $0x10] sm:$0xf]
          %v9138 = vld [vmem:[%s9 + $0x14] sm:$0xf]
          %v9139 = vld [vmem:[%s9 + $0x18] sm:$0xf]
          %v9140 = vld [vmem:[%s9 + $0x1c] sm:$0xf]
          %v9141 = vld [vmem:[%s10] sm:$0x1]
          %v9150 = vunpack.c.l.b16 %v9133
          %v9151 = vunpack.c.l.b16 %v9134
          %v9152 = vunpack.c.l.b16 %v9135
          %v9153 = vunpack.c.l.b16 %v9136
          %v9154 = vunpack.c.l.b16 %v9137
          %v9155 = vunpack.c.l.b16 %v9138
          %v9156 = vunpack.c.l.b16 %v9139
          %v9157 = vunpack.c.l.b16 %v9140
          %v9158 = vpack.c.b16 %v9151, %v9150
          %v9159 = vpack.c.b16 %v9153, %v9152
          %v9160 = vpack.c.b16 %v9155, %v9154
          %v9161 = vpack.c.b16 %v9157, %v9156
          %vm9166 = vcmask 523264
          %v9168 = vsel %vm9166, %v9132, 0
          %9170 = vmatpush.bf16.msra.mxu0 0
          %9171 = vmatpush.bf16.msra.mxu0 0
          %9172 = vmatpush.bf16.msra.mxu0 0
          %9173 = vmatpush.bf16.msra.mxu0 0
          %9174 = vmatpush.bf16.msra.mxu0 %v9161
          %9175 = vmatpush.bf16.msra.mxu0 %v9160
          %9176 = vmatpush.bf16.msra.mxu0 %v9159
          %9177 = vmatpush.bf16.msra.mxu0 %v9158
          %9178 = vmatmul.bf16.gmra.mxu0 %v9168
          %v9179 = vpop.f32.mrf.mxu0
          %v9180 = vadd.f32 %v9141, %v9179
          %v9181 = vpop.f32.mrf.mxu0
          %9182 = vdwg.mxu0
          %vm9183 = vcmask 16384
          %v9184 = vsel %vm9183, %v9180, -inf
          %9185 = vmax.xlane.f32.xlu0 %v9184
          %v9186 = vpop.xlane.xlu0 %9185
          %v9187 = vsub.f32 %v9180, %v9186
          %v9188 = vmul.f32 %v9187, 1.442695
          %v9189 = vpow.pop %v9188
          %v9190 = vsel %vm9183, %v9189, 0.0
          %9191 = vadd.xlane.f32.xlu0 %v9190
          %v9192 = vpop.xlane.xlu0 %9191
          %v9193 = vrcp.pop %v9192
          %v9194 = vmul.f32 %v9192, %v9193
          %v9195 = vsub.f32 1.0, %v9194
          %v9196 = vmul.f32 %v9193, %v9195
          %v9197 = vadd.f32 %v9193, %v9196
          %vm9198 = vweird.f32 %v9192
          %vm9199 = vweird.f32 %v9193
          %vm9200 = vmor %vm9198, %vm9199
          %v9201 = vsel %vm9200, %v9193, %v9197
          %v9202 = vand.u32 2147483647, %v9192
          %vm9203 = vcmp.eq.f32.partialorder %v9202, 8.507059e+37
          %v9204 = vand.u32 %v9192, 2147483648
          %v9205 = vor.u32 1.1754944e-38, %v9204
          %v9206 = vsel %vm9203, %v9205, %v9201
          %v9207 = vmul.f32 %v9189, %v9206
          %9208 = vst.msk [vmem:[#allocation4] sm:$0x1] %vm9183, %v9207
          %v9209 = vld [vmem:[%s11] sm:$0xf]
          %v9210 = vld [vmem:[%s11 + $0x4] sm:$0xf]
          %v9211 = vld [vmem:[%s11 + $0x8] sm:$0xf]
          %v9212 = vld [vmem:[%s11 + $0xc] sm:$0xf]
          %v9213 = vld [vmem:[%s11 + $0x10] sm:$0xf]
          %v9214 = vld [vmem:[%s11 + $0x14] sm:$0xf]
          %v9215 = vld [vmem:[%s11 + $0x18] sm:$0xf]
          %v9216 = vld [vmem:[%s11 + $0x1c] sm:$0xf]
          %v9217 = vld [vmem:[%s11 + $0x20] sm:$0xf]
          %v9218 = vld [vmem:[%s11 + $0x24] sm:$0xf]
          %v9219 = vld [vmem:[%s11 + $0x28] sm:$0xf]
          %v9220 = vld [vmem:[%s11 + $0x2c] sm:$0xf]
          %v9221 = vld [vmem:[%s11 + $0x30] sm:$0xf]
          %v9222 = vld [vmem:[%s11 + $0x34] sm:$0xf]
          %v9223 = vld [vmem:[%s11 + $0x38] sm:$0xf]
          %v9224 = vld [vmem:[%s11 + $0x3c] sm:$0xf]
          %v9225 = vld [vmem:[%s11 + $0x40] sm:$0xf]
          %v9226 = vld [vmem:[%s11 + $0x44] sm:$0xf]
          %v9227 = vld [vmem:[%s11 + $0x48] sm:$0xf]
          %v9228 = vld [vmem:[%s11 + $0x4c] sm:$0xf]
          %v9229 = vld [vmem:[%s11 + $0x50] sm:$0xf]
          %v9230 = vld [vmem:[%s11 + $0x54] sm:$0xf]
          %v9231 = vld [vmem:[%s11 + $0x58] sm:$0xf]
          %v9232 = vld [vmem:[%s11 + $0x5c] sm:$0xf]
          %v9233 = vld [vmem:[%s11 + $0x60] sm:$0xf]
          %v9234 = vld [vmem:[%s11 + $0x64] sm:$0xf]
          %v9235 = vld [vmem:[%s11 + $0x68] sm:$0xf]
          %v9236 = vld [vmem:[%s11 + $0x6c] sm:$0xf]
          %v9237 = vld [vmem:[%s11 + $0x70] sm:$0xf]
          %v9238 = vld [vmem:[%s11 + $0x74] sm:$0xf]
          %v9239 = vld [vmem:[%s11 + $0x78] sm:$0xf]
          %v9240 = vld [vmem:[%s11 + $0x7c] sm:$0xf]
          %v9241 = vld [vmem:[%s11 + $0x80] sm:$0xf]
          %v9242 = vld [vmem:[%s11 + $0x84] sm:$0xf]
          %v9243 = vld [vmem:[%s11 + $0x88] sm:$0xf]
          %v9244 = vld [vmem:[%s11 + $0x8c] sm:$0xf]
          %v9245 = vld [vmem:[%s11 + $0x90] sm:$0xf]
          %v9246 = vld [vmem:[%s11 + $0x94] sm:$0xf]
          %v9247 = vld [vmem:[%s11 + $0x98] sm:$0xf]
          %v9248 = vld [vmem:[%s11 + $0x9c] sm:$0xf]
          %v9249 = vld [vmem:[%s11 + $0xa0] sm:$0xf]
          %v9250 = vld [vmem:[%s11 + $0xa4] sm:$0xf]
          %v9251 = vld [vmem:[%s11 + $0xa8] sm:$0xf]
          %v9252 = vld [vmem:[%s11 + $0xac] sm:$0xf]
          %v9253 = vld [vmem:[%s11 + $0xb0] sm:$0xf]
          %v9254 = vld [vmem:[%s11 + $0xb4] sm:$0xf]
          %v9255 = vld [vmem:[%s11 + $0xb8] sm:$0xf]
          %v9256 = vld [vmem:[%s11 + $0xbc] sm:$0xf]
          %v9257 = vld [vmem:[%s11 + $0xc0] sm:$0xf]
          %v9258 = vld [vmem:[%s11 + $0xc4] sm:$0xf]
          %v9259 = vld [vmem:[%s11 + $0xc8] sm:$0xf]
          %v9260 = vld [vmem:[%s11 + $0xcc] sm:$0xf]
          %v9261 = vld [vmem:[%s11 + $0xd0] sm:$0xf]
          %v9262 = vld [vmem:[%s11 + $0xd4] sm:$0xf]
          %v9263 = vld [vmem:[%s11 + $0xd8] sm:$0xf]
          %v9264 = vld [vmem:[%s11 + $0xdc] sm:$0xf]
          %v9265 = vld [vmem:[%s11 + $0xe0] sm:$0xf]
          %v9266 = vld [vmem:[%s11 + $0xe4] sm:$0xf]
          %v9267 = vld [vmem:[%s11 + $0xe8] sm:$0xf]
          %v9268 = vld [vmem:[%s11 + $0xec] sm:$0xf]
          %v9269 = vld [vmem:[%s11 + $0xf0] sm:$0xf]
          %v9270 = vld [vmem:[%s11 + $0xf4] sm:$0xf]
          %v9271 = vld [vmem:[%s11 + $0xf8] sm:$0xf]
          %v9272 = vld [vmem:[%s11 + $0xfc] sm:$0xf]
          %v9273 = vld [vmem:[%s12] sm:$0x1]
          %v9338 = vunpack.c.l.b16 %v9209
          %v9339 = vunpack.c.l.b16 %v9210
          %v9340 = vunpack.c.l.b16 %v9211
          %v9341 = vunpack.c.l.b16 %v9212
          %v9342 = vunpack.c.l.b16 %v9213
          %v9343 = vunpack.c.l.b16 %v9214
          %v9344 = vunpack.c.l.b16 %v9215
          %v9345 = vunpack.c.l.b16 %v9216
          %v9346 = vunpack.c.l.b16 %v9217
          %v9347 = vunpack.c.l.b16 %v9218
          %v9348 = vunpack.c.l.b16 %v9219
          %v9349 = vunpack.c.l.b16 %v9220
          %v9350 = vunpack.c.l.b16 %v9221
          %v9351 = vunpack.c.l.b16 %v9222
          %v9352 = vunpack.c.l.b16 %v9223
          %v9353 = vunpack.c.l.b16 %v9224
          %v9354 = vunpack.c.l.b16 %v9225
          %v9355 = vunpack.c.l.b16 %v9226
          %v9356 = vunpack.c.l.b16 %v9227
          %v9357 = vunpack.c.l.b16 %v9228
          %v9358 = vunpack.c.l.b16 %v9229
          %v9359 = vunpack.c.l.b16 %v9230
          %v9360 = vunpack.c.l.b16 %v9231
          %v9361 = vunpack.c.l.b16 %v9232
          %v9362 = vunpack.c.l.b16 %v9233
          %v9363 = vunpack.c.l.b16 %v9234
          %v9364 = vunpack.c.l.b16 %v9235
          %v9365 = vunpack.c.l.b16 %v9236
          %v9366 = vunpack.c.l.b16 %v9237
          %v9367 = vunpack.c.l.b16 %v9238
          %v9368 = vunpack.c.l.b16 %v9239
          %v9369 = vunpack.c.l.b16 %v9240
          %v9370 = vunpack.c.l.b16 %v9241
          %v9371 = vunpack.c.l.b16 %v9242
          %v9372 = vunpack.c.l.b16 %v9243
          %v9373 = vunpack.c.l.b16 %v9244
          %v9374 = vunpack.c.l.b16 %v9245
          %v9375 = vunpack.c.l.b16 %v9246
          %v9376 = vunpack.c.l.b16 %v9247
          %v9377 = vunpack.c.l.b16 %v9248
          %v9378 = vunpack.c.l.b16 %v9249
          %v9379 = vunpack.c.l.b16 %v9250
          %v9380 = vunpack.c.l.b16 %v9251
          %v9381 = vunpack.c.l.b16 %v9252
          %v9382 = vunpack.c.l.b16 %v9253
          %v9383 = vunpack.c.l.b16 %v9254
          %v9384 = vunpack.c.l.b16 %v9255
          %v9385 = vunpack.c.l.b16 %v9256
          %v9386 = vunpack.c.l.b16 %v9257
          %v9387 = vunpack.c.l.b16 %v9258
          %v9388 = vunpack.c.l.b16 %v9259
          %v9389 = vunpack.c.l.b16 %v9260
          %v9390 = vunpack.c.l.b16 %v9261
          %v9391 = vunpack.c.l.b16 %v9262
          %v9392 = vunpack.c.l.b16 %v9263
          %v9393 = vunpack.c.l.b16 %v9264
          %v9394 = vunpack.c.l.b16 %v9265
          %v9395 = vunpack.c.l.b16 %v9266
          %v9396 = vunpack.c.l.b16 %v9267
          %v9397 = vunpack.c.l.b16 %v9268
          %v9398 = vunpack.c.l.b16 %v9269
          %v9399 = vunpack.c.l.b16 %v9270
          %v9400 = vunpack.c.l.b16 %v9271
          %v9401 = vunpack.c.l.b16 %v9272
          %v9402 = vpack.c.b16 %v9339, %v9338
          %v9403 = vpack.c.b16 %v9341, %v9340
          %v9404 = vpack.c.b16 %v9343, %v9342
          %v9405 = vpack.c.b16 %v9345, %v9344
          %v9406 = vpack.c.b16 %v9347, %v9346
          %v9407 = vpack.c.b16 %v9349, %v9348
          %v9408 = vpack.c.b16 %v9351, %v9350
          %v9409 = vpack.c.b16 %v9353, %v9352
          %v9410 = vpack.c.b16 %v9355, %v9354
          %v9411 = vpack.c.b16 %v9357, %v9356
          %v9412 = vpack.c.b16 %v9359, %v9358
          %v9413 = vpack.c.b16 %v9361, %v9360
          %v9414 = vpack.c.b16 %v9363, %v9362
          %v9415 = vpack.c.b16 %v9365, %v9364
          %v9416 = vpack.c.b16 %v9367, %v9366
          %v9417 = vpack.c.b16 %v9369, %v9368
          %v9418 = vpack.c.b16 %v9371, %v9370
          %v9419 = vpack.c.b16 %v9373, %v9372
          %v9420 = vpack.c.b16 %v9375, %v9374
          %v9421 = vpack.c.b16 %v9377, %v9376
          %v9422 = vpack.c.b16 %v9379, %v9378
          %v9423 = vpack.c.b16 %v9381, %v9380
          %v9424 = vpack.c.b16 %v9383, %v9382
          %v9425 = vpack.c.b16 %v9385, %v9384
          %v9426 = vpack.c.b16 %v9387, %v9386
          %v9427 = vpack.c.b16 %v9389, %v9388
          %v9428 = vpack.c.b16 %v9391, %v9390
          %v9429 = vpack.c.b16 %v9393, %v9392
          %v9430 = vpack.c.b16 %v9395, %v9394
          %v9431 = vpack.c.b16 %v9397, %v9396
          %v9432 = vpack.c.b16 %v9399, %v9398
          %v9433 = vpack.c.b16 %v9401, %v9400
          %9466 = vmatpush.bf16.msra.mxu0 %v9409
          %9467 = vmatpush.bf16.msra.mxu0 %v9408
          %9468 = vmatpush.bf16.msra.mxu0 %v9407
          %9469 = vmatpush.bf16.msra.mxu0 %v9406
          %9470 = vmatpush.bf16.msra.mxu0 %v9405
          %9471 = vmatpush.bf16.msra.mxu0 %v9404
          %9472 = vmatpush.bf16.msra.mxu0 %v9403
          %9473 = vmatpush.bf16.msra.mxu0 %v9402
          %9474 = vmatmul.bf16.gmra.mxu0 %v8738
          %v9475 = vpop.f32.mrf.mxu0
          %v9476 = vadd.f32 %v9273, %v9475
          %v9477 = vpop.f32.mrf.mxu0
          %9478 = vdwg.mxu0
          %9479 = vmatpush.bf16.msra.mxu0 %v9417
          %9480 = vmatpush.bf16.msra.mxu0 %v9416
          %9481 = vmatpush.bf16.msra.mxu0 %v9415
          %9482 = vmatpush.bf16.msra.mxu0 %v9414
          %9483 = vmatpush.bf16.msra.mxu0 %v9413
          %9484 = vmatpush.bf16.msra.mxu0 %v9412
          %9485 = vmatpush.bf16.msra.mxu0 %v9411
          %9486 = vmatpush.bf16.msra.mxu0 %v9410
          %9487 = vmatmul.bf16.gmra.mxu0 %v8739
          %v9488 = vpop.f32.mrf.mxu0
          %v9489 = vadd.f32 %v9476, %v9488
          %v9490 = vpop.f32.mrf.mxu0
          %9491 = vdwg.mxu0
          %9492 = vmatpush.bf16.msra.mxu0 %v9425
          %9493 = vmatpush.bf16.msra.mxu0 %v9424
          %9494 = vmatpush.bf16.msra.mxu0 %v9423
          %9495 = vmatpush.bf16.msra.mxu0 %v9422
          %9496 = vmatpush.bf16.msra.mxu0 %v9421
          %9497 = vmatpush.bf16.msra.mxu0 %v9420
          %9498 = vmatpush.bf16.msra.mxu0 %v9419
          %9499 = vmatpush.bf16.msra.mxu0 %v9418
          %9500 = vmatmul.bf16.gmra.mxu0 %v8740
          %v9501 = vpop.f32.mrf.mxu0
          %v9502 = vadd.f32 %v9489, %v9501
          %v9503 = vpop.f32.mrf.mxu0
          %9504 = vdwg.mxu0
          %9505 = vmatpush.bf16.msra.mxu0 %v9433
          %9506 = vmatpush.bf16.msra.mxu0 %v9432
          %9507 = vmatpush.bf16.msra.mxu0 %v9431
          %9508 = vmatpush.bf16.msra.mxu0 %v9430
          %9509 = vmatpush.bf16.msra.mxu0 %v9429
          %9510 = vmatpush.bf16.msra.mxu0 %v9428
          %9511 = vmatpush.bf16.msra.mxu0 %v9427
          %9512 = vmatpush.bf16.msra.mxu0 %v9426
          %9513 = vmatmul.bf16.gmra.mxu0 %v8741
          %v9514 = vpop.f32.mrf.mxu0
          %v9515 = vadd.f32 %v9502, %v9514
          %v9516 = vpop.f32.mrf.mxu0
          %9517 = vdwg.mxu0
          %v9518 = vmax.f32 %v9515, 0.0
          %v9519 = vpack.c.bf16 %v9518, %v9518
          %v9520 = vld [vmem:[%s13] sm:$0xf]
          %v9521 = vld [vmem:[%s13 + $0x4] sm:$0xf]
          %v9522 = vld [vmem:[%s13 + $0x8] sm:$0xf]
          %v9523 = vld [vmem:[%s13 + $0xc] sm:$0xf]
          %v9524 = vld [vmem:[%s13 + $0x10] sm:$0xf]
          %v9525 = vld [vmem:[%s13 + $0x14] sm:$0xf]
          %v9526 = vld [vmem:[%s13 + $0x18] sm:$0xf]
          %v9527 = vld [vmem:[%s13 + $0x1c] sm:$0xf]
          %v9528 = vld [vmem:[%s13 + $0x20] sm:$0xf]
          %v9529 = vld [vmem:[%s13 + $0x24] sm:$0xf]
          %v9530 = vld [vmem:[%s13 + $0x28] sm:$0xf]
          %v9531 = vld [vmem:[%s13 + $0x2c] sm:$0xf]
          %v9532 = vld [vmem:[%s13 + $0x30] sm:$0xf]
          %v9533 = vld [vmem:[%s13 + $0x34] sm:$0xf]
          %v9534 = vld [vmem:[%s13 + $0x38] sm:$0xf]
          %v9535 = vld [vmem:[%s13 + $0x3c] sm:$0xf]
          %v9536 = vld [vmem:[%s14] sm:$0x1]
          %v9553 = vunpack.c.l.b16 %v9520
          %v9554 = vunpack.c.l.b16 %v9521
          %v9555 = vunpack.c.l.b16 %v9522
          %v9556 = vunpack.c.l.b16 %v9523
          %v9557 = vunpack.c.l.b16 %v9524
          %v9558 = vunpack.c.l.b16 %v9525
          %v9559 = vunpack.c.l.b16 %v9526
          %v9560 = vunpack.c.l.b16 %v9527
          %v9561 = vunpack.c.l.b16 %v9528
          %v9562 = vunpack.c.l.b16 %v9529
          %v9563 = vunpack.c.l.b16 %v9530
          %v9564 = vunpack.c.l.b16 %v9531
          %v9565 = vunpack.c.l.b16 %v9532
          %v9566 = vunpack.c.l.b16 %v9533
          %v9567 = vunpack.c.l.b16 %v9534
          %v9568 = vunpack.c.l.b16 %v9535
          %v9569 = vpack.c.b16 %v9554, %v9553
          %v9570 = vpack.c.b16 %v9556, %v9555
          %v9571 = vpack.c.b16 %v9558, %v9557
          %v9572 = vpack.c.b16 %v9560, %v9559
          %v9573 = vpack.c.b16 %v9562, %v9561
          %v9574 = vpack.c.b16 %v9564, %v9563
          %v9575 = vpack.c.b16 %v9566, %v9565
          %v9576 = vpack.c.b16 %v9568, %v9567
          %9585 = vmatpush.bf16.msra.mxu0 %v9576
          %9586 = vmatpush.bf16.msra.mxu0 %v9575
          %9587 = vmatpush.bf16.msra.mxu0 %v9574
          %9588 = vmatpush.bf16.msra.mxu0 %v9573
          %9589 = vmatpush.bf16.msra.mxu0 %v9572
          %9590 = vmatpush.bf16.msra.mxu0 %v9571
          %9591 = vmatpush.bf16.msra.mxu0 %v9570
          %9592 = vmatpush.bf16.msra.mxu0 %v9569
          %9593 = vmatmul.bf16.gmra.mxu0 %v9519
          %v9594 = vpop.f32.mrf.mxu0
          %v9595 = vadd.f32 %v9536, %v9594
          %v9596 = vpop.f32.mrf.mxu0
          %9597 = vdwg.mxu0
          %v9598 = vmax.f32 %v9595, 0.0
          %v9599 = vpack.c.bf16 %v9598, %v9598
          %v9600 = vld [vmem:[%s15] sm:$0xf]
          %v9601 = vld [vmem:[%s15 + $0x4] sm:$0xf]
          %v9602 = vld [vmem:[%s15 + $0x8] sm:$0xf]
          %v9603 = vld [vmem:[%s15 + $0xc] sm:$0xf]
          %v9604 = vld [vmem:[%s15 + $0x10] sm:$0xf]
          %v9605 = vld [vmem:[%s15 + $0x14] sm:$0xf]
          %v9606 = vld [vmem:[%s15 + $0x18] sm:$0xf]
          %v9607 = vld [vmem:[%s15 + $0x1c] sm:$0xf]
          %v9608 = vld [vmem:[#allocation3] sm:$0x1]
          %v9617 = vunpack.c.l.b16 %v9600
          %v9618 = vunpack.c.l.b16 %v9601
          %v9619 = vunpack.c.l.b16 %v9602
          %v9620 = vunpack.c.l.b16 %v9603
          %v9621 = vunpack.c.l.b16 %v9604
          %v9622 = vunpack.c.l.b16 %v9605
          %v9623 = vunpack.c.l.b16 %v9606
          %v9624 = vunpack.c.l.b16 %v9607
          %v9625 = vpack.c.b16 %v9618, %v9617
          %v9626 = vpack.c.b16 %v9620, %v9619
          %v9627 = vpack.c.b16 %v9622, %v9621
          %v9628 = vpack.c.b16 %v9624, %v9623
          %v9634 = vsel %vm9166, %v9599, 0
          %9636 = vmatpush.bf16.msra.mxu0 0
          %9637 = vmatpush.bf16.msra.mxu0 0
          %9638 = vmatpush.bf16.msra.mxu0 0
          %9639 = vmatpush.bf16.msra.mxu0 0
          %9640 = vmatpush.bf16.msra.mxu0 %v9628
          %9641 = vmatpush.bf16.msra.mxu0 %v9627
          %9642 = vmatpush.bf16.msra.mxu0 %v9626
          %9643 = vmatpush.bf16.msra.mxu0 %v9625
          %9644 = vmatmul.bf16.gmra.mxu0 %v9634
          %v9645 = vpop.f32.mrf.mxu0
          %v9646 = vadd.f32 %v9608, %v9645
          %v9647 = vpop.f32.mrf.mxu0
          %9648 = vdwg.mxu0
          %vm9649 = vcmask 0
          %9650 = vst.msk [vmem:[#allocation6] sm:$0x1] %vm9649, %v9646
        $region96: #{policy_forward.7} parent=87 // pred_fallthru
          _
        // Predicated region
        $region97: #{policy_forward.7} parent=87 // pred_check
          %p9651 = pneg %p414
        $region98: #{policy_forward.7} parent=87 // pred_check_branch
          %9653 = sbr.rel (%p9651) target = $region100
        $region99: #{policy_forward.7} parent=87 // pred_region
          %9655 = vsyncadd [#allocation5], 0
          %s9657 = sshll.u32 [#allocation4], 4
          %s9658 = int_to_ptr.vmem [resolvable:$true] %s9657
          %s9659 = sshll.u32 %s17, 4
          %s9660 = int_to_ptr.hbm [resolvable:$true] %s9659
          %9662 = dma.vmem_to_hbm [thread:$0]  %s9658, 16, %s9660, [#allocation5]
        $region100: #{policy_forward.7} parent=87 // pred_fallthru
          _
        // Predicated region
        $region101: #{policy_forward.7} parent=87 // pred_check
          %p9663 = pneg %p435
        $region102: #{policy_forward.7} parent=87 // pred_check_branch
          %9665 = sbr.rel (%p9663) target = $region104
        $region103: #{policy_forward.7} parent=87 // pred_region
          %9667 = vsyncadd [#allocation7], 0
          %s9669 = sshll.u32 [#allocation6], 4
          %s9670 = int_to_ptr.vmem [resolvable:$true] %s9669
          %s9671 = sshll.u32 %s18, 4
          %s9672 = int_to_ptr.hbm [resolvable:$true] %s9671
          %9674 = dma.vmem_to_hbm [thread:$0]  %s9670, 16, %s9672, [#allocation7]
        $region104: #{policy_forward.7} parent=87 // pred_fallthru
          _
        // Predicated region
        $region105: #{policy_forward.7} parent=87 // pred_check
          %p9675 = pneg %p414
        $region106: #{policy_forward.7} parent=87 // pred_check_branch
          %9677 = sbr.rel (%p9675) target = $region108
        $region107: #{policy_forward.7} parent=87 // pred_region
          %9679 = dma.done [#allocation5], 16
        $region108: #{policy_forward.7} parent=87 // pred_fallthru
          _
        // Predicated region
        $region109: #{policy_forward.7} parent=87 // pred_check
          %p9680 = pneg %p435
        $region110: #{policy_forward.7} parent=87 // pred_check_branch
          %9682 = sbr.rel (%p9680) target = $region112
        $region111: #{policy_forward.7} parent=87 // pred_region
          %9684 = dma.done [#allocation7], 16
        $region112: #{policy_forward.7} parent=87 // pred_fallthru
          _
      $region88: #{policy_forward.7} parent=5 // pred_fallthru
        _
      %p9685 = scmp.le.s32.totalorder 2, %s29
      // Predicated region
      $region113: #{policy_forward.7} parent=5 // pred_check
        %p9686 = pneg %p9685
      $region114: #{policy_forward.7} parent=5 // pred_check_branch
        %9688 = sbr.rel (%p9686) target = $region116
      $region115: #{policy_forward.7} parent=5 // pred_region
        %s9689 = ssub.s32 %s29, 2
      $region116: #{policy_forward.7} parent=5 // pred_fallthru
        _
    $region6: #{policy_forward.7} parent=1 // loop_footer
      %s33 = sadd.s32 1, %s29
    $region7: #{policy_forward.7} parent=1 // loop_footer_branch
      %28 = sbr.rel target = $region3
    $region8: #{policy_forward.7} parent=1 // loop_exit
      _
    %9690 = vsyncpa [#allocation5], 1
    %s9691 = scalar_lea.sflag [#allocation5], 1
    %9692 = vsyncpa %s9691, 1
    %9693 = vsyncpa [#allocation7], 1

</llo_original>
